<compile_context>
chip_gen: v7x
topology: tpu7x:2x2x1
jax: 0.10.0
libtpu: 0.0.40
codegen_flags: <defaults>
</compile_context>

<pallas_src>
import functools

import jax
import jax.numpy as jnp
from jax import lax
from jax.experimental import pallas as pl
from jax.experimental.pallas import tpu as pltpu

LANE = 128
SUBLANE = 8


def _round_up(x, m):
    return (x + m - 1) // m * m


def _const_spec(shape, index_map):
    """BlockSpec for operands whose block never changes across the grid (single-buffer)."""
    try:
        return pl.BlockSpec(shape, index_map, pipeline_mode=pl.Buffered(1))
    except (AttributeError, TypeError, ValueError):
        return pl.BlockSpec(shape, index_map)


def _pick_block_h(H, W, desired):
    """Largest divisor of H not exceeding `desired` with (bh*W) % 8 == 0."""
    for bh in range(min(desired, H), 0, -1):
        if H % bh == 0 and (bh * W) % SUBLANE == 0:
            return bh
    raise ValueError(f"cannot tile H={H}, W={W} into 8-element-aligned row blocks")


def _vmem_limit(nbytes):
    return int(min(max(nbytes + (8 << 20), 32 << 20), 100 << 20))


# --------------------------------------------------------------------------- #
# Pass 1: split branches (strip-im2col conv + folded BN + ReLU) + GAP sums     #
# --------------------------------------------------------------------------- #
def _split_kernel(x_ref, w_ref, bns_ref, bnb_ref, t_ref, psum_ref, im_ref,
                  *, TH, W, Cp, K, kmax, mp, dy_plan):
    halo = TH + 2 * mp
    row0 = pl.multiple_of(pl.program_id(1) * TH, TH)

    # --- gather: kmax dx-shifted strips, one lane-aligned vector store per dx ---
    for dx in range(kmax):
        strip = x_ref[0, pl.ds(row0, halo), dx:dx + W, :]            # (halo, W, Cp) bf16
        im_ref[:, dx * Cp:(dx + 1) * Cp] = strip.reshape(halo * W, Cp)

    # --- conv: kmax row-shifted MXU matmuls; only the branches active at each dy ---
    accs = [jnp.zeros((TH * W, Cp), jnp.float32) for _ in range(K)]
    for dy, col_off, active in dy_plan:                              # static python loop
        patches = im_ref[dy * W:dy * W + TH * W, :]                  # (TH*W, kmax*Cp) bf16
        nact = len(active)
        part = jnp.dot(patches, w_ref[:, col_off:col_off + nact * Cp],
                       preferred_element_type=jnp.float32)           # (TH*W, nact*Cp) f32
        for idx, k in enumerate(active):
            accs[k] = accs[k] + part[:, idx * Cp:(idx + 1) * Cp]

    # --- folded eval-mode BN + ReLU, branch sum for GAP, bf16 branch store ---
    u = None
    for k in range(K):
        t_k = jnp.maximum(accs[k] * bns_ref[0:1, k * Cp:(k + 1) * Cp]
                          + bnb_ref[0:1, k * Cp:(k + 1) * Cp], 0.0)
        u = t_k if u is None else u + t_k
        t_ref[0, :, :, k * Cp:(k + 1) * Cp] = t_k.reshape(TH, W, Cp).astype(t_ref.dtype)

    # 8-row grouped partial sums for the global average pool (f32, before bf16 cast)
    psum_ref[0, 0] = jnp.sum(u.reshape(SUBLANE, (TH * W) // SUBLANE, Cp), axis=1)


# --------------------------------------------------------------------------- #
# Fuse + attention: GAP -> dense -> BN1d -> ReLU -> fused 1x1 -> softmax       #
# --------------------------------------------------------------------------- #
def _fuse_attn_kernel(ps_ref, wf_ref, fs_ref, fb_ref, wa_ref, att_ref,
                      *, K, Cp, Fp, inv_hw):
    sg = jnp.sum(ps_ref[0], axis=0)                                    # (8, Cp) grouped sums
    # matmul is linear in the row-sum: contract first (MXU-aligned M=8), reduce after
    zg = jnp.dot(sg, wf_ref[...], preferred_element_type=jnp.float32)  # (8, Fp)
    z = jnp.sum(zg, axis=0, keepdims=True) * inv_hw                    # == mean(u) @ W_fuse
    z = jnp.maximum(z * fs_ref[...] + fb_ref[...], 0.0)                # (1, Fp)

    z8 = pl.broadcast_to(z, (SUBLANE, Fp))                             # MXU-aligned rows
    # single fused attention matmul across all branches (N = K*Cp)
    logits = jnp.dot(z8, wa_ref[...], preferred_element_type=jnp.float32)[0:1, :]

    m = logits[:, 0:Cp]
    for k in range(1, K):
        m = jnp.maximum(m, logits[:, k * Cp:(k + 1) * Cp])
    exps = [jnp.exp(logits[:, k * Cp:(k + 1) * Cp] - m) for k in range(K)]
    denom = exps[0]
    for e in exps[1:]:
        denom = denom + e
    inv = pl.reciprocal(denom, approx=True)                            # EUP slot
    att_ref[0] = jnp.concatenate([e * inv for e in exps], axis=0)      # (K, Cp)


# --------------------------------------------------------------------------- #
# Pass 2: apply per-channel attention weights to the bf16 branch tiles         #
# --------------------------------------------------------------------------- #
def _apply_kernel(t_ref, att_ref, out_ref, *, Cp, K):
    t = t_ref[0]                                                       # (TH, W, K*Cp) bf16
    out = t[:, :, 0:Cp].astype(jnp.float32) * att_ref[0, 0:1, :].reshape(1, 1, Cp)
    for k in range(1, K):
        out = out + (t[:, :, k * Cp:(k + 1) * Cp].astype(jnp.float32)
                     * att_ref[0, k:k + 1, :].reshape(1, 1, Cp))
    out_ref[0] = out.astype(out_ref.dtype)


# --------------------------------------------------------------------------- #
# Parameter packing                                                            #
# --------------------------------------------------------------------------- #
def _prepare_params(params, kernels, C, Cp, kmax, mp):
    """Pad / fold module parameters into the lane-dense layouts the kernels use."""
    K = len(kernels)
    F = params['wf'].shape[1]
    Fp = _round_up(F, LANE)
    offs = [mp - (ks - 1) // 2 for ks in kernels]

    # per-dy plan: which branches get a contribution from padded-image row offset dy and
    # where their weight columns live in the packed weight matrix (element offsets).
    dy_plan, col = [], 0
    for dy in range(kmax):
        active = tuple(k for k in range(K) if offs[k] <= dy < offs[k] + kernels[k])
        dy_plan.append((dy, col, active))
        col += len(active) * Cp
    total_cols = col
    dy_plan = tuple(dy_plan)

    # packed conv weight: rows = dx-strip-major / cin-minor im2col contraction layout,
    # columns = per-dy, per-active-branch output channels.
    w_all = jnp.zeros((kmax * Cp, total_cols), jnp.float32)
    for dy, col_off, active in dy_plan:
        for idx, k in enumerate(active):
            ks, off = kernels[k], offs[k]
            i = dy - off
            for j in range(ks):
                dx = off + j
                w_all = w_all.at[dx * Cp:dx * Cp + C,
                                 col_off + idx * Cp:col_off + idx * Cp + C].set(
                                     params['w'][k][i, j])
    w_all = w_all.astype(jnp.bfloat16)

    bns = jnp.zeros((1, K * Cp), jnp.float32)
    bnb = jnp.zeros((1, K * Cp), jnp.float32)
    for k in range(K):
        bns = bns.at[0, k * Cp:k * Cp + C].set(params['bn_scale'][k, 0])
        bnb = bnb.at[0, k * Cp:k * Cp + C].set(params['bn_bias'][k, 0])

    wf_p = jnp.zeros((Cp, Fp), jnp.float32).at[:C, :F].set(params['wf'])
    fs_p = jnp.zeros((1, Fp), jnp.float32).at[0, :F].set(params['f_scale'][0])
    fb_p = jnp.zeros((1, Fp), jnp.float32).at[0, :F].set(params['f_bias'][0])
    wa_p = jnp.zeros((Fp, K * Cp), jnp.float32)
    for k in range(K):
        wa_p = wa_p.at[:F, k * Cp:k * Cp + C].set(params['wa'][k])

    return w_all, bns, bnb, wf_p, fs_p, fb_p, wa_p, Fp, dy_plan, total_cols


# --------------------------------------------------------------------------- #
# Wrapper                                                                      #
# --------------------------------------------------------------------------- #
def selective_kernel_conv(x_nchw, params, kernels=(3, 5), block_h=32):
    """x_nchw: (B, C, H, W) float32 -> (B, C, H, W) float32."""
    B, C, H, W = x_nchw.shape
    K = len(kernels)
    kmax = max(kernels)
    mp = (kmax - 1) // 2
    Cp = _round_up(C, LANE)
    TH = _pick_block_h(H, W, block_h)
    n_ht = H // TH
    halo = TH + 2 * mp

    (w_all, bns, bnb, wf_p, fs_p, fb_p, wa_p, Fp, dy_plan,
     total_cols) = _prepare_params(params, kernels, C, Cp, kmax, mp)

    # NHWC; spatial halo + channel pad to lane width in one fused pad+cast copy;
    # MXU conv inputs are bf16 (f32 accumulation inside the kernel).
    x = jnp.transpose(x_nchw, (0, 2, 3, 1))
    xp = jnp.pad(x, ((0, 0), (mp, mp), (mp, mp), (0, Cp - C))).astype(jnp.bfloat16)
    Hp, Wp = H + 2 * mp, W + 2 * mp

    # ---------------- pass 1: bf16 branch tiles + partial GAP sums ---------------- #
    split = functools.partial(_split_kernel, TH=TH, W=W, Cp=Cp, K=K, kmax=kmax,
                              mp=mp, dy_plan=dy_plan)
    flops1 = 2 * B * H * W * (kmax * Cp) * total_cols
    bytes1 = (xp.size * 2 + w_all.size * 2 + 2 * K * Cp * 4
              + B * H * W * K * Cp * 2 + B * n_ht * SUBLANE * Cp * 4)
    vmem1 = (2 * Hp * Wp * Cp * 2                 # x block (double buffered, bf16)
             + w_all.size * 2                     # packed conv weight (bf16)
             + 2 * 2 * K * Cp * 4                 # bns + bnb
             + 2 * TH * W * K * Cp * 2            # t out block (bf16)
             + 2 * SUBLANE * Cp * 4               # psum out block
             + halo * W * kmax * Cp * 2)          # im2col strip scratch
    t_all, psum = pl.pallas_call(
        split,
        out_shape=(jax.ShapeDtypeStruct((B, H, W, K * Cp), jnp.bfloat16),
                   jax.ShapeDtypeStruct((B, n_ht, SUBLANE, Cp), jnp.float32)),
        grid=(B, n_ht),
        in_specs=[
            pl.BlockSpec((1, Hp, Wp, Cp), lambda b, h: (b, 0, 0, 0)),
            _const_spec((kmax * Cp, total_cols), lambda b, h: (0, 0)),
            _const_spec((1, K * Cp), lambda b, h: (0, 0)),
            _const_spec((1, K * Cp), lambda b, h: (0, 0)),
        ],
        out_specs=(pl.BlockSpec((1, TH, W, K * Cp), lambda b, h: (b, h, 0, 0)),
                   pl.BlockSpec((1, 1, SUBLANE, Cp), lambda b, h: (b, h, 0, 0))),
        scratch_shapes=[pltpu.VMEM((halo * W, kmax * Cp), jnp.bfloat16)],
        compiler_params=pltpu.CompilerParams(
            dimension_semantics=("parallel", "parallel"),
            vmem_limit_bytes=_vmem_limit(vmem1)),
        cost_estimate=pl.CostEstimate(flops=flops1, transcendentals=0,
                                      bytes_accessed=bytes1),
    )(xp, w_all, bns, bnb)

    # -------- fuse + attention (tiny, (B, C)-sized; one grid step per batch) -------- #
    fuse = functools.partial(_fuse_attn_kernel, K=K, Cp=Cp, Fp=Fp, inv_hw=1.0 / (H * W))
    flops2 = 2 * B * SUBLANE * (Cp * Fp + Fp * K * Cp)
    bytes2 = psum.size * 4 + (Cp * Fp + Fp * K * Cp + 2 * Fp) * 4 + B * K * Cp * 4
    att = pl.pallas_call(
        fuse,
        out_shape=jax.ShapeDtypeStruct((B, K, Cp), jnp.float32),
        grid=(B,),
        in_specs=[
            pl.BlockSpec((1, n_ht, SUBLANE, Cp), lambda b: (b, 0, 0, 0)),
            _const_spec((Cp, Fp), lambda b: (0, 0)),
            _const_spec((1, Fp), lambda b: (0, 0)),
            _const_spec((1, Fp), lambda b: (0, 0)),
            _const_spec((Fp, K * Cp), lambda b: (0, 0)),
        ],
        out_specs=pl.BlockSpec((1, K, Cp), lambda b: (b, 0, 0)),
        compiler_params=pltpu.CompilerParams(dimension_semantics=("parallel",)),
        cost_estimate=pl.CostEstimate(flops=flops2, transcendentals=B * K * Cp,
                                      bytes_accessed=bytes2),
    )(psum, wf_p, fs_p, fb_p, wa_p)

    # ---------------- pass 2: weighted sum of bf16 branches ---------------- #
    apply_k = functools.partial(_apply_kernel, Cp=Cp, K=K)
    flops3 = 2 * B * H * W * K * Cp
    bytes3 = t_all.size * 2 + att.size * 4 + B * H * W * Cp * 4
    vmem3 = 2 * TH * W * K * Cp * 2 + 2 * K * Cp * 4 + 2 * TH * W * Cp * 4
    out = pl.pallas_call(
        apply_k,
        out_shape=jax.ShapeDtypeStruct((B, H, W, Cp), jnp.float32),
        grid=(B, n_ht),
        in_specs=[
            pl.BlockSpec((1, TH, W, K * Cp), lambda b, h: (b, h, 0, 0)),
            pl.BlockSpec((1, K, Cp), lambda b, h: (b, 0, 0)),
        ],
        out_specs=pl.BlockSpec((1, TH, W, Cp), lambda b, h: (b, h, 0, 0)),
        compiler_params=pltpu.CompilerParams(
            dimension_semantics=("parallel", "parallel"),
            vmem_limit_bytes=_vmem_limit(vmem3)),
        cost_estimate=pl.CostEstimate(flops=flops3, transcendentals=0,
                                      bytes_accessed=bytes3),
    )(t_all, att)

    return jnp.transpose(out[:, :, :, :C], (0, 3, 1, 2))                 # back to NCHW


# --------------------------------------------------------------------------- #
# Parameters + pure-JAX reference                                              #
# --------------------------------------------------------------------------- #
def init_params(key, channels, kernels=(3, 5), ratio=4, min_features=32):
    """Deterministic synthetic parameters mirroring the module's __init__ shapes."""
    C = channels
    F = max(C // ratio, min_features)
    K = len(kernels)
    ks = jax.random.split(key, K + 6)
    eps = 1e-5

    # conv weights, HWIO (cross-correlation, same as PyTorch Conv2d semantics)
    w = [0.1 * jax.random.normal(ks[i], (kernels[i], kernels[i], C, C), jnp.float32)
         for i in range(K)]

    # per-branch BatchNorm2d (eval mode, running_mean=0, running_var=1) folded
    gamma = 1.0 + 0.1 * jax.random.normal(ks[K], (K, 1, C), jnp.float32)
    beta = 0.1 * jax.random.normal(ks[K + 1], (K, 1, C), jnp.float32)
    bn_scale = gamma / jnp.sqrt(1.0 + eps)
    bn_bias = beta

    # fuse dense (C -> F), bias=False, followed by BatchNorm1d (folded)
    wf = 0.1 * jax.random.normal(ks[K + 2], (C, F), jnp.float32)
    fgamma = 1.0 + 0.1 * jax.random.normal(ks[K + 3], (1, F), jnp.float32)
    fbeta = 0.1 * jax.random.normal(ks[K + 4], (1, F), jnp.float32)
    f_scale = fgamma / jnp.sqrt(1.0 + eps)
    f_bias = fbeta

    # attention 1x1 convs (F -> C), one per branch, bias=False
    wa = 0.1 * jax.random.normal(ks[K + 5], (K, F, C), jnp.float32)

    return dict(w=w, bn_scale=bn_scale, bn_bias=bn_bias, wf=wf,
                f_scale=f_scale, f_bias=f_bias, wa=wa)


def reference(x_nchw, params, kernels=(3, 5)):
    """Pure-JAX f32 reference of the same forward pass (for sanity check)."""
    x = jnp.transpose(x_nchw, (0, 2, 3, 1))
    branch_outs = []
    for k_idx in range(len(kernels)):
        y = lax.conv_general_dilated(x, params['w'][k_idx], window_strides=(1, 1),
                                     padding='SAME',
                                     dimension_numbers=('NHWC', 'HWIO', 'NHWC'))
        t = jnp.maximum(y * params['bn_scale'][k_idx, 0] + params['bn_bias'][k_idx, 0], 0.0)
        branch_outs.append(t)
    u = branch_outs[0]
    for t in branch_outs[1:]:
        u = u + t
    s = jnp.mean(u, axis=(1, 2))                                              # (B, C)
    z = jnp.maximum(s @ params['wf'] * params['f_scale'][0] + params['f_bias'][0], 0.0)
    logits = jnp.stack([z @ params['wa'][k] for k in range(len(kernels))], axis=-1)
    att = jax.nn.softmax(logits, axis=-1)                                     # (B, C, K)
    out = jnp.zeros_like(u)
    for k in range(len(kernels)):
        out = out + branch_outs[k] * att[:, :, k][:, None, None, :]
    return jnp.transpose(out, (0, 3, 1, 2))


if __name__ == "__main__":
    key = jax.random.PRNGKey(0)
    kx, kp = jax.random.split(key)

    B, C, H, W = 2, 4, 16, 16
    x = jax.random.normal(kx, (B, C, H, W), jnp.float32)
    params = init_params(kp, C)

    out = selective_kernel_conv(x, params)
    out = jax.block_until_ready(out)
    assert out.shape == (B, C, H, W), out.shape

    ref = reference(x, params)
    err = float(jnp.max(jnp.abs(out - ref)))
    scale = float(jnp.max(jnp.abs(ref))) + 1e-6
    assert err / scale < 2e-2, f"relative error too large: {err / scale} (abs {err})"

    print("KERNEL_OK")
</pallas_src>

<mosaic_0001>
module attributes {stable_mosaic.version = 11 : i64} {
  func.func @_split_kernel(%arg0: i32, %arg1: i32, %arg2: memref<1x20x20x128xbf16, #tpu.memory_space<vmem>>, %arg3: memref<640x1024xbf16, #tpu.memory_space<vmem>>, %arg4: memref<1x256xf32, #tpu.memory_space<vmem>>, %arg5: memref<1x256xf32, #tpu.memory_space<vmem>>, %arg6: memref<1x16x16x256xbf16, #tpu.memory_space<vmem>>, %arg7: memref<1x1x8x128xf32, #tpu.memory_space<vmem>>, %arg8: memref<320x640xbf16, #tpu.memory_space<vmem>>) attributes {dimension_semantics = [#tpu.dimension_semantics<parallel>, #tpu.dimension_semantics<parallel>], iteration_bounds = array<i64: 2, 1>, scalar_prefetch = 0 : i64, scratch_operands = 1 : i64, tpu.core_type = #tpu.core_type<tc>, window_params = [{transform_indices = @transform_0, window_bounds = array<i64: 1, 20, 20, 128>}, {pipeline_mode = #tpu.pipeline_mode<synchronous>, transform_indices = @transform_1, window_bounds = array<i64: 640, 1024>}, {pipeline_mode = #tpu.pipeline_mode<synchronous>, transform_indices = @transform_2, window_bounds = array<i64: 1, 256>}, {pipeline_mode = #tpu.pipeline_mode<synchronous>, transform_indices = @transform_3, window_bounds = array<i64: 1, 256>}, {transform_indices = @transform_4, window_bounds = array<i64: 1, 16, 16, 256>}, {transform_indices = @transform_5, window_bounds = array<i64: 1, 1, 8, 128>}]} {
    %c16_i32 = arith.constant 16 : i32
    %0 = arith.muli %arg1, %c16_i32 : i32
    %1 = tpu.assume_multiple %0, 16 : i32
    %c0 = arith.constant 0 : index
    %2 = arith.index_cast %1 : i32 to index
    %c0_0 = arith.constant 0 : index
    %c0_1 = arith.constant 0 : index
    %3 = vector.load %arg2[%c0, %2, %c0_0, %c0_1] : memref<1x20x20x128xbf16, #tpu.memory_space<vmem>>, vector<1x20x16x128xbf16>
    %4 = vector.shape_cast %3 : vector<1x20x16x128xbf16> to vector<20x16x128xbf16>
    %5 = vector.shape_cast %4 : vector<20x16x128xbf16> to vector<320x128xbf16>
    %c0_2 = arith.constant 0 : index
    %c0_3 = arith.constant 0 : index
    %6 = vector.load %arg8[%c0_2, %c0_3] : memref<320x640xbf16, #tpu.memory_space<vmem>>, vector<320x128xbf16>
    tpu.vector_store %arg8[%c0_2, %c0_3], %5 {strides = array<i32>} : memref<320x640xbf16, #tpu.memory_space<vmem>>, vector<320x128xbf16>,
    %c0_4 = arith.constant 0 : index
    %7 = arith.index_cast %1 : i32 to index
    %c1 = arith.constant 1 : index
    %c0_5 = arith.constant 0 : index
    %8 = vector.load %arg2[%c0_4, %7, %c1, %c0_5] : memref<1x20x20x128xbf16, #tpu.memory_space<vmem>>, vector<1x20x16x128xbf16>
    %9 = vector.shape_cast %8 : vector<1x20x16x128xbf16> to vector<20x16x128xbf16>
    %10 = vector.shape_cast %9 : vector<20x16x128xbf16> to vector<320x128xbf16>
    %c0_6 = arith.constant 0 : index
    %c128 = arith.constant 128 : index
    %11 = vector.load %arg8[%c0_6, %c128] : memref<320x640xbf16, #tpu.memory_space<vmem>>, vector<320x128xbf16>
    tpu.vector_store %arg8[%c0_6, %c128], %10 {strides = array<i32>} : memref<320x640xbf16, #tpu.memory_space<vmem>>, vector<320x128xbf16>,
    %c0_7 = arith.constant 0 : index
    %12 = arith.index_cast %1 : i32 to index
    %c2 = arith.constant 2 : index
    %c0_8 = arith.constant 0 : index
    %13 = vector.load %arg2[%c0_7, %12, %c2, %c0_8] : memref<1x20x20x128xbf16, #tpu.memory_space<vmem>>, vector<1x20x16x128xbf16>
    %14 = vector.shape_cast %13 : vector<1x20x16x128xbf16> to vector<20x16x128xbf16>
    %15 = vector.shape_cast %14 : vector<20x16x128xbf16> to vector<320x128xbf16>
    %c0_9 = arith.constant 0 : index
    %c256 = arith.constant 256 : index
    %16 = vector.load %arg8[%c0_9, %c256] : memref<320x640xbf16, #tpu.memory_space<vmem>>, vector<320x128xbf16>
    tpu.vector_store %arg8[%c0_9, %c256], %15 {strides = array<i32>} : memref<320x640xbf16, #tpu.memory_space<vmem>>, vector<320x128xbf16>,
    %c0_10 = arith.constant 0 : index
    %17 = arith.index_cast %1 : i32 to index
    %c3 = arith.constant 3 : index
    %c0_11 = arith.constant 0 : index
    %18 = vector.load %arg2[%c0_10, %17, %c3, %c0_11] : memref<1x20x20x128xbf16, #tpu.memory_space<vmem>>, vector<1x20x16x128xbf16>
    %19 = vector.shape_cast %18 : vector<1x20x16x128xbf16> to vector<20x16x128xbf16>
    %20 = vector.shape_cast %19 : vector<20x16x128xbf16> to vector<320x128xbf16>
    %c0_12 = arith.constant 0 : index
    %c384 = arith.constant 384 : index
    %21 = vector.load %arg8[%c0_12, %c384] : memref<320x640xbf16, #tpu.memory_space<vmem>>, vector<320x128xbf16>
    tpu.vector_store %arg8[%c0_12, %c384], %20 {strides = array<i32>} : memref<320x640xbf16, #tpu.memory_space<vmem>>, vector<320x128xbf16>,
    %c0_13 = arith.constant 0 : index
    %22 = arith.index_cast %1 : i32 to index
    %c4 = arith.constant 4 : index
    %c0_14 = arith.constant 0 : index
    %23 = vector.load %arg2[%c0_13, %22, %c4, %c0_14] : memref<1x20x20x128xbf16, #tpu.memory_space<vmem>>, vector<1x20x16x128xbf16>
    %24 = vector.shape_cast %23 : vector<1x20x16x128xbf16> to vector<20x16x128xbf16>
    %25 = vector.shape_cast %24 : vector<20x16x128xbf16> to vector<320x128xbf16>
    %c0_15 = arith.constant 0 : index
    %c512 = arith.constant 512 : index
    %26 = vector.load %arg8[%c0_15, %c512] : memref<320x640xbf16, #tpu.memory_space<vmem>>, vector<320x128xbf16>
    tpu.vector_store %arg8[%c0_15, %c512], %25 {strides = array<i32>} : memref<320x640xbf16, #tpu.memory_space<vmem>>, vector<320x128xbf16>,
    %cst = arith.constant 0.000000e+00 : f32
    %27 = vector.broadcast %cst : f32 to vector<256x128xf32>
    %cst_16 = arith.constant 0.000000e+00 : f32
    %28 = vector.broadcast %cst_16 : f32 to vector<256x128xf32>
    %c0_17 = arith.constant 0 : index
    %c0_18 = arith.constant 0 : index
    %29 = vector.load %arg8[%c0_17, %c0_18] : memref<320x640xbf16, #tpu.memory_space<vmem>>, vector<256x640xbf16>
    %c0_19 = arith.constant 0 : index
    %c0_20 = arith.constant 0 : index
    %30 = vector.load %arg3[%c0_19, %c0_20] : memref<640x1024xbf16, #tpu.memory_space<vmem>>, vector<640x128xbf16>
    %cst_21 = arith.constant dense<0.000000e+00> : vector<256x128xf32>
    %31 = tpu.matmul %29, %30, %cst_21 {dimension_numbers = #tpu.dot_dimension_numbers<[1], [0], [0], [1], [0, 0, 1, 1], [], []>} : vector<256x640xbf16>, vector<640x128xbf16>, vector<256x128xf32> -> vector<256x128xf32>
    %32 = arith.addf %28, %31 : vector<256x128xf32>
    %c16 = arith.constant 16 : index
    %c0_22 = arith.constant 0 : index
    %33 = vector.load %arg8[%c16, %c0_22] : memref<320x640xbf16, #tpu.memory_space<vmem>>, vector<256x640xbf16>
    %c0_23 = arith.constant 0 : index
    %c128_24 = arith.constant 128 : index
    %34 = vector.load %arg3[%c0_23, %c128_24] : memref<640x1024xbf16, #tpu.memory_space<vmem>>, vector<640x256xbf16>
    %cst_25 = arith.constant dense<0.000000e+00> : vector<256x256xf32>
    %35 = tpu.matmul %33, %34, %cst_25 {dimension_numbers = #tpu.dot_dimension_numbers<[1], [0], [0], [1], [0, 0, 1, 1], [], []>} : vector<256x640xbf16>, vector<640x256xbf16>, vector<256x256xf32> -> vector<256x256xf32>
    %36 = vector.extract_strided_slice %35 {offsets = [0, 0], sizes = [256, 128], strides = [1, 1]} : vector<256x256xf32> to vector<256x128xf32>
    %37 = arith.addf %27, %36 : vector<256x128xf32>
    %38 = vector.extract_strided_slice %35 {offsets = [0, 128], sizes = [256, 128], strides = [1, 1]} : vector<256x256xf32> to vector<256x128xf32>
    %39 = arith.addf %32, %38 : vector<256x128xf32>
    %c32 = arith.constant 32 : index
    %c0_26 = arith.constant 0 : index
    %40 = vector.load %arg8[%c32, %c0_26] : memref<320x640xbf16, #tpu.memory_space<vmem>>, vector<256x640xbf16>
    %c0_27 = arith.constant 0 : index
    %c384_28 = arith.constant 384 : index
    %41 = vector.load %arg3[%c0_27, %c384_28] : memref<640x1024xbf16, #tpu.memory_space<vmem>>, vector<640x256xbf16>
    %cst_29 = arith.constant dense<0.000000e+00> : vector<256x256xf32>
    %42 = tpu.matmul %40, %41, %cst_29 {dimension_numbers = #tpu.dot_dimension_numbers<[1], [0], [0], [1], [0, 0, 1, 1], [], []>} : vector<256x640xbf16>, vector<640x256xbf16>, vector<256x256xf32> -> vector<256x256xf32>
    %43 = vector.extract_strided_slice %42 {offsets = [0, 0], sizes = [256, 128], strides = [1, 1]} : vector<256x256xf32> to vector<256x128xf32>
    %44 = arith.addf %37, %43 : vector<256x128xf32>
    %45 = vector.extract_strided_slice %42 {offsets = [0, 128], sizes = [256, 128], strides = [1, 1]} : vector<256x256xf32> to vector<256x128xf32>
    %46 = arith.addf %39, %45 : vector<256x128xf32>
    %c48 = arith.constant 48 : index
    %c0_30 = arith.constant 0 : index
    %47 = vector.load %arg8[%c48, %c0_30] : memref<320x640xbf16, #tpu.memory_space<vmem>>, vector<256x640xbf16>
    %c0_31 = arith.constant 0 : index
    %c640 = arith.constant 640 : index
    %48 = vector.load %arg3[%c0_31, %c640] : memref<640x1024xbf16, #tpu.memory_space<vmem>>, vector<640x256xbf16>
    %cst_32 = arith.constant dense<0.000000e+00> : vector<256x256xf32>
    %49 = tpu.matmul %47, %48, %cst_32 {dimension_numbers = #tpu.dot_dimension_numbers<[1], [0], [0], [1], [0, 0, 1, 1], [], []>} : vector<256x640xbf16>, vector<640x256xbf16>, vector<256x256xf32> -> vector<256x256xf32>
    %50 = vector.extract_strided_slice %49 {offsets = [0, 0], sizes = [256, 128], strides = [1, 1]} : vector<256x256xf32> to vector<256x128xf32>
    %51 = arith.addf %44, %50 : vector<256x128xf32>
    %52 = vector.extract_strided_slice %49 {offsets = [0, 128], sizes = [256, 128], strides = [1, 1]} : vector<256x256xf32> to vector<256x128xf32>
    %53 = arith.addf %46, %52 : vector<256x128xf32>
    %c64 = arith.constant 64 : index
    %c0_33 = arith.constant 0 : index
    %54 = vector.load %arg8[%c64, %c0_33] : memref<320x640xbf16, #tpu.memory_space<vmem>>, vector<256x640xbf16>
    %c0_34 = arith.constant 0 : index
    %c896 = arith.constant 896 : index
    %55 = vector.load %arg3[%c0_34, %c896] : memref<640x1024xbf16, #tpu.memory_space<vmem>>, vector<640x128xbf16>
    %cst_35 = arith.constant dense<0.000000e+00> : vector<256x128xf32>
    %56 = tpu.matmul %54, %55, %cst_35 {dimension_numbers = #tpu.dot_dimension_numbers<[1], [0], [0], [1], [0, 0, 1, 1], [], []>} : vector<256x640xbf16>, vector<640x128xbf16>, vector<256x128xf32> -> vector<256x128xf32>
    %57 = arith.addf %53, %56 : vector<256x128xf32>
    %c0_36 = arith.constant 0 : index
    %c0_37 = arith.constant 0 : index
    %58 = vector.load %arg4[%c0_36, %c0_37] : memref<1x256xf32, #tpu.memory_space<vmem>>, vector<1x128xf32>
    %59 = vector.broadcast %58 : vector<1x128xf32> to vector<256x128xf32>
    %60 = arith.mulf %51, %59 : vector<256x128xf32>
    %c0_38 = arith.constant 0 : index
    %c0_39 = arith.constant 0 : index
    %61 = vector.load %arg5[%c0_38, %c0_39] : memref<1x256xf32, #tpu.memory_space<vmem>>, vector<1x128xf32>
    %62 = vector.broadcast %61 : vector<1x128xf32> to vector<256x128xf32>
    %63 = arith.addf %60, %62 : vector<256x128xf32>
    %cst_40 = arith.constant 0.000000e+00 : f32
    %64 = vector.broadcast %cst_40 : f32 to vector<256x128xf32>
    %65 = arith.maximumf %63, %64 : vector<256x128xf32>
    %66 = vector.shape_cast %65 : vector<256x128xf32> to vector<16x16x128xf32>
    %67 = arith.truncf %66 : vector<16x16x128xf32> to vector<16x16x128xbf16>
    %c0_41 = arith.constant 0 : index
    %c0_42 = arith.constant 0 : index
    %c0_43 = arith.constant 0 : index
    %c0_44 = arith.constant 0 : index
    %68 = vector.load %arg6[%c0_41, %c0_42, %c0_43, %c0_44] : memref<1x16x16x256xbf16, #tpu.memory_space<vmem>>, vector<1x16x16x128xbf16>
    %69 = vector.shape_cast %68 : vector<1x16x16x128xbf16> to vector<16x16x128xbf16>
    %70 = vector.shape_cast %67 : vector<16x16x128xbf16> to vector<1x16x16x128xbf16>
    tpu.vector_store %arg6[%c0_41, %c0_42, %c0_43, %c0_44], %70 {strides = array<i32>} : memref<1x16x16x256xbf16, #tpu.memory_space<vmem>>, vector<1x16x16x128xbf16>,
    %c0_45 = arith.constant 0 : index
    %c128_46 = arith.constant 128 : index
    %71 = vector.load %arg4[%c0_45, %c128_46] : memref<1x256xf32, #tpu.memory_space<vmem>>, vector<1x128xf32>
    %72 = vector.broadcast %71 : vector<1x128xf32> to vector<256x128xf32>
    %73 = arith.mulf %57, %72 : vector<256x128xf32>
    %c0_47 = arith.constant 0 : index
    %c128_48 = arith.constant 128 : index
    %74 = vector.load %arg5[%c0_47, %c128_48] : memref<1x256xf32, #tpu.memory_space<vmem>>, vector<1x128xf32>
    %75 = vector.broadcast %74 : vector<1x128xf32> to vector<256x128xf32>
    %76 = arith.addf %73, %75 : vector<256x128xf32>
    %cst_49 = arith.constant 0.000000e+00 : f32
    %77 = vector.broadcast %cst_49 : f32 to vector<256x128xf32>
    %78 = arith.maximumf %76, %77 : vector<256x128xf32>
    %79 = arith.addf %65, %78 : vector<256x128xf32>
    %80 = vector.shape_cast %78 : vector<256x128xf32> to vector<16x16x128xf32>
    %81 = arith.truncf %80 : vector<16x16x128xf32> to vector<16x16x128xbf16>
    %c0_50 = arith.constant 0 : index
    %c0_51 = arith.constant 0 : index
    %c0_52 = arith.constant 0 : index
    %c128_53 = arith.constant 128 : index
    %82 = vector.load %arg6[%c0_50, %c0_51, %c0_52, %c128_53] : memref<1x16x16x256xbf16, #tpu.memory_space<vmem>>, vector<1x16x16x128xbf16>
    %83 = vector.shape_cast %82 : vector<1x16x16x128xbf16> to vector<16x16x128xbf16>
    %84 = vector.shape_cast %81 : vector<16x16x128xbf16> to vector<1x16x16x128xbf16>
    tpu.vector_store %arg6[%c0_50, %c0_51, %c0_52, %c128_53], %84 {strides = array<i32>} : memref<1x16x16x256xbf16, #tpu.memory_space<vmem>>, vector<1x16x16x128xbf16>,
    %85 = vector.shape_cast %79 : vector<256x128xf32> to vector<8x32x128xf32>
    %cst_54 = arith.constant dense<0.000000e+00> : vector<8x128xf32>
    %86 = vector.multi_reduction <add>, %85, %cst_54 [1] : vector<8x32x128xf32> to vector<8x128xf32>
    %c0_55 = arith.constant 0 : index
    %c0_56 = arith.constant 0 : index
    %c0_57 = arith.constant 0 : index
    %c0_58 = arith.constant 0 : index
    %87 = vector.load %arg7[%c0_55, %c0_56, %c0_57, %c0_58] : memref<1x1x8x128xf32, #tpu.memory_space<vmem>>, vector<1x1x8x128xf32>
    %88 = vector.shape_cast %87 : vector<1x1x8x128xf32> to vector<8x128xf32>
    %89 = vector.shape_cast %86 : vector<8x128xf32> to vector<1x1x8x128xf32>
    tpu.vector_store %arg7[%c0_55, %c0_56, %c0_57, %c0_58], %89 {strides = array<i32>} : memref<1x1x8x128xf32, #tpu.memory_space<vmem>>, vector<1x1x8x128xf32>,
    return
  }
  func.func @transform_0(%arg0: i32, %arg1: i32) -> (i32, i32, i32, i32) {
    %c0_i32 = arith.constant 0 : i32
    %c0_i32_0 = arith.constant 0 : i32
    %c0_i32_1 = arith.constant 0 : i32
    %c0_i32_2 = arith.constant 0 : i32
    return %arg0, %c0_i32, %c0_i32_0, %c0_i32_1 : i32, i32, i32, i32
  }
  func.func @transform_1(%arg0: i32, %arg1: i32) -> (i32, i32) {
    %c0_i32 = arith.constant 0 : i32
    %c0_i32_0 = arith.constant 0 : i32
    %c0_i32_1 = arith.constant 0 : i32
    return %c0_i32, %c0_i32_0 : i32, i32
  }
  func.func @transform_2(%arg0: i32, %arg1: i32) -> (i32, i32) {
    %c0_i32 = arith.constant 0 : i32
    %c0_i32_0 = arith.constant 0 : i32
    %c0_i32_1 = arith.constant 0 : i32
    return %c0_i32, %c0_i32_0 : i32, i32
  }
  func.func @transform_3(%arg0: i32, %arg1: i32) -> (i32, i32) {
    %c0_i32 = arith.constant 0 : i32
    %c0_i32_0 = arith.constant 0 : i32
    %c0_i32_1 = arith.constant 0 : i32
    return %c0_i32, %c0_i32_0 : i32, i32
  }
  func.func @transform_4(%arg0: i32, %arg1: i32) -> (i32, i32, i32, i32) {
    %c0_i32 = arith.constant 0 : i32
    %c0_i32_0 = arith.constant 0 : i32
    %c0_i32_1 = arith.constant 0 : i32
    return %arg0, %arg1, %c0_i32, %c0_i32_0 : i32, i32, i32, i32
  }
  func.func @transform_5(%arg0: i32, %arg1: i32) -> (i32, i32, i32, i32) {
    %c0_i32 = arith.constant 0 : i32
    %c0_i32_0 = arith.constant 0 : i32
    %c0_i32_1 = arith.constant 0 : i32
    return %arg0, %arg1, %c0_i32, %c0_i32_0 : i32, i32, i32, i32
  }
}

</mosaic_0001>

<llo_original>
// kernel: tpu_custom_call.1
$region0: #{tpu_custom_call.1}
  #allocation0 [shape = 'u32[]', space=smem, size = 0x4, offset = 0x4, fixed_abs, tag = 'smem constant byte address 0x4 - core index']
  #allocation1 [shape = 'u32[144,128]{1,0:T(1,128)}', space=vmem, size = 0x12000, scoped, tag = 'internal scratch']
  #allocation2 [shape = 'bf16[320,640]{1,0:T(16,128)(2,1)}', space=vmem, size = 0x64000, scoped, tag = 'scratch operand']
  %s0 = inlined_call_operand.vmem [shape: bf16[2,20,20,128], index: 0, kind: input, shape index: {}]
  %s1 = inlined_call_operand.hbm [shape: bf16[640,1024], index: 1, kind: input, shape index: {}]
  %s2 = inlined_call_operand.hbm [shape: f32[1,256], index: 2, kind: input, shape index: {}]
  %s3 = inlined_call_operand.hbm [shape: f32[1,256], index: 3, kind: input, shape index: {}]
  %s4 = inlined_call_operand.hbm [shape: bf16[2,16,16,256], index: 4, kind: output, shape index: {0}]
  %s5 = inlined_call_operand.hbm [shape: f32[2,1,8,128], index: 5, kind: output, shape index: {1}]
  %6 = xla_tuple %s4, %s5
  %s7 = sld [smem:[#allocation0]]
  $region69: #{tpu_custom_call.1} parent=0
    _
  %s9 = ssub.s32 1, %s7
  %s10 = scalar_select 0, %s9, %s7
  $region1: #{tpu_custom_call.1} parent=0
    #allocation3 [shape = 'u8[1310720]{0}', space=vmem, size = 0x140000, scoped, tag = 'input window, operand 1, single buffered']
    #allocation4 [shape = 's32[2]{0}', space=sflag, size = 0x8, scoped, tag = 'scoped memory for tpu_custom_call.1']
    #allocation5 [shape = 's32[2]{0}', space=sflag, size = 0x8, scoped, tag = 'scoped memory for tpu_custom_call.1']
    #allocation6 [shape = 'u8[1024]{0}', space=vmem, size = 0x400, scoped, tag = 'input window, operand 2, single buffered']
    #allocation7 [shape = 's32[1]{0}', space=sflag, size = 0x4, scoped, tag = 'scoped memory for tpu_custom_call.1']
    #allocation8 [shape = 'u8[1024]{0}', space=vmem, size = 0x400, scoped, tag = 'input window, operand 3, single buffered']
    #allocation9 [shape = 'u8[262144]{0}', space=vmem, size = 0x40000, scoped, tag = 'output window, operand 0']
    #allocation10 [shape = 'u8[8192]{0}', space=vmem, size = 0x2000, scoped, tag = 'output window, operand 1']
    #allocation11 [shape = 's32[2]{0}', space=sflag, size = 0x8, scoped, tag = 'scoped memory for tpu_custom_call.1']
    %11 = vsyncpa [#allocation4], 0
    %12 = vsyncpa [#allocation7], 0
    %13 = vsyncpa [#allocation5], 0
    %s14 = scalar_lea.sflag [#allocation5], 1
    %15 = vsyncpa %s14, 0
    %16 = vsyncpa [#allocation11], 0
    %s17 = scalar_lea.sflag [#allocation11], 1
    %18 = vsyncpa %s17, 0
    loop: start=0, step=1, limit=4
    $region2: #{tpu_custom_call.1} parent=1 // loop_pre_header
      _
    $region3: #{tpu_custom_call.1} parent=1 // loop_header
      %s20 = sphi 0, %s24
      %p21 = scmp.ge.s32.totalorder %s20, 4
      %s27 = sphi 0, %s39
      %s28 = sphi 0, %s35
      %s29 = sphi 0, %s27
      %s30 = sphi 0, %s28
      %s31 = sphi 0, %s29
      %s32 = sphi 0, %s30
      %s42 = sphi 0, %s44
      %s45 = sphi 0, %s42
      %s46 = sphi 0, %s45
      %s62 = sphi 0, %s46
      %s66 = sphi 0, %s66
      %s68 = sphi 0, %s66
      %s69 = sphi 0, %s68
      %s83 = sphi 0, %s69
      %s87 = sphi 0, %s87
      %s89 = sphi 0, %s87
      %s90 = sphi 0, %s89
      %s104 = sphi 0, %s90
      %s108 = sphi 0, %s108
      %s110 = sphi 0, %s108
      %s111 = sphi 0, %s110
      %s125 = sphi 0, %s111
      %s133 = sphi 0, %s135
      %s136 = sphi 0, %s133
      %s137 = sphi 0, %s136
      %s153 = sphi 0, %s137
      %s161 = sphi 0, %s163
      %s164 = sphi 0, %s161
      %s165 = sphi 0, %s164
      %s181 = sphi 0, %s165
    $region4: #{tpu_custom_call.1} parent=1 // loop_header_branch
      %23 = sbr.rel (%p21) target = $region8
    $region5: #{tpu_custom_call.1} parent=1 // loop_body
      %s25 = ssub.s32 %s20, 1
      %s26 = ssub.s32 %s20, 2
      %s33 = sadd.s32 1, %s28
      %p34 = scmp.ge.s32.totalorder %s33, 1
      %s35 = scalar_select %p34, 0, %s33
      %s36 = sadd.s32 1, %s27
      %s37 = scalar_select %p34, %s36, %s27
      %p38 = scmp.ge.s32.totalorder %s37, 2
      %s39 = scalar_select %p38, 0, %s37
      %s40 = ssub.s32 %s27, %s39
      %p41 = scmp.eq.s32.totalorder %s40, 0
      %s43 = sadd.s32 %s42, 1
      %s44 = scalar_select %p41, %s42, %s43
      %p47 = pneg %p41
      %p48 = scmp.eq.s32.totalorder %s20, 1
      %p49 = por %p47, %p48
      %p50 = scmp.ne.s32.totalorder %s42, %s45
      %p51 = scmp.eq.s32.totalorder %s20, 0
      %p52 = por %p50, %p51
      %p53 = scmp.ne.s32.totalorder %s42, %s45
      %p54 = scmp.eq.s32.totalorder %s25, 1
      %p55 = por %p53, %p54
      %p56 = scmp.ne.s32.totalorder %s45, %s46
      %p57 = scmp.eq.s32.totalorder %s25, 0
      %p58 = por %p56, %p57
      %p59 = scmp.ne.s32.totalorder %s45, %s46
      %p60 = scmp.eq.s32.totalorder %s26, 1
      %p61 = por %p59, %p60
      %p63 = scmp.ne.s32.totalorder %s46, %s62
      %p64 = scmp.eq.s32.totalorder %s26, 0
      %p65 = por %p63, %p64
      %s67 = sadd.s32 %s66, 1
      %p70 = scmp.eq.s32.totalorder %s20, 1
      %p71 = scmp.ne.s32.totalorder %s66, %s68
      %p72 = scmp.eq.s32.totalorder %s20, 0
      %p73 = por %p71, %p72
      %p74 = scmp.ne.s32.totalorder %s66, %s68
      %p75 = scmp.eq.s32.totalorder %s25, 1
      %p76 = por %p74, %p75
      %p77 = scmp.ne.s32.totalorder %s68, %s69
      %p78 = scmp.eq.s32.totalorder %s25, 0
      %p79 = por %p77, %p78
      %p80 = scmp.ne.s32.totalorder %s68, %s69
      %p81 = scmp.eq.s32.totalorder %s26, 1
      %p82 = por %p80, %p81
      %p84 = scmp.ne.s32.totalorder %s69, %s83
      %p85 = scmp.eq.s32.totalorder %s26, 0
      %p86 = por %p84, %p85
      %s88 = sadd.s32 %s87, 1
      %p91 = scmp.eq.s32.totalorder %s20, 1
      %p92 = scmp.ne.s32.totalorder %s87, %s89
      %p93 = scmp.eq.s32.totalorder %s20, 0
      %p94 = por %p92, %p93
      %p95 = scmp.ne.s32.totalorder %s87, %s89
      %p96 = scmp.eq.s32.totalorder %s25, 1
      %p97 = por %p95, %p96
      %p98 = scmp.ne.s32.totalorder %s89, %s90
      %p99 = scmp.eq.s32.totalorder %s25, 0
      %p100 = por %p98, %p99
      %p101 = scmp.ne.s32.totalorder %s89, %s90
      %p102 = scmp.eq.s32.totalorder %s26, 1
      %p103 = por %p101, %p102
      %p105 = scmp.ne.s32.totalorder %s90, %s104
      %p106 = scmp.eq.s32.totalorder %s26, 0
      %p107 = por %p105, %p106
      %s109 = sadd.s32 %s108, 1
      %p112 = scmp.eq.s32.totalorder %s20, 1
      %p113 = scmp.ne.s32.totalorder %s108, %s110
      %p114 = scmp.eq.s32.totalorder %s20, 0
      %p115 = por %p113, %p114
      %p116 = scmp.ne.s32.totalorder %s108, %s110
      %p117 = scmp.eq.s32.totalorder %s25, 1
      %p118 = por %p116, %p117
      %p119 = scmp.ne.s32.totalorder %s110, %s111
      %p120 = scmp.eq.s32.totalorder %s25, 0
      %p121 = por %p119, %p120
      %p122 = scmp.ne.s32.totalorder %s110, %s111
      %p123 = scmp.eq.s32.totalorder %s26, 1
      %p124 = por %p122, %p123
      %p126 = scmp.ne.s32.totalorder %s111, %s125
      %p127 = scmp.eq.s32.totalorder %s26, 0
      %p128 = por %p126, %p127
      %s129 = ssub.s32 %s27, %s39
      %s130 = ssub.s32 %s28, %s35
      %s131 = sor.u32 %s129, %s130
      %p132 = scmp.eq.s32.totalorder %s131, 0
      %s134 = sadd.s32 %s133, 1
      %s135 = scalar_select %p132, %s133, %s134
      %p138 = pneg %p132
      %p139 = scmp.eq.s32.totalorder %s20, 1
      %p140 = por %p138, %p139
      %p141 = scmp.ne.s32.totalorder %s133, %s136
      %p142 = scmp.eq.s32.totalorder %s20, 0
      %p143 = por %p141, %p142
      %p144 = scmp.ne.s32.totalorder %s133, %s136
      %p145 = scmp.eq.s32.totalorder %s25, 1
      %p146 = por %p144, %p145
      %p147 = scmp.ne.s32.totalorder %s136, %s137
      %p148 = scmp.eq.s32.totalorder %s25, 0
      %p149 = por %p147, %p148
      %p150 = scmp.ne.s32.totalorder %s136, %s137
      %p151 = scmp.eq.s32.totalorder %s26, 1
      %p152 = por %p150, %p151
      %p154 = scmp.ne.s32.totalorder %s137, %s153
      %p155 = scmp.eq.s32.totalorder %s26, 0
      %p156 = por %p154, %p155
      %s157 = ssub.s32 %s27, %s39
      %s158 = ssub.s32 %s28, %s35
      %s159 = sor.u32 %s157, %s158
      %p160 = scmp.eq.s32.totalorder %s159, 0
      %s162 = sadd.s32 %s161, 1
      %s163 = scalar_select %p160, %s161, %s162
      %p166 = pneg %p160
      %p167 = scmp.eq.s32.totalorder %s20, 1
      %p168 = por %p166, %p167
      %p169 = scmp.ne.s32.totalorder %s161, %s164
      %p170 = scmp.eq.s32.totalorder %s20, 0
      %p171 = por %p169, %p170
      %p172 = scmp.ne.s32.totalorder %s161, %s164
      %p173 = scmp.eq.s32.totalorder %s25, 1
      %p174 = por %p172, %p173
      %p175 = scmp.ne.s32.totalorder %s164, %s165
      %p176 = scmp.eq.s32.totalorder %s25, 0
      %p177 = por %p175, %p176
      %p178 = scmp.ne.s32.totalorder %s164, %s165
      %p179 = scmp.eq.s32.totalorder %s26, 1
      %p180 = por %p178, %p179
      %p182 = scmp.ne.s32.totalorder %s165, %s181
      %p183 = scmp.eq.s32.totalorder %s26, 0
      %p184 = por %p182, %p183
      %p185 = scmp.le.s32.totalorder 1, %s20
      %p186 = scmp.lt.s32.totalorder %s20, 3
      %p187 = pnand %p185, %p186
      %p188 = pneg %p187
      // Predicated region
      $region9: #{tpu_custom_call.1} parent=5 // pred_check
        _
      $region10: #{tpu_custom_call.1} parent=5 // pred_check_branch
        %190 = sbr.rel (%p187) target = $region12
      $region11: #{tpu_custom_call.1} parent=5 // pred_region
        %s191 = ssub.s32 %s20, 1
        // Predicated region
        $region13: #{tpu_custom_call.1} parent=11 // pred_check
          %p192 = pneg %p79
        $region14: #{tpu_custom_call.1} parent=11 // pred_check_branch
          %194 = sbr.rel (%p192) target = $region16
        $region15: #{tpu_custom_call.1} parent=11 // pred_region
          %s196 = ssub.s32 40960, 40960
          %197 = vsyncadd [#allocation4], %s196
          %s198 = sshll.u32 [#allocation3], 4
          %s199 = int_to_ptr.vmem [resolvable:$true] %s198
          %204 = dma.hbm_to_vmem [thread:$0]  %s1, 40960, %s199, [#allocation4], 512, 512, 32
        $region16: #{tpu_custom_call.1} parent=11 // pred_fallthru
          _
        // Predicated region
        $region17: #{tpu_custom_call.1} parent=11 // pred_check
          %p205 = pneg %p100
        $region18: #{tpu_custom_call.1} parent=11 // pred_check_branch
          %207 = sbr.rel (%p205) target = $region20
        $region19: #{tpu_custom_call.1} parent=11 // pred_region
          %s209 = ssub.s32 32, 32
          %210 = vsyncadd [#allocation7], %s209
          %s212 = sshll.u32 [#allocation6], 4
          %s213 = int_to_ptr.vmem [resolvable:$true] %s212
          %215 = dma.hbm_to_vmem [thread:$0]  %s2, 32, %s213, [#allocation7]
        $region20: #{tpu_custom_call.1} parent=11 // pred_fallthru
          _
        // Predicated region
        $region21: #{tpu_custom_call.1} parent=11 // pred_check
          %p216 = pneg %p121
        $region22: #{tpu_custom_call.1} parent=11 // pred_check_branch
          %218 = sbr.rel (%p216) target = $region24
        $region23: #{tpu_custom_call.1} parent=11 // pred_region
          %s220 = ssub.s32 32, 32
          %221 = vsyncadd [#allocation7], %s220
          %s223 = sshll.u32 [#allocation8], 4
          %s224 = int_to_ptr.vmem [resolvable:$true] %s223
          %226 = dma.hbm_to_vmem [thread:$0]  %s3, 32, %s224, [#allocation7]
        $region24: #{tpu_custom_call.1} parent=11 // pred_fallthru
          _
      $region12: #{tpu_custom_call.1} parent=5 // pred_fallthru
        _
      %p227 = scmp.lt.s32.totalorder %s20, 2
      // Predicated region
      $region25: #{tpu_custom_call.1} parent=5 // pred_check
        %p228 = pneg %p227
      $region26: #{tpu_custom_call.1} parent=5 // pred_check_branch
        %230 = sbr.rel (%p228) target = $region28
      $region27: #{tpu_custom_call.1} parent=5 // pred_region
        // Predicated region
        $region29: #{tpu_custom_call.1} parent=27 // pred_check
          %p231 = pneg %p52
        $region30: #{tpu_custom_call.1} parent=27 // pred_check_branch
          %233 = sbr.rel (%p231) target = $region32
        $region31: #{tpu_custom_call.1} parent=27 // pred_region
          %p234 = scmp.lt.s32.totalorder %s27, 1
          %s235 = scalar_select %p234, %s27, 1
          %s236 = smul.addr %s235, 60
          %s237 = smul.addr %s236, 4
          %s238 = scalar_lea.vmem %s0, %s237
        $region32: #{tpu_custom_call.1} parent=27 // pred_fallthru
          _
      $region28: #{tpu_custom_call.1} parent=5 // pred_fallthru
        _
      %p239 = scmp.le.s32.totalorder 1, %s20
      %p240 = scmp.lt.s32.totalorder %s20, 3
      %p241 = pnand %p239, %p240
      %p242 = pneg %p241
      // Predicated region
      $region33: #{tpu_custom_call.1} parent=5 // pred_check
        _
      $region34: #{tpu_custom_call.1} parent=5 // pred_check_branch
        %244 = sbr.rel (%p241) target = $region36
      $region35: #{tpu_custom_call.1} parent=5 // pred_region
        %s245 = ssub.s32 %s20, 1
        // Predicated region
        $region37: #{tpu_custom_call.1} parent=35 // pred_check
          %p246 = pneg %p79
        $region38: #{tpu_custom_call.1} parent=35 // pred_check_branch
          %248 = sbr.rel (%p246) target = $region40
        $region39: #{tpu_custom_call.1} parent=35 // pred_region
          %249 = dma.done [#allocation4], 40960
        $region40: #{tpu_custom_call.1} parent=35 // pred_fallthru
          _
        // Predicated region
        $region41: #{tpu_custom_call.1} parent=35 // pred_check
          %p250 = pneg %p100
        $region42: #{tpu_custom_call.1} parent=35 // pred_check_branch
          %252 = sbr.rel (%p250) target = $region44
        $region43: #{tpu_custom_call.1} parent=35 // pred_region
          %253 = dma.done [#allocation7], 32
        $region44: #{tpu_custom_call.1} parent=35 // pred_fallthru
          _
        // Predicated region
        $region45: #{tpu_custom_call.1} parent=35 // pred_check
          %p254 = pneg %p121
        $region46: #{tpu_custom_call.1} parent=35 // pred_check_branch
          %256 = sbr.rel (%p254) target = $region48
        $region47: #{tpu_custom_call.1} parent=35 // pred_region
          %257 = dma.done [#allocation7], 32
        $region48: #{tpu_custom_call.1} parent=35 // pred_fallthru
          _
        %p258 = scmp.lt.s32.totalorder %s29, 1
        %s259 = scalar_select %p258, %s29, 1
        %s260 = smul.addr %s259, 60
        %s261 = smul.addr %s260, 4
        %s262 = scalar_lea.vmem %s0, %s261
        %p263 = pneg %p58
        %p264 = pneg %p55
        %p265 = pneg %p79
        %p266 = pneg %p76
        %p267 = pneg %p100
        %p268 = pneg %p97
        %p269 = pneg %p121
        %p270 = pneg %p118
        %p271 = pneg %p149
        %p272 = pneg %p146
        %s273 = sand.u32 %s136, 1
        %s274 = scalar_lea.sflag [#allocation5], %s273
        %s275 = sand.u32 %s136, 1
        %s276 = smul.addr %s275, 256
        %s277 = scalar_lea.vmem [#allocation9], %s276
        %p278 = pneg %p177
        %p279 = pneg %p174
        %s280 = sand.u32 %s164, 1
        %s281 = scalar_lea.sflag [#allocation11], %s280
        %s282 = sand.u32 %s164, 1
        %s283 = smul.addr %s282, 8
        %s284 = scalar_lea.vmem [#allocation10], %s283
        %p285 = scmp.lt.s32.totalorder %s29, 1
        %s286 = scalar_select %p285, %s29, 1
        %s287 = smul.addr %s286, 60
        %s288 = smul.addr %s287, 4
        %s289 = scalar_lea.vmem %s0, %s288
        %s290 = smul.u32 16, %s30
        %s292 = smul.u32 %s30, 16
        %s293 = smul.u32 %s292, 3
        %s294 = smul.addr %s293, 4
        %s295 = scalar_lea.vmem %s289, %s294
        %v296 = vld [vmem:[%s295] sm:$0xf]
        %v297 = vld [vmem:[%s295 + $0x4] sm:$0xf]
        %v298 = vld [vmem:[%s295 + $0xc] sm:$0xf]
        %v299 = vld [vmem:[%s295 + $0x10] sm:$0xf]
        %v300 = vld [vmem:[%s295 + $0x18] sm:$0xf]
        %v301 = vld [vmem:[%s295 + $0x1c] sm:$0xf]
        %v302 = vld [vmem:[%s295 + $0x24] sm:$0xf]
        %v303 = vld [vmem:[%s295 + $0x28] sm:$0xf]
        %v304 = vld [vmem:[%s295 + $0x30] sm:$0xf]
        %v305 = vld [vmem:[%s295 + $0x34] sm:$0xf]
        %v306 = vld [vmem:[%s295 + $0x3c] sm:$0xf]
        %v307 = vld [vmem:[%s295 + $0x40] sm:$0xf]
        %v308 = vld [vmem:[%s295 + $0x48] sm:$0xf]
        %v309 = vld [vmem:[%s295 + $0x4c] sm:$0xf]
        %v310 = vld [vmem:[%s295 + $0x54] sm:$0xf]
        %v311 = vld [vmem:[%s295 + $0x58] sm:$0xf]
        %v312 = vld [vmem:[%s295 + $0x60] sm:$0xf]
        %v313 = vld [vmem:[%s295 + $0x64] sm:$0xf]
        %v314 = vld [vmem:[%s295 + $0x6c] sm:$0xf]
        %v315 = vld [vmem:[%s295 + $0x70] sm:$0xf]
        %v316 = vld [vmem:[%s295 + $0x78] sm:$0xf]
        %v317 = vld [vmem:[%s295 + $0x7c] sm:$0xf]
        %v318 = vld [vmem:[%s295 + $0x84] sm:$0xf]
        %v319 = vld [vmem:[%s295 + $0x88] sm:$0xf]
        %v320 = vld [vmem:[%s295 + $0x90] sm:$0xf]
        %v321 = vld [vmem:[%s295 + $0x94] sm:$0xf]
        %v322 = vld [vmem:[%s295 + $0x9c] sm:$0xf]
        %v323 = vld [vmem:[%s295 + $0xa0] sm:$0xf]
        %v324 = vld [vmem:[%s295 + $0xa8] sm:$0xf]
        %v325 = vld [vmem:[%s295 + $0xac] sm:$0xf]
        %v326 = vld [vmem:[%s295 + $0xb4] sm:$0xf]
        %v327 = vld [vmem:[%s295 + $0xb8] sm:$0xf]
        %v328 = vld [vmem:[%s295 + $0xc0] sm:$0xf]
        %v329 = vld [vmem:[%s295 + $0xc4] sm:$0xf]
        %v330 = vld [vmem:[%s295 + $0xcc] sm:$0xf]
        %v331 = vld [vmem:[%s295 + $0xd0] sm:$0xf]
        %v332 = vld [vmem:[%s295 + $0xd8] sm:$0xf]
        %v333 = vld [vmem:[%s295 + $0xdc] sm:$0xf]
        %v334 = vld [vmem:[%s295 + $0xe4] sm:$0xf]
        %v335 = vld [vmem:[%s295 + $0xe8] sm:$0xf]
        %v376 = vunpack.c.l.b16 %v296
        %v377 = vunpack.c.l.b16 %v297
        %v378 = vunpack.c.l.b16 %v298
        %v379 = vunpack.c.l.b16 %v299
        %v380 = vunpack.c.l.b16 %v300
        %v381 = vunpack.c.l.b16 %v301
        %v382 = vunpack.c.l.b16 %v302
        %v383 = vunpack.c.l.b16 %v303
        %v384 = vunpack.c.l.b16 %v304
        %v385 = vunpack.c.l.b16 %v305
        %v386 = vunpack.c.l.b16 %v306
        %v387 = vunpack.c.l.b16 %v307
        %v388 = vunpack.c.l.b16 %v308
        %v389 = vunpack.c.l.b16 %v309
        %v390 = vunpack.c.l.b16 %v310
        %v391 = vunpack.c.l.b16 %v311
        %v392 = vunpack.c.l.b16 %v312
        %v393 = vunpack.c.l.b16 %v313
        %v394 = vunpack.c.l.b16 %v314
        %v395 = vunpack.c.l.b16 %v315
        %v396 = vunpack.c.l.b16 %v316
        %v397 = vunpack.c.l.b16 %v317
        %v398 = vunpack.c.l.b16 %v318
        %v399 = vunpack.c.l.b16 %v319
        %v400 = vunpack.c.l.b16 %v320
        %v401 = vunpack.c.l.b16 %v321
        %v402 = vunpack.c.l.b16 %v322
        %v403 = vunpack.c.l.b16 %v323
        %v404 = vunpack.c.l.b16 %v324
        %v405 = vunpack.c.l.b16 %v325
        %v406 = vunpack.c.l.b16 %v326
        %v407 = vunpack.c.l.b16 %v327
        %v408 = vunpack.c.l.b16 %v328
        %v409 = vunpack.c.l.b16 %v329
        %v410 = vunpack.c.l.b16 %v330
        %v411 = vunpack.c.l.b16 %v331
        %v412 = vunpack.c.l.b16 %v332
        %v413 = vunpack.c.l.b16 %v333
        %v414 = vunpack.c.l.b16 %v334
        %v415 = vunpack.c.l.b16 %v335
        %v416 = vpack.c.b16 %v377, %v376
        %v417 = vpack.c.b16 %v379, %v378
        %v418 = vpack.c.b16 %v381, %v380
        %v419 = vpack.c.b16 %v383, %v382
        %v420 = vpack.c.b16 %v385, %v384
        %v421 = vpack.c.b16 %v387, %v386
        %v422 = vpack.c.b16 %v389, %v388
        %v423 = vpack.c.b16 %v391, %v390
        %v424 = vpack.c.b16 %v393, %v392
        %v425 = vpack.c.b16 %v395, %v394
        %v426 = vpack.c.b16 %v397, %v396
        %v427 = vpack.c.b16 %v399, %v398
        %v428 = vpack.c.b16 %v401, %v400
        %v429 = vpack.c.b16 %v403, %v402
        %v430 = vpack.c.b16 %v405, %v404
        %v431 = vpack.c.b16 %v407, %v406
        %v432 = vpack.c.b16 %v409, %v408
        %v433 = vpack.c.b16 %v411, %v410
        %v434 = vpack.c.b16 %v413, %v412
        %v435 = vpack.c.b16 %v415, %v414
        %456 = vst [vmem:[#allocation2] sm:$0xff] %v416
        %457 = vst [vmem:[#allocation2 + $0x28] sm:$0xff] %v417
        %458 = vst [vmem:[#allocation2 + $0x50] sm:$0xff] %v418
        %459 = vst [vmem:[#allocation2 + $0x78] sm:$0xff] %v419
        %460 = vst [vmem:[#allocation2 + $0xa0] sm:$0xff] %v420
        %461 = vst [vmem:[#allocation2 + $0xc8] sm:$0xff] %v421
        %462 = vst [vmem:[#allocation2 + $0xf0] sm:$0xff] %v422
        %463 = vst [vmem:[#allocation2 + $0x118] sm:$0xff] %v423
        %464 = vst [vmem:[#allocation2 + $0x140] sm:$0xff] %v424
        %465 = vst [vmem:[#allocation2 + $0x168] sm:$0xff] %v425
        %466 = vst [vmem:[#allocation2 + $0x190] sm:$0xff] %v426
        %467 = vst [vmem:[#allocation2 + $0x1b8] sm:$0xff] %v427
        %468 = vst [vmem:[#allocation2 + $0x1e0] sm:$0xff] %v428
        %469 = vst [vmem:[#allocation2 + $0x208] sm:$0xff] %v429
        %470 = vst [vmem:[#allocation2 + $0x230] sm:$0xff] %v430
        %471 = vst [vmem:[#allocation2 + $0x258] sm:$0xff] %v431
        %472 = vst [vmem:[#allocation2 + $0x280] sm:$0xff] %v432
        %473 = vst [vmem:[#allocation2 + $0x2a8] sm:$0xff] %v433
        %474 = vst [vmem:[#allocation2 + $0x2d0] sm:$0xff] %v434
        %475 = vst [vmem:[#allocation2 + $0x2f8] sm:$0xff] %v435
        %v476 = vld [vmem:[%s295] sm:$0xf]
        %v477 = vld [vmem:[%s295 + $0x4] sm:$0xf]
        %v478 = vld [vmem:[%s295 + $0x8] sm:$0x1]
        %v479 = vld [vmem:[%s295 + $0xc] sm:$0xf]
        %v480 = vld [vmem:[%s295 + $0x10] sm:$0xf]
        %v481 = vld [vmem:[%s295 + $0x14] sm:$0x1]
        %v482 = vld [vmem:[%s295 + $0x18] sm:$0xf]
        %v483 = vld [vmem:[%s295 + $0x1c] sm:$0xf]
        %v484 = vld [vmem:[%s295 + $0x20] sm:$0x1]
        %v485 = vld [vmem:[%s295 + $0x24] sm:$0xf]
        %v486 = vld [vmem:[%s295 + $0x28] sm:$0xf]
        %v487 = vld [vmem:[%s295 + $0x2c] sm:$0x1]
        %v488 = vld [vmem:[%s295 + $0x30] sm:$0xf]
        %v489 = vld [vmem:[%s295 + $0x34] sm:$0xf]
        %v490 = vld [vmem:[%s295 + $0x38] sm:$0x1]
        %v491 = vld [vmem:[%s295 + $0x3c] sm:$0xf]
        %v492 = vld [vmem:[%s295 + $0x40] sm:$0xf]
        %v493 = vld [vmem:[%s295 + $0x44] sm:$0x1]
        %v494 = vld [vmem:[%s295 + $0x48] sm:$0xf]
        %v495 = vld [vmem:[%s295 + $0x4c] sm:$0xf]
        %v496 = vld [vmem:[%s295 + $0x50] sm:$0x1]
        %v497 = vld [vmem:[%s295 + $0x54] sm:$0xf]
        %v498 = vld [vmem:[%s295 + $0x58] sm:$0xf]
        %v499 = vld [vmem:[%s295 + $0x5c] sm:$0x1]
        %v500 = vld [vmem:[%s295 + $0x60] sm:$0xf]
        %v501 = vld [vmem:[%s295 + $0x64] sm:$0xf]
        %v502 = vld [vmem:[%s295 + $0x68] sm:$0x1]
        %v503 = vld [vmem:[%s295 + $0x6c] sm:$0xf]
        %v504 = vld [vmem:[%s295 + $0x70] sm:$0xf]
        %v505 = vld [vmem:[%s295 + $0x74] sm:$0x1]
        %v506 = vld [vmem:[%s295 + $0x78] sm:$0xf]
        %v507 = vld [vmem:[%s295 + $0x7c] sm:$0xf]
        %v508 = vld [vmem:[%s295 + $0x80] sm:$0x1]
        %v509 = vld [vmem:[%s295 + $0x84] sm:$0xf]
        %v510 = vld [vmem:[%s295 + $0x88] sm:$0xf]
        %v511 = vld [vmem:[%s295 + $0x8c] sm:$0x1]
        %v512 = vld [vmem:[%s295 + $0x90] sm:$0xf]
        %v513 = vld [vmem:[%s295 + $0x94] sm:$0xf]
        %v514 = vld [vmem:[%s295 + $0x98] sm:$0x1]
        %v515 = vld [vmem:[%s295 + $0x9c] sm:$0xf]
        %v516 = vld [vmem:[%s295 + $0xa0] sm:$0xf]
        %v517 = vld [vmem:[%s295 + $0xa4] sm:$0x1]
        %v518 = vld [vmem:[%s295 + $0xa8] sm:$0xf]
        %v519 = vld [vmem:[%s295 + $0xac] sm:$0xf]
        %v520 = vld [vmem:[%s295 + $0xb0] sm:$0x1]
        %v521 = vld [vmem:[%s295 + $0xb4] sm:$0xf]
        %v522 = vld [vmem:[%s295 + $0xb8] sm:$0xf]
        %v523 = vld [vmem:[%s295 + $0xbc] sm:$0x1]
        %v524 = vld [vmem:[%s295 + $0xc0] sm:$0xf]
        %v525 = vld [vmem:[%s295 + $0xc4] sm:$0xf]
        %v526 = vld [vmem:[%s295 + $0xc8] sm:$0x1]
        %v527 = vld [vmem:[%s295 + $0xcc] sm:$0xf]
        %v528 = vld [vmem:[%s295 + $0xd0] sm:$0xf]
        %v529 = vld [vmem:[%s295 + $0xd4] sm:$0x1]
        %v530 = vld [vmem:[%s295 + $0xd8] sm:$0xf]
        %v531 = vld [vmem:[%s295 + $0xdc] sm:$0xf]
        %v532 = vld [vmem:[%s295 + $0xe0] sm:$0x1]
        %v533 = vld [vmem:[%s295 + $0xe4] sm:$0xf]
        %v534 = vld [vmem:[%s295 + $0xe8] sm:$0xf]
        %v535 = vld [vmem:[%s295 + $0xec] sm:$0x1]
        %vm536 = vsmask.f32 3328
        %vm537 = vsmask.f32 7440
        %vm538 = vmor %vm536, %vm537
        %v540 = vshrl.u32 %v476, 16
        %v542 = vrot.slane %v540, 4
        %v543 = vshll.u32 %v476, 16
        %v545 = vrot.slane %v543, 5
        %v546 = vor.u32 %v542, %v545
        %v547 = vrot.slane %v546, 4
        %v549 = vshll.u32 %v477, 16
        %v551 = vrot.slane %v549, 5
        %v552 = vsel %vm538, %v547, %v551
        %v553 = vshrl.u32 %v477, 16
        %v555 = vrot.slane %v553, 4
        %v556 = vor.u32 %v555, %v551
        %v557 = vrot.slane %v556, 4
        %v559 = vshll.u32 %v478, 16
        %v561 = vrot.slane %v559, 5
        %v562 = vsel %vm538, %v557, %v561
        %v564 = vshrl.u32 %v479, 16
        %v566 = vrot.slane %v564, 4
        %v567 = vshll.u32 %v479, 16
        %v569 = vrot.slane %v567, 5
        %v570 = vor.u32 %v566, %v569
        %v571 = vrot.slane %v570, 4
        %v573 = vshll.u32 %v480, 16
        %v575 = vrot.slane %v573, 5
        %v576 = vsel %vm538, %v571, %v575
        %v577 = vshrl.u32 %v480, 16
        %v579 = vrot.slane %v577, 4
        %v580 = vor.u32 %v579, %v575
        %v581 = vrot.slane %v580, 4
        %v583 = vshll.u32 %v481, 16
        %v585 = vrot.slane %v583, 5
        %v586 = vsel %vm538, %v581, %v585
        %v588 = vshrl.u32 %v482, 16
        %v590 = vrot.slane %v588, 4
        %v591 = vshll.u32 %v482, 16
        %v593 = vrot.slane %v591, 5
        %v594 = vor.u32 %v590, %v593
        %v595 = vrot.slane %v594, 4
        %v597 = vshll.u32 %v483, 16
        %v599 = vrot.slane %v597, 5
        %v600 = vsel %vm538, %v595, %v599
        %v601 = vshrl.u32 %v483, 16
        %v603 = vrot.slane %v601, 4
        %v604 = vor.u32 %v603, %v599
        %v605 = vrot.slane %v604, 4
        %v607 = vshll.u32 %v484, 16
        %v609 = vrot.slane %v607, 5
        %v610 = vsel %vm538, %v605, %v609
        %v612 = vshrl.u32 %v485, 16
        %v614 = vrot.slane %v612, 4
        %v615 = vshll.u32 %v485, 16
        %v617 = vrot.slane %v615, 5
        %v618 = vor.u32 %v614, %v617
        %v619 = vrot.slane %v618, 4
        %v621 = vshll.u32 %v486, 16
        %v623 = vrot.slane %v621, 5
        %v624 = vsel %vm538, %v619, %v623
        %v625 = vshrl.u32 %v486, 16
        %v627 = vrot.slane %v625, 4
        %v628 = vor.u32 %v627, %v623
        %v629 = vrot.slane %v628, 4
        %v631 = vshll.u32 %v487, 16
        %v633 = vrot.slane %v631, 5
        %v634 = vsel %vm538, %v629, %v633
        %v636 = vshrl.u32 %v488, 16
        %v638 = vrot.slane %v636, 4
        %v639 = vshll.u32 %v488, 16
        %v641 = vrot.slane %v639, 5
        %v642 = vor.u32 %v638, %v641
        %v643 = vrot.slane %v642, 4
        %v645 = vshll.u32 %v489, 16
        %v647 = vrot.slane %v645, 5
        %v648 = vsel %vm538, %v643, %v647
        %v649 = vshrl.u32 %v489, 16
        %v651 = vrot.slane %v649, 4
        %v652 = vor.u32 %v651, %v647
        %v653 = vrot.slane %v652, 4
        %v655 = vshll.u32 %v490, 16
        %v657 = vrot.slane %v655, 5
        %v658 = vsel %vm538, %v653, %v657
        %v660 = vshrl.u32 %v491, 16
        %v662 = vrot.slane %v660, 4
        %v663 = vshll.u32 %v491, 16
        %v665 = vrot.slane %v663, 5
        %v666 = vor.u32 %v662, %v665
        %v667 = vrot.slane %v666, 4
        %v669 = vshll.u32 %v492, 16
        %v671 = vrot.slane %v669, 5
        %v672 = vsel %vm538, %v667, %v671
        %v673 = vshrl.u32 %v492, 16
        %v675 = vrot.slane %v673, 4
        %v676 = vor.u32 %v675, %v671
        %v677 = vrot.slane %v676, 4
        %v679 = vshll.u32 %v493, 16
        %v681 = vrot.slane %v679, 5
        %v682 = vsel %vm538, %v677, %v681
        %v684 = vshrl.u32 %v494, 16
        %v686 = vrot.slane %v684, 4
        %v687 = vshll.u32 %v494, 16
        %v689 = vrot.slane %v687, 5
        %v690 = vor.u32 %v686, %v689
        %v691 = vrot.slane %v690, 4
        %v693 = vshll.u32 %v495, 16
        %v695 = vrot.slane %v693, 5
        %v696 = vsel %vm538, %v691, %v695
        %v697 = vshrl.u32 %v495, 16
        %v699 = vrot.slane %v697, 4
        %v700 = vor.u32 %v699, %v695
        %v701 = vrot.slane %v700, 4
        %v703 = vshll.u32 %v496, 16
        %v705 = vrot.slane %v703, 5
        %v706 = vsel %vm538, %v701, %v705
        %v708 = vshrl.u32 %v497, 16
        %v710 = vrot.slane %v708, 4
        %v711 = vshll.u32 %v497, 16
        %v713 = vrot.slane %v711, 5
        %v714 = vor.u32 %v710, %v713
        %v715 = vrot.slane %v714, 4
        %v717 = vshll.u32 %v498, 16
        %v719 = vrot.slane %v717, 5
        %v720 = vsel %vm538, %v715, %v719
        %v721 = vshrl.u32 %v498, 16
        %v723 = vrot.slane %v721, 4
        %v724 = vor.u32 %v723, %v719
        %v725 = vrot.slane %v724, 4
        %v727 = vshll.u32 %v499, 16
        %v729 = vrot.slane %v727, 5
        %v730 = vsel %vm538, %v725, %v729
        %v732 = vshrl.u32 %v500, 16
        %v734 = vrot.slane %v732, 4
        %v735 = vshll.u32 %v500, 16
        %v737 = vrot.slane %v735, 5
        %v738 = vor.u32 %v734, %v737
        %v739 = vrot.slane %v738, 4
        %v741 = vshll.u32 %v501, 16
        %v743 = vrot.slane %v741, 5
        %v744 = vsel %vm538, %v739, %v743
        %v745 = vshrl.u32 %v501, 16
        %v747 = vrot.slane %v745, 4
        %v748 = vor.u32 %v747, %v743
        %v749 = vrot.slane %v748, 4
        %v751 = vshll.u32 %v502, 16
        %v753 = vrot.slane %v751, 5
        %v754 = vsel %vm538, %v749, %v753
        %v756 = vshrl.u32 %v503, 16
        %v758 = vrot.slane %v756, 4
        %v759 = vshll.u32 %v503, 16
        %v761 = vrot.slane %v759, 5
        %v762 = vor.u32 %v758, %v761
        %v763 = vrot.slane %v762, 4
        %v765 = vshll.u32 %v504, 16
        %v767 = vrot.slane %v765, 5
        %v768 = vsel %vm538, %v763, %v767
        %v769 = vshrl.u32 %v504, 16
        %v771 = vrot.slane %v769, 4
        %v772 = vor.u32 %v771, %v767
        %v773 = vrot.slane %v772, 4
        %v775 = vshll.u32 %v505, 16
        %v777 = vrot.slane %v775, 5
        %v778 = vsel %vm538, %v773, %v777
        %v780 = vshrl.u32 %v506, 16
        %v782 = vrot.slane %v780, 4
        %v783 = vshll.u32 %v506, 16
        %v785 = vrot.slane %v783, 5
        %v786 = vor.u32 %v782, %v785
        %v787 = vrot.slane %v786, 4
        %v789 = vshll.u32 %v507, 16
        %v791 = vrot.slane %v789, 5
        %v792 = vsel %vm538, %v787, %v791
        %v793 = vshrl.u32 %v507, 16
        %v795 = vrot.slane %v793, 4
        %v796 = vor.u32 %v795, %v791
        %v797 = vrot.slane %v796, 4
        %v799 = vshll.u32 %v508, 16
        %v801 = vrot.slane %v799, 5
        %v802 = vsel %vm538, %v797, %v801
        %v804 = vshrl.u32 %v509, 16
        %v806 = vrot.slane %v804, 4
        %v807 = vshll.u32 %v509, 16
        %v809 = vrot.slane %v807, 5
        %v810 = vor.u32 %v806, %v809
        %v811 = vrot.slane %v810, 4
        %v813 = vshll.u32 %v510, 16
        %v815 = vrot.slane %v813, 5
        %v816 = vsel %vm538, %v811, %v815
        %v817 = vshrl.u32 %v510, 16
        %v819 = vrot.slane %v817, 4
        %v820 = vor.u32 %v819, %v815
        %v821 = vrot.slane %v820, 4
        %v823 = vshll.u32 %v511, 16
        %v825 = vrot.slane %v823, 5
        %v826 = vsel %vm538, %v821, %v825
        %v828 = vshrl.u32 %v512, 16
        %v830 = vrot.slane %v828, 4
        %v831 = vshll.u32 %v512, 16
        %v833 = vrot.slane %v831, 5
        %v834 = vor.u32 %v830, %v833
        %v835 = vrot.slane %v834, 4
        %v837 = vshll.u32 %v513, 16
        %v839 = vrot.slane %v837, 5
        %v840 = vsel %vm538, %v835, %v839
        %v841 = vshrl.u32 %v513, 16
        %v843 = vrot.slane %v841, 4
        %v844 = vor.u32 %v843, %v839
        %v845 = vrot.slane %v844, 4
        %v847 = vshll.u32 %v514, 16
        %v849 = vrot.slane %v847, 5
        %v850 = vsel %vm538, %v845, %v849
        %v852 = vshrl.u32 %v515, 16
        %v854 = vrot.slane %v852, 4
        %v855 = vshll.u32 %v515, 16
        %v857 = vrot.slane %v855, 5
        %v858 = vor.u32 %v854, %v857
        %v859 = vrot.slane %v858, 4
        %v861 = vshll.u32 %v516, 16
        %v863 = vrot.slane %v861, 5
        %v864 = vsel %vm538, %v859, %v863
        %v865 = vshrl.u32 %v516, 16
        %v867 = vrot.slane %v865, 4
        %v868 = vor.u32 %v867, %v863
        %v869 = vrot.slane %v868, 4
        %v871 = vshll.u32 %v517, 16
        %v873 = vrot.slane %v871, 5
        %v874 = vsel %vm538, %v869, %v873
        %v876 = vshrl.u32 %v518, 16
        %v878 = vrot.slane %v876, 4
        %v879 = vshll.u32 %v518, 16
        %v881 = vrot.slane %v879, 5
        %v882 = vor.u32 %v878, %v881
        %v883 = vrot.slane %v882, 4
        %v885 = vshll.u32 %v519, 16
        %v887 = vrot.slane %v885, 5
        %v888 = vsel %vm538, %v883, %v887
        %v889 = vshrl.u32 %v519, 16
        %v891 = vrot.slane %v889, 4
        %v892 = vor.u32 %v891, %v887
        %v893 = vrot.slane %v892, 4
        %v895 = vshll.u32 %v520, 16
        %v897 = vrot.slane %v895, 5
        %v898 = vsel %vm538, %v893, %v897
        %v900 = vshrl.u32 %v521, 16
        %v902 = vrot.slane %v900, 4
        %v903 = vshll.u32 %v521, 16
        %v905 = vrot.slane %v903, 5
        %v906 = vor.u32 %v902, %v905
        %v907 = vrot.slane %v906, 4
        %v909 = vshll.u32 %v522, 16
        %v911 = vrot.slane %v909, 5
        %v912 = vsel %vm538, %v907, %v911
        %v913 = vshrl.u32 %v522, 16
        %v915 = vrot.slane %v913, 4
        %v916 = vor.u32 %v915, %v911
        %v917 = vrot.slane %v916, 4
        %v919 = vshll.u32 %v523, 16
        %v921 = vrot.slane %v919, 5
        %v922 = vsel %vm538, %v917, %v921
        %v924 = vshrl.u32 %v524, 16
        %v926 = vrot.slane %v924, 4
        %v927 = vshll.u32 %v524, 16
        %v929 = vrot.slane %v927, 5
        %v930 = vor.u32 %v926, %v929
        %v931 = vrot.slane %v930, 4
        %v933 = vshll.u32 %v525, 16
        %v935 = vrot.slane %v933, 5
        %v936 = vsel %vm538, %v931, %v935
        %v937 = vshrl.u32 %v525, 16
        %v939 = vrot.slane %v937, 4
        %v940 = vor.u32 %v939, %v935
        %v941 = vrot.slane %v940, 4
        %v943 = vshll.u32 %v526, 16
        %v945 = vrot.slane %v943, 5
        %v946 = vsel %vm538, %v941, %v945
        %v948 = vshrl.u32 %v527, 16
        %v950 = vrot.slane %v948, 4
        %v951 = vshll.u32 %v527, 16
        %v953 = vrot.slane %v951, 5
        %v954 = vor.u32 %v950, %v953
        %v955 = vrot.slane %v954, 4
        %v957 = vshll.u32 %v528, 16
        %v959 = vrot.slane %v957, 5
        %v960 = vsel %vm538, %v955, %v959
        %v961 = vshrl.u32 %v528, 16
        %v963 = vrot.slane %v961, 4
        %v964 = vor.u32 %v963, %v959
        %v965 = vrot.slane %v964, 4
        %v967 = vshll.u32 %v529, 16
        %v969 = vrot.slane %v967, 5
        %v970 = vsel %vm538, %v965, %v969
        %v972 = vshrl.u32 %v530, 16
        %v974 = vrot.slane %v972, 4
        %v975 = vshll.u32 %v530, 16
        %v977 = vrot.slane %v975, 5
        %v978 = vor.u32 %v974, %v977
        %v979 = vrot.slane %v978, 4
        %v981 = vshll.u32 %v531, 16
        %v983 = vrot.slane %v981, 5
        %v984 = vsel %vm538, %v979, %v983
        %v985 = vshrl.u32 %v531, 16
        %v987 = vrot.slane %v985, 4
        %v988 = vor.u32 %v987, %v983
        %v989 = vrot.slane %v988, 4
        %v991 = vshll.u32 %v532, 16
        %v993 = vrot.slane %v991, 5
        %v994 = vsel %vm538, %v989, %v993
        %v996 = vshrl.u32 %v533, 16
        %v998 = vrot.slane %v996, 4
        %v999 = vshll.u32 %v533, 16
        %v1001 = vrot.slane %v999, 5
        %v1002 = vor.u32 %v998, %v1001
        %v1003 = vrot.slane %v1002, 4
        %v1005 = vshll.u32 %v534, 16
        %v1007 = vrot.slane %v1005, 5
        %v1008 = vsel %vm538, %v1003, %v1007
        %v1009 = vshrl.u32 %v534, 16
        %v1011 = vrot.slane %v1009, 4
        %v1012 = vor.u32 %v1011, %v1007
        %v1013 = vrot.slane %v1012, 4
        %v1015 = vshll.u32 %v535, 16
        %v1017 = vrot.slane %v1015, 5
        %v1018 = vsel %vm538, %v1013, %v1017
        %v1019 = vunpack.c.l.b16 %v552
        %v1020 = vunpack.c.l.b16 %v562
        %v1021 = vunpack.c.l.b16 %v576
        %v1022 = vunpack.c.l.b16 %v586
        %v1023 = vunpack.c.l.b16 %v600
        %v1024 = vunpack.c.l.b16 %v610
        %v1025 = vunpack.c.l.b16 %v624
        %v1026 = vunpack.c.l.b16 %v634
        %v1027 = vunpack.c.l.b16 %v648
        %v1028 = vunpack.c.l.b16 %v658
        %v1029 = vunpack.c.l.b16 %v672
        %v1030 = vunpack.c.l.b16 %v682
        %v1031 = vunpack.c.l.b16 %v696
        %v1032 = vunpack.c.l.b16 %v706
        %v1033 = vunpack.c.l.b16 %v720
        %v1034 = vunpack.c.l.b16 %v730
        %v1035 = vunpack.c.l.b16 %v744
        %v1036 = vunpack.c.l.b16 %v754
        %v1037 = vunpack.c.l.b16 %v768
        %v1038 = vunpack.c.l.b16 %v778
        %v1039 = vunpack.c.l.b16 %v792
        %v1040 = vunpack.c.l.b16 %v802
        %v1041 = vunpack.c.l.b16 %v816
        %v1042 = vunpack.c.l.b16 %v826
        %v1043 = vunpack.c.l.b16 %v840
        %v1044 = vunpack.c.l.b16 %v850
        %v1045 = vunpack.c.l.b16 %v864
        %v1046 = vunpack.c.l.b16 %v874
        %v1047 = vunpack.c.l.b16 %v888
        %v1048 = vunpack.c.l.b16 %v898
        %v1049 = vunpack.c.l.b16 %v912
        %v1050 = vunpack.c.l.b16 %v922
        %v1051 = vunpack.c.l.b16 %v936
        %v1052 = vunpack.c.l.b16 %v946
        %v1053 = vunpack.c.l.b16 %v960
        %v1054 = vunpack.c.l.b16 %v970
        %v1055 = vunpack.c.l.b16 %v984
        %v1056 = vunpack.c.l.b16 %v994
        %v1057 = vunpack.c.l.b16 %v1008
        %v1058 = vunpack.c.l.b16 %v1018
        %v1059 = vpack.c.b16 %v1020, %v1019
        %v1060 = vpack.c.b16 %v1022, %v1021
        %v1061 = vpack.c.b16 %v1024, %v1023
        %v1062 = vpack.c.b16 %v1026, %v1025
        %v1063 = vpack.c.b16 %v1028, %v1027
        %v1064 = vpack.c.b16 %v1030, %v1029
        %v1065 = vpack.c.b16 %v1032, %v1031
        %v1066 = vpack.c.b16 %v1034, %v1033
        %v1067 = vpack.c.b16 %v1036, %v1035
        %v1068 = vpack.c.b16 %v1038, %v1037
        %v1069 = vpack.c.b16 %v1040, %v1039
        %v1070 = vpack.c.b16 %v1042, %v1041
        %v1071 = vpack.c.b16 %v1044, %v1043
        %v1072 = vpack.c.b16 %v1046, %v1045
        %v1073 = vpack.c.b16 %v1048, %v1047
        %v1074 = vpack.c.b16 %v1050, %v1049
        %v1075 = vpack.c.b16 %v1052, %v1051
        %v1076 = vpack.c.b16 %v1054, %v1053
        %v1077 = vpack.c.b16 %v1056, %v1055
        %v1078 = vpack.c.b16 %v1058, %v1057
        %1099 = vst [vmem:[#allocation2 + $0x8] sm:$0xff] %v1059
        %1100 = vst [vmem:[#allocation2 + $0x30] sm:$0xff] %v1060
        %1101 = vst [vmem:[#allocation2 + $0x58] sm:$0xff] %v1061
        %1102 = vst [vmem:[#allocation2 + $0x80] sm:$0xff] %v1062
        %1103 = vst [vmem:[#allocation2 + $0xa8] sm:$0xff] %v1063
        %1104 = vst [vmem:[#allocation2 + $0xd0] sm:$0xff] %v1064
        %1105 = vst [vmem:[#allocation2 + $0xf8] sm:$0xff] %v1065
        %1106 = vst [vmem:[#allocation2 + $0x120] sm:$0xff] %v1066
        %1107 = vst [vmem:[#allocation2 + $0x148] sm:$0xff] %v1067
        %1108 = vst [vmem:[#allocation2 + $0x170] sm:$0xff] %v1068
        %1109 = vst [vmem:[#allocation2 + $0x198] sm:$0xff] %v1069
        %1110 = vst [vmem:[#allocation2 + $0x1c0] sm:$0xff] %v1070
        %1111 = vst [vmem:[#allocation2 + $0x1e8] sm:$0xff] %v1071
        %1112 = vst [vmem:[#allocation2 + $0x210] sm:$0xff] %v1072
        %1113 = vst [vmem:[#allocation2 + $0x238] sm:$0xff] %v1073
        %1114 = vst [vmem:[#allocation2 + $0x260] sm:$0xff] %v1074
        %1115 = vst [vmem:[#allocation2 + $0x288] sm:$0xff] %v1075
        %1116 = vst [vmem:[#allocation2 + $0x2b0] sm:$0xff] %v1076
        %1117 = vst [vmem:[#allocation2 + $0x2d8] sm:$0xff] %v1077
        %1118 = vst [vmem:[#allocation2 + $0x300] sm:$0xff] %v1078
        %v1119 = vld [vmem:[%s295] sm:$0xe]
        %v1120 = vld [vmem:[%s295 + $0x4] sm:$0xf]
        %v1121 = vld [vmem:[%s295 + $0x8] sm:$0x1]
        %v1122 = vld [vmem:[%s295 + $0xc] sm:$0xe]
        %v1123 = vld [vmem:[%s295 + $0x10] sm:$0xf]
        %v1124 = vld [vmem:[%s295 + $0x14] sm:$0x1]
        %v1125 = vld [vmem:[%s295 + $0x18] sm:$0xe]
        %v1126 = vld [vmem:[%s295 + $0x1c] sm:$0xf]
        %v1127 = vld [vmem:[%s295 + $0x20] sm:$0x1]
        %v1128 = vld [vmem:[%s295 + $0x24] sm:$0xe]
        %v1129 = vld [vmem:[%s295 + $0x28] sm:$0xf]
        %v1130 = vld [vmem:[%s295 + $0x2c] sm:$0x1]
        %v1131 = vld [vmem:[%s295 + $0x30] sm:$0xe]
        %v1132 = vld [vmem:[%s295 + $0x34] sm:$0xf]
        %v1133 = vld [vmem:[%s295 + $0x38] sm:$0x1]
        %v1134 = vld [vmem:[%s295 + $0x3c] sm:$0xe]
        %v1135 = vld [vmem:[%s295 + $0x40] sm:$0xf]
        %v1136 = vld [vmem:[%s295 + $0x44] sm:$0x1]
        %v1137 = vld [vmem:[%s295 + $0x48] sm:$0xe]
        %v1138 = vld [vmem:[%s295 + $0x4c] sm:$0xf]
        %v1139 = vld [vmem:[%s295 + $0x50] sm:$0x1]
        %v1140 = vld [vmem:[%s295 + $0x54] sm:$0xe]
        %v1141 = vld [vmem:[%s295 + $0x58] sm:$0xf]
        %v1142 = vld [vmem:[%s295 + $0x5c] sm:$0x1]
        %v1143 = vld [vmem:[%s295 + $0x60] sm:$0xe]
        %v1144 = vld [vmem:[%s295 + $0x64] sm:$0xf]
        %v1145 = vld [vmem:[%s295 + $0x68] sm:$0x1]
        %v1146 = vld [vmem:[%s295 + $0x6c] sm:$0xe]
        %v1147 = vld [vmem:[%s295 + $0x70] sm:$0xf]
        %v1148 = vld [vmem:[%s295 + $0x74] sm:$0x1]
        %v1149 = vld [vmem:[%s295 + $0x78] sm:$0xe]
        %v1150 = vld [vmem:[%s295 + $0x7c] sm:$0xf]
        %v1151 = vld [vmem:[%s295 + $0x80] sm:$0x1]
        %v1152 = vld [vmem:[%s295 + $0x84] sm:$0xe]
        %v1153 = vld [vmem:[%s295 + $0x88] sm:$0xf]
        %v1154 = vld [vmem:[%s295 + $0x8c] sm:$0x1]
        %v1155 = vld [vmem:[%s295 + $0x90] sm:$0xe]
        %v1156 = vld [vmem:[%s295 + $0x94] sm:$0xf]
        %v1157 = vld [vmem:[%s295 + $0x98] sm:$0x1]
        %v1158 = vld [vmem:[%s295 + $0x9c] sm:$0xe]
        %v1159 = vld [vmem:[%s295 + $0xa0] sm:$0xf]
        %v1160 = vld [vmem:[%s295 + $0xa4] sm:$0x1]
        %v1161 = vld [vmem:[%s295 + $0xa8] sm:$0xe]
        %v1162 = vld [vmem:[%s295 + $0xac] sm:$0xf]
        %v1163 = vld [vmem:[%s295 + $0xb0] sm:$0x1]
        %v1164 = vld [vmem:[%s295 + $0xb4] sm:$0xe]
        %v1165 = vld [vmem:[%s295 + $0xb8] sm:$0xf]
        %v1166 = vld [vmem:[%s295 + $0xbc] sm:$0x1]
        %v1167 = vld [vmem:[%s295 + $0xc0] sm:$0xe]
        %v1168 = vld [vmem:[%s295 + $0xc4] sm:$0xf]
        %v1169 = vld [vmem:[%s295 + $0xc8] sm:$0x1]
        %v1170 = vld [vmem:[%s295 + $0xcc] sm:$0xe]
        %v1171 = vld [vmem:[%s295 + $0xd0] sm:$0xf]
        %v1172 = vld [vmem:[%s295 + $0xd4] sm:$0x1]
        %v1173 = vld [vmem:[%s295 + $0xd8] sm:$0xe]
        %v1174 = vld [vmem:[%s295 + $0xdc] sm:$0xf]
        %v1175 = vld [vmem:[%s295 + $0xe0] sm:$0x1]
        %v1176 = vld [vmem:[%s295 + $0xe4] sm:$0xe]
        %v1177 = vld [vmem:[%s295 + $0xe8] sm:$0xf]
        %v1178 = vld [vmem:[%s295 + $0xec] sm:$0x1]
        %vm1239 = vcmask 1042432
        %vm1240 = vcmask 1046532
        %vm1241 = vmor %vm1239, %vm1240
        %v1242 = vrot.slane %v1119, 5
        %v1243 = vrot.slane %v1242, 4
        %v1244 = vrot.slane %v1120, 5
        %v1245 = vsel %vm1241, %v1243, %v1244
        %v1246 = vrot.slane %v1244, 4
        %v1247 = vrot.slane %v1121, 5
        %v1248 = vsel %vm1241, %v1246, %v1247
        %v1249 = vrot.slane %v1122, 5
        %v1250 = vrot.slane %v1249, 4
        %v1251 = vrot.slane %v1123, 5
        %v1252 = vsel %vm1241, %v1250, %v1251
        %v1253 = vrot.slane %v1251, 4
        %v1254 = vrot.slane %v1124, 5
        %v1255 = vsel %vm1241, %v1253, %v1254
        %v1256 = vrot.slane %v1125, 5
        %v1257 = vrot.slane %v1256, 4
        %v1258 = vrot.slane %v1126, 5
        %v1259 = vsel %vm1241, %v1257, %v1258
        %v1260 = vrot.slane %v1258, 4
        %v1261 = vrot.slane %v1127, 5
        %v1262 = vsel %vm1241, %v1260, %v1261
        %v1263 = vrot.slane %v1128, 5
        %v1264 = vrot.slane %v1263, 4
        %v1265 = vrot.slane %v1129, 5
        %v1266 = vsel %vm1241, %v1264, %v1265
        %v1267 = vrot.slane %v1265, 4
        %v1268 = vrot.slane %v1130, 5
        %v1269 = vsel %vm1241, %v1267, %v1268
        %v1270 = vrot.slane %v1131, 5
        %v1271 = vrot.slane %v1270, 4
        %v1272 = vrot.slane %v1132, 5
        %v1273 = vsel %vm1241, %v1271, %v1272
        %v1274 = vrot.slane %v1272, 4
        %v1275 = vrot.slane %v1133, 5
        %v1276 = vsel %vm1241, %v1274, %v1275
        %v1277 = vrot.slane %v1134, 5
        %v1278 = vrot.slane %v1277, 4
        %v1279 = vrot.slane %v1135, 5
        %v1280 = vsel %vm1241, %v1278, %v1279
        %v1281 = vrot.slane %v1279, 4
        %v1282 = vrot.slane %v1136, 5
        %v1283 = vsel %vm1241, %v1281, %v1282
        %v1284 = vrot.slane %v1137, 5
        %v1285 = vrot.slane %v1284, 4
        %v1286 = vrot.slane %v1138, 5
        %v1287 = vsel %vm1241, %v1285, %v1286
        %v1288 = vrot.slane %v1286, 4
        %v1289 = vrot.slane %v1139, 5
        %v1290 = vsel %vm1241, %v1288, %v1289
        %v1291 = vrot.slane %v1140, 5
        %v1292 = vrot.slane %v1291, 4
        %v1293 = vrot.slane %v1141, 5
        %v1294 = vsel %vm1241, %v1292, %v1293
        %v1295 = vrot.slane %v1293, 4
        %v1296 = vrot.slane %v1142, 5
        %v1297 = vsel %vm1241, %v1295, %v1296
        %v1298 = vrot.slane %v1143, 5
        %v1299 = vrot.slane %v1298, 4
        %v1300 = vrot.slane %v1144, 5
        %v1301 = vsel %vm1241, %v1299, %v1300
        %v1302 = vrot.slane %v1300, 4
        %v1303 = vrot.slane %v1145, 5
        %v1304 = vsel %vm1241, %v1302, %v1303
        %v1305 = vrot.slane %v1146, 5
        %v1306 = vrot.slane %v1305, 4
        %v1307 = vrot.slane %v1147, 5
        %v1308 = vsel %vm1241, %v1306, %v1307
        %v1309 = vrot.slane %v1307, 4
        %v1310 = vrot.slane %v1148, 5
        %v1311 = vsel %vm1241, %v1309, %v1310
        %v1312 = vrot.slane %v1149, 5
        %v1313 = vrot.slane %v1312, 4
        %v1314 = vrot.slane %v1150, 5
        %v1315 = vsel %vm1241, %v1313, %v1314
        %v1316 = vrot.slane %v1314, 4
        %v1317 = vrot.slane %v1151, 5
        %v1318 = vsel %vm1241, %v1316, %v1317
        %v1319 = vrot.slane %v1152, 5
        %v1320 = vrot.slane %v1319, 4
        %v1321 = vrot.slane %v1153, 5
        %v1322 = vsel %vm1241, %v1320, %v1321
        %v1323 = vrot.slane %v1321, 4
        %v1324 = vrot.slane %v1154, 5
        %v1325 = vsel %vm1241, %v1323, %v1324
        %v1326 = vrot.slane %v1155, 5
        %v1327 = vrot.slane %v1326, 4
        %v1328 = vrot.slane %v1156, 5
        %v1329 = vsel %vm1241, %v1327, %v1328
        %v1330 = vrot.slane %v1328, 4
        %v1331 = vrot.slane %v1157, 5
        %v1332 = vsel %vm1241, %v1330, %v1331
        %v1333 = vrot.slane %v1158, 5
        %v1334 = vrot.slane %v1333, 4
        %v1335 = vrot.slane %v1159, 5
        %v1336 = vsel %vm1241, %v1334, %v1335
        %v1337 = vrot.slane %v1335, 4
        %v1338 = vrot.slane %v1160, 5
        %v1339 = vsel %vm1241, %v1337, %v1338
        %v1340 = vrot.slane %v1161, 5
        %v1341 = vrot.slane %v1340, 4
        %v1342 = vrot.slane %v1162, 5
        %v1343 = vsel %vm1241, %v1341, %v1342
        %v1344 = vrot.slane %v1342, 4
        %v1345 = vrot.slane %v1163, 5
        %v1346 = vsel %vm1241, %v1344, %v1345
        %v1347 = vrot.slane %v1164, 5
        %v1348 = vrot.slane %v1347, 4
        %v1349 = vrot.slane %v1165, 5
        %v1350 = vsel %vm1241, %v1348, %v1349
        %v1351 = vrot.slane %v1349, 4
        %v1352 = vrot.slane %v1166, 5
        %v1353 = vsel %vm1241, %v1351, %v1352
        %v1354 = vrot.slane %v1167, 5
        %v1355 = vrot.slane %v1354, 4
        %v1356 = vrot.slane %v1168, 5
        %v1357 = vsel %vm1241, %v1355, %v1356
        %v1358 = vrot.slane %v1356, 4
        %v1359 = vrot.slane %v1169, 5
        %v1360 = vsel %vm1241, %v1358, %v1359
        %v1361 = vrot.slane %v1170, 5
        %v1362 = vrot.slane %v1361, 4
        %v1363 = vrot.slane %v1171, 5
        %v1364 = vsel %vm1241, %v1362, %v1363
        %v1365 = vrot.slane %v1363, 4
        %v1366 = vrot.slane %v1172, 5
        %v1367 = vsel %vm1241, %v1365, %v1366
        %v1368 = vrot.slane %v1173, 5
        %v1369 = vrot.slane %v1368, 4
        %v1370 = vrot.slane %v1174, 5
        %v1371 = vsel %vm1241, %v1369, %v1370
        %v1372 = vrot.slane %v1370, 4
        %v1373 = vrot.slane %v1175, 5
        %v1374 = vsel %vm1241, %v1372, %v1373
        %v1375 = vrot.slane %v1176, 5
        %v1376 = vrot.slane %v1375, 4
        %v1377 = vrot.slane %v1177, 5
        %v1378 = vsel %vm1241, %v1376, %v1377
        %v1379 = vrot.slane %v1377, 4
        %v1380 = vrot.slane %v1178, 5
        %v1381 = vsel %vm1241, %v1379, %v1380
        %v1382 = vunpack.c.l.b16 %v1245
        %v1383 = vunpack.c.l.b16 %v1248
        %v1384 = vunpack.c.l.b16 %v1252
        %v1385 = vunpack.c.l.b16 %v1255
        %v1386 = vunpack.c.l.b16 %v1259
        %v1387 = vunpack.c.l.b16 %v1262
        %v1388 = vunpack.c.l.b16 %v1266
        %v1389 = vunpack.c.l.b16 %v1269
        %v1390 = vunpack.c.l.b16 %v1273
        %v1391 = vunpack.c.l.b16 %v1276
        %v1392 = vunpack.c.l.b16 %v1280
        %v1393 = vunpack.c.l.b16 %v1283
        %v1394 = vunpack.c.l.b16 %v1287
        %v1395 = vunpack.c.l.b16 %v1290
        %v1396 = vunpack.c.l.b16 %v1294
        %v1397 = vunpack.c.l.b16 %v1297
        %v1398 = vunpack.c.l.b16 %v1301
        %v1399 = vunpack.c.l.b16 %v1304
        %v1400 = vunpack.c.l.b16 %v1308
        %v1401 = vunpack.c.l.b16 %v1311
        %v1402 = vunpack.c.l.b16 %v1315
        %v1403 = vunpack.c.l.b16 %v1318
        %v1404 = vunpack.c.l.b16 %v1322
        %v1405 = vunpack.c.l.b16 %v1325
        %v1406 = vunpack.c.l.b16 %v1329
        %v1407 = vunpack.c.l.b16 %v1332
        %v1408 = vunpack.c.l.b16 %v1336
        %v1409 = vunpack.c.l.b16 %v1339
        %v1410 = vunpack.c.l.b16 %v1343
        %v1411 = vunpack.c.l.b16 %v1346
        %v1412 = vunpack.c.l.b16 %v1350
        %v1413 = vunpack.c.l.b16 %v1353
        %v1414 = vunpack.c.l.b16 %v1357
        %v1415 = vunpack.c.l.b16 %v1360
        %v1416 = vunpack.c.l.b16 %v1364
        %v1417 = vunpack.c.l.b16 %v1367
        %v1418 = vunpack.c.l.b16 %v1371
        %v1419 = vunpack.c.l.b16 %v1374
        %v1420 = vunpack.c.l.b16 %v1378
        %v1421 = vunpack.c.l.b16 %v1381
        %v1422 = vpack.c.b16 %v1383, %v1382
        %v1423 = vpack.c.b16 %v1385, %v1384
        %v1424 = vpack.c.b16 %v1387, %v1386
        %v1425 = vpack.c.b16 %v1389, %v1388
        %v1426 = vpack.c.b16 %v1391, %v1390
        %v1427 = vpack.c.b16 %v1393, %v1392
        %v1428 = vpack.c.b16 %v1395, %v1394
        %v1429 = vpack.c.b16 %v1397, %v1396
        %v1430 = vpack.c.b16 %v1399, %v1398
        %v1431 = vpack.c.b16 %v1401, %v1400
        %v1432 = vpack.c.b16 %v1403, %v1402
        %v1433 = vpack.c.b16 %v1405, %v1404
        %v1434 = vpack.c.b16 %v1407, %v1406
        %v1435 = vpack.c.b16 %v1409, %v1408
        %v1436 = vpack.c.b16 %v1411, %v1410
        %v1437 = vpack.c.b16 %v1413, %v1412
        %v1438 = vpack.c.b16 %v1415, %v1414
        %v1439 = vpack.c.b16 %v1417, %v1416
        %v1440 = vpack.c.b16 %v1419, %v1418
        %v1441 = vpack.c.b16 %v1421, %v1420
        %1462 = vst [vmem:[#allocation2 + $0x10] sm:$0xff] %v1422
        %1463 = vst [vmem:[#allocation2 + $0x38] sm:$0xff] %v1423
        %1464 = vst [vmem:[#allocation2 + $0x60] sm:$0xff] %v1424
        %1465 = vst [vmem:[#allocation2 + $0x88] sm:$0xff] %v1425
        %1466 = vst [vmem:[#allocation2 + $0xb0] sm:$0xff] %v1426
        %1467 = vst [vmem:[#allocation2 + $0xd8] sm:$0xff] %v1427
        %1468 = vst [vmem:[#allocation2 + $0x100] sm:$0xff] %v1428
        %1469 = vst [vmem:[#allocation2 + $0x128] sm:$0xff] %v1429
        %1470 = vst [vmem:[#allocation2 + $0x150] sm:$0xff] %v1430
        %1471 = vst [vmem:[#allocation2 + $0x178] sm:$0xff] %v1431
        %1472 = vst [vmem:[#allocation2 + $0x1a0] sm:$0xff] %v1432
        %1473 = vst [vmem:[#allocation2 + $0x1c8] sm:$0xff] %v1433
        %1474 = vst [vmem:[#allocation2 + $0x1f0] sm:$0xff] %v1434
        %1475 = vst [vmem:[#allocation2 + $0x218] sm:$0xff] %v1435
        %1476 = vst [vmem:[#allocation2 + $0x240] sm:$0xff] %v1436
        %1477 = vst [vmem:[#allocation2 + $0x268] sm:$0xff] %v1437
        %1478 = vst [vmem:[#allocation2 + $0x290] sm:$0xff] %v1438
        %1479 = vst [vmem:[#allocation2 + $0x2b8] sm:$0xff] %v1439
        %1480 = vst [vmem:[#allocation2 + $0x2e0] sm:$0xff] %v1440
        %1481 = vst [vmem:[#allocation2 + $0x308] sm:$0xff] %v1441
        %v1482 = vld [vmem:[%s295] sm:$0xe]
        %v1483 = vld [vmem:[%s295 + $0x4] sm:$0xf]
        %v1484 = vld [vmem:[%s295 + $0x8] sm:$0x3]
        %v1485 = vld [vmem:[%s295 + $0xc] sm:$0xe]
        %v1486 = vld [vmem:[%s295 + $0x10] sm:$0xf]
        %v1487 = vld [vmem:[%s295 + $0x14] sm:$0x3]
        %v1488 = vld [vmem:[%s295 + $0x18] sm:$0xe]
        %v1489 = vld [vmem:[%s295 + $0x1c] sm:$0xf]
        %v1490 = vld [vmem:[%s295 + $0x20] sm:$0x3]
        %v1491 = vld [vmem:[%s295 + $0x24] sm:$0xe]
        %v1492 = vld [vmem:[%s295 + $0x28] sm:$0xf]
        %v1493 = vld [vmem:[%s295 + $0x2c] sm:$0x3]
        %v1494 = vld [vmem:[%s295 + $0x30] sm:$0xe]
        %v1495 = vld [vmem:[%s295 + $0x34] sm:$0xf]
        %v1496 = vld [vmem:[%s295 + $0x38] sm:$0x3]
        %v1497 = vld [vmem:[%s295 + $0x3c] sm:$0xe]
        %v1498 = vld [vmem:[%s295 + $0x40] sm:$0xf]
        %v1499 = vld [vmem:[%s295 + $0x44] sm:$0x3]
        %v1500 = vld [vmem:[%s295 + $0x48] sm:$0xe]
        %v1501 = vld [vmem:[%s295 + $0x4c] sm:$0xf]
        %v1502 = vld [vmem:[%s295 + $0x50] sm:$0x3]
        %v1503 = vld [vmem:[%s295 + $0x54] sm:$0xe]
        %v1504 = vld [vmem:[%s295 + $0x58] sm:$0xf]
        %v1505 = vld [vmem:[%s295 + $0x5c] sm:$0x3]
        %v1506 = vld [vmem:[%s295 + $0x60] sm:$0xe]
        %v1507 = vld [vmem:[%s295 + $0x64] sm:$0xf]
        %v1508 = vld [vmem:[%s295 + $0x68] sm:$0x3]
        %v1509 = vld [vmem:[%s295 + $0x6c] sm:$0xe]
        %v1510 = vld [vmem:[%s295 + $0x70] sm:$0xf]
        %v1511 = vld [vmem:[%s295 + $0x74] sm:$0x3]
        %v1512 = vld [vmem:[%s295 + $0x78] sm:$0xe]
        %v1513 = vld [vmem:[%s295 + $0x7c] sm:$0xf]
        %v1514 = vld [vmem:[%s295 + $0x80] sm:$0x3]
        %v1515 = vld [vmem:[%s295 + $0x84] sm:$0xe]
        %v1516 = vld [vmem:[%s295 + $0x88] sm:$0xf]
        %v1517 = vld [vmem:[%s295 + $0x8c] sm:$0x3]
        %v1518 = vld [vmem:[%s295 + $0x90] sm:$0xe]
        %v1519 = vld [vmem:[%s295 + $0x94] sm:$0xf]
        %v1520 = vld [vmem:[%s295 + $0x98] sm:$0x3]
        %v1521 = vld [vmem:[%s295 + $0x9c] sm:$0xe]
        %v1522 = vld [vmem:[%s295 + $0xa0] sm:$0xf]
        %v1523 = vld [vmem:[%s295 + $0xa4] sm:$0x3]
        %v1524 = vld [vmem:[%s295 + $0xa8] sm:$0xe]
        %v1525 = vld [vmem:[%s295 + $0xac] sm:$0xf]
        %v1526 = vld [vmem:[%s295 + $0xb0] sm:$0x3]
        %v1527 = vld [vmem:[%s295 + $0xb4] sm:$0xe]
        %v1528 = vld [vmem:[%s295 + $0xb8] sm:$0xf]
        %v1529 = vld [vmem:[%s295 + $0xbc] sm:$0x3]
        %v1530 = vld [vmem:[%s295 + $0xc0] sm:$0xe]
        %v1531 = vld [vmem:[%s295 + $0xc4] sm:$0xf]
        %v1532 = vld [vmem:[%s295 + $0xc8] sm:$0x3]
        %v1533 = vld [vmem:[%s295 + $0xcc] sm:$0xe]
        %v1534 = vld [vmem:[%s295 + $0xd0] sm:$0xf]
        %v1535 = vld [vmem:[%s295 + $0xd4] sm:$0x3]
        %v1536 = vld [vmem:[%s295 + $0xd8] sm:$0xe]
        %v1537 = vld [vmem:[%s295 + $0xdc] sm:$0xf]
        %v1538 = vld [vmem:[%s295 + $0xe0] sm:$0x3]
        %v1539 = vld [vmem:[%s295 + $0xe4] sm:$0xe]
        %v1540 = vld [vmem:[%s295 + $0xe8] sm:$0xf]
        %v1541 = vld [vmem:[%s295 + $0xec] sm:$0x3]
        %vm1542 = vsmask.f32 2304
        %vm1543 = vsmask.f32 6416
        %vm1544 = vmor %vm1542, %vm1543
        %v1546 = vshrl.u32 %v1482, 16
        %v1548 = vrot.slane %v1546, 5
        %v1549 = vshll.u32 %v1482, 16
        %v1551 = vrot.slane %v1549, 6
        %v1552 = vor.u32 %v1548, %v1551
        %v1553 = vrot.slane %v1552, 4
        %v1555 = vshrl.u32 %v1483, 16
        %v1557 = vrot.slane %v1555, 5
        %v1558 = vshll.u32 %v1483, 16
        %v1560 = vrot.slane %v1558, 6
        %v1561 = vor.u32 %v1557, %v1560
        %v1562 = vsel %vm1544, %v1553, %v1561
        %v1563 = vrot.slane %v1561, 4
        %v1565 = vshrl.u32 %v1484, 16
        %v1567 = vrot.slane %v1565, 5
        %v1568 = vshll.u32 %v1484, 16
        %v1570 = vrot.slane %v1568, 6
        %v1571 = vor.u32 %v1567, %v1570
        %v1572 = vsel %vm1544, %v1563, %v1571
        %v1574 = vshrl.u32 %v1485, 16
        %v1576 = vrot.slane %v1574, 5
        %v1577 = vshll.u32 %v1485, 16
        %v1579 = vrot.slane %v1577, 6
        %v1580 = vor.u32 %v1576, %v1579
        %v1581 = vrot.slane %v1580, 4
        %v1583 = vshrl.u32 %v1486, 16
        %v1585 = vrot.slane %v1583, 5
        %v1586 = vshll.u32 %v1486, 16
        %v1588 = vrot.slane %v1586, 6
        %v1589 = vor.u32 %v1585, %v1588
        %v1590 = vsel %vm1544, %v1581, %v1589
        %v1591 = vrot.slane %v1589, 4
        %v1593 = vshrl.u32 %v1487, 16
        %v1595 = vrot.slane %v1593, 5
        %v1596 = vshll.u32 %v1487, 16
        %v1598 = vrot.slane %v1596, 6
        %v1599 = vor.u32 %v1595, %v1598
        %v1600 = vsel %vm1544, %v1591, %v1599
        %v1602 = vshrl.u32 %v1488, 16
        %v1604 = vrot.slane %v1602, 5
        %v1605 = vshll.u32 %v1488, 16
        %v1607 = vrot.slane %v1605, 6
        %v1608 = vor.u32 %v1604, %v1607
        %v1609 = vrot.slane %v1608, 4
        %v1611 = vshrl.u32 %v1489, 16
        %v1613 = vrot.slane %v1611, 5
        %v1614 = vshll.u32 %v1489, 16
        %v1616 = vrot.slane %v1614, 6
        %v1617 = vor.u32 %v1613, %v1616
        %v1618 = vsel %vm1544, %v1609, %v1617
        %v1619 = vrot.slane %v1617, 4
        %v1621 = vshrl.u32 %v1490, 16
        %v1623 = vrot.slane %v1621, 5
        %v1624 = vshll.u32 %v1490, 16
        %v1626 = vrot.slane %v1624, 6
        %v1627 = vor.u32 %v1623, %v1626
        %v1628 = vsel %vm1544, %v1619, %v1627
        %v1630 = vshrl.u32 %v1491, 16
        %v1632 = vrot.slane %v1630, 5
        %v1633 = vshll.u32 %v1491, 16
        %v1635 = vrot.slane %v1633, 6
        %v1636 = vor.u32 %v1632, %v1635
        %v1637 = vrot.slane %v1636, 4
        %v1639 = vshrl.u32 %v1492, 16
        %v1641 = vrot.slane %v1639, 5
        %v1642 = vshll.u32 %v1492, 16
        %v1644 = vrot.slane %v1642, 6
        %v1645 = vor.u32 %v1641, %v1644
        %v1646 = vsel %vm1544, %v1637, %v1645
        %v1647 = vrot.slane %v1645, 4
        %v1649 = vshrl.u32 %v1493, 16
        %v1651 = vrot.slane %v1649, 5
        %v1652 = vshll.u32 %v1493, 16
        %v1654 = vrot.slane %v1652, 6
        %v1655 = vor.u32 %v1651, %v1654
        %v1656 = vsel %vm1544, %v1647, %v1655
        %v1658 = vshrl.u32 %v1494, 16
        %v1660 = vrot.slane %v1658, 5
        %v1661 = vshll.u32 %v1494, 16
        %v1663 = vrot.slane %v1661, 6
        %v1664 = vor.u32 %v1660, %v1663
        %v1665 = vrot.slane %v1664, 4
        %v1667 = vshrl.u32 %v1495, 16
        %v1669 = vrot.slane %v1667, 5
        %v1670 = vshll.u32 %v1495, 16
        %v1672 = vrot.slane %v1670, 6
        %v1673 = vor.u32 %v1669, %v1672
        %v1674 = vsel %vm1544, %v1665, %v1673
        %v1675 = vrot.slane %v1673, 4
        %v1677 = vshrl.u32 %v1496, 16
        %v1679 = vrot.slane %v1677, 5
        %v1680 = vshll.u32 %v1496, 16
        %v1682 = vrot.slane %v1680, 6
        %v1683 = vor.u32 %v1679, %v1682
        %v1684 = vsel %vm1544, %v1675, %v1683
        %v1686 = vshrl.u32 %v1497, 16
        %v1688 = vrot.slane %v1686, 5
        %v1689 = vshll.u32 %v1497, 16
        %v1691 = vrot.slane %v1689, 6
        %v1692 = vor.u32 %v1688, %v1691
        %v1693 = vrot.slane %v1692, 4
        %v1695 = vshrl.u32 %v1498, 16
        %v1697 = vrot.slane %v1695, 5
        %v1698 = vshll.u32 %v1498, 16
        %v1700 = vrot.slane %v1698, 6
        %v1701 = vor.u32 %v1697, %v1700
        %v1702 = vsel %vm1544, %v1693, %v1701
        %v1703 = vrot.slane %v1701, 4
        %v1705 = vshrl.u32 %v1499, 16
        %v1707 = vrot.slane %v1705, 5
        %v1708 = vshll.u32 %v1499, 16
        %v1710 = vrot.slane %v1708, 6
        %v1711 = vor.u32 %v1707, %v1710
        %v1712 = vsel %vm1544, %v1703, %v1711
        %v1714 = vshrl.u32 %v1500, 16
        %v1716 = vrot.slane %v1714, 5
        %v1717 = vshll.u32 %v1500, 16
        %v1719 = vrot.slane %v1717, 6
        %v1720 = vor.u32 %v1716, %v1719
        %v1721 = vrot.slane %v1720, 4
        %v1723 = vshrl.u32 %v1501, 16
        %v1725 = vrot.slane %v1723, 5
        %v1726 = vshll.u32 %v1501, 16
        %v1728 = vrot.slane %v1726, 6
        %v1729 = vor.u32 %v1725, %v1728
        %v1730 = vsel %vm1544, %v1721, %v1729
        %v1731 = vrot.slane %v1729, 4
        %v1733 = vshrl.u32 %v1502, 16
        %v1735 = vrot.slane %v1733, 5
        %v1736 = vshll.u32 %v1502, 16
        %v1738 = vrot.slane %v1736, 6
        %v1739 = vor.u32 %v1735, %v1738
        %v1740 = vsel %vm1544, %v1731, %v1739
        %v1742 = vshrl.u32 %v1503, 16
        %v1744 = vrot.slane %v1742, 5
        %v1745 = vshll.u32 %v1503, 16
        %v1747 = vrot.slane %v1745, 6
        %v1748 = vor.u32 %v1744, %v1747
        %v1749 = vrot.slane %v1748, 4
        %v1751 = vshrl.u32 %v1504, 16
        %v1753 = vrot.slane %v1751, 5
        %v1754 = vshll.u32 %v1504, 16
        %v1756 = vrot.slane %v1754, 6
        %v1757 = vor.u32 %v1753, %v1756
        %v1758 = vsel %vm1544, %v1749, %v1757
        %v1759 = vrot.slane %v1757, 4
        %v1761 = vshrl.u32 %v1505, 16
        %v1763 = vrot.slane %v1761, 5
        %v1764 = vshll.u32 %v1505, 16
        %v1766 = vrot.slane %v1764, 6
        %v1767 = vor.u32 %v1763, %v1766
        %v1768 = vsel %vm1544, %v1759, %v1767
        %v1770 = vshrl.u32 %v1506, 16
        %v1772 = vrot.slane %v1770, 5
        %v1773 = vshll.u32 %v1506, 16
        %v1775 = vrot.slane %v1773, 6
        %v1776 = vor.u32 %v1772, %v1775
        %v1777 = vrot.slane %v1776, 4
        %v1779 = vshrl.u32 %v1507, 16
        %v1781 = vrot.slane %v1779, 5
        %v1782 = vshll.u32 %v1507, 16
        %v1784 = vrot.slane %v1782, 6
        %v1785 = vor.u32 %v1781, %v1784
        %v1786 = vsel %vm1544, %v1777, %v1785
        %v1787 = vrot.slane %v1785, 4
        %v1789 = vshrl.u32 %v1508, 16
        %v1791 = vrot.slane %v1789, 5
        %v1792 = vshll.u32 %v1508, 16
        %v1794 = vrot.slane %v1792, 6
        %v1795 = vor.u32 %v1791, %v1794
        %v1796 = vsel %vm1544, %v1787, %v1795
        %v1798 = vshrl.u32 %v1509, 16
        %v1800 = vrot.slane %v1798, 5
        %v1801 = vshll.u32 %v1509, 16
        %v1803 = vrot.slane %v1801, 6
        %v1804 = vor.u32 %v1800, %v1803
        %v1805 = vrot.slane %v1804, 4
        %v1807 = vshrl.u32 %v1510, 16
        %v1809 = vrot.slane %v1807, 5
        %v1810 = vshll.u32 %v1510, 16
        %v1812 = vrot.slane %v1810, 6
        %v1813 = vor.u32 %v1809, %v1812
        %v1814 = vsel %vm1544, %v1805, %v1813
        %v1815 = vrot.slane %v1813, 4
        %v1817 = vshrl.u32 %v1511, 16
        %v1819 = vrot.slane %v1817, 5
        %v1820 = vshll.u32 %v1511, 16
        %v1822 = vrot.slane %v1820, 6
        %v1823 = vor.u32 %v1819, %v1822
        %v1824 = vsel %vm1544, %v1815, %v1823
        %v1826 = vshrl.u32 %v1512, 16
        %v1828 = vrot.slane %v1826, 5
        %v1829 = vshll.u32 %v1512, 16
        %v1831 = vrot.slane %v1829, 6
        %v1832 = vor.u32 %v1828, %v1831
        %v1833 = vrot.slane %v1832, 4
        %v1835 = vshrl.u32 %v1513, 16
        %v1837 = vrot.slane %v1835, 5
        %v1838 = vshll.u32 %v1513, 16
        %v1840 = vrot.slane %v1838, 6
        %v1841 = vor.u32 %v1837, %v1840
        %v1842 = vsel %vm1544, %v1833, %v1841
        %v1843 = vrot.slane %v1841, 4
        %v1845 = vshrl.u32 %v1514, 16
        %v1847 = vrot.slane %v1845, 5
        %v1848 = vshll.u32 %v1514, 16
        %v1850 = vrot.slane %v1848, 6
        %v1851 = vor.u32 %v1847, %v1850
        %v1852 = vsel %vm1544, %v1843, %v1851
        %v1854 = vshrl.u32 %v1515, 16
        %v1856 = vrot.slane %v1854, 5
        %v1857 = vshll.u32 %v1515, 16
        %v1859 = vrot.slane %v1857, 6
        %v1860 = vor.u32 %v1856, %v1859
        %v1861 = vrot.slane %v1860, 4
        %v1863 = vshrl.u32 %v1516, 16
        %v1865 = vrot.slane %v1863, 5
        %v1866 = vshll.u32 %v1516, 16
        %v1868 = vrot.slane %v1866, 6
        %v1869 = vor.u32 %v1865, %v1868
        %v1870 = vsel %vm1544, %v1861, %v1869
        %v1871 = vrot.slane %v1869, 4
        %v1873 = vshrl.u32 %v1517, 16
        %v1875 = vrot.slane %v1873, 5
        %v1876 = vshll.u32 %v1517, 16
        %v1878 = vrot.slane %v1876, 6
        %v1879 = vor.u32 %v1875, %v1878
        %v1880 = vsel %vm1544, %v1871, %v1879
        %v1882 = vshrl.u32 %v1518, 16
        %v1884 = vrot.slane %v1882, 5
        %v1885 = vshll.u32 %v1518, 16
        %v1887 = vrot.slane %v1885, 6
        %v1888 = vor.u32 %v1884, %v1887
        %v1889 = vrot.slane %v1888, 4
        %v1891 = vshrl.u32 %v1519, 16
        %v1893 = vrot.slane %v1891, 5
        %v1894 = vshll.u32 %v1519, 16
        %v1896 = vrot.slane %v1894, 6
        %v1897 = vor.u32 %v1893, %v1896
        %v1898 = vsel %vm1544, %v1889, %v1897
        %v1899 = vrot.slane %v1897, 4
        %v1901 = vshrl.u32 %v1520, 16
        %v1903 = vrot.slane %v1901, 5
        %v1904 = vshll.u32 %v1520, 16
        %v1906 = vrot.slane %v1904, 6
        %v1907 = vor.u32 %v1903, %v1906
        %v1908 = vsel %vm1544, %v1899, %v1907
        %v1910 = vshrl.u32 %v1521, 16
        %v1912 = vrot.slane %v1910, 5
        %v1913 = vshll.u32 %v1521, 16
        %v1915 = vrot.slane %v1913, 6
        %v1916 = vor.u32 %v1912, %v1915
        %v1917 = vrot.slane %v1916, 4
        %v1919 = vshrl.u32 %v1522, 16
        %v1921 = vrot.slane %v1919, 5
        %v1922 = vshll.u32 %v1522, 16
        %v1924 = vrot.slane %v1922, 6
        %v1925 = vor.u32 %v1921, %v1924
        %v1926 = vsel %vm1544, %v1917, %v1925
        %v1927 = vrot.slane %v1925, 4
        %v1929 = vshrl.u32 %v1523, 16
        %v1931 = vrot.slane %v1929, 5
        %v1932 = vshll.u32 %v1523, 16
        %v1934 = vrot.slane %v1932, 6
        %v1935 = vor.u32 %v1931, %v1934
        %v1936 = vsel %vm1544, %v1927, %v1935
        %v1938 = vshrl.u32 %v1524, 16
        %v1940 = vrot.slane %v1938, 5
        %v1941 = vshll.u32 %v1524, 16
        %v1943 = vrot.slane %v1941, 6
        %v1944 = vor.u32 %v1940, %v1943
        %v1945 = vrot.slane %v1944, 4
        %v1947 = vshrl.u32 %v1525, 16
        %v1949 = vrot.slane %v1947, 5
        %v1950 = vshll.u32 %v1525, 16
        %v1952 = vrot.slane %v1950, 6
        %v1953 = vor.u32 %v1949, %v1952
        %v1954 = vsel %vm1544, %v1945, %v1953
        %v1955 = vrot.slane %v1953, 4
        %v1957 = vshrl.u32 %v1526, 16
        %v1959 = vrot.slane %v1957, 5
        %v1960 = vshll.u32 %v1526, 16
        %v1962 = vrot.slane %v1960, 6
        %v1963 = vor.u32 %v1959, %v1962
        %v1964 = vsel %vm1544, %v1955, %v1963
        %v1966 = vshrl.u32 %v1527, 16
        %v1968 = vrot.slane %v1966, 5
        %v1969 = vshll.u32 %v1527, 16
        %v1971 = vrot.slane %v1969, 6
        %v1972 = vor.u32 %v1968, %v1971
        %v1973 = vrot.slane %v1972, 4
        %v1975 = vshrl.u32 %v1528, 16
        %v1977 = vrot.slane %v1975, 5
        %v1978 = vshll.u32 %v1528, 16
        %v1980 = vrot.slane %v1978, 6
        %v1981 = vor.u32 %v1977, %v1980
        %v1982 = vsel %vm1544, %v1973, %v1981
        %v1983 = vrot.slane %v1981, 4
        %v1985 = vshrl.u32 %v1529, 16
        %v1987 = vrot.slane %v1985, 5
        %v1988 = vshll.u32 %v1529, 16
        %v1990 = vrot.slane %v1988, 6
        %v1991 = vor.u32 %v1987, %v1990
        %v1992 = vsel %vm1544, %v1983, %v1991
        %v1994 = vshrl.u32 %v1530, 16
        %v1996 = vrot.slane %v1994, 5
        %v1997 = vshll.u32 %v1530, 16
        %v1999 = vrot.slane %v1997, 6
        %v2000 = vor.u32 %v1996, %v1999
        %v2001 = vrot.slane %v2000, 4
        %v2003 = vshrl.u32 %v1531, 16
        %v2005 = vrot.slane %v2003, 5
        %v2006 = vshll.u32 %v1531, 16
        %v2008 = vrot.slane %v2006, 6
        %v2009 = vor.u32 %v2005, %v2008
        %v2010 = vsel %vm1544, %v2001, %v2009
        %v2011 = vrot.slane %v2009, 4
        %v2013 = vshrl.u32 %v1532, 16
        %v2015 = vrot.slane %v2013, 5
        %v2016 = vshll.u32 %v1532, 16
        %v2018 = vrot.slane %v2016, 6
        %v2019 = vor.u32 %v2015, %v2018
        %v2020 = vsel %vm1544, %v2011, %v2019
        %v2022 = vshrl.u32 %v1533, 16
        %v2024 = vrot.slane %v2022, 5
        %v2025 = vshll.u32 %v1533, 16
        %v2027 = vrot.slane %v2025, 6
        %v2028 = vor.u32 %v2024, %v2027
        %v2029 = vrot.slane %v2028, 4
        %v2031 = vshrl.u32 %v1534, 16
        %v2033 = vrot.slane %v2031, 5
        %v2034 = vshll.u32 %v1534, 16
        %v2036 = vrot.slane %v2034, 6
        %v2037 = vor.u32 %v2033, %v2036
        %v2038 = vsel %vm1544, %v2029, %v2037
        %v2039 = vrot.slane %v2037, 4
        %v2041 = vshrl.u32 %v1535, 16
        %v2043 = vrot.slane %v2041, 5
        %v2044 = vshll.u32 %v1535, 16
        %v2046 = vrot.slane %v2044, 6
        %v2047 = vor.u32 %v2043, %v2046
        %v2048 = vsel %vm1544, %v2039, %v2047
        %v2050 = vshrl.u32 %v1536, 16
        %v2052 = vrot.slane %v2050, 5
        %v2053 = vshll.u32 %v1536, 16
        %v2055 = vrot.slane %v2053, 6
        %v2056 = vor.u32 %v2052, %v2055
        %v2057 = vrot.slane %v2056, 4
        %v2059 = vshrl.u32 %v1537, 16
        %v2061 = vrot.slane %v2059, 5
        %v2062 = vshll.u32 %v1537, 16
        %v2064 = vrot.slane %v2062, 6
        %v2065 = vor.u32 %v2061, %v2064
        %v2066 = vsel %vm1544, %v2057, %v2065
        %v2067 = vrot.slane %v2065, 4
        %v2069 = vshrl.u32 %v1538, 16
        %v2071 = vrot.slane %v2069, 5
        %v2072 = vshll.u32 %v1538, 16
        %v2074 = vrot.slane %v2072, 6
        %v2075 = vor.u32 %v2071, %v2074
        %v2076 = vsel %vm1544, %v2067, %v2075
        %v2078 = vshrl.u32 %v1539, 16
        %v2080 = vrot.slane %v2078, 5
        %v2081 = vshll.u32 %v1539, 16
        %v2083 = vrot.slane %v2081, 6
        %v2084 = vor.u32 %v2080, %v2083
        %v2085 = vrot.slane %v2084, 4
        %v2087 = vshrl.u32 %v1540, 16
        %v2089 = vrot.slane %v2087, 5
        %v2090 = vshll.u32 %v1540, 16
        %v2092 = vrot.slane %v2090, 6
        %v2093 = vor.u32 %v2089, %v2092
        %v2094 = vsel %vm1544, %v2085, %v2093
        %v2095 = vrot.slane %v2093, 4
        %v2097 = vshrl.u32 %v1541, 16
        %v2099 = vrot.slane %v2097, 5
        %v2100 = vshll.u32 %v1541, 16
        %v2102 = vrot.slane %v2100, 6
        %v2103 = vor.u32 %v2099, %v2102
        %v2104 = vsel %vm1544, %v2095, %v2103
        %v2105 = vunpack.c.l.b16 %v1562
        %v2106 = vunpack.c.l.b16 %v1572
        %v2107 = vunpack.c.l.b16 %v1590
        %v2108 = vunpack.c.l.b16 %v1600
        %v2109 = vunpack.c.l.b16 %v1618
        %v2110 = vunpack.c.l.b16 %v1628
        %v2111 = vunpack.c.l.b16 %v1646
        %v2112 = vunpack.c.l.b16 %v1656
        %v2113 = vunpack.c.l.b16 %v1674
        %v2114 = vunpack.c.l.b16 %v1684
        %v2115 = vunpack.c.l.b16 %v1702
        %v2116 = vunpack.c.l.b16 %v1712
        %v2117 = vunpack.c.l.b16 %v1730
        %v2118 = vunpack.c.l.b16 %v1740
        %v2119 = vunpack.c.l.b16 %v1758
        %v2120 = vunpack.c.l.b16 %v1768
        %v2121 = vunpack.c.l.b16 %v1786
        %v2122 = vunpack.c.l.b16 %v1796
        %v2123 = vunpack.c.l.b16 %v1814
        %v2124 = vunpack.c.l.b16 %v1824
        %v2125 = vunpack.c.l.b16 %v1842
        %v2126 = vunpack.c.l.b16 %v1852
        %v2127 = vunpack.c.l.b16 %v1870
        %v2128 = vunpack.c.l.b16 %v1880
        %v2129 = vunpack.c.l.b16 %v1898
        %v2130 = vunpack.c.l.b16 %v1908
        %v2131 = vunpack.c.l.b16 %v1926
        %v2132 = vunpack.c.l.b16 %v1936
        %v2133 = vunpack.c.l.b16 %v1954
        %v2134 = vunpack.c.l.b16 %v1964
        %v2135 = vunpack.c.l.b16 %v1982
        %v2136 = vunpack.c.l.b16 %v1992
        %v2137 = vunpack.c.l.b16 %v2010
        %v2138 = vunpack.c.l.b16 %v2020
        %v2139 = vunpack.c.l.b16 %v2038
        %v2140 = vunpack.c.l.b16 %v2048
        %v2141 = vunpack.c.l.b16 %v2066
        %v2142 = vunpack.c.l.b16 %v2076
        %v2143 = vunpack.c.l.b16 %v2094
        %v2144 = vunpack.c.l.b16 %v2104
        %v2145 = vpack.c.b16 %v2106, %v2105
        %v2146 = vpack.c.b16 %v2108, %v2107
        %v2147 = vpack.c.b16 %v2110, %v2109
        %v2148 = vpack.c.b16 %v2112, %v2111
        %v2149 = vpack.c.b16 %v2114, %v2113
        %v2150 = vpack.c.b16 %v2116, %v2115
        %v2151 = vpack.c.b16 %v2118, %v2117
        %v2152 = vpack.c.b16 %v2120, %v2119
        %v2153 = vpack.c.b16 %v2122, %v2121
        %v2154 = vpack.c.b16 %v2124, %v2123
        %v2155 = vpack.c.b16 %v2126, %v2125
        %v2156 = vpack.c.b16 %v2128, %v2127
        %v2157 = vpack.c.b16 %v2130, %v2129
        %v2158 = vpack.c.b16 %v2132, %v2131
        %v2159 = vpack.c.b16 %v2134, %v2133
        %v2160 = vpack.c.b16 %v2136, %v2135
        %v2161 = vpack.c.b16 %v2138, %v2137
        %v2162 = vpack.c.b16 %v2140, %v2139
        %v2163 = vpack.c.b16 %v2142, %v2141
        %v2164 = vpack.c.b16 %v2144, %v2143
        %2185 = vst [vmem:[#allocation2 + $0x18] sm:$0xff] %v2145
        %2186 = vst [vmem:[#allocation2 + $0x40] sm:$0xff] %v2146
        %2187 = vst [vmem:[#allocation2 + $0x68] sm:$0xff] %v2147
        %2188 = vst [vmem:[#allocation2 + $0x90] sm:$0xff] %v2148
        %2189 = vst [vmem:[#allocation2 + $0xb8] sm:$0xff] %v2149
        %2190 = vst [vmem:[#allocation2 + $0xe0] sm:$0xff] %v2150
        %2191 = vst [vmem:[#allocation2 + $0x108] sm:$0xff] %v2151
        %2192 = vst [vmem:[#allocation2 + $0x130] sm:$0xff] %v2152
        %2193 = vst [vmem:[#allocation2 + $0x158] sm:$0xff] %v2153
        %2194 = vst [vmem:[#allocation2 + $0x180] sm:$0xff] %v2154
        %2195 = vst [vmem:[#allocation2 + $0x1a8] sm:$0xff] %v2155
        %2196 = vst [vmem:[#allocation2 + $0x1d0] sm:$0xff] %v2156
        %2197 = vst [vmem:[#allocation2 + $0x1f8] sm:$0xff] %v2157
        %2198 = vst [vmem:[#allocation2 + $0x220] sm:$0xff] %v2158
        %2199 = vst [vmem:[#allocation2 + $0x248] sm:$0xff] %v2159
        %2200 = vst [vmem:[#allocation2 + $0x270] sm:$0xff] %v2160
        %2201 = vst [vmem:[#allocation2 + $0x298] sm:$0xff] %v2161
        %2202 = vst [vmem:[#allocation2 + $0x2c0] sm:$0xff] %v2162
        %2203 = vst [vmem:[#allocation2 + $0x2e8] sm:$0xff] %v2163
        %2204 = vst [vmem:[#allocation2 + $0x310] sm:$0xff] %v2164
        %v2205 = vld [vmem:[%s295] sm:$0xc]
        %v2206 = vld [vmem:[%s295 + $0x4] sm:$0xf]
        %v2207 = vld [vmem:[%s295 + $0x8] sm:$0x3]
        %v2208 = vld [vmem:[%s295 + $0xc] sm:$0xc]
        %v2209 = vld [vmem:[%s295 + $0x10] sm:$0xf]
        %v2210 = vld [vmem:[%s295 + $0x14] sm:$0x3]
        %v2211 = vld [vmem:[%s295 + $0x18] sm:$0xc]
        %v2212 = vld [vmem:[%s295 + $0x1c] sm:$0xf]
        %v2213 = vld [vmem:[%s295 + $0x20] sm:$0x3]
        %v2214 = vld [vmem:[%s295 + $0x24] sm:$0xc]
        %v2215 = vld [vmem:[%s295 + $0x28] sm:$0xf]
        %v2216 = vld [vmem:[%s295 + $0x2c] sm:$0x3]
        %v2217 = vld [vmem:[%s295 + $0x30] sm:$0xc]
        %v2218 = vld [vmem:[%s295 + $0x34] sm:$0xf]
        %v2219 = vld [vmem:[%s295 + $0x38] sm:$0x3]
        %v2220 = vld [vmem:[%s295 + $0x3c] sm:$0xc]
        %v2221 = vld [vmem:[%s295 + $0x40] sm:$0xf]
        %v2222 = vld [vmem:[%s295 + $0x44] sm:$0x3]
        %v2223 = vld [vmem:[%s295 + $0x48] sm:$0xc]
        %v2224 = vld [vmem:[%s295 + $0x4c] sm:$0xf]
        %v2225 = vld [vmem:[%s295 + $0x50] sm:$0x3]
        %v2226 = vld [vmem:[%s295 + $0x54] sm:$0xc]
        %v2227 = vld [vmem:[%s295 + $0x58] sm:$0xf]
        %v2228 = vld [vmem:[%s295 + $0x5c] sm:$0x3]
        %v2229 = vld [vmem:[%s295 + $0x60] sm:$0xc]
        %v2230 = vld [vmem:[%s295 + $0x64] sm:$0xf]
        %v2231 = vld [vmem:[%s295 + $0x68] sm:$0x3]
        %v2232 = vld [vmem:[%s295 + $0x6c] sm:$0xc]
        %v2233 = vld [vmem:[%s295 + $0x70] sm:$0xf]
        %v2234 = vld [vmem:[%s295 + $0x74] sm:$0x3]
        %v2235 = vld [vmem:[%s295 + $0x78] sm:$0xc]
        %v2236 = vld [vmem:[%s295 + $0x7c] sm:$0xf]
        %v2237 = vld [vmem:[%s295 + $0x80] sm:$0x3]
        %v2238 = vld [vmem:[%s295 + $0x84] sm:$0xc]
        %v2239 = vld [vmem:[%s295 + $0x88] sm:$0xf]
        %v2240 = vld [vmem:[%s295 + $0x8c] sm:$0x3]
        %v2241 = vld [vmem:[%s295 + $0x90] sm:$0xc]
        %v2242 = vld [vmem:[%s295 + $0x94] sm:$0xf]
        %v2243 = vld [vmem:[%s295 + $0x98] sm:$0x3]
        %v2244 = vld [vmem:[%s295 + $0x9c] sm:$0xc]
        %v2245 = vld [vmem:[%s295 + $0xa0] sm:$0xf]
        %v2246 = vld [vmem:[%s295 + $0xa4] sm:$0x3]
        %v2247 = vld [vmem:[%s295 + $0xa8] sm:$0xc]
        %v2248 = vld [vmem:[%s295 + $0xac] sm:$0xf]
        %v2249 = vld [vmem:[%s295 + $0xb0] sm:$0x3]
        %v2250 = vld [vmem:[%s295 + $0xb4] sm:$0xc]
        %v2251 = vld [vmem:[%s295 + $0xb8] sm:$0xf]
        %v2252 = vld [vmem:[%s295 + $0xbc] sm:$0x3]
        %v2253 = vld [vmem:[%s295 + $0xc0] sm:$0xc]
        %v2254 = vld [vmem:[%s295 + $0xc4] sm:$0xf]
        %v2255 = vld [vmem:[%s295 + $0xc8] sm:$0x3]
        %v2256 = vld [vmem:[%s295 + $0xcc] sm:$0xc]
        %v2257 = vld [vmem:[%s295 + $0xd0] sm:$0xf]
        %v2258 = vld [vmem:[%s295 + $0xd4] sm:$0x3]
        %v2259 = vld [vmem:[%s295 + $0xd8] sm:$0xc]
        %v2260 = vld [vmem:[%s295 + $0xdc] sm:$0xf]
        %v2261 = vld [vmem:[%s295 + $0xe0] sm:$0x3]
        %v2262 = vld [vmem:[%s295 + $0xe4] sm:$0xc]
        %v2263 = vld [vmem:[%s295 + $0xe8] sm:$0xf]
        %v2264 = vld [vmem:[%s295 + $0xec] sm:$0x3]
        %vm2325 = vcmask 1041408
        %vm2326 = vcmask 1045508
        %vm2327 = vmor %vm2325, %vm2326
        %v2328 = vrot.slane %v2205, 6
        %v2329 = vrot.slane %v2328, 4
        %v2330 = vrot.slane %v2206, 6
        %v2331 = vsel %vm2327, %v2329, %v2330
        %v2332 = vrot.slane %v2330, 4
        %v2333 = vrot.slane %v2207, 6
        %v2334 = vsel %vm2327, %v2332, %v2333
        %v2335 = vrot.slane %v2208, 6
        %v2336 = vrot.slane %v2335, 4
        %v2337 = vrot.slane %v2209, 6
        %v2338 = vsel %vm2327, %v2336, %v2337
        %v2339 = vrot.slane %v2337, 4
        %v2340 = vrot.slane %v2210, 6
        %v2341 = vsel %vm2327, %v2339, %v2340
        %v2342 = vrot.slane %v2211, 6
        %v2343 = vrot.slane %v2342, 4
        %v2344 = vrot.slane %v2212, 6
        %v2345 = vsel %vm2327, %v2343, %v2344
        %v2346 = vrot.slane %v2344, 4
        %v2347 = vrot.slane %v2213, 6
        %v2348 = vsel %vm2327, %v2346, %v2347
        %v2349 = vrot.slane %v2214, 6
        %v2350 = vrot.slane %v2349, 4
        %v2351 = vrot.slane %v2215, 6
        %v2352 = vsel %vm2327, %v2350, %v2351
        %v2353 = vrot.slane %v2351, 4
        %v2354 = vrot.slane %v2216, 6
        %v2355 = vsel %vm2327, %v2353, %v2354
        %v2356 = vrot.slane %v2217, 6
        %v2357 = vrot.slane %v2356, 4
        %v2358 = vrot.slane %v2218, 6
        %v2359 = vsel %vm2327, %v2357, %v2358
        %v2360 = vrot.slane %v2358, 4
        %v2361 = vrot.slane %v2219, 6
        %v2362 = vsel %vm2327, %v2360, %v2361
        %v2363 = vrot.slane %v2220, 6
        %v2364 = vrot.slane %v2363, 4
        %v2365 = vrot.slane %v2221, 6
        %v2366 = vsel %vm2327, %v2364, %v2365
        %v2367 = vrot.slane %v2365, 4
        %v2368 = vrot.slane %v2222, 6
        %v2369 = vsel %vm2327, %v2367, %v2368
        %v2370 = vrot.slane %v2223, 6
        %v2371 = vrot.slane %v2370, 4
        %v2372 = vrot.slane %v2224, 6
        %v2373 = vsel %vm2327, %v2371, %v2372
        %v2374 = vrot.slane %v2372, 4
        %v2375 = vrot.slane %v2225, 6
        %v2376 = vsel %vm2327, %v2374, %v2375
        %v2377 = vrot.slane %v2226, 6
        %v2378 = vrot.slane %v2377, 4
        %v2379 = vrot.slane %v2227, 6
        %v2380 = vsel %vm2327, %v2378, %v2379
        %v2381 = vrot.slane %v2379, 4
        %v2382 = vrot.slane %v2228, 6
        %v2383 = vsel %vm2327, %v2381, %v2382
        %v2384 = vrot.slane %v2229, 6
        %v2385 = vrot.slane %v2384, 4
        %v2386 = vrot.slane %v2230, 6
        %v2387 = vsel %vm2327, %v2385, %v2386
        %v2388 = vrot.slane %v2386, 4
        %v2389 = vrot.slane %v2231, 6
        %v2390 = vsel %vm2327, %v2388, %v2389
        %v2391 = vrot.slane %v2232, 6
        %v2392 = vrot.slane %v2391, 4
        %v2393 = vrot.slane %v2233, 6
        %v2394 = vsel %vm2327, %v2392, %v2393
        %v2395 = vrot.slane %v2393, 4
        %v2396 = vrot.slane %v2234, 6
        %v2397 = vsel %vm2327, %v2395, %v2396
        %v2398 = vrot.slane %v2235, 6
        %v2399 = vrot.slane %v2398, 4
        %v2400 = vrot.slane %v2236, 6
        %v2401 = vsel %vm2327, %v2399, %v2400
        %v2402 = vrot.slane %v2400, 4
        %v2403 = vrot.slane %v2237, 6
        %v2404 = vsel %vm2327, %v2402, %v2403
        %v2405 = vrot.slane %v2238, 6
        %v2406 = vrot.slane %v2405, 4
        %v2407 = vrot.slane %v2239, 6
        %v2408 = vsel %vm2327, %v2406, %v2407
        %v2409 = vrot.slane %v2407, 4
        %v2410 = vrot.slane %v2240, 6
        %v2411 = vsel %vm2327, %v2409, %v2410
        %v2412 = vrot.slane %v2241, 6
        %v2413 = vrot.slane %v2412, 4
        %v2414 = vrot.slane %v2242, 6
        %v2415 = vsel %vm2327, %v2413, %v2414
        %v2416 = vrot.slane %v2414, 4
        %v2417 = vrot.slane %v2243, 6
        %v2418 = vsel %vm2327, %v2416, %v2417
        %v2419 = vrot.slane %v2244, 6
        %v2420 = vrot.slane %v2419, 4
        %v2421 = vrot.slane %v2245, 6
        %v2422 = vsel %vm2327, %v2420, %v2421
        %v2423 = vrot.slane %v2421, 4
        %v2424 = vrot.slane %v2246, 6
        %v2425 = vsel %vm2327, %v2423, %v2424
        %v2426 = vrot.slane %v2247, 6
        %v2427 = vrot.slane %v2426, 4
        %v2428 = vrot.slane %v2248, 6
        %v2429 = vsel %vm2327, %v2427, %v2428
        %v2430 = vrot.slane %v2428, 4
        %v2431 = vrot.slane %v2249, 6
        %v2432 = vsel %vm2327, %v2430, %v2431
        %v2433 = vrot.slane %v2250, 6
        %v2434 = vrot.slane %v2433, 4
        %v2435 = vrot.slane %v2251, 6
        %v2436 = vsel %vm2327, %v2434, %v2435
        %v2437 = vrot.slane %v2435, 4
        %v2438 = vrot.slane %v2252, 6
        %v2439 = vsel %vm2327, %v2437, %v2438
        %v2440 = vrot.slane %v2253, 6
        %v2441 = vrot.slane %v2440, 4
        %v2442 = vrot.slane %v2254, 6
        %v2443 = vsel %vm2327, %v2441, %v2442
        %v2444 = vrot.slane %v2442, 4
        %v2445 = vrot.slane %v2255, 6
        %v2446 = vsel %vm2327, %v2444, %v2445
        %v2447 = vrot.slane %v2256, 6
        %v2448 = vrot.slane %v2447, 4
        %v2449 = vrot.slane %v2257, 6
        %v2450 = vsel %vm2327, %v2448, %v2449
        %v2451 = vrot.slane %v2449, 4
        %v2452 = vrot.slane %v2258, 6
        %v2453 = vsel %vm2327, %v2451, %v2452
        %v2454 = vrot.slane %v2259, 6
        %v2455 = vrot.slane %v2454, 4
        %v2456 = vrot.slane %v2260, 6
        %v2457 = vsel %vm2327, %v2455, %v2456
        %v2458 = vrot.slane %v2456, 4
        %v2459 = vrot.slane %v2261, 6
        %v2460 = vsel %vm2327, %v2458, %v2459
        %v2461 = vrot.slane %v2262, 6
        %v2462 = vrot.slane %v2461, 4
        %v2463 = vrot.slane %v2263, 6
        %v2464 = vsel %vm2327, %v2462, %v2463
        %v2465 = vrot.slane %v2463, 4
        %v2466 = vrot.slane %v2264, 6
        %v2467 = vsel %vm2327, %v2465, %v2466
        %v2468 = vunpack.c.l.b16 %v2331
        %v2469 = vunpack.c.l.b16 %v2334
        %v2470 = vunpack.c.l.b16 %v2338
        %v2471 = vunpack.c.l.b16 %v2341
        %v2472 = vunpack.c.l.b16 %v2345
        %v2473 = vunpack.c.l.b16 %v2348
        %v2474 = vunpack.c.l.b16 %v2352
        %v2475 = vunpack.c.l.b16 %v2355
        %v2476 = vunpack.c.l.b16 %v2359
        %v2477 = vunpack.c.l.b16 %v2362
        %v2478 = vunpack.c.l.b16 %v2366
        %v2479 = vunpack.c.l.b16 %v2369
        %v2480 = vunpack.c.l.b16 %v2373
        %v2481 = vunpack.c.l.b16 %v2376
        %v2482 = vunpack.c.l.b16 %v2380
        %v2483 = vunpack.c.l.b16 %v2383
        %v2484 = vunpack.c.l.b16 %v2387
        %v2485 = vunpack.c.l.b16 %v2390
        %v2486 = vunpack.c.l.b16 %v2394
        %v2487 = vunpack.c.l.b16 %v2397
        %v2488 = vunpack.c.l.b16 %v2401
        %v2489 = vunpack.c.l.b16 %v2404
        %v2490 = vunpack.c.l.b16 %v2408
        %v2491 = vunpack.c.l.b16 %v2411
        %v2492 = vunpack.c.l.b16 %v2415
        %v2493 = vunpack.c.l.b16 %v2418
        %v2494 = vunpack.c.l.b16 %v2422
        %v2495 = vunpack.c.l.b16 %v2425
        %v2496 = vunpack.c.l.b16 %v2429
        %v2497 = vunpack.c.l.b16 %v2432
        %v2498 = vunpack.c.l.b16 %v2436
        %v2499 = vunpack.c.l.b16 %v2439
        %v2500 = vunpack.c.l.b16 %v2443
        %v2501 = vunpack.c.l.b16 %v2446
        %v2502 = vunpack.c.l.b16 %v2450
        %v2503 = vunpack.c.l.b16 %v2453
        %v2504 = vunpack.c.l.b16 %v2457
        %v2505 = vunpack.c.l.b16 %v2460
        %v2506 = vunpack.c.l.b16 %v2464
        %v2507 = vunpack.c.l.b16 %v2467
        %v2508 = vpack.c.b16 %v2469, %v2468
        %v2509 = vpack.c.b16 %v2471, %v2470
        %v2510 = vpack.c.b16 %v2473, %v2472
        %v2511 = vpack.c.b16 %v2475, %v2474
        %v2512 = vpack.c.b16 %v2477, %v2476
        %v2513 = vpack.c.b16 %v2479, %v2478
        %v2514 = vpack.c.b16 %v2481, %v2480
        %v2515 = vpack.c.b16 %v2483, %v2482
        %v2516 = vpack.c.b16 %v2485, %v2484
        %v2517 = vpack.c.b16 %v2487, %v2486
        %v2518 = vpack.c.b16 %v2489, %v2488
        %v2519 = vpack.c.b16 %v2491, %v2490
        %v2520 = vpack.c.b16 %v2493, %v2492
        %v2521 = vpack.c.b16 %v2495, %v2494
        %v2522 = vpack.c.b16 %v2497, %v2496
        %v2523 = vpack.c.b16 %v2499, %v2498
        %v2524 = vpack.c.b16 %v2501, %v2500
        %v2525 = vpack.c.b16 %v2503, %v2502
        %v2526 = vpack.c.b16 %v2505, %v2504
        %v2527 = vpack.c.b16 %v2507, %v2506
        %2548 = vst [vmem:[#allocation2 + $0x20] sm:$0xff] %v2508
        %2549 = vst [vmem:[#allocation2 + $0x48] sm:$0xff] %v2509
        %2550 = vst [vmem:[#allocation2 + $0x70] sm:$0xff] %v2510
        %2551 = vst [vmem:[#allocation2 + $0x98] sm:$0xff] %v2511
        %2552 = vst [vmem:[#allocation2 + $0xc0] sm:$0xff] %v2512
        %2553 = vst [vmem:[#allocation2 + $0xe8] sm:$0xff] %v2513
        %2554 = vst [vmem:[#allocation2 + $0x110] sm:$0xff] %v2514
        %2555 = vst [vmem:[#allocation2 + $0x138] sm:$0xff] %v2515
        %2556 = vst [vmem:[#allocation2 + $0x160] sm:$0xff] %v2516
        %2557 = vst [vmem:[#allocation2 + $0x188] sm:$0xff] %v2517
        %2558 = vst [vmem:[#allocation2 + $0x1b0] sm:$0xff] %v2518
        %2559 = vst [vmem:[#allocation2 + $0x1d8] sm:$0xff] %v2519
        %2560 = vst [vmem:[#allocation2 + $0x200] sm:$0xff] %v2520
        %2561 = vst [vmem:[#allocation2 + $0x228] sm:$0xff] %v2521
        %2562 = vst [vmem:[#allocation2 + $0x250] sm:$0xff] %v2522
        %2563 = vst [vmem:[#allocation2 + $0x278] sm:$0xff] %v2523
        %2564 = vst [vmem:[#allocation2 + $0x2a0] sm:$0xff] %v2524
        %2565 = vst [vmem:[#allocation2 + $0x2c8] sm:$0xff] %v2525
        %2566 = vst [vmem:[#allocation2 + $0x2f0] sm:$0xff] %v2526
        %2567 = vst [vmem:[#allocation2 + $0x318] sm:$0xff] %v2527
        %v2568 = vld [vmem:[#allocation2] sm:$0xff]
        %v2569 = vld [vmem:[#allocation2 + $0x8] sm:$0xff]
        %v2570 = vld [vmem:[#allocation2 + $0x10] sm:$0xff]
        %v2571 = vld [vmem:[#allocation2 + $0x18] sm:$0xff]
        %v2572 = vld [vmem:[#allocation2 + $0x20] sm:$0xff]
        %v2573 = vld [vmem:[#allocation2 + $0x28] sm:$0xff]
        %v2574 = vld [vmem:[#allocation2 + $0x30] sm:$0xff]
        %v2575 = vld [vmem:[#allocation2 + $0x38] sm:$0xff]
        %v2576 = vld [vmem:[#allocation2 + $0x40] sm:$0xff]
        %v2577 = vld [vmem:[#allocation2 + $0x48] sm:$0xff]
        %v2578 = vld [vmem:[#allocation2 + $0x50] sm:$0xff]
        %v2579 = vld [vmem:[#allocation2 + $0x58] sm:$0xff]
        %v2580 = vld [vmem:[#allocation2 + $0x60] sm:$0xff]
        %v2581 = vld [vmem:[#allocation2 + $0x68] sm:$0xff]
        %v2582 = vld [vmem:[#allocation2 + $0x70] sm:$0xff]
        %v2583 = vld [vmem:[#allocation2 + $0x78] sm:$0xff]
        %v2584 = vld [vmem:[#allocation2 + $0x80] sm:$0xff]
        %v2585 = vld [vmem:[#allocation2 + $0x88] sm:$0xff]
        %v2586 = vld [vmem:[#allocation2 + $0x90] sm:$0xff]
        %v2587 = vld [vmem:[#allocation2 + $0x98] sm:$0xff]
        %v2588 = vld [vmem:[#allocation2 + $0xa0] sm:$0xff]
        %v2589 = vld [vmem:[#allocation2 + $0xa8] sm:$0xff]
        %v2590 = vld [vmem:[#allocation2 + $0xb0] sm:$0xff]
        %v2591 = vld [vmem:[#allocation2 + $0xb8] sm:$0xff]
        %v2592 = vld [vmem:[#allocation2 + $0xc0] sm:$0xff]
        %v2593 = vld [vmem:[#allocation2 + $0xc8] sm:$0xff]
        %v2594 = vld [vmem:[#allocation2 + $0xd0] sm:$0xff]
        %v2595 = vld [vmem:[#allocation2 + $0xd8] sm:$0xff]
        %v2596 = vld [vmem:[#allocation2 + $0xe0] sm:$0xff]
        %v2597 = vld [vmem:[#allocation2 + $0xe8] sm:$0xff]
        %v2598 = vld [vmem:[#allocation2 + $0xf0] sm:$0xff]
        %v2599 = vld [vmem:[#allocation2 + $0xf8] sm:$0xff]
        %v2600 = vld [vmem:[#allocation2 + $0x100] sm:$0xff]
        %v2601 = vld [vmem:[#allocation2 + $0x108] sm:$0xff]
        %v2602 = vld [vmem:[#allocation2 + $0x110] sm:$0xff]
        %v2603 = vld [vmem:[#allocation2 + $0x118] sm:$0xff]
        %v2604 = vld [vmem:[#allocation2 + $0x120] sm:$0xff]
        %v2605 = vld [vmem:[#allocation2 + $0x128] sm:$0xff]
        %v2606 = vld [vmem:[#allocation2 + $0x130] sm:$0xff]
        %v2607 = vld [vmem:[#allocation2 + $0x138] sm:$0xff]
        %v2608 = vld [vmem:[#allocation2 + $0x140] sm:$0xff]
        %v2609 = vld [vmem:[#allocation2 + $0x148] sm:$0xff]
        %v2610 = vld [vmem:[#allocation2 + $0x150] sm:$0xff]
        %v2611 = vld [vmem:[#allocation2 + $0x158] sm:$0xff]
        %v2612 = vld [vmem:[#allocation2 + $0x160] sm:$0xff]
        %v2613 = vld [vmem:[#allocation2 + $0x168] sm:$0xff]
        %v2614 = vld [vmem:[#allocation2 + $0x170] sm:$0xff]
        %v2615 = vld [vmem:[#allocation2 + $0x178] sm:$0xff]
        %v2616 = vld [vmem:[#allocation2 + $0x180] sm:$0xff]
        %v2617 = vld [vmem:[#allocation2 + $0x188] sm:$0xff]
        %v2618 = vld [vmem:[#allocation2 + $0x190] sm:$0xff]
        %v2619 = vld [vmem:[#allocation2 + $0x198] sm:$0xff]
        %v2620 = vld [vmem:[#allocation2 + $0x1a0] sm:$0xff]
        %v2621 = vld [vmem:[#allocation2 + $0x1a8] sm:$0xff]
        %v2622 = vld [vmem:[#allocation2 + $0x1b0] sm:$0xff]
        %v2623 = vld [vmem:[#allocation2 + $0x1b8] sm:$0xff]
        %v2624 = vld [vmem:[#allocation2 + $0x1c0] sm:$0xff]
        %v2625 = vld [vmem:[#allocation2 + $0x1c8] sm:$0xff]
        %v2626 = vld [vmem:[#allocation2 + $0x1d0] sm:$0xff]
        %v2627 = vld [vmem:[#allocation2 + $0x1d8] sm:$0xff]
        %v2628 = vld [vmem:[#allocation2 + $0x1e0] sm:$0xff]
        %v2629 = vld [vmem:[#allocation2 + $0x1e8] sm:$0xff]
        %v2630 = vld [vmem:[#allocation2 + $0x1f0] sm:$0xff]
        %v2631 = vld [vmem:[#allocation2 + $0x1f8] sm:$0xff]
        %v2632 = vld [vmem:[#allocation2 + $0x200] sm:$0xff]
        %v2633 = vld [vmem:[#allocation2 + $0x208] sm:$0xff]
        %v2634 = vld [vmem:[#allocation2 + $0x210] sm:$0xff]
        %v2635 = vld [vmem:[#allocation2 + $0x218] sm:$0xff]
        %v2636 = vld [vmem:[#allocation2 + $0x220] sm:$0xff]
        %v2637 = vld [vmem:[#allocation2 + $0x228] sm:$0xff]
        %v2638 = vld [vmem:[#allocation2 + $0x230] sm:$0xff]
        %v2639 = vld [vmem:[#allocation2 + $0x238] sm:$0xff]
        %v2640 = vld [vmem:[#allocation2 + $0x240] sm:$0xff]
        %v2641 = vld [vmem:[#allocation2 + $0x248] sm:$0xff]
        %v2642 = vld [vmem:[#allocation2 + $0x250] sm:$0xff]
        %v2643 = vld [vmem:[#allocation2 + $0x258] sm:$0xff]
        %v2644 = vld [vmem:[#allocation2 + $0x260] sm:$0xff]
        %v2645 = vld [vmem:[#allocation2 + $0x268] sm:$0xff]
        %v2646 = vld [vmem:[#allocation2 + $0x270] sm:$0xff]
        %v2647 = vld [vmem:[#allocation2 + $0x278] sm:$0xff]
        %v2648 = vld [vmem:[#allocation3] sm:$0xf]
        %v2649 = vld [vmem:[#allocation3 + $0x20] sm:$0xf]
        %v2650 = vld [vmem:[#allocation3 + $0x40] sm:$0xf]
        %v2651 = vld [vmem:[#allocation3 + $0x60] sm:$0xf]
        %v2652 = vld [vmem:[#allocation3 + $0x80] sm:$0xf]
        %v2653 = vld [vmem:[#allocation3 + $0xa0] sm:$0xf]
        %v2654 = vld [vmem:[#allocation3 + $0xc0] sm:$0xf]
        %v2655 = vld [vmem:[#allocation3 + $0xe0] sm:$0xf]
        %v2656 = vld [vmem:[#allocation3 + $0x100] sm:$0xf]
        %v2657 = vld [vmem:[#allocation3 + $0x120] sm:$0xf]
        %v2658 = vld [vmem:[#allocation3 + $0x140] sm:$0xf]
        %v2659 = vld [vmem:[#allocation3 + $0x160] sm:$0xf]
        %v2660 = vld [vmem:[#allocation3 + $0x180] sm:$0xf]
        %v2661 = vld [vmem:[#allocation3 + $0x1a0] sm:$0xf]
        %v2662 = vld [vmem:[#allocation3 + $0x1c0] sm:$0xf]
        %v2663 = vld [vmem:[#allocation3 + $0x1e0] sm:$0xf]
        %v2664 = vld [vmem:[#allocation3 + $0x200] sm:$0xf]
        %v2665 = vld [vmem:[#allocation3 + $0x220] sm:$0xf]
        %v2666 = vld [vmem:[#allocation3 + $0x240] sm:$0xf]
        %v2667 = vld [vmem:[#allocation3 + $0x260] sm:$0xf]
        %v2668 = vld [vmem:[#allocation3 + $0x280] sm:$0xf]
        %v2669 = vld [vmem:[#allocation3 + $0x2a0] sm:$0xf]
        %v2670 = vld [vmem:[#allocation3 + $0x2c0] sm:$0xf]
        %v2671 = vld [vmem:[#allocation3 + $0x2e0] sm:$0xf]
        %v2672 = vld [vmem:[#allocation3 + $0x300] sm:$0xf]
        %v2673 = vld [vmem:[#allocation3 + $0x320] sm:$0xf]
        %v2674 = vld [vmem:[#allocation3 + $0x340] sm:$0xf]
        %v2675 = vld [vmem:[#allocation3 + $0x360] sm:$0xf]
        %v2676 = vld [vmem:[#allocation3 + $0x380] sm:$0xf]
        %v2677 = vld [vmem:[#allocation3 + $0x3a0] sm:$0xf]
        %v2678 = vld [vmem:[#allocation3 + $0x3c0] sm:$0xf]
        %v2679 = vld [vmem:[#allocation3 + $0x3e0] sm:$0xf]
        %v2680 = vld [vmem:[#allocation3 + $0x400] sm:$0xf]
        %v2681 = vld [vmem:[#allocation3 + $0x420] sm:$0xf]
        %v2682 = vld [vmem:[#allocation3 + $0x440] sm:$0xf]
        %v2683 = vld [vmem:[#allocation3 + $0x460] sm:$0xf]
        %v2684 = vld [vmem:[#allocation3 + $0x480] sm:$0xf]
        %v2685 = vld [vmem:[#allocation3 + $0x4a0] sm:$0xf]
        %v2686 = vld [vmem:[#allocation3 + $0x4c0] sm:$0xf]
        %v2687 = vld [vmem:[#allocation3 + $0x4e0] sm:$0xf]
        %v2688 = vld [vmem:[#allocation3 + $0x500] sm:$0xf]
        %v2689 = vld [vmem:[#allocation3 + $0x520] sm:$0xf]
        %v2690 = vld [vmem:[#allocation3 + $0x540] sm:$0xf]
        %v2691 = vld [vmem:[#allocation3 + $0x560] sm:$0xf]
        %v2692 = vld [vmem:[#allocation3 + $0x580] sm:$0xf]
        %v2693 = vld [vmem:[#allocation3 + $0x5a0] sm:$0xf]
        %v2694 = vld [vmem:[#allocation3 + $0x5c0] sm:$0xf]
        %v2695 = vld [vmem:[#allocation3 + $0x5e0] sm:$0xf]
        %v2696 = vld [vmem:[#allocation3 + $0x600] sm:$0xf]
        %v2697 = vld [vmem:[#allocation3 + $0x620] sm:$0xf]
        %v2698 = vld [vmem:[#allocation3 + $0x640] sm:$0xf]
        %v2699 = vld [vmem:[#allocation3 + $0x660] sm:$0xf]
        %v2700 = vld [vmem:[#allocation3 + $0x680] sm:$0xf]
        %v2701 = vld [vmem:[#allocation3 + $0x6a0] sm:$0xf]
        %v2702 = vld [vmem:[#allocation3 + $0x6c0] sm:$0xf]
        %v2703 = vld [vmem:[#allocation3 + $0x6e0] sm:$0xf]
        %v2704 = vld [vmem:[#allocation3 + $0x700] sm:$0xf]
        %v2705 = vld [vmem:[#allocation3 + $0x720] sm:$0xf]
        %v2706 = vld [vmem:[#allocation3 + $0x740] sm:$0xf]
        %v2707 = vld [vmem:[#allocation3 + $0x760] sm:$0xf]
        %v2708 = vld [vmem:[#allocation3 + $0x780] sm:$0xf]
        %v2709 = vld [vmem:[#allocation3 + $0x7a0] sm:$0xf]
        %v2710 = vld [vmem:[#allocation3 + $0x7c0] sm:$0xf]
        %v2711 = vld [vmem:[#allocation3 + $0x7e0] sm:$0xf]
        %v2712 = vld [vmem:[#allocation3 + $0x800] sm:$0xf]
        %v2713 = vld [vmem:[#allocation3 + $0x820] sm:$0xf]
        %v2714 = vld [vmem:[#allocation3 + $0x840] sm:$0xf]
        %v2715 = vld [vmem:[#allocation3 + $0x860] sm:$0xf]
        %v2716 = vld [vmem:[#allocation3 + $0x880] sm:$0xf]
        %v2717 = vld [vmem:[#allocation3 + $0x8a0] sm:$0xf]
        %v2718 = vld [vmem:[#allocation3 + $0x8c0] sm:$0xf]
        %v2719 = vld [vmem:[#allocation3 + $0x8e0] sm:$0xf]
        %v2720 = vld [vmem:[#allocation3 + $0x900] sm:$0xf]
        %v2721 = vld [vmem:[#allocation3 + $0x920] sm:$0xf]
        %v2722 = vld [vmem:[#allocation3 + $0x940] sm:$0xf]
        %v2723 = vld [vmem:[#allocation3 + $0x960] sm:$0xf]
        %v2724 = vld [vmem:[#allocation3 + $0x980] sm:$0xf]
        %v2725 = vld [vmem:[#allocation3 + $0x9a0] sm:$0xf]
        %v2726 = vld [vmem:[#allocation3 + $0x9c0] sm:$0xf]
        %v2727 = vld [vmem:[#allocation3 + $0x9e0] sm:$0xf]
        %v2728 = vld [vmem:[#allocation2 + $0x280] sm:$0xff]
        %v2729 = vld [vmem:[#allocation2 + $0x288] sm:$0xff]
        %v2730 = vld [vmem:[#allocation2 + $0x290] sm:$0xff]
        %v2731 = vld [vmem:[#allocation2 + $0x298] sm:$0xff]
        %v2732 = vld [vmem:[#allocation2 + $0x2a0] sm:$0xff]
        %v2733 = vld [vmem:[#allocation3 + $0x4] sm:$0xff]
        %v2734 = vld [vmem:[#allocation3 + $0x24] sm:$0xff]
        %v2735 = vld [vmem:[#allocation3 + $0x44] sm:$0xff]
        %v2736 = vld [vmem:[#allocation3 + $0x64] sm:$0xff]
        %v2737 = vld [vmem:[#allocation3 + $0x84] sm:$0xff]
        %v2738 = vld [vmem:[#allocation3 + $0xa4] sm:$0xff]
        %v2739 = vld [vmem:[#allocation3 + $0xc4] sm:$0xff]
        %v2740 = vld [vmem:[#allocation3 + $0xe4] sm:$0xff]
        %v2741 = vld [vmem:[#allocation3 + $0x104] sm:$0xff]
        %v2742 = vld [vmem:[#allocation3 + $0x124] sm:$0xff]
        %v2743 = vld [vmem:[#allocation3 + $0x144] sm:$0xff]
        %v2744 = vld [vmem:[#allocation3 + $0x164] sm:$0xff]
        %v2745 = vld [vmem:[#allocation3 + $0x184] sm:$0xff]
        %v2746 = vld [vmem:[#allocation3 + $0x1a4] sm:$0xff]
        %v2747 = vld [vmem:[#allocation3 + $0x1c4] sm:$0xff]
        %v2748 = vld [vmem:[#allocation3 + $0x1e4] sm:$0xff]
        %v2749 = vld [vmem:[#allocation3 + $0x204] sm:$0xff]
        %v2750 = vld [vmem:[#allocation3 + $0x224] sm:$0xff]
        %v2751 = vld [vmem:[#allocation3 + $0x244] sm:$0xff]
        %v2752 = vld [vmem:[#allocation3 + $0x264] sm:$0xff]
        %v2753 = vld [vmem:[#allocation3 + $0x284] sm:$0xff]
        %v2754 = vld [vmem:[#allocation3 + $0x2a4] sm:$0xff]
        %v2755 = vld [vmem:[#allocation3 + $0x2c4] sm:$0xff]
        %v2756 = vld [vmem:[#allocation3 + $0x2e4] sm:$0xff]
        %v2757 = vld [vmem:[#allocation3 + $0x304] sm:$0xff]
        %v2758 = vld [vmem:[#allocation3 + $0x324] sm:$0xff]
        %v2759 = vld [vmem:[#allocation3 + $0x344] sm:$0xff]
        %v2760 = vld [vmem:[#allocation3 + $0x364] sm:$0xff]
        %v2761 = vld [vmem:[#allocation3 + $0x384] sm:$0xff]
        %v2762 = vld [vmem:[#allocation3 + $0x3a4] sm:$0xff]
        %v2763 = vld [vmem:[#allocation3 + $0x3c4] sm:$0xff]
        %v2764 = vld [vmem:[#allocation3 + $0x3e4] sm:$0xff]
        %v2765 = vld [vmem:[#allocation3 + $0x404] sm:$0xff]
        %v2766 = vld [vmem:[#allocation3 + $0x424] sm:$0xff]
        %v2767 = vld [vmem:[#allocation3 + $0x444] sm:$0xff]
        %v2768 = vld [vmem:[#allocation3 + $0x464] sm:$0xff]
        %v2769 = vld [vmem:[#allocation3 + $0x484] sm:$0xff]
        %v2770 = vld [vmem:[#allocation3 + $0x4a4] sm:$0xff]
        %v2771 = vld [vmem:[#allocation3 + $0x4c4] sm:$0xff]
        %v2772 = vld [vmem:[#allocation3 + $0x4e4] sm:$0xff]
        %v2773 = vld [vmem:[#allocation3 + $0x504] sm:$0xff]
        %v2774 = vld [vmem:[#allocation3 + $0x524] sm:$0xff]
        %v2775 = vld [vmem:[#allocation3 + $0x544] sm:$0xff]
        %v2776 = vld [vmem:[#allocation3 + $0x564] sm:$0xff]
        %v2777 = vld [vmem:[#allocation3 + $0x584] sm:$0xff]
        %v2778 = vld [vmem:[#allocation3 + $0x5a4] sm:$0xff]
        %v2779 = vld [vmem:[#allocation3 + $0x5c4] sm:$0xff]
        %v2780 = vld [vmem:[#allocation3 + $0x5e4] sm:$0xff]
        %v2781 = vld [vmem:[#allocation3 + $0x604] sm:$0xff]
        %v2782 = vld [vmem:[#allocation3 + $0x624] sm:$0xff]
        %v2783 = vld [vmem:[#allocation3 + $0x644] sm:$0xff]
        %v2784 = vld [vmem:[#allocation3 + $0x664] sm:$0xff]
        %v2785 = vld [vmem:[#allocation3 + $0x684] sm:$0xff]
        %v2786 = vld [vmem:[#allocation3 + $0x6a4] sm:$0xff]
        %v2787 = vld [vmem:[#allocation3 + $0x6c4] sm:$0xff]
        %v2788 = vld [vmem:[#allocation3 + $0x6e4] sm:$0xff]
        %v2789 = vld [vmem:[#allocation3 + $0x704] sm:$0xff]
        %v2790 = vld [vmem:[#allocation3 + $0x724] sm:$0xff]
        %v2791 = vld [vmem:[#allocation3 + $0x744] sm:$0xff]
        %v2792 = vld [vmem:[#allocation3 + $0x764] sm:$0xff]
        %v2793 = vld [vmem:[#allocation3 + $0x784] sm:$0xff]
        %v2794 = vld [vmem:[#allocation3 + $0x7a4] sm:$0xff]
        %v2795 = vld [vmem:[#allocation3 + $0x7c4] sm:$0xff]
        %v2796 = vld [vmem:[#allocation3 + $0x7e4] sm:$0xff]
        %v2797 = vld [vmem:[#allocation3 + $0x804] sm:$0xff]
        %v2798 = vld [vmem:[#allocation3 + $0x824] sm:$0xff]
        %v2799 = vld [vmem:[#allocation3 + $0x844] sm:$0xff]
        %v2800 = vld [vmem:[#allocation3 + $0x864] sm:$0xff]
        %v2801 = vld [vmem:[#allocation3 + $0x884] sm:$0xff]
        %v2802 = vld [vmem:[#allocation3 + $0x8a4] sm:$0xff]
        %v2803 = vld [vmem:[#allocation3 + $0x8c4] sm:$0xff]
        %v2804 = vld [vmem:[#allocation3 + $0x8e4] sm:$0xff]
        %v2805 = vld [vmem:[#allocation3 + $0x904] sm:$0xff]
        %v2806 = vld [vmem:[#allocation3 + $0x924] sm:$0xff]
        %v2807 = vld [vmem:[#allocation3 + $0x944] sm:$0xff]
        %v2808 = vld [vmem:[#allocation3 + $0x964] sm:$0xff]
        %v2809 = vld [vmem:[#allocation3 + $0x984] sm:$0xff]
        %v2810 = vld [vmem:[#allocation3 + $0x9a4] sm:$0xff]
        %v2811 = vld [vmem:[#allocation3 + $0x9c4] sm:$0xff]
        %v2812 = vld [vmem:[#allocation3 + $0x9e4] sm:$0xff]
        %v2893 = vunpack.c.l.b16 %v2733
        %v2894 = vunpack.c.h.b16 %v2733
        %v2895 = vunpack.c.l.b16 %v2734
        %v2896 = vunpack.c.h.b16 %v2734
        %v2897 = vunpack.c.l.b16 %v2735
        %v2898 = vunpack.c.h.b16 %v2735
        %v2899 = vunpack.c.l.b16 %v2736
        %v2900 = vunpack.c.h.b16 %v2736
        %v2901 = vunpack.c.l.b16 %v2737
        %v2902 = vunpack.c.h.b16 %v2737
        %v2903 = vunpack.c.l.b16 %v2738
        %v2904 = vunpack.c.h.b16 %v2738
        %v2905 = vunpack.c.l.b16 %v2739
        %v2906 = vunpack.c.h.b16 %v2739
        %v2907 = vunpack.c.l.b16 %v2740
        %v2908 = vunpack.c.h.b16 %v2740
        %v2909 = vunpack.c.l.b16 %v2741
        %v2910 = vunpack.c.h.b16 %v2741
        %v2911 = vunpack.c.l.b16 %v2742
        %v2912 = vunpack.c.h.b16 %v2742
        %v2913 = vunpack.c.l.b16 %v2743
        %v2914 = vunpack.c.h.b16 %v2743
        %v2915 = vunpack.c.l.b16 %v2744
        %v2916 = vunpack.c.h.b16 %v2744
        %v2917 = vunpack.c.l.b16 %v2745
        %v2918 = vunpack.c.h.b16 %v2745
        %v2919 = vunpack.c.l.b16 %v2746
        %v2920 = vunpack.c.h.b16 %v2746
        %v2921 = vunpack.c.l.b16 %v2747
        %v2922 = vunpack.c.h.b16 %v2747
        %v2923 = vunpack.c.l.b16 %v2748
        %v2924 = vunpack.c.h.b16 %v2748
        %v2925 = vunpack.c.l.b16 %v2749
        %v2926 = vunpack.c.h.b16 %v2749
        %v2927 = vunpack.c.l.b16 %v2750
        %v2928 = vunpack.c.h.b16 %v2750
        %v2929 = vunpack.c.l.b16 %v2751
        %v2930 = vunpack.c.h.b16 %v2751
        %v2931 = vunpack.c.l.b16 %v2752
        %v2932 = vunpack.c.h.b16 %v2752
        %v2933 = vunpack.c.l.b16 %v2753
        %v2934 = vunpack.c.h.b16 %v2753
        %v2935 = vunpack.c.l.b16 %v2754
        %v2936 = vunpack.c.h.b16 %v2754
        %v2937 = vunpack.c.l.b16 %v2755
        %v2938 = vunpack.c.h.b16 %v2755
        %v2939 = vunpack.c.l.b16 %v2756
        %v2940 = vunpack.c.h.b16 %v2756
        %v2941 = vunpack.c.l.b16 %v2757
        %v2942 = vunpack.c.h.b16 %v2757
        %v2943 = vunpack.c.l.b16 %v2758
        %v2944 = vunpack.c.h.b16 %v2758
        %v2945 = vunpack.c.l.b16 %v2759
        %v2946 = vunpack.c.h.b16 %v2759
        %v2947 = vunpack.c.l.b16 %v2760
        %v2948 = vunpack.c.h.b16 %v2760
        %v2949 = vunpack.c.l.b16 %v2761
        %v2950 = vunpack.c.h.b16 %v2761
        %v2951 = vunpack.c.l.b16 %v2762
        %v2952 = vunpack.c.h.b16 %v2762
        %v2953 = vunpack.c.l.b16 %v2763
        %v2954 = vunpack.c.h.b16 %v2763
        %v2955 = vunpack.c.l.b16 %v2764
        %v2956 = vunpack.c.h.b16 %v2764
        %v2957 = vunpack.c.l.b16 %v2765
        %v2958 = vunpack.c.h.b16 %v2765
        %v2959 = vunpack.c.l.b16 %v2766
        %v2960 = vunpack.c.h.b16 %v2766
        %v2961 = vunpack.c.l.b16 %v2767
        %v2962 = vunpack.c.h.b16 %v2767
        %v2963 = vunpack.c.l.b16 %v2768
        %v2964 = vunpack.c.h.b16 %v2768
        %v2965 = vunpack.c.l.b16 %v2769
        %v2966 = vunpack.c.h.b16 %v2769
        %v2967 = vunpack.c.l.b16 %v2770
        %v2968 = vunpack.c.h.b16 %v2770
        %v2969 = vunpack.c.l.b16 %v2771
        %v2970 = vunpack.c.h.b16 %v2771
        %v2971 = vunpack.c.l.b16 %v2772
        %v2972 = vunpack.c.h.b16 %v2772
        %v2973 = vunpack.c.l.b16 %v2773
        %v2974 = vunpack.c.h.b16 %v2773
        %v2975 = vunpack.c.l.b16 %v2774
        %v2976 = vunpack.c.h.b16 %v2774
        %v2977 = vunpack.c.l.b16 %v2775
        %v2978 = vunpack.c.h.b16 %v2775
        %v2979 = vunpack.c.l.b16 %v2776
        %v2980 = vunpack.c.h.b16 %v2776
        %v2981 = vunpack.c.l.b16 %v2777
        %v2982 = vunpack.c.h.b16 %v2777
        %v2983 = vunpack.c.l.b16 %v2778
        %v2984 = vunpack.c.h.b16 %v2778
        %v2985 = vunpack.c.l.b16 %v2779
        %v2986 = vunpack.c.h.b16 %v2779
        %v2987 = vunpack.c.l.b16 %v2780
        %v2988 = vunpack.c.h.b16 %v2780
        %v2989 = vunpack.c.l.b16 %v2781
        %v2990 = vunpack.c.h.b16 %v2781
        %v2991 = vunpack.c.l.b16 %v2782
        %v2992 = vunpack.c.h.b16 %v2782
        %v2993 = vunpack.c.l.b16 %v2783
        %v2994 = vunpack.c.h.b16 %v2783
        %v2995 = vunpack.c.l.b16 %v2784
        %v2996 = vunpack.c.h.b16 %v2784
        %v2997 = vunpack.c.l.b16 %v2785
        %v2998 = vunpack.c.h.b16 %v2785
        %v2999 = vunpack.c.l.b16 %v2786
        %v3000 = vunpack.c.h.b16 %v2786
        %v3001 = vunpack.c.l.b16 %v2787
        %v3002 = vunpack.c.h.b16 %v2787
        %v3003 = vunpack.c.l.b16 %v2788
        %v3004 = vunpack.c.h.b16 %v2788
        %v3005 = vunpack.c.l.b16 %v2789
        %v3006 = vunpack.c.h.b16 %v2789
        %v3007 = vunpack.c.l.b16 %v2790
        %v3008 = vunpack.c.h.b16 %v2790
        %v3009 = vunpack.c.l.b16 %v2791
        %v3010 = vunpack.c.h.b16 %v2791
        %v3011 = vunpack.c.l.b16 %v2792
        %v3012 = vunpack.c.h.b16 %v2792
        %v3013 = vunpack.c.l.b16 %v2793
        %v3014 = vunpack.c.h.b16 %v2793
        %v3015 = vunpack.c.l.b16 %v2794
        %v3016 = vunpack.c.h.b16 %v2794
        %v3017 = vunpack.c.l.b16 %v2795
        %v3018 = vunpack.c.h.b16 %v2795
        %v3019 = vunpack.c.l.b16 %v2796
        %v3020 = vunpack.c.h.b16 %v2796
        %v3021 = vunpack.c.l.b16 %v2797
        %v3022 = vunpack.c.h.b16 %v2797
        %v3023 = vunpack.c.l.b16 %v2798
        %v3024 = vunpack.c.h.b16 %v2798
        %v3025 = vunpack.c.l.b16 %v2799
        %v3026 = vunpack.c.h.b16 %v2799
        %v3027 = vunpack.c.l.b16 %v2800
        %v3028 = vunpack.c.h.b16 %v2800
        %v3029 = vunpack.c.l.b16 %v2801
        %v3030 = vunpack.c.h.b16 %v2801
        %v3031 = vunpack.c.l.b16 %v2802
        %v3032 = vunpack.c.h.b16 %v2802
        %v3033 = vunpack.c.l.b16 %v2803
        %v3034 = vunpack.c.h.b16 %v2803
        %v3035 = vunpack.c.l.b16 %v2804
        %v3036 = vunpack.c.h.b16 %v2804
        %v3037 = vunpack.c.l.b16 %v2805
        %v3038 = vunpack.c.h.b16 %v2805
        %v3039 = vunpack.c.l.b16 %v2806
        %v3040 = vunpack.c.h.b16 %v2806
        %v3041 = vunpack.c.l.b16 %v2807
        %v3042 = vunpack.c.h.b16 %v2807
        %v3043 = vunpack.c.l.b16 %v2808
        %v3044 = vunpack.c.h.b16 %v2808
        %v3045 = vunpack.c.l.b16 %v2809
        %v3046 = vunpack.c.h.b16 %v2809
        %v3047 = vunpack.c.l.b16 %v2810
        %v3048 = vunpack.c.h.b16 %v2810
        %v3049 = vunpack.c.l.b16 %v2811
        %v3050 = vunpack.c.h.b16 %v2811
        %v3051 = vunpack.c.l.b16 %v2812
        %v3052 = vunpack.c.h.b16 %v2812
        %v3053 = vpack.c.b16 %v2895, %v2893
        %v3054 = vpack.c.b16 %v2896, %v2894
        %v3055 = vpack.c.b16 %v2899, %v2897
        %v3056 = vpack.c.b16 %v2900, %v2898
        %v3057 = vpack.c.b16 %v2903, %v2901
        %v3058 = vpack.c.b16 %v2904, %v2902
        %v3059 = vpack.c.b16 %v2907, %v2905
        %v3060 = vpack.c.b16 %v2908, %v2906
        %v3061 = vpack.c.b16 %v2911, %v2909
        %v3062 = vpack.c.b16 %v2912, %v2910
        %v3063 = vpack.c.b16 %v2915, %v2913
        %v3064 = vpack.c.b16 %v2916, %v2914
        %v3065 = vpack.c.b16 %v2919, %v2917
        %v3066 = vpack.c.b16 %v2920, %v2918
        %v3067 = vpack.c.b16 %v2923, %v2921
        %v3068 = vpack.c.b16 %v2924, %v2922
        %v3069 = vpack.c.b16 %v2927, %v2925
        %v3070 = vpack.c.b16 %v2928, %v2926
        %v3071 = vpack.c.b16 %v2931, %v2929
        %v3072 = vpack.c.b16 %v2932, %v2930
        %v3073 = vpack.c.b16 %v2935, %v2933
        %v3074 = vpack.c.b16 %v2936, %v2934
        %v3075 = vpack.c.b16 %v2939, %v2937
        %v3076 = vpack.c.b16 %v2940, %v2938
        %v3077 = vpack.c.b16 %v2943, %v2941
        %v3078 = vpack.c.b16 %v2944, %v2942
        %v3079 = vpack.c.b16 %v2947, %v2945
        %v3080 = vpack.c.b16 %v2948, %v2946
        %v3081 = vpack.c.b16 %v2951, %v2949
        %v3082 = vpack.c.b16 %v2952, %v2950
        %v3083 = vpack.c.b16 %v2955, %v2953
        %v3084 = vpack.c.b16 %v2956, %v2954
        %v3085 = vpack.c.b16 %v2959, %v2957
        %v3086 = vpack.c.b16 %v2960, %v2958
        %v3087 = vpack.c.b16 %v2963, %v2961
        %v3088 = vpack.c.b16 %v2964, %v2962
        %v3089 = vpack.c.b16 %v2967, %v2965
        %v3090 = vpack.c.b16 %v2968, %v2966
        %v3091 = vpack.c.b16 %v2971, %v2969
        %v3092 = vpack.c.b16 %v2972, %v2970
        %v3093 = vpack.c.b16 %v2975, %v2973
        %v3094 = vpack.c.b16 %v2976, %v2974
        %v3095 = vpack.c.b16 %v2979, %v2977
        %v3096 = vpack.c.b16 %v2980, %v2978
        %v3097 = vpack.c.b16 %v2983, %v2981
        %v3098 = vpack.c.b16 %v2984, %v2982
        %v3099 = vpack.c.b16 %v2987, %v2985
        %v3100 = vpack.c.b16 %v2988, %v2986
        %v3101 = vpack.c.b16 %v2991, %v2989
        %v3102 = vpack.c.b16 %v2992, %v2990
        %v3103 = vpack.c.b16 %v2995, %v2993
        %v3104 = vpack.c.b16 %v2996, %v2994
        %v3105 = vpack.c.b16 %v2999, %v2997
        %v3106 = vpack.c.b16 %v3000, %v2998
        %v3107 = vpack.c.b16 %v3003, %v3001
        %v3108 = vpack.c.b16 %v3004, %v3002
        %v3109 = vpack.c.b16 %v3007, %v3005
        %v3110 = vpack.c.b16 %v3008, %v3006
        %v3111 = vpack.c.b16 %v3011, %v3009
        %v3112 = vpack.c.b16 %v3012, %v3010
        %v3113 = vpack.c.b16 %v3015, %v3013
        %v3114 = vpack.c.b16 %v3016, %v3014
        %v3115 = vpack.c.b16 %v3019, %v3017
        %v3116 = vpack.c.b16 %v3020, %v3018
        %v3117 = vpack.c.b16 %v3023, %v3021
        %v3118 = vpack.c.b16 %v3024, %v3022
        %v3119 = vpack.c.b16 %v3027, %v3025
        %v3120 = vpack.c.b16 %v3028, %v3026
        %v3121 = vpack.c.b16 %v3031, %v3029
        %v3122 = vpack.c.b16 %v3032, %v3030
        %v3123 = vpack.c.b16 %v3035, %v3033
        %v3124 = vpack.c.b16 %v3036, %v3034
        %v3125 = vpack.c.b16 %v3039, %v3037
        %v3126 = vpack.c.b16 %v3040, %v3038
        %v3127 = vpack.c.b16 %v3043, %v3041
        %v3128 = vpack.c.b16 %v3044, %v3042
        %v3129 = vpack.c.b16 %v3047, %v3045
        %v3130 = vpack.c.b16 %v3048, %v3046
        %v3131 = vpack.c.b16 %v3051, %v3049
        %v3132 = vpack.c.b16 %v3052, %v3050
        %3213 = vmatprep.subr.bf16.mxu0 %v3054
        %3214 = vmatpush1.bf16.msra.mxu0 %v3053
        %3215 = vmatprep.subr.bf16.mxu0 %v3056
        %3216 = vmatpush1.bf16.msra.mxu0 %v3055
        %3217 = vmatprep.subr.bf16.mxu0 %v3058
        %3218 = vmatpush1.bf16.msra.mxu0 %v3057
        %3219 = vmatprep.subr.bf16.mxu0 %v3060
        %3220 = vmatpush1.bf16.msra.mxu0 %v3059
        %3221 = vmatprep.subr.bf16.mxu0 %v3062
        %3222 = vmatpush1.bf16.msra.mxu0 %v3061
        %3223 = vmatprep.subr.bf16.mxu0 %v3064
        %3224 = vmatpush1.bf16.msra.mxu0 %v3063
        %3225 = vmatprep.subr.bf16.mxu0 %v3066
        %3226 = vmatpush1.bf16.msra.mxu0 %v3065
        %3227 = vmatprep.subr.bf16.mxu0 %v3068
        %3228 = vmatpush1.bf16.msra.mxu0 %v3067
        %3229 = vmatprep.subr.bf16.mxu0 %v3070
        %3230 = vmatpush1.bf16.msra.mxu0 %v3069
        %3231 = vmatprep.subr.bf16.mxu0 %v3072
        %3232 = vmatpush1.bf16.msra.mxu0 %v3071
        %3233 = vmatprep.subr.bf16.mxu0 %v3074
        %3234 = vmatpush1.bf16.msra.mxu0 %v3073
        %3235 = vmatprep.subr.bf16.mxu0 %v3076
        %3236 = vmatpush1.bf16.msra.mxu0 %v3075
        %3237 = vmatprep.subr.bf16.mxu0 %v3078
        %3238 = vmatpush1.bf16.msra.mxu0 %v3077
        %3239 = vmatprep.subr.bf16.mxu0 %v3080
        %3240 = vmatpush1.bf16.msra.mxu0 %v3079
        %3241 = vmatprep.subr.bf16.mxu0 %v3082
        %3242 = vmatpush1.bf16.msra.mxu0 %v3081
        %3243 = vmatprep.subr.bf16.mxu0 %v3084
        %3244 = vmatpush1.bf16.msra.mxu0 %v3083
        %3245 = vmatprep.mubr.bf16.mxu0 %v2574
        %3246 = vmatmul.mubr.bf16.gmra.mrb[0].mxu0 %v2573
        %v3247 = vpop.f32.mrb[0].mxu0
        %v3248 = vadd.f32 0.0, %v3247
        %v3249 = vpop.f32.mrb[0].mxu0
        %v3250 = vadd.f32 0.0, %v3249
        %v3251 = vpop.f32.mrb[0].mxu0
        %v3252 = vadd.f32 0.0, %v3251
        %v3253 = vpop.f32.mrb[0].mxu0
        %v3254 = vadd.f32 0.0, %v3253
        %3255 = vmatprep.mubr.bf16.mxu0 %v2579
        %3256 = vmatmul.mubr.bf16.gmra.mrb[0].mxu0 %v2578
        %v3257 = vpop.f32.mrb[0].mxu0
        %v3258 = vadd.f32 0.0, %v3257
        %v3259 = vpop.f32.mrb[0].mxu0
        %v3260 = vadd.f32 0.0, %v3259
        %v3261 = vpop.f32.mrb[0].mxu0
        %v3262 = vadd.f32 0.0, %v3261
        %v3263 = vpop.f32.mrb[0].mxu0
        %v3264 = vadd.f32 0.0, %v3263
        %3265 = vmatprep.mubr.bf16.mxu0 %v2584
        %3266 = vmatmul.mubr.bf16.gmra.mrb[0].mxu0 %v2583
        %v3267 = vpop.f32.mrb[0].mxu0
        %v3268 = vadd.f32 0.0, %v3267
        %v3269 = vpop.f32.mrb[0].mxu0
        %v3270 = vadd.f32 0.0, %v3269
        %v3271 = vpop.f32.mrb[0].mxu0
        %v3272 = vadd.f32 0.0, %v3271
        %v3273 = vpop.f32.mrb[0].mxu0
        %v3274 = vadd.f32 0.0, %v3273
        %3275 = vmatprep.mubr.bf16.mxu0 %v2589
        %3276 = vmatmul.mubr.bf16.gmra.mrb[0].mxu0 %v2588
        %v3277 = vpop.f32.mrb[0].mxu0
        %v3278 = vadd.f32 0.0, %v3277
        %v3279 = vpop.f32.mrb[0].mxu0
        %v3280 = vadd.f32 0.0, %v3279
        %v3281 = vpop.f32.mrb[0].mxu0
        %v3282 = vadd.f32 0.0, %v3281
        %v3283 = vpop.f32.mrb[0].mxu0
        %v3284 = vadd.f32 0.0, %v3283
        %3285 = vmatprep.mubr.bf16.mxu0 %v2594
        %3286 = vmatmul.mubr.bf16.gmra.mrb[0].mxu0 %v2593
        %v3287 = vpop.f32.mrb[0].mxu0
        %v3288 = vadd.f32 0.0, %v3287
        %v3289 = vpop.f32.mrb[0].mxu0
        %v3290 = vadd.f32 0.0, %v3289
        %v3291 = vpop.f32.mrb[0].mxu0
        %v3292 = vadd.f32 0.0, %v3291
        %v3293 = vpop.f32.mrb[0].mxu0
        %v3294 = vadd.f32 0.0, %v3293
        %3295 = vmatprep.mubr.bf16.mxu0 %v2599
        %3296 = vmatmul.mubr.bf16.gmra.mrb[0].mxu0 %v2598
        %v3297 = vpop.f32.mrb[0].mxu0
        %v3298 = vadd.f32 0.0, %v3297
        %v3299 = vpop.f32.mrb[0].mxu0
        %v3300 = vadd.f32 0.0, %v3299
        %v3301 = vpop.f32.mrb[0].mxu0
        %v3302 = vadd.f32 0.0, %v3301
        %v3303 = vpop.f32.mrb[0].mxu0
        %v3304 = vadd.f32 0.0, %v3303
        %3305 = vmatprep.mubr.bf16.mxu0 %v2604
        %3306 = vmatmul.mubr.bf16.gmra.mrb[0].mxu0 %v2603
        %v3307 = vpop.f32.mrb[0].mxu0
        %v3308 = vadd.f32 0.0, %v3307
        %v3309 = vpop.f32.mrb[0].mxu0
        %v3310 = vadd.f32 0.0, %v3309
        %v3311 = vpop.f32.mrb[0].mxu0
        %v3312 = vadd.f32 0.0, %v3311
        %v3313 = vpop.f32.mrb[0].mxu0
        %v3314 = vadd.f32 0.0, %v3313
        %3315 = vmatprep.mubr.bf16.mxu0 %v2609
        %3316 = vmatmul.mubr.bf16.gmra.mrb[0].mxu0 %v2608
        %v3317 = vpop.f32.mrb[0].mxu0
        %v3318 = vadd.f32 0.0, %v3317
        %v3319 = vpop.f32.mrb[0].mxu0
        %v3320 = vadd.f32 0.0, %v3319
        %v3321 = vpop.f32.mrb[0].mxu0
        %v3322 = vadd.f32 0.0, %v3321
        %v3323 = vpop.f32.mrb[0].mxu0
        %v3324 = vadd.f32 0.0, %v3323
        %3325 = vmatprep.mubr.bf16.mxu0 %v2614
        %3326 = vmatmul.mubr.bf16.gmra.mrb[0].mxu0 %v2613
        %v3327 = vpop.f32.mrb[0].mxu0
        %v3328 = vadd.f32 0.0, %v3327
        %v3329 = vpop.f32.mrb[0].mxu0
        %v3330 = vadd.f32 0.0, %v3329
        %v3331 = vpop.f32.mrb[0].mxu0
        %v3332 = vadd.f32 0.0, %v3331
        %v3333 = vpop.f32.mrb[0].mxu0
        %v3334 = vadd.f32 0.0, %v3333
        %3335 = vmatprep.mubr.bf16.mxu0 %v2619
        %3336 = vmatmul.mubr.bf16.gmra.mrb[0].mxu0 %v2618
        %v3337 = vpop.f32.mrb[0].mxu0
        %v3338 = vadd.f32 0.0, %v3337
        %v3339 = vpop.f32.mrb[0].mxu0
        %v3340 = vadd.f32 0.0, %v3339
        %v3341 = vpop.f32.mrb[0].mxu0
        %v3342 = vadd.f32 0.0, %v3341
        %v3343 = vpop.f32.mrb[0].mxu0
        %v3344 = vadd.f32 0.0, %v3343
        %3345 = vmatprep.mubr.bf16.mxu0 %v2624
        %3346 = vmatmul.mubr.bf16.gmra.mrb[0].mxu0 %v2623
        %v3347 = vpop.f32.mrb[0].mxu0
        %v3348 = vadd.f32 0.0, %v3347
        %v3349 = vpop.f32.mrb[0].mxu0
        %v3350 = vadd.f32 0.0, %v3349
        %v3351 = vpop.f32.mrb[0].mxu0
        %v3352 = vadd.f32 0.0, %v3351
        %v3353 = vpop.f32.mrb[0].mxu0
        %v3354 = vadd.f32 0.0, %v3353
        %3355 = vmatprep.mubr.bf16.mxu0 %v2629
        %3356 = vmatmul.mubr.bf16.gmra.mrb[0].mxu0 %v2628
        %v3357 = vpop.f32.mrb[0].mxu0
        %v3358 = vadd.f32 0.0, %v3357
        %v3359 = vpop.f32.mrb[0].mxu0
        %v3360 = vadd.f32 0.0, %v3359
        %v3361 = vpop.f32.mrb[0].mxu0
        %v3362 = vadd.f32 0.0, %v3361
        %v3363 = vpop.f32.mrb[0].mxu0
        %v3364 = vadd.f32 0.0, %v3363
        %3365 = vmatprep.mubr.bf16.mxu0 %v2634
        %3366 = vmatmul.mubr.bf16.gmra.mrb[0].mxu0 %v2633
        %v3367 = vpop.f32.mrb[0].mxu0
        %v3368 = vadd.f32 0.0, %v3367
        %v3369 = vpop.f32.mrb[0].mxu0
        %v3370 = vadd.f32 0.0, %v3369
        %v3371 = vpop.f32.mrb[0].mxu0
        %v3372 = vadd.f32 0.0, %v3371
        %v3373 = vpop.f32.mrb[0].mxu0
        %v3374 = vadd.f32 0.0, %v3373
        %3375 = vmatprep.mubr.bf16.mxu0 %v2639
        %3376 = vmatmul.mubr.bf16.gmra.mrb[0].mxu0 %v2638
        %v3377 = vpop.f32.mrb[0].mxu0
        %v3378 = vadd.f32 0.0, %v3377
        %v3379 = vpop.f32.mrb[0].mxu0
        %v3380 = vadd.f32 0.0, %v3379
        %v3381 = vpop.f32.mrb[0].mxu0
        %v3382 = vadd.f32 0.0, %v3381
        %v3383 = vpop.f32.mrb[0].mxu0
        %v3384 = vadd.f32 0.0, %v3383
        %3385 = vmatprep.mubr.bf16.mxu0 %v2644
        %3386 = vmatmul.mubr.bf16.gmra.mrb[0].mxu0 %v2643
        %v3387 = vpop.f32.mrb[0].mxu0
        %v3388 = vadd.f32 0.0, %v3387
        %v3389 = vpop.f32.mrb[0].mxu0
        %v3390 = vadd.f32 0.0, %v3389
        %v3391 = vpop.f32.mrb[0].mxu0
        %v3392 = vadd.f32 0.0, %v3391
        %v3393 = vpop.f32.mrb[0].mxu0
        %v3394 = vadd.f32 0.0, %v3393
        %3395 = vmatprep.mubr.bf16.mxu0 %v2729
        %3396 = vmatmul.mubr.bf16.gmra.mrb[0].mxu0 %v2728
        %v3397 = vpop.f32.mrb[0].mxu0
        %v3398 = vadd.f32 0.0, %v3397
        %v3399 = vpop.f32.mrb[0].mxu0
        %v3400 = vadd.f32 0.0, %v3399
        %v3401 = vpop.f32.mrb[0].mxu0
        %v3402 = vadd.f32 0.0, %v3401
        %v3403 = vpop.f32.mrb[0].mxu0
        %v3404 = vadd.f32 0.0, %v3403
        %3405 = vdwg.mxu0
        %3406 = vmatprep.subr.bf16.mxu0 %v3086
        %3407 = vmatpush1.bf16.msra.mxu0 %v3085
        %3408 = vmatprep.subr.bf16.mxu0 %v3088
        %3409 = vmatpush1.bf16.msra.mxu0 %v3087
        %3410 = vmatprep.subr.bf16.mxu0 %v3090
        %3411 = vmatpush1.bf16.msra.mxu0 %v3089
        %3412 = vmatprep.subr.bf16.mxu0 %v3092
        %3413 = vmatpush1.bf16.msra.mxu0 %v3091
        %3414 = vmatprep.subr.bf16.mxu0 %v3094
        %3415 = vmatpush1.bf16.msra.mxu0 %v3093
        %3416 = vmatprep.subr.bf16.mxu0 %v3096
        %3417 = vmatpush1.bf16.msra.mxu0 %v3095
        %3418 = vmatprep.subr.bf16.mxu0 %v3098
        %3419 = vmatpush1.bf16.msra.mxu0 %v3097
        %3420 = vmatprep.subr.bf16.mxu0 %v3100
        %3421 = vmatpush1.bf16.msra.mxu0 %v3099
        %3422 = vmatprep.subr.bf16.mxu0 %v3102
        %3423 = vmatpush1.bf16.msra.mxu0 %v3101
        %3424 = vmatprep.subr.bf16.mxu0 %v3104
        %3425 = vmatpush1.bf16.msra.mxu0 %v3103
        %3426 = vmatprep.subr.bf16.mxu0 %v3106
        %3427 = vmatpush1.bf16.msra.mxu0 %v3105
        %3428 = vmatprep.subr.bf16.mxu0 %v3108
        %3429 = vmatpush1.bf16.msra.mxu0 %v3107
        %3430 = vmatprep.subr.bf16.mxu0 %v3110
        %3431 = vmatpush1.bf16.msra.mxu0 %v3109
        %3432 = vmatprep.subr.bf16.mxu0 %v3112
        %3433 = vmatpush1.bf16.msra.mxu0 %v3111
        %3434 = vmatprep.subr.bf16.mxu0 %v3114
        %3435 = vmatpush1.bf16.msra.mxu0 %v3113
        %3436 = vmatprep.subr.bf16.mxu0 %v3116
        %3437 = vmatpush1.bf16.msra.mxu0 %v3115
        %3438 = vmatprep.mubr.bf16.mxu0 %v2576
        %3439 = vmatmul.mubr.bf16.gmra.mrb[0].mxu0 %v2575
        %v3440 = vpop.f32.mrb[0].mxu0
        %v3441 = vadd.f32 %v3248, %v3440
        %v3442 = vpop.f32.mrb[0].mxu0
        %v3443 = vadd.f32 %v3250, %v3442
        %v3444 = vpop.f32.mrb[0].mxu0
        %v3445 = vadd.f32 %v3252, %v3444
        %v3446 = vpop.f32.mrb[0].mxu0
        %v3447 = vadd.f32 %v3254, %v3446
        %3448 = vmatprep.mubr.bf16.mxu0 %v2581
        %3449 = vmatmul.mubr.bf16.gmra.mrb[0].mxu0 %v2580
        %v3450 = vpop.f32.mrb[0].mxu0
        %v3451 = vadd.f32 %v3258, %v3450
        %v3452 = vpop.f32.mrb[0].mxu0
        %v3453 = vadd.f32 %v3260, %v3452
        %v3454 = vpop.f32.mrb[0].mxu0
        %v3455 = vadd.f32 %v3262, %v3454
        %v3456 = vpop.f32.mrb[0].mxu0
        %v3457 = vadd.f32 %v3264, %v3456
        %3458 = vmatprep.mubr.bf16.mxu0 %v2586
        %3459 = vmatmul.mubr.bf16.gmra.mrb[0].mxu0 %v2585
        %v3460 = vpop.f32.mrb[0].mxu0
        %v3461 = vadd.f32 %v3268, %v3460
        %v3462 = vpop.f32.mrb[0].mxu0
        %v3463 = vadd.f32 %v3270, %v3462
        %v3464 = vpop.f32.mrb[0].mxu0
        %v3465 = vadd.f32 %v3272, %v3464
        %v3466 = vpop.f32.mrb[0].mxu0
        %v3467 = vadd.f32 %v3274, %v3466
        %3468 = vmatprep.mubr.bf16.mxu0 %v2591
        %3469 = vmatmul.mubr.bf16.gmra.mrb[0].mxu0 %v2590
        %v3470 = vpop.f32.mrb[0].mxu0
        %v3471 = vadd.f32 %v3278, %v3470
        %v3472 = vpop.f32.mrb[0].mxu0
        %v3473 = vadd.f32 %v3280, %v3472
        %v3474 = vpop.f32.mrb[0].mxu0
        %v3475 = vadd.f32 %v3282, %v3474
        %v3476 = vpop.f32.mrb[0].mxu0
        %v3477 = vadd.f32 %v3284, %v3476
        %3478 = vmatprep.mubr.bf16.mxu0 %v2596
        %3479 = vmatmul.mubr.bf16.gmra.mrb[0].mxu0 %v2595
        %v3480 = vpop.f32.mrb[0].mxu0
        %v3481 = vadd.f32 %v3288, %v3480
        %v3482 = vpop.f32.mrb[0].mxu0
        %v3483 = vadd.f32 %v3290, %v3482
        %v3484 = vpop.f32.mrb[0].mxu0
        %v3485 = vadd.f32 %v3292, %v3484
        %v3486 = vpop.f32.mrb[0].mxu0
        %v3487 = vadd.f32 %v3294, %v3486
        %3488 = vmatprep.mubr.bf16.mxu0 %v2601
        %3489 = vmatmul.mubr.bf16.gmra.mrb[0].mxu0 %v2600
        %v3490 = vpop.f32.mrb[0].mxu0
        %v3491 = vadd.f32 %v3298, %v3490
        %v3492 = vpop.f32.mrb[0].mxu0
        %v3493 = vadd.f32 %v3300, %v3492
        %v3494 = vpop.f32.mrb[0].mxu0
        %v3495 = vadd.f32 %v3302, %v3494
        %v3496 = vpop.f32.mrb[0].mxu0
        %v3497 = vadd.f32 %v3304, %v3496
        %3498 = vmatprep.mubr.bf16.mxu0 %v2606
        %3499 = vmatmul.mubr.bf16.gmra.mrb[0].mxu0 %v2605
        %v3500 = vpop.f32.mrb[0].mxu0
        %v3501 = vadd.f32 %v3308, %v3500
        %v3502 = vpop.f32.mrb[0].mxu0
        %v3503 = vadd.f32 %v3310, %v3502
        %v3504 = vpop.f32.mrb[0].mxu0
        %v3505 = vadd.f32 %v3312, %v3504
        %v3506 = vpop.f32.mrb[0].mxu0
        %v3507 = vadd.f32 %v3314, %v3506
        %3508 = vmatprep.mubr.bf16.mxu0 %v2611
        %3509 = vmatmul.mubr.bf16.gmra.mrb[0].mxu0 %v2610
        %v3510 = vpop.f32.mrb[0].mxu0
        %v3511 = vadd.f32 %v3318, %v3510
        %v3512 = vpop.f32.mrb[0].mxu0
        %v3513 = vadd.f32 %v3320, %v3512
        %v3514 = vpop.f32.mrb[0].mxu0
        %v3515 = vadd.f32 %v3322, %v3514
        %v3516 = vpop.f32.mrb[0].mxu0
        %v3517 = vadd.f32 %v3324, %v3516
        %3518 = vmatprep.mubr.bf16.mxu0 %v2616
        %3519 = vmatmul.mubr.bf16.gmra.mrb[0].mxu0 %v2615
        %v3520 = vpop.f32.mrb[0].mxu0
        %v3521 = vadd.f32 %v3328, %v3520
        %v3522 = vpop.f32.mrb[0].mxu0
        %v3523 = vadd.f32 %v3330, %v3522
        %v3524 = vpop.f32.mrb[0].mxu0
        %v3525 = vadd.f32 %v3332, %v3524
        %v3526 = vpop.f32.mrb[0].mxu0
        %v3527 = vadd.f32 %v3334, %v3526
        %3528 = vmatprep.mubr.bf16.mxu0 %v2621
        %3529 = vmatmul.mubr.bf16.gmra.mrb[0].mxu0 %v2620
        %v3530 = vpop.f32.mrb[0].mxu0
        %v3531 = vadd.f32 %v3338, %v3530
        %v3532 = vpop.f32.mrb[0].mxu0
        %v3533 = vadd.f32 %v3340, %v3532
        %v3534 = vpop.f32.mrb[0].mxu0
        %v3535 = vadd.f32 %v3342, %v3534
        %v3536 = vpop.f32.mrb[0].mxu0
        %v3537 = vadd.f32 %v3344, %v3536
        %3538 = vmatprep.mubr.bf16.mxu0 %v2626
        %3539 = vmatmul.mubr.bf16.gmra.mrb[0].mxu0 %v2625
        %v3540 = vpop.f32.mrb[0].mxu0
        %v3541 = vadd.f32 %v3348, %v3540
        %v3542 = vpop.f32.mrb[0].mxu0
        %v3543 = vadd.f32 %v3350, %v3542
        %v3544 = vpop.f32.mrb[0].mxu0
        %v3545 = vadd.f32 %v3352, %v3544
        %v3546 = vpop.f32.mrb[0].mxu0
        %v3547 = vadd.f32 %v3354, %v3546
        %3548 = vmatprep.mubr.bf16.mxu0 %v2631
        %3549 = vmatmul.mubr.bf16.gmra.mrb[0].mxu0 %v2630
        %v3550 = vpop.f32.mrb[0].mxu0
        %v3551 = vadd.f32 %v3358, %v3550
        %v3552 = vpop.f32.mrb[0].mxu0
        %v3553 = vadd.f32 %v3360, %v3552
        %v3554 = vpop.f32.mrb[0].mxu0
        %v3555 = vadd.f32 %v3362, %v3554
        %v3556 = vpop.f32.mrb[0].mxu0
        %v3557 = vadd.f32 %v3364, %v3556
        %3558 = vmatprep.mubr.bf16.mxu0 %v2636
        %3559 = vmatmul.mubr.bf16.gmra.mrb[0].mxu0 %v2635
        %v3560 = vpop.f32.mrb[0].mxu0
        %v3561 = vadd.f32 %v3368, %v3560
        %v3562 = vpop.f32.mrb[0].mxu0
        %v3563 = vadd.f32 %v3370, %v3562
        %v3564 = vpop.f32.mrb[0].mxu0
        %v3565 = vadd.f32 %v3372, %v3564
        %v3566 = vpop.f32.mrb[0].mxu0
        %v3567 = vadd.f32 %v3374, %v3566
        %3568 = vmatprep.mubr.bf16.mxu0 %v2641
        %3569 = vmatmul.mubr.bf16.gmra.mrb[0].mxu0 %v2640
        %v3570 = vpop.f32.mrb[0].mxu0
        %v3571 = vadd.f32 %v3378, %v3570
        %v3572 = vpop.f32.mrb[0].mxu0
        %v3573 = vadd.f32 %v3380, %v3572
        %v3574 = vpop.f32.mrb[0].mxu0
        %v3575 = vadd.f32 %v3382, %v3574
        %v3576 = vpop.f32.mrb[0].mxu0
        %v3577 = vadd.f32 %v3384, %v3576
        %3578 = vmatprep.mubr.bf16.mxu0 %v2646
        %3579 = vmatmul.mubr.bf16.gmra.mrb[0].mxu0 %v2645
        %v3580 = vpop.f32.mrb[0].mxu0
        %v3581 = vadd.f32 %v3388, %v3580
        %v3582 = vpop.f32.mrb[0].mxu0
        %v3583 = vadd.f32 %v3390, %v3582
        %v3584 = vpop.f32.mrb[0].mxu0
        %v3585 = vadd.f32 %v3392, %v3584
        %v3586 = vpop.f32.mrb[0].mxu0
        %v3587 = vadd.f32 %v3394, %v3586
        %3588 = vmatprep.mubr.bf16.mxu0 %v2731
        %3589 = vmatmul.mubr.bf16.gmra.mrb[0].mxu0 %v2730
        %v3590 = vpop.f32.mrb[0].mxu0
        %v3591 = vadd.f32 %v3398, %v3590
        %v3592 = vpop.f32.mrb[0].mxu0
        %v3593 = vadd.f32 %v3400, %v3592
        %v3594 = vpop.f32.mrb[0].mxu0
        %v3595 = vadd.f32 %v3402, %v3594
        %v3596 = vpop.f32.mrb[0].mxu0
        %v3597 = vadd.f32 %v3404, %v3596
        %3598 = vdwg.mxu0
        %3599 = vmatprep.subr.bf16.mxu0 %v3118
        %3600 = vmatpush1.bf16.msra.mxu0 %v3117
        %3601 = vmatprep.subr.bf16.mxu0 %v3120
        %3602 = vmatpush1.bf16.msra.mxu0 %v3119
        %3603 = vmatprep.subr.bf16.mxu0 %v3122
        %3604 = vmatpush1.bf16.msra.mxu0 %v3121
        %3605 = vmatprep.subr.bf16.mxu0 %v3124
        %3606 = vmatpush1.bf16.msra.mxu0 %v3123
        %3607 = vmatprep.subr.bf16.mxu0 %v3126
        %3608 = vmatpush1.bf16.msra.mxu0 %v3125
        %3609 = vmatprep.subr.bf16.mxu0 %v3128
        %3610 = vmatpush1.bf16.msra.mxu0 %v3127
        %3611 = vmatprep.subr.bf16.mxu0 %v3130
        %3612 = vmatpush1.bf16.msra.mxu0 %v3129
        %3613 = vmatprep.subr.bf16.mxu0 %v3132
        %3614 = vmatpush1.bf16.msra.mxu0 %v3131
        %3615 = vmatprep.subr.bf16.mxu0 0
        %3616 = vmatpush1.bf16.msra.mxu0 0
        %3617 = vmatprep.subr.bf16.mxu0 0
        %3618 = vmatpush1.bf16.msra.mxu0 0
        %3619 = vmatprep.subr.bf16.mxu0 0
        %3620 = vmatpush1.bf16.msra.mxu0 0
        %3621 = vmatprep.subr.bf16.mxu0 0
        %3622 = vmatpush1.bf16.msra.mxu0 0
        %3623 = vmatprep.subr.bf16.mxu0 0
        %3624 = vmatpush1.bf16.msra.mxu0 0
        %3625 = vmatprep.subr.bf16.mxu0 0
        %3626 = vmatpush1.bf16.msra.mxu0 0
        %3627 = vmatprep.subr.bf16.mxu0 0
        %3628 = vmatpush1.bf16.msra.mxu0 0
        %3629 = vmatprep.subr.bf16.mxu0 0
        %3630 = vmatpush1.bf16.msra.mxu0 0
        %3631 = vmatprep.mubr.bf16.mxu0 0
        %3632 = vmatmul.mubr.bf16.gmra.mrb[0].mxu0 %v2577
        %v3633 = vpop.f32.mrb[0].mxu0
        %v3634 = vadd.f32 %v3441, %v3633
        %v3635 = vpop.f32.mrb[0].mxu0
        %v3636 = vadd.f32 %v3443, %v3635
        %v3637 = vpop.f32.mrb[0].mxu0
        %v3638 = vadd.f32 %v3445, %v3637
        %v3639 = vpop.f32.mrb[0].mxu0
        %v3640 = vadd.f32 %v3447, %v3639
        %3641 = vmatprep.mubr.bf16.mxu0 0
        %3642 = vmatmul.mubr.bf16.gmra.mrb[0].mxu0 %v2582
        %v3643 = vpop.f32.mrb[0].mxu0
        %v3644 = vadd.f32 %v3451, %v3643
        %v3645 = vpop.f32.mrb[0].mxu0
        %v3646 = vadd.f32 %v3453, %v3645
        %v3647 = vpop.f32.mrb[0].mxu0
        %v3648 = vadd.f32 %v3455, %v3647
        %v3649 = vpop.f32.mrb[0].mxu0
        %v3650 = vadd.f32 %v3457, %v3649
        %3651 = vmatprep.mubr.bf16.mxu0 0
        %3652 = vmatmul.mubr.bf16.gmra.mrb[0].mxu0 %v2587
        %v3653 = vpop.f32.mrb[0].mxu0
        %v3654 = vadd.f32 %v3461, %v3653
        %v3655 = vpop.f32.mrb[0].mxu0
        %v3656 = vadd.f32 %v3463, %v3655
        %v3657 = vpop.f32.mrb[0].mxu0
        %v3658 = vadd.f32 %v3465, %v3657
        %v3659 = vpop.f32.mrb[0].mxu0
        %v3660 = vadd.f32 %v3467, %v3659
        %3661 = vmatprep.mubr.bf16.mxu0 0
        %3662 = vmatmul.mubr.bf16.gmra.mrb[0].mxu0 %v2592
        %v3663 = vpop.f32.mrb[0].mxu0
        %v3664 = vadd.f32 %v3471, %v3663
        %v3665 = vpop.f32.mrb[0].mxu0
        %v3666 = vadd.f32 %v3473, %v3665
        %v3667 = vpop.f32.mrb[0].mxu0
        %v3668 = vadd.f32 %v3475, %v3667
        %v3669 = vpop.f32.mrb[0].mxu0
        %v3670 = vadd.f32 %v3477, %v3669
        %3671 = vmatprep.mubr.bf16.mxu0 0
        %3672 = vmatmul.mubr.bf16.gmra.mrb[0].mxu0 %v2597
        %v3673 = vpop.f32.mrb[0].mxu0
        %v3674 = vadd.f32 %v3481, %v3673
        %v3675 = vpop.f32.mrb[0].mxu0
        %v3676 = vadd.f32 %v3483, %v3675
        %v3677 = vpop.f32.mrb[0].mxu0
        %v3678 = vadd.f32 %v3485, %v3677
        %v3679 = vpop.f32.mrb[0].mxu0
        %v3680 = vadd.f32 %v3487, %v3679
        %3681 = vmatprep.mubr.bf16.mxu0 0
        %3682 = vmatmul.mubr.bf16.gmra.mrb[0].mxu0 %v2602
        %v3683 = vpop.f32.mrb[0].mxu0
        %v3684 = vadd.f32 %v3491, %v3683
        %v3685 = vpop.f32.mrb[0].mxu0
        %v3686 = vadd.f32 %v3493, %v3685
        %v3687 = vpop.f32.mrb[0].mxu0
        %v3688 = vadd.f32 %v3495, %v3687
        %v3689 = vpop.f32.mrb[0].mxu0
        %v3690 = vadd.f32 %v3497, %v3689
        %3691 = vmatprep.mubr.bf16.mxu0 0
        %3692 = vmatmul.mubr.bf16.gmra.mrb[0].mxu0 %v2607
        %v3693 = vpop.f32.mrb[0].mxu0
        %v3694 = vadd.f32 %v3501, %v3693
        %v3695 = vpop.f32.mrb[0].mxu0
        %v3696 = vadd.f32 %v3503, %v3695
        %v3697 = vpop.f32.mrb[0].mxu0
        %v3698 = vadd.f32 %v3505, %v3697
        %v3699 = vpop.f32.mrb[0].mxu0
        %v3700 = vadd.f32 %v3507, %v3699
        %3701 = vmatprep.mubr.bf16.mxu0 0
        %3702 = vmatmul.mubr.bf16.gmra.mrb[0].mxu0 %v2612
        %v3703 = vpop.f32.mrb[0].mxu0
        %v3704 = vadd.f32 %v3511, %v3703
        %v3705 = vpop.f32.mrb[0].mxu0
        %v3706 = vadd.f32 %v3513, %v3705
        %v3707 = vpop.f32.mrb[0].mxu0
        %v3708 = vadd.f32 %v3515, %v3707
        %v3709 = vpop.f32.mrb[0].mxu0
        %v3710 = vadd.f32 %v3517, %v3709
        %3711 = vmatprep.mubr.bf16.mxu0 0
        %3712 = vmatmul.mubr.bf16.gmra.mrb[0].mxu0 %v2617
        %v3713 = vpop.f32.mrb[0].mxu0
        %v3714 = vadd.f32 %v3521, %v3713
        %v3715 = vpop.f32.mrb[0].mxu0
        %v3716 = vadd.f32 %v3523, %v3715
        %v3717 = vpop.f32.mrb[0].mxu0
        %v3718 = vadd.f32 %v3525, %v3717
        %v3719 = vpop.f32.mrb[0].mxu0
        %v3720 = vadd.f32 %v3527, %v3719
        %3721 = vmatprep.mubr.bf16.mxu0 0
        %3722 = vmatmul.mubr.bf16.gmra.mrb[0].mxu0 %v2622
        %v3723 = vpop.f32.mrb[0].mxu0
        %v3724 = vadd.f32 %v3531, %v3723
        %v3725 = vpop.f32.mrb[0].mxu0
        %v3726 = vadd.f32 %v3533, %v3725
        %v3727 = vpop.f32.mrb[0].mxu0
        %v3728 = vadd.f32 %v3535, %v3727
        %v3729 = vpop.f32.mrb[0].mxu0
        %v3730 = vadd.f32 %v3537, %v3729
        %3731 = vmatprep.mubr.bf16.mxu0 0
        %3732 = vmatmul.mubr.bf16.gmra.mrb[0].mxu0 %v2627
        %v3733 = vpop.f32.mrb[0].mxu0
        %v3734 = vadd.f32 %v3541, %v3733
        %v3735 = vpop.f32.mrb[0].mxu0
        %v3736 = vadd.f32 %v3543, %v3735
        %v3737 = vpop.f32.mrb[0].mxu0
        %v3738 = vadd.f32 %v3545, %v3737
        %v3739 = vpop.f32.mrb[0].mxu0
        %v3740 = vadd.f32 %v3547, %v3739
        %3741 = vmatprep.mubr.bf16.mxu0 0
        %3742 = vmatmul.mubr.bf16.gmra.mrb[0].mxu0 %v2632
        %v3743 = vpop.f32.mrb[0].mxu0
        %v3744 = vadd.f32 %v3551, %v3743
        %v3745 = vpop.f32.mrb[0].mxu0
        %v3746 = vadd.f32 %v3553, %v3745
        %v3747 = vpop.f32.mrb[0].mxu0
        %v3748 = vadd.f32 %v3555, %v3747
        %v3749 = vpop.f32.mrb[0].mxu0
        %v3750 = vadd.f32 %v3557, %v3749
        %3751 = vmatprep.mubr.bf16.mxu0 0
        %3752 = vmatmul.mubr.bf16.gmra.mrb[0].mxu0 %v2637
        %v3753 = vpop.f32.mrb[0].mxu0
        %v3754 = vadd.f32 %v3561, %v3753
        %v3755 = vpop.f32.mrb[0].mxu0
        %v3756 = vadd.f32 %v3563, %v3755
        %v3757 = vpop.f32.mrb[0].mxu0
        %v3758 = vadd.f32 %v3565, %v3757
        %v3759 = vpop.f32.mrb[0].mxu0
        %v3760 = vadd.f32 %v3567, %v3759
        %3761 = vmatprep.mubr.bf16.mxu0 0
        %3762 = vmatmul.mubr.bf16.gmra.mrb[0].mxu0 %v2642
        %v3763 = vpop.f32.mrb[0].mxu0
        %v3764 = vadd.f32 %v3571, %v3763
        %v3765 = vpop.f32.mrb[0].mxu0
        %v3766 = vadd.f32 %v3573, %v3765
        %v3767 = vpop.f32.mrb[0].mxu0
        %v3768 = vadd.f32 %v3575, %v3767
        %v3769 = vpop.f32.mrb[0].mxu0
        %v3770 = vadd.f32 %v3577, %v3769
        %3771 = vmatprep.mubr.bf16.mxu0 0
        %3772 = vmatmul.mubr.bf16.gmra.mrb[0].mxu0 %v2647
        %v3773 = vpop.f32.mrb[0].mxu0
        %v3774 = vadd.f32 %v3581, %v3773
        %v3775 = vpop.f32.mrb[0].mxu0
        %v3776 = vadd.f32 %v3583, %v3775
        %v3777 = vpop.f32.mrb[0].mxu0
        %v3778 = vadd.f32 %v3585, %v3777
        %v3779 = vpop.f32.mrb[0].mxu0
        %v3780 = vadd.f32 %v3587, %v3779
        %3781 = vmatprep.mubr.bf16.mxu0 0
        %3782 = vmatmul.mubr.bf16.gmra.mrb[0].mxu0 %v2732
        %v3783 = vpop.f32.mrb[0].mxu0
        %v3784 = vadd.f32 %v3591, %v3783
        %v3785 = vpop.f32.mrb[0].mxu0
        %v3786 = vadd.f32 %v3593, %v3785
        %v3787 = vpop.f32.mrb[0].mxu0
        %v3788 = vadd.f32 %v3595, %v3787
        %v3789 = vpop.f32.mrb[0].mxu0
        %v3790 = vadd.f32 %v3597, %v3789
        %3791 = vdwg.mxu0
        %v3792 = vadd.f32 %v3634, 0.0
        %v3793 = vadd.f32 %v3638, 0.0
        %v3794 = vadd.f32 %v3644, 0.0
        %v3795 = vadd.f32 %v3648, 0.0
        %v3796 = vadd.f32 %v3654, 0.0
        %v3797 = vadd.f32 %v3658, 0.0
        %v3798 = vadd.f32 %v3664, 0.0
        %v3799 = vadd.f32 %v3668, 0.0
        %v3800 = vadd.f32 %v3674, 0.0
        %v3801 = vadd.f32 %v3678, 0.0
        %v3802 = vadd.f32 %v3684, 0.0
        %v3803 = vadd.f32 %v3688, 0.0
        %v3804 = vadd.f32 %v3694, 0.0
        %v3805 = vadd.f32 %v3698, 0.0
        %v3806 = vadd.f32 %v3704, 0.0
        %v3807 = vadd.f32 %v3708, 0.0
        %v3808 = vadd.f32 %v3714, 0.0
        %v3809 = vadd.f32 %v3718, 0.0
        %v3810 = vadd.f32 %v3724, 0.0
        %v3811 = vadd.f32 %v3728, 0.0
        %v3812 = vadd.f32 %v3734, 0.0
        %v3813 = vadd.f32 %v3738, 0.0
        %v3814 = vadd.f32 %v3744, 0.0
        %v3815 = vadd.f32 %v3748, 0.0
        %v3816 = vadd.f32 %v3754, 0.0
        %v3817 = vadd.f32 %v3758, 0.0
        %v3818 = vadd.f32 %v3764, 0.0
        %v3819 = vadd.f32 %v3768, 0.0
        %v3820 = vadd.f32 %v3774, 0.0
        %v3821 = vadd.f32 %v3778, 0.0
        %v3822 = vadd.f32 %v3784, 0.0
        %v3823 = vadd.f32 %v3788, 0.0
        %v3904 = vunpack.c.l.b16 %v2648
        %v3905 = vunpack.c.l.b16 %v2649
        %v3906 = vunpack.c.l.b16 %v2650
        %v3907 = vunpack.c.l.b16 %v2651
        %v3908 = vunpack.c.l.b16 %v2652
        %v3909 = vunpack.c.l.b16 %v2653
        %v3910 = vunpack.c.l.b16 %v2654
        %v3911 = vunpack.c.l.b16 %v2655
        %v3912 = vunpack.c.l.b16 %v2656
        %v3913 = vunpack.c.l.b16 %v2657
        %v3914 = vunpack.c.l.b16 %v2658
        %v3915 = vunpack.c.l.b16 %v2659
        %v3916 = vunpack.c.l.b16 %v2660
        %v3917 = vunpack.c.l.b16 %v2661
        %v3918 = vunpack.c.l.b16 %v2662
        %v3919 = vunpack.c.l.b16 %v2663
        %v3920 = vunpack.c.l.b16 %v2664
        %v3921 = vunpack.c.l.b16 %v2665
        %v3922 = vunpack.c.l.b16 %v2666
        %v3923 = vunpack.c.l.b16 %v2667
        %v3924 = vunpack.c.l.b16 %v2668
        %v3925 = vunpack.c.l.b16 %v2669
        %v3926 = vunpack.c.l.b16 %v2670
        %v3927 = vunpack.c.l.b16 %v2671
        %v3928 = vunpack.c.l.b16 %v2672
        %v3929 = vunpack.c.l.b16 %v2673
        %v3930 = vunpack.c.l.b16 %v2674
        %v3931 = vunpack.c.l.b16 %v2675
        %v3932 = vunpack.c.l.b16 %v2676
        %v3933 = vunpack.c.l.b16 %v2677
        %v3934 = vunpack.c.l.b16 %v2678
        %v3935 = vunpack.c.l.b16 %v2679
        %v3936 = vunpack.c.l.b16 %v2680
        %v3937 = vunpack.c.l.b16 %v2681
        %v3938 = vunpack.c.l.b16 %v2682
        %v3939 = vunpack.c.l.b16 %v2683
        %v3940 = vunpack.c.l.b16 %v2684
        %v3941 = vunpack.c.l.b16 %v2685
        %v3942 = vunpack.c.l.b16 %v2686
        %v3943 = vunpack.c.l.b16 %v2687
        %v3944 = vunpack.c.l.b16 %v2688
        %v3945 = vunpack.c.l.b16 %v2689
        %v3946 = vunpack.c.l.b16 %v2690
        %v3947 = vunpack.c.l.b16 %v2691
        %v3948 = vunpack.c.l.b16 %v2692
        %v3949 = vunpack.c.l.b16 %v2693
        %v3950 = vunpack.c.l.b16 %v2694
        %v3951 = vunpack.c.l.b16 %v2695
        %v3952 = vunpack.c.l.b16 %v2696
        %v3953 = vunpack.c.l.b16 %v2697
        %v3954 = vunpack.c.l.b16 %v2698
        %v3955 = vunpack.c.l.b16 %v2699
        %v3956 = vunpack.c.l.b16 %v2700
        %v3957 = vunpack.c.l.b16 %v2701
        %v3958 = vunpack.c.l.b16 %v2702
        %v3959 = vunpack.c.l.b16 %v2703
        %v3960 = vunpack.c.l.b16 %v2704
        %v3961 = vunpack.c.l.b16 %v2705
        %v3962 = vunpack.c.l.b16 %v2706
        %v3963 = vunpack.c.l.b16 %v2707
        %v3964 = vunpack.c.l.b16 %v2708
        %v3965 = vunpack.c.l.b16 %v2709
        %v3966 = vunpack.c.l.b16 %v2710
        %v3967 = vunpack.c.l.b16 %v2711
        %v3968 = vunpack.c.l.b16 %v2712
        %v3969 = vunpack.c.l.b16 %v2713
        %v3970 = vunpack.c.l.b16 %v2714
        %v3971 = vunpack.c.l.b16 %v2715
        %v3972 = vunpack.c.l.b16 %v2716
        %v3973 = vunpack.c.l.b16 %v2717
        %v3974 = vunpack.c.l.b16 %v2718
        %v3975 = vunpack.c.l.b16 %v2719
        %v3976 = vunpack.c.l.b16 %v2720
        %v3977 = vunpack.c.l.b16 %v2721
        %v3978 = vunpack.c.l.b16 %v2722
        %v3979 = vunpack.c.l.b16 %v2723
        %v3980 = vunpack.c.l.b16 %v2724
        %v3981 = vunpack.c.l.b16 %v2725
        %v3982 = vunpack.c.l.b16 %v2726
        %v3983 = vunpack.c.l.b16 %v2727
        %v3984 = vpack.c.b16 %v3905, %v3904
        %v3985 = vpack.c.b16 %v3907, %v3906
        %v3986 = vpack.c.b16 %v3909, %v3908
        %v3987 = vpack.c.b16 %v3911, %v3910
        %v3988 = vpack.c.b16 %v3913, %v3912
        %v3989 = vpack.c.b16 %v3915, %v3914
        %v3990 = vpack.c.b16 %v3917, %v3916
        %v3991 = vpack.c.b16 %v3919, %v3918
        %v3992 = vpack.c.b16 %v3921, %v3920
        %v3993 = vpack.c.b16 %v3923, %v3922
        %v3994 = vpack.c.b16 %v3925, %v3924
        %v3995 = vpack.c.b16 %v3927, %v3926
        %v3996 = vpack.c.b16 %v3929, %v3928
        %v3997 = vpack.c.b16 %v3931, %v3930
        %v3998 = vpack.c.b16 %v3933, %v3932
        %v3999 = vpack.c.b16 %v3935, %v3934
        %v4000 = vpack.c.b16 %v3937, %v3936
        %v4001 = vpack.c.b16 %v3939, %v3938
        %v4002 = vpack.c.b16 %v3941, %v3940
        %v4003 = vpack.c.b16 %v3943, %v3942
        %v4004 = vpack.c.b16 %v3945, %v3944
        %v4005 = vpack.c.b16 %v3947, %v3946
        %v4006 = vpack.c.b16 %v3949, %v3948
        %v4007 = vpack.c.b16 %v3951, %v3950
        %v4008 = vpack.c.b16 %v3953, %v3952
        %v4009 = vpack.c.b16 %v3955, %v3954
        %v4010 = vpack.c.b16 %v3957, %v3956
        %v4011 = vpack.c.b16 %v3959, %v3958
        %v4012 = vpack.c.b16 %v3961, %v3960
        %v4013 = vpack.c.b16 %v3963, %v3962
        %v4014 = vpack.c.b16 %v3965, %v3964
        %v4015 = vpack.c.b16 %v3967, %v3966
        %v4016 = vpack.c.b16 %v3969, %v3968
        %v4017 = vpack.c.b16 %v3971, %v3970
        %v4018 = vpack.c.b16 %v3973, %v3972
        %v4019 = vpack.c.b16 %v3975, %v3974
        %v4020 = vpack.c.b16 %v3977, %v3976
        %v4021 = vpack.c.b16 %v3979, %v3978
        %v4022 = vpack.c.b16 %v3981, %v3980
        %v4023 = vpack.c.b16 %v3983, %v3982
        %4064 = vmatprep.subr.bf16.mxu0 0
        %4065 = vmatpush1.bf16.msra.mxu0 %v3984
        %4066 = vmatprep.subr.bf16.mxu0 0
        %4067 = vmatpush1.bf16.msra.mxu0 %v3985
        %4068 = vmatprep.subr.bf16.mxu0 0
        %4069 = vmatpush1.bf16.msra.mxu0 %v3986
        %4070 = vmatprep.subr.bf16.mxu0 0
        %4071 = vmatpush1.bf16.msra.mxu0 %v3987
        %4072 = vmatprep.subr.bf16.mxu0 0
        %4073 = vmatpush1.bf16.msra.mxu0 %v3988
        %4074 = vmatprep.subr.bf16.mxu0 0
        %4075 = vmatpush1.bf16.msra.mxu0 %v3989
        %4076 = vmatprep.subr.bf16.mxu0 0
        %4077 = vmatpush1.bf16.msra.mxu0 %v3990
        %4078 = vmatprep.subr.bf16.mxu0 0
        %4079 = vmatpush1.bf16.msra.mxu0 %v3991
        %4080 = vmatprep.subr.bf16.mxu0 0
        %4081 = vmatpush1.bf16.msra.mxu0 %v3992
        %4082 = vmatprep.subr.bf16.mxu0 0
        %4083 = vmatpush1.bf16.msra.mxu0 %v3993
        %4084 = vmatprep.subr.bf16.mxu0 0
        %4085 = vmatpush1.bf16.msra.mxu0 %v3994
        %4086 = vmatprep.subr.bf16.mxu0 0
        %4087 = vmatpush1.bf16.msra.mxu0 %v3995
        %4088 = vmatprep.subr.bf16.mxu0 0
        %4089 = vmatpush1.bf16.msra.mxu0 %v3996
        %4090 = vmatprep.subr.bf16.mxu0 0
        %4091 = vmatpush1.bf16.msra.mxu0 %v3997
        %4092 = vmatprep.subr.bf16.mxu0 0
        %4093 = vmatpush1.bf16.msra.mxu0 %v3998
        %4094 = vmatprep.subr.bf16.mxu0 0
        %4095 = vmatpush1.bf16.msra.mxu0 %v3999
        %4096 = vmatprep.mubr.bf16.mxu0 %v2569
        %4097 = vmatmul.mubr.bf16.gmra.mrb[0].mxu0 %v2568
        %v4098 = vpop.f32.mrb[0].mxu0
        %v4099 = vadd.f32 %v3636, %v4098
        %v4100 = vpop.f32.mrb[0].mxu0
        %v4101 = vpop.f32.mrb[0].mxu0
        %v4102 = vadd.f32 %v3640, %v4101
        %v4103 = vpop.f32.mrb[0].mxu0
        %4104 = vmatprep.mubr.bf16.mxu0 %v2574
        %4105 = vmatmul.mubr.bf16.gmra.mrb[0].mxu0 %v2573
        %v4106 = vpop.f32.mrb[0].mxu0
        %v4107 = vadd.f32 %v3646, %v4106
        %v4108 = vpop.f32.mrb[0].mxu0
        %v4109 = vpop.f32.mrb[0].mxu0
        %v4110 = vadd.f32 %v3650, %v4109
        %v4111 = vpop.f32.mrb[0].mxu0
        %4112 = vmatprep.mubr.bf16.mxu0 %v2579
        %4113 = vmatmul.mubr.bf16.gmra.mrb[0].mxu0 %v2578
        %v4114 = vpop.f32.mrb[0].mxu0
        %v4115 = vadd.f32 %v3656, %v4114
        %v4116 = vpop.f32.mrb[0].mxu0
        %v4117 = vpop.f32.mrb[0].mxu0
        %v4118 = vadd.f32 %v3660, %v4117
        %v4119 = vpop.f32.mrb[0].mxu0
        %4120 = vmatprep.mubr.bf16.mxu0 %v2584
        %4121 = vmatmul.mubr.bf16.gmra.mrb[0].mxu0 %v2583
        %v4122 = vpop.f32.mrb[0].mxu0
        %v4123 = vadd.f32 %v3666, %v4122
        %v4124 = vpop.f32.mrb[0].mxu0
        %v4125 = vpop.f32.mrb[0].mxu0
        %v4126 = vadd.f32 %v3670, %v4125
        %v4127 = vpop.f32.mrb[0].mxu0
        %4128 = vmatprep.mubr.bf16.mxu0 %v2589
        %4129 = vmatmul.mubr.bf16.gmra.mrb[0].mxu0 %v2588
        %v4130 = vpop.f32.mrb[0].mxu0
        %v4131 = vadd.f32 %v3676, %v4130
        %v4132 = vpop.f32.mrb[0].mxu0
        %v4133 = vpop.f32.mrb[0].mxu0
        %v4134 = vadd.f32 %v3680, %v4133
        %v4135 = vpop.f32.mrb[0].mxu0
        %4136 = vmatprep.mubr.bf16.mxu0 %v2594
        %4137 = vmatmul.mubr.bf16.gmra.mrb[0].mxu0 %v2593
        %v4138 = vpop.f32.mrb[0].mxu0
        %v4139 = vadd.f32 %v3686, %v4138
        %v4140 = vpop.f32.mrb[0].mxu0
        %v4141 = vpop.f32.mrb[0].mxu0
        %v4142 = vadd.f32 %v3690, %v4141
        %v4143 = vpop.f32.mrb[0].mxu0
        %4144 = vmatprep.mubr.bf16.mxu0 %v2599
        %4145 = vmatmul.mubr.bf16.gmra.mrb[0].mxu0 %v2598
        %v4146 = vpop.f32.mrb[0].mxu0
        %v4147 = vadd.f32 %v3696, %v4146
        %v4148 = vpop.f32.mrb[0].mxu0
        %v4149 = vpop.f32.mrb[0].mxu0
        %v4150 = vadd.f32 %v3700, %v4149
        %v4151 = vpop.f32.mrb[0].mxu0
        %4152 = vmatprep.mubr.bf16.mxu0 %v2604
        %4153 = vmatmul.mubr.bf16.gmra.mrb[0].mxu0 %v2603
        %v4154 = vpop.f32.mrb[0].mxu0
        %v4155 = vadd.f32 %v3706, %v4154
        %v4156 = vpop.f32.mrb[0].mxu0
        %v4157 = vpop.f32.mrb[0].mxu0
        %v4158 = vadd.f32 %v3710, %v4157
        %v4159 = vpop.f32.mrb[0].mxu0
        %4160 = vmatprep.mubr.bf16.mxu0 %v2609
        %4161 = vmatmul.mubr.bf16.gmra.mrb[0].mxu0 %v2608
        %v4162 = vpop.f32.mrb[0].mxu0
        %v4163 = vadd.f32 %v3716, %v4162
        %v4164 = vpop.f32.mrb[0].mxu0
        %v4165 = vpop.f32.mrb[0].mxu0
        %v4166 = vadd.f32 %v3720, %v4165
        %v4167 = vpop.f32.mrb[0].mxu0
        %4168 = vmatprep.mubr.bf16.mxu0 %v2614
        %4169 = vmatmul.mubr.bf16.gmra.mrb[0].mxu0 %v2613
        %v4170 = vpop.f32.mrb[0].mxu0
        %v4171 = vadd.f32 %v3726, %v4170
        %v4172 = vpop.f32.mrb[0].mxu0
        %v4173 = vpop.f32.mrb[0].mxu0
        %v4174 = vadd.f32 %v3730, %v4173
        %v4175 = vpop.f32.mrb[0].mxu0
        %4176 = vmatprep.mubr.bf16.mxu0 %v2619
        %4177 = vmatmul.mubr.bf16.gmra.mrb[0].mxu0 %v2618
        %v4178 = vpop.f32.mrb[0].mxu0
        %v4179 = vadd.f32 %v3736, %v4178
        %v4180 = vpop.f32.mrb[0].mxu0
        %v4181 = vpop.f32.mrb[0].mxu0
        %v4182 = vadd.f32 %v3740, %v4181
        %v4183 = vpop.f32.mrb[0].mxu0
        %4184 = vmatprep.mubr.bf16.mxu0 %v2624
        %4185 = vmatmul.mubr.bf16.gmra.mrb[0].mxu0 %v2623
        %v4186 = vpop.f32.mrb[0].mxu0
        %v4187 = vadd.f32 %v3746, %v4186
        %v4188 = vpop.f32.mrb[0].mxu0
        %v4189 = vpop.f32.mrb[0].mxu0
        %v4190 = vadd.f32 %v3750, %v4189
        %v4191 = vpop.f32.mrb[0].mxu0
        %4192 = vmatprep.mubr.bf16.mxu0 %v2629
        %4193 = vmatmul.mubr.bf16.gmra.mrb[0].mxu0 %v2628
        %v4194 = vpop.f32.mrb[0].mxu0
        %v4195 = vadd.f32 %v3756, %v4194
        %v4196 = vpop.f32.mrb[0].mxu0
        %v4197 = vpop.f32.mrb[0].mxu0
        %v4198 = vadd.f32 %v3760, %v4197
        %v4199 = vpop.f32.mrb[0].mxu0
        %4200 = vmatprep.mubr.bf16.mxu0 %v2634
        %4201 = vmatmul.mubr.bf16.gmra.mrb[0].mxu0 %v2633
        %v4202 = vpop.f32.mrb[0].mxu0
        %v4203 = vadd.f32 %v3766, %v4202
        %v4204 = vpop.f32.mrb[0].mxu0
        %v4205 = vpop.f32.mrb[0].mxu0
        %v4206 = vadd.f32 %v3770, %v4205
        %v4207 = vpop.f32.mrb[0].mxu0
        %4208 = vmatprep.mubr.bf16.mxu0 %v2639
        %4209 = vmatmul.mubr.bf16.gmra.mrb[0].mxu0 %v2638
        %v4210 = vpop.f32.mrb[0].mxu0
        %v4211 = vadd.f32 %v3776, %v4210
        %v4212 = vpop.f32.mrb[0].mxu0
        %v4213 = vpop.f32.mrb[0].mxu0
        %v4214 = vadd.f32 %v3780, %v4213
        %v4215 = vpop.f32.mrb[0].mxu0
        %4216 = vmatprep.mubr.bf16.mxu0 %v2644
        %4217 = vmatmul.mubr.bf16.gmra.mrb[0].mxu0 %v2643
        %v4218 = vpop.f32.mrb[0].mxu0
        %v4219 = vadd.f32 %v3786, %v4218
        %v4220 = vpop.f32.mrb[0].mxu0
        %v4221 = vpop.f32.mrb[0].mxu0
        %v4222 = vadd.f32 %v3790, %v4221
        %v4223 = vpop.f32.mrb[0].mxu0
        %4224 = vdwg.mxu0
        %4225 = vmatprep.subr.bf16.mxu0 0
        %4226 = vmatpush1.bf16.msra.mxu0 %v4000
        %4227 = vmatprep.subr.bf16.mxu0 0
        %4228 = vmatpush1.bf16.msra.mxu0 %v4001
        %4229 = vmatprep.subr.bf16.mxu0 0
        %4230 = vmatpush1.bf16.msra.mxu0 %v4002
        %4231 = vmatprep.subr.bf16.mxu0 0
        %4232 = vmatpush1.bf16.msra.mxu0 %v4003
        %4233 = vmatprep.subr.bf16.mxu0 0
        %4234 = vmatpush1.bf16.msra.mxu0 %v4004
        %4235 = vmatprep.subr.bf16.mxu0 0
        %4236 = vmatpush1.bf16.msra.mxu0 %v4005
        %4237 = vmatprep.subr.bf16.mxu0 0
        %4238 = vmatpush1.bf16.msra.mxu0 %v4006
        %4239 = vmatprep.subr.bf16.mxu0 0
        %4240 = vmatpush1.bf16.msra.mxu0 %v4007
        %4241 = vmatprep.subr.bf16.mxu0 0
        %4242 = vmatpush1.bf16.msra.mxu0 %v4008
        %4243 = vmatprep.subr.bf16.mxu0 0
        %4244 = vmatpush1.bf16.msra.mxu0 %v4009
        %4245 = vmatprep.subr.bf16.mxu0 0
        %4246 = vmatpush1.bf16.msra.mxu0 %v4010
        %4247 = vmatprep.subr.bf16.mxu0 0
        %4248 = vmatpush1.bf16.msra.mxu0 %v4011
        %4249 = vmatprep.subr.bf16.mxu0 0
        %4250 = vmatpush1.bf16.msra.mxu0 %v4012
        %4251 = vmatprep.subr.bf16.mxu0 0
        %4252 = vmatpush1.bf16.msra.mxu0 %v4013
        %4253 = vmatprep.subr.bf16.mxu0 0
        %4254 = vmatpush1.bf16.msra.mxu0 %v4014
        %4255 = vmatprep.subr.bf16.mxu0 0
        %4256 = vmatpush1.bf16.msra.mxu0 %v4015
        %4257 = vmatprep.mubr.bf16.mxu0 %v2571
        %4258 = vmatmul.mubr.bf16.gmra.mrb[0].mxu0 %v2570
        %v4259 = vpop.f32.mrb[0].mxu0
        %v4260 = vadd.f32 %v4099, %v4259
        %v4261 = vpop.f32.mrb[0].mxu0
        %v4262 = vpop.f32.mrb[0].mxu0
        %v4263 = vadd.f32 %v4102, %v4262
        %v4264 = vpop.f32.mrb[0].mxu0
        %4265 = vmatprep.mubr.bf16.mxu0 %v2576
        %4266 = vmatmul.mubr.bf16.gmra.mrb[0].mxu0 %v2575
        %v4267 = vpop.f32.mrb[0].mxu0
        %v4268 = vadd.f32 %v4107, %v4267
        %v4269 = vpop.f32.mrb[0].mxu0
        %v4270 = vpop.f32.mrb[0].mxu0
        %v4271 = vadd.f32 %v4110, %v4270
        %v4272 = vpop.f32.mrb[0].mxu0
        %4273 = vmatprep.mubr.bf16.mxu0 %v2581
        %4274 = vmatmul.mubr.bf16.gmra.mrb[0].mxu0 %v2580
        %v4275 = vpop.f32.mrb[0].mxu0
        %v4276 = vadd.f32 %v4115, %v4275
        %v4277 = vpop.f32.mrb[0].mxu0
        %v4278 = vpop.f32.mrb[0].mxu0
        %v4279 = vadd.f32 %v4118, %v4278
        %v4280 = vpop.f32.mrb[0].mxu0
        %4281 = vmatprep.mubr.bf16.mxu0 %v2586
        %4282 = vmatmul.mubr.bf16.gmra.mrb[0].mxu0 %v2585
        %v4283 = vpop.f32.mrb[0].mxu0
        %v4284 = vadd.f32 %v4123, %v4283
        %v4285 = vpop.f32.mrb[0].mxu0
        %v4286 = vpop.f32.mrb[0].mxu0
        %v4287 = vadd.f32 %v4126, %v4286
        %v4288 = vpop.f32.mrb[0].mxu0
        %4289 = vmatprep.mubr.bf16.mxu0 %v2591
        %4290 = vmatmul.mubr.bf16.gmra.mrb[0].mxu0 %v2590
        %v4291 = vpop.f32.mrb[0].mxu0
        %v4292 = vadd.f32 %v4131, %v4291
        %v4293 = vpop.f32.mrb[0].mxu0
        %v4294 = vpop.f32.mrb[0].mxu0
        %v4295 = vadd.f32 %v4134, %v4294
        %v4296 = vpop.f32.mrb[0].mxu0
        %4297 = vmatprep.mubr.bf16.mxu0 %v2596
        %4298 = vmatmul.mubr.bf16.gmra.mrb[0].mxu0 %v2595
        %v4299 = vpop.f32.mrb[0].mxu0
        %v4300 = vadd.f32 %v4139, %v4299
        %v4301 = vpop.f32.mrb[0].mxu0
        %v4302 = vpop.f32.mrb[0].mxu0
        %v4303 = vadd.f32 %v4142, %v4302
        %v4304 = vpop.f32.mrb[0].mxu0
        %4305 = vmatprep.mubr.bf16.mxu0 %v2601
        %4306 = vmatmul.mubr.bf16.gmra.mrb[0].mxu0 %v2600
        %v4307 = vpop.f32.mrb[0].mxu0
        %v4308 = vadd.f32 %v4147, %v4307
        %v4309 = vpop.f32.mrb[0].mxu0
        %v4310 = vpop.f32.mrb[0].mxu0
        %v4311 = vadd.f32 %v4150, %v4310
        %v4312 = vpop.f32.mrb[0].mxu0
        %4313 = vmatprep.mubr.bf16.mxu0 %v2606
        %4314 = vmatmul.mubr.bf16.gmra.mrb[0].mxu0 %v2605
        %v4315 = vpop.f32.mrb[0].mxu0
        %v4316 = vadd.f32 %v4155, %v4315
        %v4317 = vpop.f32.mrb[0].mxu0
        %v4318 = vpop.f32.mrb[0].mxu0
        %v4319 = vadd.f32 %v4158, %v4318
        %v4320 = vpop.f32.mrb[0].mxu0
        %4321 = vmatprep.mubr.bf16.mxu0 %v2611
        %4322 = vmatmul.mubr.bf16.gmra.mrb[0].mxu0 %v2610
        %v4323 = vpop.f32.mrb[0].mxu0
        %v4324 = vadd.f32 %v4163, %v4323
        %v4325 = vpop.f32.mrb[0].mxu0
        %v4326 = vpop.f32.mrb[0].mxu0
        %v4327 = vadd.f32 %v4166, %v4326
        %v4328 = vpop.f32.mrb[0].mxu0
        %4329 = vmatprep.mubr.bf16.mxu0 %v2616
        %4330 = vmatmul.mubr.bf16.gmra.mrb[0].mxu0 %v2615
        %v4331 = vpop.f32.mrb[0].mxu0
        %v4332 = vadd.f32 %v4171, %v4331
        %v4333 = vpop.f32.mrb[0].mxu0
        %v4334 = vpop.f32.mrb[0].mxu0
        %v4335 = vadd.f32 %v4174, %v4334
        %v4336 = vpop.f32.mrb[0].mxu0
        %4337 = vmatprep.mubr.bf16.mxu0 %v2621
        %4338 = vmatmul.mubr.bf16.gmra.mrb[0].mxu0 %v2620
        %v4339 = vpop.f32.mrb[0].mxu0
        %v4340 = vadd.f32 %v4179, %v4339
        %v4341 = vpop.f32.mrb[0].mxu0
        %v4342 = vpop.f32.mrb[0].mxu0
        %v4343 = vadd.f32 %v4182, %v4342
        %v4344 = vpop.f32.mrb[0].mxu0
        %4345 = vmatprep.mubr.bf16.mxu0 %v2626
        %4346 = vmatmul.mubr.bf16.gmra.mrb[0].mxu0 %v2625
        %v4347 = vpop.f32.mrb[0].mxu0
        %v4348 = vadd.f32 %v4187, %v4347
        %v4349 = vpop.f32.mrb[0].mxu0
        %v4350 = vpop.f32.mrb[0].mxu0
        %v4351 = vadd.f32 %v4190, %v4350
        %v4352 = vpop.f32.mrb[0].mxu0
        %4353 = vmatprep.mubr.bf16.mxu0 %v2631
        %4354 = vmatmul.mubr.bf16.gmra.mrb[0].mxu0 %v2630
        %v4355 = vpop.f32.mrb[0].mxu0
        %v4356 = vadd.f32 %v4195, %v4355
        %v4357 = vpop.f32.mrb[0].mxu0
        %v4358 = vpop.f32.mrb[0].mxu0
        %v4359 = vadd.f32 %v4198, %v4358
        %v4360 = vpop.f32.mrb[0].mxu0
        %4361 = vmatprep.mubr.bf16.mxu0 %v2636
        %4362 = vmatmul.mubr.bf16.gmra.mrb[0].mxu0 %v2635
        %v4363 = vpop.f32.mrb[0].mxu0
        %v4364 = vadd.f32 %v4203, %v4363
        %v4365 = vpop.f32.mrb[0].mxu0
        %v4366 = vpop.f32.mrb[0].mxu0
        %v4367 = vadd.f32 %v4206, %v4366
        %v4368 = vpop.f32.mrb[0].mxu0
        %4369 = vmatprep.mubr.bf16.mxu0 %v2641
        %4370 = vmatmul.mubr.bf16.gmra.mrb[0].mxu0 %v2640
        %v4371 = vpop.f32.mrb[0].mxu0
        %v4372 = vadd.f32 %v4211, %v4371
        %v4373 = vpop.f32.mrb[0].mxu0
        %v4374 = vpop.f32.mrb[0].mxu0
        %v4375 = vadd.f32 %v4214, %v4374
        %v4376 = vpop.f32.mrb[0].mxu0
        %4377 = vmatprep.mubr.bf16.mxu0 %v2646
        %4378 = vmatmul.mubr.bf16.gmra.mrb[0].mxu0 %v2645
        %v4379 = vpop.f32.mrb[0].mxu0
        %v4380 = vadd.f32 %v4219, %v4379
        %v4381 = vpop.f32.mrb[0].mxu0
        %v4382 = vpop.f32.mrb[0].mxu0
        %v4383 = vadd.f32 %v4222, %v4382
        %v4384 = vpop.f32.mrb[0].mxu0
        %4385 = vdwg.mxu0
        %4386 = vmatprep.subr.bf16.mxu0 0
        %4387 = vmatpush1.bf16.msra.mxu0 %v4016
        %4388 = vmatprep.subr.bf16.mxu0 0
        %4389 = vmatpush1.bf16.msra.mxu0 %v4017
        %4390 = vmatprep.subr.bf16.mxu0 0
        %4391 = vmatpush1.bf16.msra.mxu0 %v4018
        %4392 = vmatprep.subr.bf16.mxu0 0
        %4393 = vmatpush1.bf16.msra.mxu0 %v4019
        %4394 = vmatprep.subr.bf16.mxu0 0
        %4395 = vmatpush1.bf16.msra.mxu0 %v4020
        %4396 = vmatprep.subr.bf16.mxu0 0
        %4397 = vmatpush1.bf16.msra.mxu0 %v4021
        %4398 = vmatprep.subr.bf16.mxu0 0
        %4399 = vmatpush1.bf16.msra.mxu0 %v4022
        %4400 = vmatprep.subr.bf16.mxu0 0
        %4401 = vmatpush1.bf16.msra.mxu0 %v4023
        %4402 = vmatprep.subr.bf16.mxu0 0
        %4403 = vmatpush1.bf16.msra.mxu0 0
        %4404 = vmatprep.subr.bf16.mxu0 0
        %4405 = vmatpush1.bf16.msra.mxu0 0
        %4406 = vmatprep.subr.bf16.mxu0 0
        %4407 = vmatpush1.bf16.msra.mxu0 0
        %4408 = vmatprep.subr.bf16.mxu0 0
        %4409 = vmatpush1.bf16.msra.mxu0 0
        %4410 = vmatprep.subr.bf16.mxu0 0
        %4411 = vmatpush1.bf16.msra.mxu0 0
        %4412 = vmatprep.subr.bf16.mxu0 0
        %4413 = vmatpush1.bf16.msra.mxu0 0
        %4414 = vmatprep.subr.bf16.mxu0 0
        %4415 = vmatpush1.bf16.msra.mxu0 0
        %4416 = vmatprep.subr.bf16.mxu0 0
        %4417 = vmatpush1.bf16.msra.mxu0 0
        %4418 = vmatprep.mubr.bf16.mxu0 0
        %4419 = vmatmul.mubr.bf16.gmra.mrb[0].mxu0 %v2572
        %v4420 = vpop.f32.mrb[0].mxu0
        %v4421 = vadd.f32 %v4260, %v4420
        %v4422 = vpop.f32.mrb[0].mxu0
        %v4423 = vpop.f32.mrb[0].mxu0
        %v4424 = vadd.f32 %v4263, %v4423
        %v4425 = vpop.f32.mrb[0].mxu0
        %4426 = vmatprep.mubr.bf16.mxu0 0
        %4427 = vmatmul.mubr.bf16.gmra.mrb[0].mxu0 %v2577
        %v4428 = vpop.f32.mrb[0].mxu0
        %v4429 = vadd.f32 %v4268, %v4428
        %v4430 = vpop.f32.mrb[0].mxu0
        %v4431 = vpop.f32.mrb[0].mxu0
        %v4432 = vadd.f32 %v4271, %v4431
        %v4433 = vpop.f32.mrb[0].mxu0
        %4434 = vmatprep.mubr.bf16.mxu0 0
        %4435 = vmatmul.mubr.bf16.gmra.mrb[0].mxu0 %v2582
        %v4436 = vpop.f32.mrb[0].mxu0
        %v4437 = vadd.f32 %v4276, %v4436
        %v4438 = vpop.f32.mrb[0].mxu0
        %v4439 = vpop.f32.mrb[0].mxu0
        %v4440 = vadd.f32 %v4279, %v4439
        %v4441 = vpop.f32.mrb[0].mxu0
        %4442 = vmatprep.mubr.bf16.mxu0 0
        %4443 = vmatmul.mubr.bf16.gmra.mrb[0].mxu0 %v2587
        %v4444 = vpop.f32.mrb[0].mxu0
        %v4445 = vadd.f32 %v4284, %v4444
        %v4446 = vpop.f32.mrb[0].mxu0
        %v4447 = vpop.f32.mrb[0].mxu0
        %v4448 = vadd.f32 %v4287, %v4447
        %v4449 = vpop.f32.mrb[0].mxu0
        %4450 = vmatprep.mubr.bf16.mxu0 0
        %4451 = vmatmul.mubr.bf16.gmra.mrb[0].mxu0 %v2592
        %v4452 = vpop.f32.mrb[0].mxu0
        %v4453 = vadd.f32 %v4292, %v4452
        %v4454 = vpop.f32.mrb[0].mxu0
        %v4455 = vpop.f32.mrb[0].mxu0
        %v4456 = vadd.f32 %v4295, %v4455
        %v4457 = vpop.f32.mrb[0].mxu0
        %4458 = vmatprep.mubr.bf16.mxu0 0
        %4459 = vmatmul.mubr.bf16.gmra.mrb[0].mxu0 %v2597
        %v4460 = vpop.f32.mrb[0].mxu0
        %v4461 = vadd.f32 %v4300, %v4460
        %v4462 = vpop.f32.mrb[0].mxu0
        %v4463 = vpop.f32.mrb[0].mxu0
        %v4464 = vadd.f32 %v4303, %v4463
        %v4465 = vpop.f32.mrb[0].mxu0
        %4466 = vmatprep.mubr.bf16.mxu0 0
        %4467 = vmatmul.mubr.bf16.gmra.mrb[0].mxu0 %v2602
        %v4468 = vpop.f32.mrb[0].mxu0
        %v4469 = vadd.f32 %v4308, %v4468
        %v4470 = vpop.f32.mrb[0].mxu0
        %v4471 = vpop.f32.mrb[0].mxu0
        %v4472 = vadd.f32 %v4311, %v4471
        %v4473 = vpop.f32.mrb[0].mxu0
        %4474 = vmatprep.mubr.bf16.mxu0 0
        %4475 = vmatmul.mubr.bf16.gmra.mrb[0].mxu0 %v2607
        %v4476 = vpop.f32.mrb[0].mxu0
        %v4477 = vadd.f32 %v4316, %v4476
        %v4478 = vpop.f32.mrb[0].mxu0
        %v4479 = vpop.f32.mrb[0].mxu0
        %v4480 = vadd.f32 %v4319, %v4479
        %v4481 = vpop.f32.mrb[0].mxu0
        %4482 = vmatprep.mubr.bf16.mxu0 0
        %4483 = vmatmul.mubr.bf16.gmra.mrb[0].mxu0 %v2612
        %v4484 = vpop.f32.mrb[0].mxu0
        %v4485 = vadd.f32 %v4324, %v4484
        %v4486 = vpop.f32.mrb[0].mxu0
        %v4487 = vpop.f32.mrb[0].mxu0
        %v4488 = vadd.f32 %v4327, %v4487
        %v4489 = vpop.f32.mrb[0].mxu0
        %4490 = vmatprep.mubr.bf16.mxu0 0
        %4491 = vmatmul.mubr.bf16.gmra.mrb[0].mxu0 %v2617
        %v4492 = vpop.f32.mrb[0].mxu0
        %v4493 = vadd.f32 %v4332, %v4492
        %v4494 = vpop.f32.mrb[0].mxu0
        %v4495 = vpop.f32.mrb[0].mxu0
        %v4496 = vadd.f32 %v4335, %v4495
        %v4497 = vpop.f32.mrb[0].mxu0
        %4498 = vmatprep.mubr.bf16.mxu0 0
        %4499 = vmatmul.mubr.bf16.gmra.mrb[0].mxu0 %v2622
        %v4500 = vpop.f32.mrb[0].mxu0
        %v4501 = vadd.f32 %v4340, %v4500
        %v4502 = vpop.f32.mrb[0].mxu0
        %v4503 = vpop.f32.mrb[0].mxu0
        %v4504 = vadd.f32 %v4343, %v4503
        %v4505 = vpop.f32.mrb[0].mxu0
        %4506 = vmatprep.mubr.bf16.mxu0 0
        %4507 = vmatmul.mubr.bf16.gmra.mrb[0].mxu0 %v2627
        %v4508 = vpop.f32.mrb[0].mxu0
        %v4509 = vadd.f32 %v4348, %v4508
        %v4510 = vpop.f32.mrb[0].mxu0
        %v4511 = vpop.f32.mrb[0].mxu0
        %v4512 = vadd.f32 %v4351, %v4511
        %v4513 = vpop.f32.mrb[0].mxu0
        %4514 = vmatprep.mubr.bf16.mxu0 0
        %4515 = vmatmul.mubr.bf16.gmra.mrb[0].mxu0 %v2632
        %v4516 = vpop.f32.mrb[0].mxu0
        %v4517 = vadd.f32 %v4356, %v4516
        %v4518 = vpop.f32.mrb[0].mxu0
        %v4519 = vpop.f32.mrb[0].mxu0
        %v4520 = vadd.f32 %v4359, %v4519
        %v4521 = vpop.f32.mrb[0].mxu0
        %4522 = vmatprep.mubr.bf16.mxu0 0
        %4523 = vmatmul.mubr.bf16.gmra.mrb[0].mxu0 %v2637
        %v4524 = vpop.f32.mrb[0].mxu0
        %v4525 = vadd.f32 %v4364, %v4524
        %v4526 = vpop.f32.mrb[0].mxu0
        %v4527 = vpop.f32.mrb[0].mxu0
        %v4528 = vadd.f32 %v4367, %v4527
        %v4529 = vpop.f32.mrb[0].mxu0
        %4530 = vmatprep.mubr.bf16.mxu0 0
        %4531 = vmatmul.mubr.bf16.gmra.mrb[0].mxu0 %v2642
        %v4532 = vpop.f32.mrb[0].mxu0
        %v4533 = vadd.f32 %v4372, %v4532
        %v4534 = vpop.f32.mrb[0].mxu0
        %v4535 = vpop.f32.mrb[0].mxu0
        %v4536 = vadd.f32 %v4375, %v4535
        %v4537 = vpop.f32.mrb[0].mxu0
        %4538 = vmatprep.mubr.bf16.mxu0 0
        %4539 = vmatmul.mubr.bf16.gmra.mrb[0].mxu0 %v2647
        %v4540 = vpop.f32.mrb[0].mxu0
        %v4541 = vadd.f32 %v4380, %v4540
        %v4542 = vpop.f32.mrb[0].mxu0
        %v4543 = vpop.f32.mrb[0].mxu0
        %v4544 = vadd.f32 %v4383, %v4543
        %v4545 = vpop.f32.mrb[0].mxu0
        %4546 = vdwg.mxu0
        %v4547 = vld [vmem:[#allocation2 + $0x50] sm:$0xff]
        %v4548 = vld [vmem:[#allocation2 + $0x58] sm:$0xff]
        %v4549 = vld [vmem:[#allocation2 + $0x60] sm:$0xff]
        %v4550 = vld [vmem:[#allocation2 + $0x68] sm:$0xff]
        %v4551 = vld [vmem:[#allocation2 + $0x70] sm:$0xff]
        %v4552 = vld [vmem:[#allocation2 + $0x78] sm:$0xff]
        %v4553 = vld [vmem:[#allocation2 + $0x80] sm:$0xff]
        %v4554 = vld [vmem:[#allocation2 + $0x88] sm:$0xff]
        %v4555 = vld [vmem:[#allocation2 + $0x90] sm:$0xff]
        %v4556 = vld [vmem:[#allocation2 + $0x98] sm:$0xff]
        %v4557 = vld [vmem:[#allocation2 + $0xa0] sm:$0xff]
        %v4558 = vld [vmem:[#allocation2 + $0xa8] sm:$0xff]
        %v4559 = vld [vmem:[#allocation2 + $0xb0] sm:$0xff]
        %v4560 = vld [vmem:[#allocation2 + $0xb8] sm:$0xff]
        %v4561 = vld [vmem:[#allocation2 + $0xc0] sm:$0xff]
        %v4562 = vld [vmem:[#allocation2 + $0xc8] sm:$0xff]
        %v4563 = vld [vmem:[#allocation2 + $0xd0] sm:$0xff]
        %v4564 = vld [vmem:[#allocation2 + $0xd8] sm:$0xff]
        %v4565 = vld [vmem:[#allocation2 + $0xe0] sm:$0xff]
        %v4566 = vld [vmem:[#allocation2 + $0xe8] sm:$0xff]
        %v4567 = vld [vmem:[#allocation2 + $0xf0] sm:$0xff]
        %v4568 = vld [vmem:[#allocation2 + $0xf8] sm:$0xff]
        %v4569 = vld [vmem:[#allocation2 + $0x100] sm:$0xff]
        %v4570 = vld [vmem:[#allocation2 + $0x108] sm:$0xff]
        %v4571 = vld [vmem:[#allocation2 + $0x110] sm:$0xff]
        %v4572 = vld [vmem:[#allocation2 + $0x118] sm:$0xff]
        %v4573 = vld [vmem:[#allocation2 + $0x120] sm:$0xff]
        %v4574 = vld [vmem:[#allocation2 + $0x128] sm:$0xff]
        %v4575 = vld [vmem:[#allocation2 + $0x130] sm:$0xff]
        %v4576 = vld [vmem:[#allocation2 + $0x138] sm:$0xff]
        %v4577 = vld [vmem:[#allocation2 + $0x140] sm:$0xff]
        %v4578 = vld [vmem:[#allocation2 + $0x148] sm:$0xff]
        %v4579 = vld [vmem:[#allocation2 + $0x150] sm:$0xff]
        %v4580 = vld [vmem:[#allocation2 + $0x158] sm:$0xff]
        %v4581 = vld [vmem:[#allocation2 + $0x160] sm:$0xff]
        %v4582 = vld [vmem:[#allocation2 + $0x168] sm:$0xff]
        %v4583 = vld [vmem:[#allocation2 + $0x170] sm:$0xff]
        %v4584 = vld [vmem:[#allocation2 + $0x178] sm:$0xff]
        %v4585 = vld [vmem:[#allocation2 + $0x180] sm:$0xff]
        %v4586 = vld [vmem:[#allocation2 + $0x188] sm:$0xff]
        %v4587 = vld [vmem:[#allocation2 + $0x190] sm:$0xff]
        %v4588 = vld [vmem:[#allocation2 + $0x198] sm:$0xff]
        %v4589 = vld [vmem:[#allocation2 + $0x1a0] sm:$0xff]
        %v4590 = vld [vmem:[#allocation2 + $0x1a8] sm:$0xff]
        %v4591 = vld [vmem:[#allocation2 + $0x1b0] sm:$0xff]
        %v4592 = vld [vmem:[#allocation2 + $0x1b8] sm:$0xff]
        %v4593 = vld [vmem:[#allocation2 + $0x1c0] sm:$0xff]
        %v4594 = vld [vmem:[#allocation2 + $0x1c8] sm:$0xff]
        %v4595 = vld [vmem:[#allocation2 + $0x1d0] sm:$0xff]
        %v4596 = vld [vmem:[#allocation2 + $0x1d8] sm:$0xff]
        %v4597 = vld [vmem:[#allocation2 + $0x1e0] sm:$0xff]
        %v4598 = vld [vmem:[#allocation2 + $0x1e8] sm:$0xff]
        %v4599 = vld [vmem:[#allocation2 + $0x1f0] sm:$0xff]
        %v4600 = vld [vmem:[#allocation2 + $0x1f8] sm:$0xff]
        %v4601 = vld [vmem:[#allocation2 + $0x200] sm:$0xff]
        %v4602 = vld [vmem:[#allocation2 + $0x208] sm:$0xff]
        %v4603 = vld [vmem:[#allocation2 + $0x210] sm:$0xff]
        %v4604 = vld [vmem:[#allocation2 + $0x218] sm:$0xff]
        %v4605 = vld [vmem:[#allocation2 + $0x220] sm:$0xff]
        %v4606 = vld [vmem:[#allocation2 + $0x228] sm:$0xff]
        %v4607 = vld [vmem:[#allocation2 + $0x230] sm:$0xff]
        %v4608 = vld [vmem:[#allocation2 + $0x238] sm:$0xff]
        %v4609 = vld [vmem:[#allocation2 + $0x240] sm:$0xff]
        %v4610 = vld [vmem:[#allocation2 + $0x248] sm:$0xff]
        %v4611 = vld [vmem:[#allocation2 + $0x250] sm:$0xff]
        %v4612 = vld [vmem:[#allocation2 + $0x258] sm:$0xff]
        %v4613 = vld [vmem:[#allocation2 + $0x260] sm:$0xff]
        %v4614 = vld [vmem:[#allocation2 + $0x268] sm:$0xff]
        %v4615 = vld [vmem:[#allocation2 + $0x270] sm:$0xff]
        %v4616 = vld [vmem:[#allocation2 + $0x278] sm:$0xff]
        %v4617 = vld [vmem:[#allocation2 + $0x280] sm:$0xff]
        %v4618 = vld [vmem:[#allocation2 + $0x288] sm:$0xff]
        %v4619 = vld [vmem:[#allocation2 + $0x290] sm:$0xff]
        %v4620 = vld [vmem:[#allocation2 + $0x298] sm:$0xff]
        %v4621 = vld [vmem:[#allocation2 + $0x2a0] sm:$0xff]
        %v4622 = vld [vmem:[#allocation2 + $0x2a8] sm:$0xff]
        %v4623 = vld [vmem:[#allocation2 + $0x2b0] sm:$0xff]
        %v4624 = vld [vmem:[#allocation2 + $0x2b8] sm:$0xff]
        %v4625 = vld [vmem:[#allocation2 + $0x2c0] sm:$0xff]
        %v4626 = vld [vmem:[#allocation2 + $0x2c8] sm:$0xff]
        %v4627 = vld [vmem:[#allocation3 + $0xc] sm:$0xff]
        %v4628 = vld [vmem:[#allocation3 + $0x2c] sm:$0xff]
        %v4629 = vld [vmem:[#allocation3 + $0x4c] sm:$0xff]
        %v4630 = vld [vmem:[#allocation3 + $0x6c] sm:$0xff]
        %v4631 = vld [vmem:[#allocation3 + $0x8c] sm:$0xff]
        %v4632 = vld [vmem:[#allocation3 + $0xac] sm:$0xff]
        %v4633 = vld [vmem:[#allocation3 + $0xcc] sm:$0xff]
        %v4634 = vld [vmem:[#allocation3 + $0xec] sm:$0xff]
        %v4635 = vld [vmem:[#allocation3 + $0x10c] sm:$0xff]
        %v4636 = vld [vmem:[#allocation3 + $0x12c] sm:$0xff]
        %v4637 = vld [vmem:[#allocation3 + $0x14c] sm:$0xff]
        %v4638 = vld [vmem:[#allocation3 + $0x16c] sm:$0xff]
        %v4639 = vld [vmem:[#allocation3 + $0x18c] sm:$0xff]
        %v4640 = vld [vmem:[#allocation3 + $0x1ac] sm:$0xff]
        %v4641 = vld [vmem:[#allocation3 + $0x1cc] sm:$0xff]
        %v4642 = vld [vmem:[#allocation3 + $0x1ec] sm:$0xff]
        %v4643 = vld [vmem:[#allocation3 + $0x20c] sm:$0xff]
        %v4644 = vld [vmem:[#allocation3 + $0x22c] sm:$0xff]
        %v4645 = vld [vmem:[#allocation3 + $0x24c] sm:$0xff]
        %v4646 = vld [vmem:[#allocation3 + $0x26c] sm:$0xff]
        %v4647 = vld [vmem:[#allocation3 + $0x28c] sm:$0xff]
        %v4648 = vld [vmem:[#allocation3 + $0x2ac] sm:$0xff]
        %v4649 = vld [vmem:[#allocation3 + $0x2cc] sm:$0xff]
        %v4650 = vld [vmem:[#allocation3 + $0x2ec] sm:$0xff]
        %v4651 = vld [vmem:[#allocation3 + $0x30c] sm:$0xff]
        %v4652 = vld [vmem:[#allocation3 + $0x32c] sm:$0xff]
        %v4653 = vld [vmem:[#allocation3 + $0x34c] sm:$0xff]
        %v4654 = vld [vmem:[#allocation3 + $0x36c] sm:$0xff]
        %v4655 = vld [vmem:[#allocation3 + $0x38c] sm:$0xff]
        %v4656 = vld [vmem:[#allocation3 + $0x3ac] sm:$0xff]
        %v4657 = vld [vmem:[#allocation3 + $0x3cc] sm:$0xff]
        %v4658 = vld [vmem:[#allocation3 + $0x3ec] sm:$0xff]
        %v4659 = vld [vmem:[#allocation3 + $0x40c] sm:$0xff]
        %v4660 = vld [vmem:[#allocation3 + $0x42c] sm:$0xff]
        %v4661 = vld [vmem:[#allocation3 + $0x44c] sm:$0xff]
        %v4662 = vld [vmem:[#allocation3 + $0x46c] sm:$0xff]
        %v4663 = vld [vmem:[#allocation3 + $0x48c] sm:$0xff]
        %v4664 = vld [vmem:[#allocation3 + $0x4ac] sm:$0xff]
        %v4665 = vld [vmem:[#allocation3 + $0x4cc] sm:$0xff]
        %v4666 = vld [vmem:[#allocation3 + $0x4ec] sm:$0xff]
        %v4667 = vld [vmem:[#allocation3 + $0x50c] sm:$0xff]
        %v4668 = vld [vmem:[#allocation3 + $0x52c] sm:$0xff]
        %v4669 = vld [vmem:[#allocation3 + $0x54c] sm:$0xff]
        %v4670 = vld [vmem:[#allocation3 + $0x56c] sm:$0xff]
        %v4671 = vld [vmem:[#allocation3 + $0x58c] sm:$0xff]
        %v4672 = vld [vmem:[#allocation3 + $0x5ac] sm:$0xff]
        %v4673 = vld [vmem:[#allocation3 + $0x5cc] sm:$0xff]
        %v4674 = vld [vmem:[#allocation3 + $0x5ec] sm:$0xff]
        %v4675 = vld [vmem:[#allocation3 + $0x60c] sm:$0xff]
        %v4676 = vld [vmem:[#allocation3 + $0x62c] sm:$0xff]
        %v4677 = vld [vmem:[#allocation3 + $0x64c] sm:$0xff]
        %v4678 = vld [vmem:[#allocation3 + $0x66c] sm:$0xff]
        %v4679 = vld [vmem:[#allocation3 + $0x68c] sm:$0xff]
        %v4680 = vld [vmem:[#allocation3 + $0x6ac] sm:$0xff]
        %v4681 = vld [vmem:[#allocation3 + $0x6cc] sm:$0xff]
        %v4682 = vld [vmem:[#allocation3 + $0x6ec] sm:$0xff]
        %v4683 = vld [vmem:[#allocation3 + $0x70c] sm:$0xff]
        %v4684 = vld [vmem:[#allocation3 + $0x72c] sm:$0xff]
        %v4685 = vld [vmem:[#allocation3 + $0x74c] sm:$0xff]
        %v4686 = vld [vmem:[#allocation3 + $0x76c] sm:$0xff]
        %v4687 = vld [vmem:[#allocation3 + $0x78c] sm:$0xff]
        %v4688 = vld [vmem:[#allocation3 + $0x7ac] sm:$0xff]
        %v4689 = vld [vmem:[#allocation3 + $0x7cc] sm:$0xff]
        %v4690 = vld [vmem:[#allocation3 + $0x7ec] sm:$0xff]
        %v4691 = vld [vmem:[#allocation3 + $0x80c] sm:$0xff]
        %v4692 = vld [vmem:[#allocation3 + $0x82c] sm:$0xff]
        %v4693 = vld [vmem:[#allocation3 + $0x84c] sm:$0xff]
        %v4694 = vld [vmem:[#allocation3 + $0x86c] sm:$0xff]
        %v4695 = vld [vmem:[#allocation3 + $0x88c] sm:$0xff]
        %v4696 = vld [vmem:[#allocation3 + $0x8ac] sm:$0xff]
        %v4697 = vld [vmem:[#allocation3 + $0x8cc] sm:$0xff]
        %v4698 = vld [vmem:[#allocation3 + $0x8ec] sm:$0xff]
        %v4699 = vld [vmem:[#allocation3 + $0x90c] sm:$0xff]
        %v4700 = vld [vmem:[#allocation3 + $0x92c] sm:$0xff]
        %v4701 = vld [vmem:[#allocation3 + $0x94c] sm:$0xff]
        %v4702 = vld [vmem:[#allocation3 + $0x96c] sm:$0xff]
        %v4703 = vld [vmem:[#allocation3 + $0x98c] sm:$0xff]
        %v4704 = vld [vmem:[#allocation3 + $0x9ac] sm:$0xff]
        %v4705 = vld [vmem:[#allocation3 + $0x9cc] sm:$0xff]
        %v4706 = vld [vmem:[#allocation3 + $0x9ec] sm:$0xff]
        %v4787 = vunpack.c.l.b16 %v4627
        %v4788 = vunpack.c.h.b16 %v4627
        %v4789 = vunpack.c.l.b16 %v4628
        %v4790 = vunpack.c.h.b16 %v4628
        %v4791 = vunpack.c.l.b16 %v4629
        %v4792 = vunpack.c.h.b16 %v4629
        %v4793 = vunpack.c.l.b16 %v4630
        %v4794 = vunpack.c.h.b16 %v4630
        %v4795 = vunpack.c.l.b16 %v4631
        %v4796 = vunpack.c.h.b16 %v4631
        %v4797 = vunpack.c.l.b16 %v4632
        %v4798 = vunpack.c.h.b16 %v4632
        %v4799 = vunpack.c.l.b16 %v4633
        %v4800 = vunpack.c.h.b16 %v4633
        %v4801 = vunpack.c.l.b16 %v4634
        %v4802 = vunpack.c.h.b16 %v4634
        %v4803 = vunpack.c.l.b16 %v4635
        %v4804 = vunpack.c.h.b16 %v4635
        %v4805 = vunpack.c.l.b16 %v4636
        %v4806 = vunpack.c.h.b16 %v4636
        %v4807 = vunpack.c.l.b16 %v4637
        %v4808 = vunpack.c.h.b16 %v4637
        %v4809 = vunpack.c.l.b16 %v4638
        %v4810 = vunpack.c.h.b16 %v4638
        %v4811 = vunpack.c.l.b16 %v4639
        %v4812 = vunpack.c.h.b16 %v4639
        %v4813 = vunpack.c.l.b16 %v4640
        %v4814 = vunpack.c.h.b16 %v4640
        %v4815 = vunpack.c.l.b16 %v4641
        %v4816 = vunpack.c.h.b16 %v4641
        %v4817 = vunpack.c.l.b16 %v4642
        %v4818 = vunpack.c.h.b16 %v4642
        %v4819 = vunpack.c.l.b16 %v4643
        %v4820 = vunpack.c.h.b16 %v4643
        %v4821 = vunpack.c.l.b16 %v4644
        %v4822 = vunpack.c.h.b16 %v4644
        %v4823 = vunpack.c.l.b16 %v4645
        %v4824 = vunpack.c.h.b16 %v4645
        %v4825 = vunpack.c.l.b16 %v4646
        %v4826 = vunpack.c.h.b16 %v4646
        %v4827 = vunpack.c.l.b16 %v4647
        %v4828 = vunpack.c.h.b16 %v4647
        %v4829 = vunpack.c.l.b16 %v4648
        %v4830 = vunpack.c.h.b16 %v4648
        %v4831 = vunpack.c.l.b16 %v4649
        %v4832 = vunpack.c.h.b16 %v4649
        %v4833 = vunpack.c.l.b16 %v4650
        %v4834 = vunpack.c.h.b16 %v4650
        %v4835 = vunpack.c.l.b16 %v4651
        %v4836 = vunpack.c.h.b16 %v4651
        %v4837 = vunpack.c.l.b16 %v4652
        %v4838 = vunpack.c.h.b16 %v4652
        %v4839 = vunpack.c.l.b16 %v4653
        %v4840 = vunpack.c.h.b16 %v4653
        %v4841 = vunpack.c.l.b16 %v4654
        %v4842 = vunpack.c.h.b16 %v4654
        %v4843 = vunpack.c.l.b16 %v4655
        %v4844 = vunpack.c.h.b16 %v4655
        %v4845 = vunpack.c.l.b16 %v4656
        %v4846 = vunpack.c.h.b16 %v4656
        %v4847 = vunpack.c.l.b16 %v4657
        %v4848 = vunpack.c.h.b16 %v4657
        %v4849 = vunpack.c.l.b16 %v4658
        %v4850 = vunpack.c.h.b16 %v4658
        %v4851 = vunpack.c.l.b16 %v4659
        %v4852 = vunpack.c.h.b16 %v4659
        %v4853 = vunpack.c.l.b16 %v4660
        %v4854 = vunpack.c.h.b16 %v4660
        %v4855 = vunpack.c.l.b16 %v4661
        %v4856 = vunpack.c.h.b16 %v4661
        %v4857 = vunpack.c.l.b16 %v4662
        %v4858 = vunpack.c.h.b16 %v4662
        %v4859 = vunpack.c.l.b16 %v4663
        %v4860 = vunpack.c.h.b16 %v4663
        %v4861 = vunpack.c.l.b16 %v4664
        %v4862 = vunpack.c.h.b16 %v4664
        %v4863 = vunpack.c.l.b16 %v4665
        %v4864 = vunpack.c.h.b16 %v4665
        %v4865 = vunpack.c.l.b16 %v4666
        %v4866 = vunpack.c.h.b16 %v4666
        %v4867 = vunpack.c.l.b16 %v4667
        %v4868 = vunpack.c.h.b16 %v4667
        %v4869 = vunpack.c.l.b16 %v4668
        %v4870 = vunpack.c.h.b16 %v4668
        %v4871 = vunpack.c.l.b16 %v4669
        %v4872 = vunpack.c.h.b16 %v4669
        %v4873 = vunpack.c.l.b16 %v4670
        %v4874 = vunpack.c.h.b16 %v4670
        %v4875 = vunpack.c.l.b16 %v4671
        %v4876 = vunpack.c.h.b16 %v4671
        %v4877 = vunpack.c.l.b16 %v4672
        %v4878 = vunpack.c.h.b16 %v4672
        %v4879 = vunpack.c.l.b16 %v4673
        %v4880 = vunpack.c.h.b16 %v4673
        %v4881 = vunpack.c.l.b16 %v4674
        %v4882 = vunpack.c.h.b16 %v4674
        %v4883 = vunpack.c.l.b16 %v4675
        %v4884 = vunpack.c.h.b16 %v4675
        %v4885 = vunpack.c.l.b16 %v4676
        %v4886 = vunpack.c.h.b16 %v4676
        %v4887 = vunpack.c.l.b16 %v4677
        %v4888 = vunpack.c.h.b16 %v4677
        %v4889 = vunpack.c.l.b16 %v4678
        %v4890 = vunpack.c.h.b16 %v4678
        %v4891 = vunpack.c.l.b16 %v4679
        %v4892 = vunpack.c.h.b16 %v4679
        %v4893 = vunpack.c.l.b16 %v4680
        %v4894 = vunpack.c.h.b16 %v4680
        %v4895 = vunpack.c.l.b16 %v4681
        %v4896 = vunpack.c.h.b16 %v4681
        %v4897 = vunpack.c.l.b16 %v4682
        %v4898 = vunpack.c.h.b16 %v4682
        %v4899 = vunpack.c.l.b16 %v4683
        %v4900 = vunpack.c.h.b16 %v4683
        %v4901 = vunpack.c.l.b16 %v4684
        %v4902 = vunpack.c.h.b16 %v4684
        %v4903 = vunpack.c.l.b16 %v4685
        %v4904 = vunpack.c.h.b16 %v4685
        %v4905 = vunpack.c.l.b16 %v4686
        %v4906 = vunpack.c.h.b16 %v4686
        %v4907 = vunpack.c.l.b16 %v4687
        %v4908 = vunpack.c.h.b16 %v4687
        %v4909 = vunpack.c.l.b16 %v4688
        %v4910 = vunpack.c.h.b16 %v4688
        %v4911 = vunpack.c.l.b16 %v4689
        %v4912 = vunpack.c.h.b16 %v4689
        %v4913 = vunpack.c.l.b16 %v4690
        %v4914 = vunpack.c.h.b16 %v4690
        %v4915 = vunpack.c.l.b16 %v4691
        %v4916 = vunpack.c.h.b16 %v4691
        %v4917 = vunpack.c.l.b16 %v4692
        %v4918 = vunpack.c.h.b16 %v4692
        %v4919 = vunpack.c.l.b16 %v4693
        %v4920 = vunpack.c.h.b16 %v4693
        %v4921 = vunpack.c.l.b16 %v4694
        %v4922 = vunpack.c.h.b16 %v4694
        %v4923 = vunpack.c.l.b16 %v4695
        %v4924 = vunpack.c.h.b16 %v4695
        %v4925 = vunpack.c.l.b16 %v4696
        %v4926 = vunpack.c.h.b16 %v4696
        %v4927 = vunpack.c.l.b16 %v4697
        %v4928 = vunpack.c.h.b16 %v4697
        %v4929 = vunpack.c.l.b16 %v4698
        %v4930 = vunpack.c.h.b16 %v4698
        %v4931 = vunpack.c.l.b16 %v4699
        %v4932 = vunpack.c.h.b16 %v4699
        %v4933 = vunpack.c.l.b16 %v4700
        %v4934 = vunpack.c.h.b16 %v4700
        %v4935 = vunpack.c.l.b16 %v4701
        %v4936 = vunpack.c.h.b16 %v4701
        %v4937 = vunpack.c.l.b16 %v4702
        %v4938 = vunpack.c.h.b16 %v4702
        %v4939 = vunpack.c.l.b16 %v4703
        %v4940 = vunpack.c.h.b16 %v4703
        %v4941 = vunpack.c.l.b16 %v4704
        %v4942 = vunpack.c.h.b16 %v4704
        %v4943 = vunpack.c.l.b16 %v4705
        %v4944 = vunpack.c.h.b16 %v4705
        %v4945 = vunpack.c.l.b16 %v4706
        %v4946 = vunpack.c.h.b16 %v4706
        %v4947 = vpack.c.b16 %v4789, %v4787
        %v4948 = vpack.c.b16 %v4790, %v4788
        %v4949 = vpack.c.b16 %v4793, %v4791
        %v4950 = vpack.c.b16 %v4794, %v4792
        %v4951 = vpack.c.b16 %v4797, %v4795
        %v4952 = vpack.c.b16 %v4798, %v4796
        %v4953 = vpack.c.b16 %v4801, %v4799
        %v4954 = vpack.c.b16 %v4802, %v4800
        %v4955 = vpack.c.b16 %v4805, %v4803
        %v4956 = vpack.c.b16 %v4806, %v4804
        %v4957 = vpack.c.b16 %v4809, %v4807
        %v4958 = vpack.c.b16 %v4810, %v4808
        %v4959 = vpack.c.b16 %v4813, %v4811
        %v4960 = vpack.c.b16 %v4814, %v4812
        %v4961 = vpack.c.b16 %v4817, %v4815
        %v4962 = vpack.c.b16 %v4818, %v4816
        %v4963 = vpack.c.b16 %v4821, %v4819
        %v4964 = vpack.c.b16 %v4822, %v4820
        %v4965 = vpack.c.b16 %v4825, %v4823
        %v4966 = vpack.c.b16 %v4826, %v4824
        %v4967 = vpack.c.b16 %v4829, %v4827
        %v4968 = vpack.c.b16 %v4830, %v4828
        %v4969 = vpack.c.b16 %v4833, %v4831
        %v4970 = vpack.c.b16 %v4834, %v4832
        %v4971 = vpack.c.b16 %v4837, %v4835
        %v4972 = vpack.c.b16 %v4838, %v4836
        %v4973 = vpack.c.b16 %v4841, %v4839
        %v4974 = vpack.c.b16 %v4842, %v4840
        %v4975 = vpack.c.b16 %v4845, %v4843
        %v4976 = vpack.c.b16 %v4846, %v4844
        %v4977 = vpack.c.b16 %v4849, %v4847
        %v4978 = vpack.c.b16 %v4850, %v4848
        %v4979 = vpack.c.b16 %v4853, %v4851
        %v4980 = vpack.c.b16 %v4854, %v4852
        %v4981 = vpack.c.b16 %v4857, %v4855
        %v4982 = vpack.c.b16 %v4858, %v4856
        %v4983 = vpack.c.b16 %v4861, %v4859
        %v4984 = vpack.c.b16 %v4862, %v4860
        %v4985 = vpack.c.b16 %v4865, %v4863
        %v4986 = vpack.c.b16 %v4866, %v4864
        %v4987 = vpack.c.b16 %v4869, %v4867
        %v4988 = vpack.c.b16 %v4870, %v4868
        %v4989 = vpack.c.b16 %v4873, %v4871
        %v4990 = vpack.c.b16 %v4874, %v4872
        %v4991 = vpack.c.b16 %v4877, %v4875
        %v4992 = vpack.c.b16 %v4878, %v4876
        %v4993 = vpack.c.b16 %v4881, %v4879
        %v4994 = vpack.c.b16 %v4882, %v4880
        %v4995 = vpack.c.b16 %v4885, %v4883
        %v4996 = vpack.c.b16 %v4886, %v4884
        %v4997 = vpack.c.b16 %v4889, %v4887
        %v4998 = vpack.c.b16 %v4890, %v4888
        %v4999 = vpack.c.b16 %v4893, %v4891
        %v5000 = vpack.c.b16 %v4894, %v4892
        %v5001 = vpack.c.b16 %v4897, %v4895
        %v5002 = vpack.c.b16 %v4898, %v4896
        %v5003 = vpack.c.b16 %v4901, %v4899
        %v5004 = vpack.c.b16 %v4902, %v4900
        %v5005 = vpack.c.b16 %v4905, %v4903
        %v5006 = vpack.c.b16 %v4906, %v4904
        %v5007 = vpack.c.b16 %v4909, %v4907
        %v5008 = vpack.c.b16 %v4910, %v4908
        %v5009 = vpack.c.b16 %v4913, %v4911
        %v5010 = vpack.c.b16 %v4914, %v4912
        %v5011 = vpack.c.b16 %v4917, %v4915
        %v5012 = vpack.c.b16 %v4918, %v4916
        %v5013 = vpack.c.b16 %v4921, %v4919
        %v5014 = vpack.c.b16 %v4922, %v4920
        %v5015 = vpack.c.b16 %v4925, %v4923
        %v5016 = vpack.c.b16 %v4926, %v4924
        %v5017 = vpack.c.b16 %v4929, %v4927
        %v5018 = vpack.c.b16 %v4930, %v4928
        %v5019 = vpack.c.b16 %v4933, %v4931
        %v5020 = vpack.c.b16 %v4934, %v4932
        %v5021 = vpack.c.b16 %v4937, %v4935
        %v5022 = vpack.c.b16 %v4938, %v4936
        %v5023 = vpack.c.b16 %v4941, %v4939
        %v5024 = vpack.c.b16 %v4942, %v4940
        %v5025 = vpack.c.b16 %v4945, %v4943
        %v5026 = vpack.c.b16 %v4946, %v4944
        %5107 = vmatprep.subr.bf16.mxu0 %v4948
        %5108 = vmatpush1.bf16.msra.mxu0 %v4947
        %5109 = vmatprep.subr.bf16.mxu0 %v4950
        %5110 = vmatpush1.bf16.msra.mxu0 %v4949
        %5111 = vmatprep.subr.bf16.mxu0 %v4952
        %5112 = vmatpush1.bf16.msra.mxu0 %v4951
        %5113 = vmatprep.subr.bf16.mxu0 %v4954
        %5114 = vmatpush1.bf16.msra.mxu0 %v4953
        %5115 = vmatprep.subr.bf16.mxu0 %v4956
        %5116 = vmatpush1.bf16.msra.mxu0 %v4955
        %5117 = vmatprep.subr.bf16.mxu0 %v4958
        %5118 = vmatpush1.bf16.msra.mxu0 %v4957
        %5119 = vmatprep.subr.bf16.mxu0 %v4960
        %5120 = vmatpush1.bf16.msra.mxu0 %v4959
        %5121 = vmatprep.subr.bf16.mxu0 %v4962
        %5122 = vmatpush1.bf16.msra.mxu0 %v4961
        %5123 = vmatprep.subr.bf16.mxu0 %v4964
        %5124 = vmatpush1.bf16.msra.mxu0 %v4963
        %5125 = vmatprep.subr.bf16.mxu0 %v4966
        %5126 = vmatpush1.bf16.msra.mxu0 %v4965
        %5127 = vmatprep.subr.bf16.mxu0 %v4968
        %5128 = vmatpush1.bf16.msra.mxu0 %v4967
        %5129 = vmatprep.subr.bf16.mxu0 %v4970
        %5130 = vmatpush1.bf16.msra.mxu0 %v4969
        %5131 = vmatprep.subr.bf16.mxu0 %v4972
        %5132 = vmatpush1.bf16.msra.mxu0 %v4971
        %5133 = vmatprep.subr.bf16.mxu0 %v4974
        %5134 = vmatpush1.bf16.msra.mxu0 %v4973
        %5135 = vmatprep.subr.bf16.mxu0 %v4976
        %5136 = vmatpush1.bf16.msra.mxu0 %v4975
        %5137 = vmatprep.subr.bf16.mxu0 %v4978
        %5138 = vmatpush1.bf16.msra.mxu0 %v4977
        %5139 = vmatprep.mubr.bf16.mxu0 %v4548
        %5140 = vmatmul.mubr.bf16.gmra.mrb[0].mxu0 %v4547
        %v5141 = vpop.f32.mrb[0].mxu0
        %v5142 = vadd.f32 0.0, %v5141
        %v5143 = vpop.f32.mrb[0].mxu0
        %v5144 = vadd.f32 0.0, %v5143
        %v5145 = vpop.f32.mrb[0].mxu0
        %v5146 = vadd.f32 0.0, %v5145
        %v5147 = vpop.f32.mrb[0].mxu0
        %v5148 = vadd.f32 0.0, %v5147
        %5149 = vmatprep.mubr.bf16.mxu0 %v4553
        %5150 = vmatmul.mubr.bf16.gmra.mrb[0].mxu0 %v4552
        %v5151 = vpop.f32.mrb[0].mxu0
        %v5152 = vadd.f32 0.0, %v5151
        %v5153 = vpop.f32.mrb[0].mxu0
        %v5154 = vadd.f32 0.0, %v5153
        %v5155 = vpop.f32.mrb[0].mxu0
        %v5156 = vadd.f32 0.0, %v5155
        %v5157 = vpop.f32.mrb[0].mxu0
        %v5158 = vadd.f32 0.0, %v5157
        %5159 = vmatprep.mubr.bf16.mxu0 %v4558
        %5160 = vmatmul.mubr.bf16.gmra.mrb[0].mxu0 %v4557
        %v5161 = vpop.f32.mrb[0].mxu0
        %v5162 = vadd.f32 0.0, %v5161
        %v5163 = vpop.f32.mrb[0].mxu0
        %v5164 = vadd.f32 0.0, %v5163
        %v5165 = vpop.f32.mrb[0].mxu0
        %v5166 = vadd.f32 0.0, %v5165
        %v5167 = vpop.f32.mrb[0].mxu0
        %v5168 = vadd.f32 0.0, %v5167
        %5169 = vmatprep.mubr.bf16.mxu0 %v4563
        %5170 = vmatmul.mubr.bf16.gmra.mrb[0].mxu0 %v4562
        %v5171 = vpop.f32.mrb[0].mxu0
        %v5172 = vadd.f32 0.0, %v5171
        %v5173 = vpop.f32.mrb[0].mxu0
        %v5174 = vadd.f32 0.0, %v5173
        %v5175 = vpop.f32.mrb[0].mxu0
        %v5176 = vadd.f32 0.0, %v5175
        %v5177 = vpop.f32.mrb[0].mxu0
        %v5178 = vadd.f32 0.0, %v5177
        %5179 = vmatprep.mubr.bf16.mxu0 %v4568
        %5180 = vmatmul.mubr.bf16.gmra.mrb[0].mxu0 %v4567
        %v5181 = vpop.f32.mrb[0].mxu0
        %v5182 = vadd.f32 0.0, %v5181
        %v5183 = vpop.f32.mrb[0].mxu0
        %v5184 = vadd.f32 0.0, %v5183
        %v5185 = vpop.f32.mrb[0].mxu0
        %v5186 = vadd.f32 0.0, %v5185
        %v5187 = vpop.f32.mrb[0].mxu0
        %v5188 = vadd.f32 0.0, %v5187
        %5189 = vmatprep.mubr.bf16.mxu0 %v4573
        %5190 = vmatmul.mubr.bf16.gmra.mrb[0].mxu0 %v4572
        %v5191 = vpop.f32.mrb[0].mxu0
        %v5192 = vadd.f32 0.0, %v5191
        %v5193 = vpop.f32.mrb[0].mxu0
        %v5194 = vadd.f32 0.0, %v5193
        %v5195 = vpop.f32.mrb[0].mxu0
        %v5196 = vadd.f32 0.0, %v5195
        %v5197 = vpop.f32.mrb[0].mxu0
        %v5198 = vadd.f32 0.0, %v5197
        %5199 = vmatprep.mubr.bf16.mxu0 %v4578
        %5200 = vmatmul.mubr.bf16.gmra.mrb[0].mxu0 %v4577
        %v5201 = vpop.f32.mrb[0].mxu0
        %v5202 = vadd.f32 0.0, %v5201
        %v5203 = vpop.f32.mrb[0].mxu0
        %v5204 = vadd.f32 0.0, %v5203
        %v5205 = vpop.f32.mrb[0].mxu0
        %v5206 = vadd.f32 0.0, %v5205
        %v5207 = vpop.f32.mrb[0].mxu0
        %v5208 = vadd.f32 0.0, %v5207
        %5209 = vmatprep.mubr.bf16.mxu0 %v4583
        %5210 = vmatmul.mubr.bf16.gmra.mrb[0].mxu0 %v4582
        %v5211 = vpop.f32.mrb[0].mxu0
        %v5212 = vadd.f32 0.0, %v5211
        %v5213 = vpop.f32.mrb[0].mxu0
        %v5214 = vadd.f32 0.0, %v5213
        %v5215 = vpop.f32.mrb[0].mxu0
        %v5216 = vadd.f32 0.0, %v5215
        %v5217 = vpop.f32.mrb[0].mxu0
        %v5218 = vadd.f32 0.0, %v5217
        %5219 = vmatprep.mubr.bf16.mxu0 %v4588
        %5220 = vmatmul.mubr.bf16.gmra.mrb[0].mxu0 %v4587
        %v5221 = vpop.f32.mrb[0].mxu0
        %v5222 = vadd.f32 0.0, %v5221
        %v5223 = vpop.f32.mrb[0].mxu0
        %v5224 = vadd.f32 0.0, %v5223
        %v5225 = vpop.f32.mrb[0].mxu0
        %v5226 = vadd.f32 0.0, %v5225
        %v5227 = vpop.f32.mrb[0].mxu0
        %v5228 = vadd.f32 0.0, %v5227
        %5229 = vmatprep.mubr.bf16.mxu0 %v4593
        %5230 = vmatmul.mubr.bf16.gmra.mrb[0].mxu0 %v4592
        %v5231 = vpop.f32.mrb[0].mxu0
        %v5232 = vadd.f32 0.0, %v5231
        %v5233 = vpop.f32.mrb[0].mxu0
        %v5234 = vadd.f32 0.0, %v5233
        %v5235 = vpop.f32.mrb[0].mxu0
        %v5236 = vadd.f32 0.0, %v5235
        %v5237 = vpop.f32.mrb[0].mxu0
        %v5238 = vadd.f32 0.0, %v5237
        %5239 = vmatprep.mubr.bf16.mxu0 %v4598
        %5240 = vmatmul.mubr.bf16.gmra.mrb[0].mxu0 %v4597
        %v5241 = vpop.f32.mrb[0].mxu0
        %v5242 = vadd.f32 0.0, %v5241
        %v5243 = vpop.f32.mrb[0].mxu0
        %v5244 = vadd.f32 0.0, %v5243
        %v5245 = vpop.f32.mrb[0].mxu0
        %v5246 = vadd.f32 0.0, %v5245
        %v5247 = vpop.f32.mrb[0].mxu0
        %v5248 = vadd.f32 0.0, %v5247
        %5249 = vmatprep.mubr.bf16.mxu0 %v4603
        %5250 = vmatmul.mubr.bf16.gmra.mrb[0].mxu0 %v4602
        %v5251 = vpop.f32.mrb[0].mxu0
        %v5252 = vadd.f32 0.0, %v5251
        %v5253 = vpop.f32.mrb[0].mxu0
        %v5254 = vadd.f32 0.0, %v5253
        %v5255 = vpop.f32.mrb[0].mxu0
        %v5256 = vadd.f32 0.0, %v5255
        %v5257 = vpop.f32.mrb[0].mxu0
        %v5258 = vadd.f32 0.0, %v5257
        %5259 = vmatprep.mubr.bf16.mxu0 %v4608
        %5260 = vmatmul.mubr.bf16.gmra.mrb[0].mxu0 %v4607
        %v5261 = vpop.f32.mrb[0].mxu0
        %v5262 = vadd.f32 0.0, %v5261
        %v5263 = vpop.f32.mrb[0].mxu0
        %v5264 = vadd.f32 0.0, %v5263
        %v5265 = vpop.f32.mrb[0].mxu0
        %v5266 = vadd.f32 0.0, %v5265
        %v5267 = vpop.f32.mrb[0].mxu0
        %v5268 = vadd.f32 0.0, %v5267
        %5269 = vmatprep.mubr.bf16.mxu0 %v4613
        %5270 = vmatmul.mubr.bf16.gmra.mrb[0].mxu0 %v4612
        %v5271 = vpop.f32.mrb[0].mxu0
        %v5272 = vadd.f32 0.0, %v5271
        %v5273 = vpop.f32.mrb[0].mxu0
        %v5274 = vadd.f32 0.0, %v5273
        %v5275 = vpop.f32.mrb[0].mxu0
        %v5276 = vadd.f32 0.0, %v5275
        %v5277 = vpop.f32.mrb[0].mxu0
        %v5278 = vadd.f32 0.0, %v5277
        %5279 = vmatprep.mubr.bf16.mxu0 %v4618
        %5280 = vmatmul.mubr.bf16.gmra.mrb[0].mxu0 %v4617
        %v5281 = vpop.f32.mrb[0].mxu0
        %v5282 = vadd.f32 0.0, %v5281
        %v5283 = vpop.f32.mrb[0].mxu0
        %v5284 = vadd.f32 0.0, %v5283
        %v5285 = vpop.f32.mrb[0].mxu0
        %v5286 = vadd.f32 0.0, %v5285
        %v5287 = vpop.f32.mrb[0].mxu0
        %v5288 = vadd.f32 0.0, %v5287
        %5289 = vmatprep.mubr.bf16.mxu0 %v4623
        %5290 = vmatmul.mubr.bf16.gmra.mrb[0].mxu0 %v4622
        %v5291 = vpop.f32.mrb[0].mxu0
        %v5292 = vadd.f32 0.0, %v5291
        %v5293 = vpop.f32.mrb[0].mxu0
        %v5294 = vadd.f32 0.0, %v5293
        %v5295 = vpop.f32.mrb[0].mxu0
        %v5296 = vadd.f32 0.0, %v5295
        %v5297 = vpop.f32.mrb[0].mxu0
        %v5298 = vadd.f32 0.0, %v5297
        %5299 = vdwg.mxu0
        %5300 = vmatprep.subr.bf16.mxu0 %v4980
        %5301 = vmatpush1.bf16.msra.mxu0 %v4979
        %5302 = vmatprep.subr.bf16.mxu0 %v4982
        %5303 = vmatpush1.bf16.msra.mxu0 %v4981
        %5304 = vmatprep.subr.bf16.mxu0 %v4984
        %5305 = vmatpush1.bf16.msra.mxu0 %v4983
        %5306 = vmatprep.subr.bf16.mxu0 %v4986
        %5307 = vmatpush1.bf16.msra.mxu0 %v4985
        %5308 = vmatprep.subr.bf16.mxu0 %v4988
        %5309 = vmatpush1.bf16.msra.mxu0 %v4987
        %5310 = vmatprep.subr.bf16.mxu0 %v4990
        %5311 = vmatpush1.bf16.msra.mxu0 %v4989
        %5312 = vmatprep.subr.bf16.mxu0 %v4992
        %5313 = vmatpush1.bf16.msra.mxu0 %v4991
        %5314 = vmatprep.subr.bf16.mxu0 %v4994
        %5315 = vmatpush1.bf16.msra.mxu0 %v4993
        %5316 = vmatprep.subr.bf16.mxu0 %v4996
        %5317 = vmatpush1.bf16.msra.mxu0 %v4995
        %5318 = vmatprep.subr.bf16.mxu0 %v4998
        %5319 = vmatpush1.bf16.msra.mxu0 %v4997
        %5320 = vmatprep.subr.bf16.mxu0 %v5000
        %5321 = vmatpush1.bf16.msra.mxu0 %v4999
        %5322 = vmatprep.subr.bf16.mxu0 %v5002
        %5323 = vmatpush1.bf16.msra.mxu0 %v5001
        %5324 = vmatprep.subr.bf16.mxu0 %v5004
        %5325 = vmatpush1.bf16.msra.mxu0 %v5003
        %5326 = vmatprep.subr.bf16.mxu0 %v5006
        %5327 = vmatpush1.bf16.msra.mxu0 %v5005
        %5328 = vmatprep.subr.bf16.mxu0 %v5008
        %5329 = vmatpush1.bf16.msra.mxu0 %v5007
        %5330 = vmatprep.subr.bf16.mxu0 %v5010
        %5331 = vmatpush1.bf16.msra.mxu0 %v5009
        %5332 = vmatprep.mubr.bf16.mxu0 %v4550
        %5333 = vmatmul.mubr.bf16.gmra.mrb[0].mxu0 %v4549
        %v5334 = vpop.f32.mrb[0].mxu0
        %v5335 = vadd.f32 %v5142, %v5334
        %v5336 = vpop.f32.mrb[0].mxu0
        %v5337 = vadd.f32 %v5144, %v5336
        %v5338 = vpop.f32.mrb[0].mxu0
        %v5339 = vadd.f32 %v5146, %v5338
        %v5340 = vpop.f32.mrb[0].mxu0
        %v5341 = vadd.f32 %v5148, %v5340
        %5342 = vmatprep.mubr.bf16.mxu0 %v4555
        %5343 = vmatmul.mubr.bf16.gmra.mrb[0].mxu0 %v4554
        %v5344 = vpop.f32.mrb[0].mxu0
        %v5345 = vadd.f32 %v5152, %v5344
        %v5346 = vpop.f32.mrb[0].mxu0
        %v5347 = vadd.f32 %v5154, %v5346
        %v5348 = vpop.f32.mrb[0].mxu0
        %v5349 = vadd.f32 %v5156, %v5348
        %v5350 = vpop.f32.mrb[0].mxu0
        %v5351 = vadd.f32 %v5158, %v5350
        %5352 = vmatprep.mubr.bf16.mxu0 %v4560
        %5353 = vmatmul.mubr.bf16.gmra.mrb[0].mxu0 %v4559
        %v5354 = vpop.f32.mrb[0].mxu0
        %v5355 = vadd.f32 %v5162, %v5354
        %v5356 = vpop.f32.mrb[0].mxu0
        %v5357 = vadd.f32 %v5164, %v5356
        %v5358 = vpop.f32.mrb[0].mxu0
        %v5359 = vadd.f32 %v5166, %v5358
        %v5360 = vpop.f32.mrb[0].mxu0
        %v5361 = vadd.f32 %v5168, %v5360
        %5362 = vmatprep.mubr.bf16.mxu0 %v4565
        %5363 = vmatmul.mubr.bf16.gmra.mrb[0].mxu0 %v4564
        %v5364 = vpop.f32.mrb[0].mxu0
        %v5365 = vadd.f32 %v5172, %v5364
        %v5366 = vpop.f32.mrb[0].mxu0
        %v5367 = vadd.f32 %v5174, %v5366
        %v5368 = vpop.f32.mrb[0].mxu0
        %v5369 = vadd.f32 %v5176, %v5368
        %v5370 = vpop.f32.mrb[0].mxu0
        %v5371 = vadd.f32 %v5178, %v5370
        %5372 = vmatprep.mubr.bf16.mxu0 %v4570
        %5373 = vmatmul.mubr.bf16.gmra.mrb[0].mxu0 %v4569
        %v5374 = vpop.f32.mrb[0].mxu0
        %v5375 = vadd.f32 %v5182, %v5374
        %v5376 = vpop.f32.mrb[0].mxu0
        %v5377 = vadd.f32 %v5184, %v5376
        %v5378 = vpop.f32.mrb[0].mxu0
        %v5379 = vadd.f32 %v5186, %v5378
        %v5380 = vpop.f32.mrb[0].mxu0
        %v5381 = vadd.f32 %v5188, %v5380
        %5382 = vmatprep.mubr.bf16.mxu0 %v4575
        %5383 = vmatmul.mubr.bf16.gmra.mrb[0].mxu0 %v4574
        %v5384 = vpop.f32.mrb[0].mxu0
        %v5385 = vadd.f32 %v5192, %v5384
        %v5386 = vpop.f32.mrb[0].mxu0
        %v5387 = vadd.f32 %v5194, %v5386
        %v5388 = vpop.f32.mrb[0].mxu0
        %v5389 = vadd.f32 %v5196, %v5388
        %v5390 = vpop.f32.mrb[0].mxu0
        %v5391 = vadd.f32 %v5198, %v5390
        %5392 = vmatprep.mubr.bf16.mxu0 %v4580
        %5393 = vmatmul.mubr.bf16.gmra.mrb[0].mxu0 %v4579
        %v5394 = vpop.f32.mrb[0].mxu0
        %v5395 = vadd.f32 %v5202, %v5394
        %v5396 = vpop.f32.mrb[0].mxu0
        %v5397 = vadd.f32 %v5204, %v5396
        %v5398 = vpop.f32.mrb[0].mxu0
        %v5399 = vadd.f32 %v5206, %v5398
        %v5400 = vpop.f32.mrb[0].mxu0
        %v5401 = vadd.f32 %v5208, %v5400
        %5402 = vmatprep.mubr.bf16.mxu0 %v4585
        %5403 = vmatmul.mubr.bf16.gmra.mrb[0].mxu0 %v4584
        %v5404 = vpop.f32.mrb[0].mxu0
        %v5405 = vadd.f32 %v5212, %v5404
        %v5406 = vpop.f32.mrb[0].mxu0
        %v5407 = vadd.f32 %v5214, %v5406
        %v5408 = vpop.f32.mrb[0].mxu0
        %v5409 = vadd.f32 %v5216, %v5408
        %v5410 = vpop.f32.mrb[0].mxu0
        %v5411 = vadd.f32 %v5218, %v5410
        %5412 = vmatprep.mubr.bf16.mxu0 %v4590
        %5413 = vmatmul.mubr.bf16.gmra.mrb[0].mxu0 %v4589
        %v5414 = vpop.f32.mrb[0].mxu0
        %v5415 = vadd.f32 %v5222, %v5414
        %v5416 = vpop.f32.mrb[0].mxu0
        %v5417 = vadd.f32 %v5224, %v5416
        %v5418 = vpop.f32.mrb[0].mxu0
        %v5419 = vadd.f32 %v5226, %v5418
        %v5420 = vpop.f32.mrb[0].mxu0
        %v5421 = vadd.f32 %v5228, %v5420
        %5422 = vmatprep.mubr.bf16.mxu0 %v4595
        %5423 = vmatmul.mubr.bf16.gmra.mrb[0].mxu0 %v4594
        %v5424 = vpop.f32.mrb[0].mxu0
        %v5425 = vadd.f32 %v5232, %v5424
        %v5426 = vpop.f32.mrb[0].mxu0
        %v5427 = vadd.f32 %v5234, %v5426
        %v5428 = vpop.f32.mrb[0].mxu0
        %v5429 = vadd.f32 %v5236, %v5428
        %v5430 = vpop.f32.mrb[0].mxu0
        %v5431 = vadd.f32 %v5238, %v5430
        %5432 = vmatprep.mubr.bf16.mxu0 %v4600
        %5433 = vmatmul.mubr.bf16.gmra.mrb[0].mxu0 %v4599
        %v5434 = vpop.f32.mrb[0].mxu0
        %v5435 = vadd.f32 %v5242, %v5434
        %v5436 = vpop.f32.mrb[0].mxu0
        %v5437 = vadd.f32 %v5244, %v5436
        %v5438 = vpop.f32.mrb[0].mxu0
        %v5439 = vadd.f32 %v5246, %v5438
        %v5440 = vpop.f32.mrb[0].mxu0
        %v5441 = vadd.f32 %v5248, %v5440
        %5442 = vmatprep.mubr.bf16.mxu0 %v4605
        %5443 = vmatmul.mubr.bf16.gmra.mrb[0].mxu0 %v4604
        %v5444 = vpop.f32.mrb[0].mxu0
        %v5445 = vadd.f32 %v5252, %v5444
        %v5446 = vpop.f32.mrb[0].mxu0
        %v5447 = vadd.f32 %v5254, %v5446
        %v5448 = vpop.f32.mrb[0].mxu0
        %v5449 = vadd.f32 %v5256, %v5448
        %v5450 = vpop.f32.mrb[0].mxu0
        %v5451 = vadd.f32 %v5258, %v5450
        %5452 = vmatprep.mubr.bf16.mxu0 %v4610
        %5453 = vmatmul.mubr.bf16.gmra.mrb[0].mxu0 %v4609
        %v5454 = vpop.f32.mrb[0].mxu0
        %v5455 = vadd.f32 %v5262, %v5454
        %v5456 = vpop.f32.mrb[0].mxu0
        %v5457 = vadd.f32 %v5264, %v5456
        %v5458 = vpop.f32.mrb[0].mxu0
        %v5459 = vadd.f32 %v5266, %v5458
        %v5460 = vpop.f32.mrb[0].mxu0
        %v5461 = vadd.f32 %v5268, %v5460
        %5462 = vmatprep.mubr.bf16.mxu0 %v4615
        %5463 = vmatmul.mubr.bf16.gmra.mrb[0].mxu0 %v4614
        %v5464 = vpop.f32.mrb[0].mxu0
        %v5465 = vadd.f32 %v5272, %v5464
        %v5466 = vpop.f32.mrb[0].mxu0
        %v5467 = vadd.f32 %v5274, %v5466
        %v5468 = vpop.f32.mrb[0].mxu0
        %v5469 = vadd.f32 %v5276, %v5468
        %v5470 = vpop.f32.mrb[0].mxu0
        %v5471 = vadd.f32 %v5278, %v5470
        %5472 = vmatprep.mubr.bf16.mxu0 %v4620
        %5473 = vmatmul.mubr.bf16.gmra.mrb[0].mxu0 %v4619
        %v5474 = vpop.f32.mrb[0].mxu0
        %v5475 = vadd.f32 %v5282, %v5474
        %v5476 = vpop.f32.mrb[0].mxu0
        %v5477 = vadd.f32 %v5284, %v5476
        %v5478 = vpop.f32.mrb[0].mxu0
        %v5479 = vadd.f32 %v5286, %v5478
        %v5480 = vpop.f32.mrb[0].mxu0
        %v5481 = vadd.f32 %v5288, %v5480
        %5482 = vmatprep.mubr.bf16.mxu0 %v4625
        %5483 = vmatmul.mubr.bf16.gmra.mrb[0].mxu0 %v4624
        %v5484 = vpop.f32.mrb[0].mxu0
        %v5485 = vadd.f32 %v5292, %v5484
        %v5486 = vpop.f32.mrb[0].mxu0
        %v5487 = vadd.f32 %v5294, %v5486
        %v5488 = vpop.f32.mrb[0].mxu0
        %v5489 = vadd.f32 %v5296, %v5488
        %v5490 = vpop.f32.mrb[0].mxu0
        %v5491 = vadd.f32 %v5298, %v5490
        %5492 = vdwg.mxu0
        %5493 = vmatprep.subr.bf16.mxu0 %v5012
        %5494 = vmatpush1.bf16.msra.mxu0 %v5011
        %5495 = vmatprep.subr.bf16.mxu0 %v5014
        %5496 = vmatpush1.bf16.msra.mxu0 %v5013
        %5497 = vmatprep.subr.bf16.mxu0 %v5016
        %5498 = vmatpush1.bf16.msra.mxu0 %v5015
        %5499 = vmatprep.subr.bf16.mxu0 %v5018
        %5500 = vmatpush1.bf16.msra.mxu0 %v5017
        %5501 = vmatprep.subr.bf16.mxu0 %v5020
        %5502 = vmatpush1.bf16.msra.mxu0 %v5019
        %5503 = vmatprep.subr.bf16.mxu0 %v5022
        %5504 = vmatpush1.bf16.msra.mxu0 %v5021
        %5505 = vmatprep.subr.bf16.mxu0 %v5024
        %5506 = vmatpush1.bf16.msra.mxu0 %v5023
        %5507 = vmatprep.subr.bf16.mxu0 %v5026
        %5508 = vmatpush1.bf16.msra.mxu0 %v5025
        %5509 = vmatprep.subr.bf16.mxu0 0
        %5510 = vmatpush1.bf16.msra.mxu0 0
        %5511 = vmatprep.subr.bf16.mxu0 0
        %5512 = vmatpush1.bf16.msra.mxu0 0
        %5513 = vmatprep.subr.bf16.mxu0 0
        %5514 = vmatpush1.bf16.msra.mxu0 0
        %5515 = vmatprep.subr.bf16.mxu0 0
        %5516 = vmatpush1.bf16.msra.mxu0 0
        %5517 = vmatprep.subr.bf16.mxu0 0
        %5518 = vmatpush1.bf16.msra.mxu0 0
        %5519 = vmatprep.subr.bf16.mxu0 0
        %5520 = vmatpush1.bf16.msra.mxu0 0
        %5521 = vmatprep.subr.bf16.mxu0 0
        %5522 = vmatpush1.bf16.msra.mxu0 0
        %5523 = vmatprep.subr.bf16.mxu0 0
        %5524 = vmatpush1.bf16.msra.mxu0 0
        %5525 = vmatprep.mubr.bf16.mxu0 0
        %5526 = vmatmul.mubr.bf16.gmra.mrb[0].mxu0 %v4551
        %v5527 = vpop.f32.mrb[0].mxu0
        %v5528 = vadd.f32 %v5335, %v5527
        %v5529 = vpop.f32.mrb[0].mxu0
        %v5530 = vadd.f32 %v5337, %v5529
        %v5531 = vpop.f32.mrb[0].mxu0
        %v5532 = vadd.f32 %v5339, %v5531
        %v5533 = vpop.f32.mrb[0].mxu0
        %v5534 = vadd.f32 %v5341, %v5533
        %5535 = vmatprep.mubr.bf16.mxu0 0
        %5536 = vmatmul.mubr.bf16.gmra.mrb[0].mxu0 %v4556
        %v5537 = vpop.f32.mrb[0].mxu0
        %v5538 = vadd.f32 %v5345, %v5537
        %v5539 = vpop.f32.mrb[0].mxu0
        %v5540 = vadd.f32 %v5347, %v5539
        %v5541 = vpop.f32.mrb[0].mxu0
        %v5542 = vadd.f32 %v5349, %v5541
        %v5543 = vpop.f32.mrb[0].mxu0
        %v5544 = vadd.f32 %v5351, %v5543
        %5545 = vmatprep.mubr.bf16.mxu0 0
        %5546 = vmatmul.mubr.bf16.gmra.mrb[0].mxu0 %v4561
        %v5547 = vpop.f32.mrb[0].mxu0
        %v5548 = vadd.f32 %v5355, %v5547
        %v5549 = vpop.f32.mrb[0].mxu0
        %v5550 = vadd.f32 %v5357, %v5549
        %v5551 = vpop.f32.mrb[0].mxu0
        %v5552 = vadd.f32 %v5359, %v5551
        %v5553 = vpop.f32.mrb[0].mxu0
        %v5554 = vadd.f32 %v5361, %v5553
        %5555 = vmatprep.mubr.bf16.mxu0 0
        %5556 = vmatmul.mubr.bf16.gmra.mrb[0].mxu0 %v4566
        %v5557 = vpop.f32.mrb[0].mxu0
        %v5558 = vadd.f32 %v5365, %v5557
        %v5559 = vpop.f32.mrb[0].mxu0
        %v5560 = vadd.f32 %v5367, %v5559
        %v5561 = vpop.f32.mrb[0].mxu0
        %v5562 = vadd.f32 %v5369, %v5561
        %v5563 = vpop.f32.mrb[0].mxu0
        %v5564 = vadd.f32 %v5371, %v5563
        %5565 = vmatprep.mubr.bf16.mxu0 0
        %5566 = vmatmul.mubr.bf16.gmra.mrb[0].mxu0 %v4571
        %v5567 = vpop.f32.mrb[0].mxu0
        %v5568 = vadd.f32 %v5375, %v5567
        %v5569 = vpop.f32.mrb[0].mxu0
        %v5570 = vadd.f32 %v5377, %v5569
        %v5571 = vpop.f32.mrb[0].mxu0
        %v5572 = vadd.f32 %v5379, %v5571
        %v5573 = vpop.f32.mrb[0].mxu0
        %v5574 = vadd.f32 %v5381, %v5573
        %5575 = vmatprep.mubr.bf16.mxu0 0
        %5576 = vmatmul.mubr.bf16.gmra.mrb[0].mxu0 %v4576
        %v5577 = vpop.f32.mrb[0].mxu0
        %v5578 = vadd.f32 %v5385, %v5577
        %v5579 = vpop.f32.mrb[0].mxu0
        %v5580 = vadd.f32 %v5387, %v5579
        %v5581 = vpop.f32.mrb[0].mxu0
        %v5582 = vadd.f32 %v5389, %v5581
        %v5583 = vpop.f32.mrb[0].mxu0
        %v5584 = vadd.f32 %v5391, %v5583
        %5585 = vmatprep.mubr.bf16.mxu0 0
        %5586 = vmatmul.mubr.bf16.gmra.mrb[0].mxu0 %v4581
        %v5587 = vpop.f32.mrb[0].mxu0
        %v5588 = vadd.f32 %v5395, %v5587
        %v5589 = vpop.f32.mrb[0].mxu0
        %v5590 = vadd.f32 %v5397, %v5589
        %v5591 = vpop.f32.mrb[0].mxu0
        %v5592 = vadd.f32 %v5399, %v5591
        %v5593 = vpop.f32.mrb[0].mxu0
        %v5594 = vadd.f32 %v5401, %v5593
        %5595 = vmatprep.mubr.bf16.mxu0 0
        %5596 = vmatmul.mubr.bf16.gmra.mrb[0].mxu0 %v4586
        %v5597 = vpop.f32.mrb[0].mxu0
        %v5598 = vadd.f32 %v5405, %v5597
        %v5599 = vpop.f32.mrb[0].mxu0
        %v5600 = vadd.f32 %v5407, %v5599
        %v5601 = vpop.f32.mrb[0].mxu0
        %v5602 = vadd.f32 %v5409, %v5601
        %v5603 = vpop.f32.mrb[0].mxu0
        %v5604 = vadd.f32 %v5411, %v5603
        %5605 = vmatprep.mubr.bf16.mxu0 0
        %5606 = vmatmul.mubr.bf16.gmra.mrb[0].mxu0 %v4591
        %v5607 = vpop.f32.mrb[0].mxu0
        %v5608 = vadd.f32 %v5415, %v5607
        %v5609 = vpop.f32.mrb[0].mxu0
        %v5610 = vadd.f32 %v5417, %v5609
        %v5611 = vpop.f32.mrb[0].mxu0
        %v5612 = vadd.f32 %v5419, %v5611
        %v5613 = vpop.f32.mrb[0].mxu0
        %v5614 = vadd.f32 %v5421, %v5613
        %5615 = vmatprep.mubr.bf16.mxu0 0
        %5616 = vmatmul.mubr.bf16.gmra.mrb[0].mxu0 %v4596
        %v5617 = vpop.f32.mrb[0].mxu0
        %v5618 = vadd.f32 %v5425, %v5617
        %v5619 = vpop.f32.mrb[0].mxu0
        %v5620 = vadd.f32 %v5427, %v5619
        %v5621 = vpop.f32.mrb[0].mxu0
        %v5622 = vadd.f32 %v5429, %v5621
        %v5623 = vpop.f32.mrb[0].mxu0
        %v5624 = vadd.f32 %v5431, %v5623
        %5625 = vmatprep.mubr.bf16.mxu0 0
        %5626 = vmatmul.mubr.bf16.gmra.mrb[0].mxu0 %v4601
        %v5627 = vpop.f32.mrb[0].mxu0
        %v5628 = vadd.f32 %v5435, %v5627
        %v5629 = vpop.f32.mrb[0].mxu0
        %v5630 = vadd.f32 %v5437, %v5629
        %v5631 = vpop.f32.mrb[0].mxu0
        %v5632 = vadd.f32 %v5439, %v5631
        %v5633 = vpop.f32.mrb[0].mxu0
        %v5634 = vadd.f32 %v5441, %v5633
        %5635 = vmatprep.mubr.bf16.mxu0 0
        %5636 = vmatmul.mubr.bf16.gmra.mrb[0].mxu0 %v4606
        %v5637 = vpop.f32.mrb[0].mxu0
        %v5638 = vadd.f32 %v5445, %v5637
        %v5639 = vpop.f32.mrb[0].mxu0
        %v5640 = vadd.f32 %v5447, %v5639
        %v5641 = vpop.f32.mrb[0].mxu0
        %v5642 = vadd.f32 %v5449, %v5641
        %v5643 = vpop.f32.mrb[0].mxu0
        %v5644 = vadd.f32 %v5451, %v5643
        %5645 = vmatprep.mubr.bf16.mxu0 0
        %5646 = vmatmul.mubr.bf16.gmra.mrb[0].mxu0 %v4611
        %v5647 = vpop.f32.mrb[0].mxu0
        %v5648 = vadd.f32 %v5455, %v5647
        %v5649 = vpop.f32.mrb[0].mxu0
        %v5650 = vadd.f32 %v5457, %v5649
        %v5651 = vpop.f32.mrb[0].mxu0
        %v5652 = vadd.f32 %v5459, %v5651
        %v5653 = vpop.f32.mrb[0].mxu0
        %v5654 = vadd.f32 %v5461, %v5653
        %5655 = vmatprep.mubr.bf16.mxu0 0
        %5656 = vmatmul.mubr.bf16.gmra.mrb[0].mxu0 %v4616
        %v5657 = vpop.f32.mrb[0].mxu0
        %v5658 = vadd.f32 %v5465, %v5657
        %v5659 = vpop.f32.mrb[0].mxu0
        %v5660 = vadd.f32 %v5467, %v5659
        %v5661 = vpop.f32.mrb[0].mxu0
        %v5662 = vadd.f32 %v5469, %v5661
        %v5663 = vpop.f32.mrb[0].mxu0
        %v5664 = vadd.f32 %v5471, %v5663
        %5665 = vmatprep.mubr.bf16.mxu0 0
        %5666 = vmatmul.mubr.bf16.gmra.mrb[0].mxu0 %v4621
        %v5667 = vpop.f32.mrb[0].mxu0
        %v5668 = vadd.f32 %v5475, %v5667
        %v5669 = vpop.f32.mrb[0].mxu0
        %v5670 = vadd.f32 %v5477, %v5669
        %v5671 = vpop.f32.mrb[0].mxu0
        %v5672 = vadd.f32 %v5479, %v5671
        %v5673 = vpop.f32.mrb[0].mxu0
        %v5674 = vadd.f32 %v5481, %v5673
        %5675 = vmatprep.mubr.bf16.mxu0 0
        %5676 = vmatmul.mubr.bf16.gmra.mrb[0].mxu0 %v4626
        %v5677 = vpop.f32.mrb[0].mxu0
        %v5678 = vadd.f32 %v5485, %v5677
        %v5679 = vpop.f32.mrb[0].mxu0
        %v5680 = vadd.f32 %v5487, %v5679
        %v5681 = vpop.f32.mrb[0].mxu0
        %v5682 = vadd.f32 %v5489, %v5681
        %v5683 = vpop.f32.mrb[0].mxu0
        %v5684 = vadd.f32 %v5491, %v5683
        %5685 = vdwg.mxu0
        %v5686 = vadd.f32 %v3792, %v5528
        %v5687 = vadd.f32 %v3793, %v5532
        %v5688 = vadd.f32 %v3794, %v5538
        %v5689 = vadd.f32 %v3795, %v5542
        %v5690 = vadd.f32 %v3796, %v5548
        %v5691 = vadd.f32 %v3797, %v5552
        %v5692 = vadd.f32 %v3798, %v5558
        %v5693 = vadd.f32 %v3799, %v5562
        %v5694 = vadd.f32 %v3800, %v5568
        %v5695 = vadd.f32 %v3801, %v5572
        %v5696 = vadd.f32 %v3802, %v5578
        %v5697 = vadd.f32 %v3803, %v5582
        %v5698 = vadd.f32 %v3804, %v5588
        %v5699 = vadd.f32 %v3805, %v5592
        %v5700 = vadd.f32 %v3806, %v5598
        %v5701 = vadd.f32 %v3807, %v5602
        %v5702 = vadd.f32 %v3808, %v5608
        %v5703 = vadd.f32 %v3809, %v5612
        %v5704 = vadd.f32 %v3810, %v5618
        %v5705 = vadd.f32 %v3811, %v5622
        %v5706 = vadd.f32 %v3812, %v5628
        %v5707 = vadd.f32 %v3813, %v5632
        %v5708 = vadd.f32 %v3814, %v5638
        %v5709 = vadd.f32 %v3815, %v5642
        %v5710 = vadd.f32 %v3816, %v5648
        %v5711 = vadd.f32 %v3817, %v5652
        %v5712 = vadd.f32 %v3818, %v5658
        %v5713 = vadd.f32 %v3819, %v5662
        %v5714 = vadd.f32 %v3820, %v5668
        %v5715 = vadd.f32 %v3821, %v5672
        %v5716 = vadd.f32 %v3822, %v5678
        %v5717 = vadd.f32 %v3823, %v5682
        %v5718 = vadd.f32 %v4421, %v5530
        %v5719 = vadd.f32 %v4424, %v5534
        %v5720 = vadd.f32 %v4429, %v5540
        %v5721 = vadd.f32 %v4432, %v5544
        %v5722 = vadd.f32 %v4437, %v5550
        %v5723 = vadd.f32 %v4440, %v5554
        %v5724 = vadd.f32 %v4445, %v5560
        %v5725 = vadd.f32 %v4448, %v5564
        %v5726 = vadd.f32 %v4453, %v5570
        %v5727 = vadd.f32 %v4456, %v5574
        %v5728 = vadd.f32 %v4461, %v5580
        %v5729 = vadd.f32 %v4464, %v5584
        %v5730 = vadd.f32 %v4469, %v5590
        %v5731 = vadd.f32 %v4472, %v5594
        %v5732 = vadd.f32 %v4477, %v5600
        %v5733 = vadd.f32 %v4480, %v5604
        %v5734 = vadd.f32 %v4485, %v5610
        %v5735 = vadd.f32 %v4488, %v5614
        %v5736 = vadd.f32 %v4493, %v5620
        %v5737 = vadd.f32 %v4496, %v5624
        %v5738 = vadd.f32 %v4501, %v5630
        %v5739 = vadd.f32 %v4504, %v5634
        %v5740 = vadd.f32 %v4509, %v5640
        %v5741 = vadd.f32 %v4512, %v5644
        %v5742 = vadd.f32 %v4517, %v5650
        %v5743 = vadd.f32 %v4520, %v5654
        %v5744 = vadd.f32 %v4525, %v5660
        %v5745 = vadd.f32 %v4528, %v5664
        %v5746 = vadd.f32 %v4533, %v5670
        %v5747 = vadd.f32 %v4536, %v5674
        %v5748 = vadd.f32 %v4541, %v5680
        %v5749 = vadd.f32 %v4544, %v5684
        %v5750 = vld [vmem:[#allocation2 + $0x78] sm:$0xff]
        %v5751 = vld [vmem:[#allocation2 + $0x80] sm:$0xff]
        %v5752 = vld [vmem:[#allocation2 + $0x88] sm:$0xff]
        %v5753 = vld [vmem:[#allocation2 + $0x90] sm:$0xff]
        %v5754 = vld [vmem:[#allocation2 + $0x98] sm:$0xff]
        %v5755 = vld [vmem:[#allocation2 + $0xa0] sm:$0xff]
        %v5756 = vld [vmem:[#allocation2 + $0xa8] sm:$0xff]
        %v5757 = vld [vmem:[#allocation2 + $0xb0] sm:$0xff]
        %v5758 = vld [vmem:[#allocation2 + $0xb8] sm:$0xff]
        %v5759 = vld [vmem:[#allocation2 + $0xc0] sm:$0xff]
        %v5760 = vld [vmem:[#allocation2 + $0xc8] sm:$0xff]
        %v5761 = vld [vmem:[#allocation2 + $0xd0] sm:$0xff]
        %v5762 = vld [vmem:[#allocation2 + $0xd8] sm:$0xff]
        %v5763 = vld [vmem:[#allocation2 + $0xe0] sm:$0xff]
        %v5764 = vld [vmem:[#allocation2 + $0xe8] sm:$0xff]
        %v5765 = vld [vmem:[#allocation2 + $0xf0] sm:$0xff]
        %v5766 = vld [vmem:[#allocation2 + $0xf8] sm:$0xff]
        %v5767 = vld [vmem:[#allocation2 + $0x100] sm:$0xff]
        %v5768 = vld [vmem:[#allocation2 + $0x108] sm:$0xff]
        %v5769 = vld [vmem:[#allocation2 + $0x110] sm:$0xff]
        %v5770 = vld [vmem:[#allocation2 + $0x118] sm:$0xff]
        %v5771 = vld [vmem:[#allocation2 + $0x120] sm:$0xff]
        %v5772 = vld [vmem:[#allocation2 + $0x128] sm:$0xff]
        %v5773 = vld [vmem:[#allocation2 + $0x130] sm:$0xff]
        %v5774 = vld [vmem:[#allocation2 + $0x138] sm:$0xff]
        %v5775 = vld [vmem:[#allocation2 + $0x140] sm:$0xff]
        %v5776 = vld [vmem:[#allocation2 + $0x148] sm:$0xff]
        %v5777 = vld [vmem:[#allocation2 + $0x150] sm:$0xff]
        %v5778 = vld [vmem:[#allocation2 + $0x158] sm:$0xff]
        %v5779 = vld [vmem:[#allocation2 + $0x160] sm:$0xff]
        %v5780 = vld [vmem:[#allocation2 + $0x168] sm:$0xff]
        %v5781 = vld [vmem:[#allocation2 + $0x170] sm:$0xff]
        %v5782 = vld [vmem:[#allocation2 + $0x178] sm:$0xff]
        %v5783 = vld [vmem:[#allocation2 + $0x180] sm:$0xff]
        %v5784 = vld [vmem:[#allocation2 + $0x188] sm:$0xff]
        %v5785 = vld [vmem:[#allocation2 + $0x190] sm:$0xff]
        %v5786 = vld [vmem:[#allocation2 + $0x198] sm:$0xff]
        %v5787 = vld [vmem:[#allocation2 + $0x1a0] sm:$0xff]
        %v5788 = vld [vmem:[#allocation2 + $0x1a8] sm:$0xff]
        %v5789 = vld [vmem:[#allocation2 + $0x1b0] sm:$0xff]
        %v5790 = vld [vmem:[#allocation2 + $0x1b8] sm:$0xff]
        %v5791 = vld [vmem:[#allocation2 + $0x1c0] sm:$0xff]
        %v5792 = vld [vmem:[#allocation2 + $0x1c8] sm:$0xff]
        %v5793 = vld [vmem:[#allocation2 + $0x1d0] sm:$0xff]
        %v5794 = vld [vmem:[#allocation2 + $0x1d8] sm:$0xff]
        %v5795 = vld [vmem:[#allocation2 + $0x1e0] sm:$0xff]
        %v5796 = vld [vmem:[#allocation2 + $0x1e8] sm:$0xff]
        %v5797 = vld [vmem:[#allocation2 + $0x1f0] sm:$0xff]
        %v5798 = vld [vmem:[#allocation2 + $0x1f8] sm:$0xff]
        %v5799 = vld [vmem:[#allocation2 + $0x200] sm:$0xff]
        %v5800 = vld [vmem:[#allocation2 + $0x208] sm:$0xff]
        %v5801 = vld [vmem:[#allocation2 + $0x210] sm:$0xff]
        %v5802 = vld [vmem:[#allocation2 + $0x218] sm:$0xff]
        %v5803 = vld [vmem:[#allocation2 + $0x220] sm:$0xff]
        %v5804 = vld [vmem:[#allocation2 + $0x228] sm:$0xff]
        %v5805 = vld [vmem:[#allocation2 + $0x230] sm:$0xff]
        %v5806 = vld [vmem:[#allocation2 + $0x238] sm:$0xff]
        %v5807 = vld [vmem:[#allocation2 + $0x240] sm:$0xff]
        %v5808 = vld [vmem:[#allocation2 + $0x248] sm:$0xff]
        %v5809 = vld [vmem:[#allocation2 + $0x250] sm:$0xff]
        %v5810 = vld [vmem:[#allocation2 + $0x258] sm:$0xff]
        %v5811 = vld [vmem:[#allocation2 + $0x260] sm:$0xff]
        %v5812 = vld [vmem:[#allocation2 + $0x268] sm:$0xff]
        %v5813 = vld [vmem:[#allocation2 + $0x270] sm:$0xff]
        %v5814 = vld [vmem:[#allocation2 + $0x278] sm:$0xff]
        %v5815 = vld [vmem:[#allocation2 + $0x280] sm:$0xff]
        %v5816 = vld [vmem:[#allocation2 + $0x288] sm:$0xff]
        %v5817 = vld [vmem:[#allocation2 + $0x290] sm:$0xff]
        %v5818 = vld [vmem:[#allocation2 + $0x298] sm:$0xff]
        %v5819 = vld [vmem:[#allocation2 + $0x2a0] sm:$0xff]
        %v5820 = vld [vmem:[#allocation2 + $0x2a8] sm:$0xff]
        %v5821 = vld [vmem:[#allocation2 + $0x2b0] sm:$0xff]
        %v5822 = vld [vmem:[#allocation2 + $0x2b8] sm:$0xff]
        %v5823 = vld [vmem:[#allocation2 + $0x2c0] sm:$0xff]
        %v5824 = vld [vmem:[#allocation2 + $0x2c8] sm:$0xff]
        %v5825 = vld [vmem:[#allocation2 + $0x2d0] sm:$0xff]
        %v5826 = vld [vmem:[#allocation2 + $0x2d8] sm:$0xff]
        %v5827 = vld [vmem:[#allocation2 + $0x2e0] sm:$0xff]
        %v5828 = vld [vmem:[#allocation2 + $0x2e8] sm:$0xff]
        %v5829 = vld [vmem:[#allocation2 + $0x2f0] sm:$0xff]
        %v5830 = vld [vmem:[#allocation3 + $0x14] sm:$0xff]
        %v5831 = vld [vmem:[#allocation3 + $0x34] sm:$0xff]
        %v5832 = vld [vmem:[#allocation3 + $0x54] sm:$0xff]
        %v5833 = vld [vmem:[#allocation3 + $0x74] sm:$0xff]
        %v5834 = vld [vmem:[#allocation3 + $0x94] sm:$0xff]
        %v5835 = vld [vmem:[#allocation3 + $0xb4] sm:$0xff]
        %v5836 = vld [vmem:[#allocation3 + $0xd4] sm:$0xff]
        %v5837 = vld [vmem:[#allocation3 + $0xf4] sm:$0xff]
        %v5838 = vld [vmem:[#allocation3 + $0x114] sm:$0xff]
        %v5839 = vld [vmem:[#allocation3 + $0x134] sm:$0xff]
        %v5840 = vld [vmem:[#allocation3 + $0x154] sm:$0xff]
        %v5841 = vld [vmem:[#allocation3 + $0x174] sm:$0xff]
        %v5842 = vld [vmem:[#allocation3 + $0x194] sm:$0xff]
        %v5843 = vld [vmem:[#allocation3 + $0x1b4] sm:$0xff]
        %v5844 = vld [vmem:[#allocation3 + $0x1d4] sm:$0xff]
        %v5845 = vld [vmem:[#allocation3 + $0x1f4] sm:$0xff]
        %v5846 = vld [vmem:[#allocation3 + $0x214] sm:$0xff]
        %v5847 = vld [vmem:[#allocation3 + $0x234] sm:$0xff]
        %v5848 = vld [vmem:[#allocation3 + $0x254] sm:$0xff]
        %v5849 = vld [vmem:[#allocation3 + $0x274] sm:$0xff]
        %v5850 = vld [vmem:[#allocation3 + $0x294] sm:$0xff]
        %v5851 = vld [vmem:[#allocation3 + $0x2b4] sm:$0xff]
        %v5852 = vld [vmem:[#allocation3 + $0x2d4] sm:$0xff]
        %v5853 = vld [vmem:[#allocation3 + $0x2f4] sm:$0xff]
        %v5854 = vld [vmem:[#allocation3 + $0x314] sm:$0xff]
        %v5855 = vld [vmem:[#allocation3 + $0x334] sm:$0xff]
        %v5856 = vld [vmem:[#allocation3 + $0x354] sm:$0xff]
        %v5857 = vld [vmem:[#allocation3 + $0x374] sm:$0xff]
        %v5858 = vld [vmem:[#allocation3 + $0x394] sm:$0xff]
        %v5859 = vld [vmem:[#allocation3 + $0x3b4] sm:$0xff]
        %v5860 = vld [vmem:[#allocation3 + $0x3d4] sm:$0xff]
        %v5861 = vld [vmem:[#allocation3 + $0x3f4] sm:$0xff]
        %v5862 = vld [vmem:[#allocation3 + $0x414] sm:$0xff]
        %v5863 = vld [vmem:[#allocation3 + $0x434] sm:$0xff]
        %v5864 = vld [vmem:[#allocation3 + $0x454] sm:$0xff]
        %v5865 = vld [vmem:[#allocation3 + $0x474] sm:$0xff]
        %v5866 = vld [vmem:[#allocation3 + $0x494] sm:$0xff]
        %v5867 = vld [vmem:[#allocation3 + $0x4b4] sm:$0xff]
        %v5868 = vld [vmem:[#allocation3 + $0x4d4] sm:$0xff]
        %v5869 = vld [vmem:[#allocation3 + $0x4f4] sm:$0xff]
        %v5870 = vld [vmem:[#allocation3 + $0x514] sm:$0xff]
        %v5871 = vld [vmem:[#allocation3 + $0x534] sm:$0xff]
        %v5872 = vld [vmem:[#allocation3 + $0x554] sm:$0xff]
        %v5873 = vld [vmem:[#allocation3 + $0x574] sm:$0xff]
        %v5874 = vld [vmem:[#allocation3 + $0x594] sm:$0xff]
        %v5875 = vld [vmem:[#allocation3 + $0x5b4] sm:$0xff]
        %v5876 = vld [vmem:[#allocation3 + $0x5d4] sm:$0xff]
        %v5877 = vld [vmem:[#allocation3 + $0x5f4] sm:$0xff]
        %v5878 = vld [vmem:[#allocation3 + $0x614] sm:$0xff]
        %v5879 = vld [vmem:[#allocation3 + $0x634] sm:$0xff]
        %v5880 = vld [vmem:[#allocation3 + $0x654] sm:$0xff]
        %v5881 = vld [vmem:[#allocation3 + $0x674] sm:$0xff]
        %v5882 = vld [vmem:[#allocation3 + $0x694] sm:$0xff]
        %v5883 = vld [vmem:[#allocation3 + $0x6b4] sm:$0xff]
        %v5884 = vld [vmem:[#allocation3 + $0x6d4] sm:$0xff]
        %v5885 = vld [vmem:[#allocation3 + $0x6f4] sm:$0xff]
        %v5886 = vld [vmem:[#allocation3 + $0x714] sm:$0xff]
        %v5887 = vld [vmem:[#allocation3 + $0x734] sm:$0xff]
        %v5888 = vld [vmem:[#allocation3 + $0x754] sm:$0xff]
        %v5889 = vld [vmem:[#allocation3 + $0x774] sm:$0xff]
        %v5890 = vld [vmem:[#allocation3 + $0x794] sm:$0xff]
        %v5891 = vld [vmem:[#allocation3 + $0x7b4] sm:$0xff]
        %v5892 = vld [vmem:[#allocation3 + $0x7d4] sm:$0xff]
        %v5893 = vld [vmem:[#allocation3 + $0x7f4] sm:$0xff]
        %v5894 = vld [vmem:[#allocation3 + $0x814] sm:$0xff]
        %v5895 = vld [vmem:[#allocation3 + $0x834] sm:$0xff]
        %v5896 = vld [vmem:[#allocation3 + $0x854] sm:$0xff]
        %v5897 = vld [vmem:[#allocation3 + $0x874] sm:$0xff]
        %v5898 = vld [vmem:[#allocation3 + $0x894] sm:$0xff]
        %v5899 = vld [vmem:[#allocation3 + $0x8b4] sm:$0xff]
        %v5900 = vld [vmem:[#allocation3 + $0x8d4] sm:$0xff]
        %v5901 = vld [vmem:[#allocation3 + $0x8f4] sm:$0xff]
        %v5902 = vld [vmem:[#allocation3 + $0x914] sm:$0xff]
        %v5903 = vld [vmem:[#allocation3 + $0x934] sm:$0xff]
        %v5904 = vld [vmem:[#allocation3 + $0x954] sm:$0xff]
        %v5905 = vld [vmem:[#allocation3 + $0x974] sm:$0xff]
        %v5906 = vld [vmem:[#allocation3 + $0x994] sm:$0xff]
        %v5907 = vld [vmem:[#allocation3 + $0x9b4] sm:$0xff]
        %v5908 = vld [vmem:[#allocation3 + $0x9d4] sm:$0xff]
        %v5909 = vld [vmem:[#allocation3 + $0x9f4] sm:$0xff]
        %v5990 = vunpack.c.l.b16 %v5830
        %v5991 = vunpack.c.h.b16 %v5830
        %v5992 = vunpack.c.l.b16 %v5831
        %v5993 = vunpack.c.h.b16 %v5831
        %v5994 = vunpack.c.l.b16 %v5832
        %v5995 = vunpack.c.h.b16 %v5832
        %v5996 = vunpack.c.l.b16 %v5833
        %v5997 = vunpack.c.h.b16 %v5833
        %v5998 = vunpack.c.l.b16 %v5834
        %v5999 = vunpack.c.h.b16 %v5834
        %v6000 = vunpack.c.l.b16 %v5835
        %v6001 = vunpack.c.h.b16 %v5835
        %v6002 = vunpack.c.l.b16 %v5836
        %v6003 = vunpack.c.h.b16 %v5836
        %v6004 = vunpack.c.l.b16 %v5837
        %v6005 = vunpack.c.h.b16 %v5837
        %v6006 = vunpack.c.l.b16 %v5838
        %v6007 = vunpack.c.h.b16 %v5838
        %v6008 = vunpack.c.l.b16 %v5839
        %v6009 = vunpack.c.h.b16 %v5839
        %v6010 = vunpack.c.l.b16 %v5840
        %v6011 = vunpack.c.h.b16 %v5840
        %v6012 = vunpack.c.l.b16 %v5841
        %v6013 = vunpack.c.h.b16 %v5841
        %v6014 = vunpack.c.l.b16 %v5842
        %v6015 = vunpack.c.h.b16 %v5842
        %v6016 = vunpack.c.l.b16 %v5843
        %v6017 = vunpack.c.h.b16 %v5843
        %v6018 = vunpack.c.l.b16 %v5844
        %v6019 = vunpack.c.h.b16 %v5844
        %v6020 = vunpack.c.l.b16 %v5845
        %v6021 = vunpack.c.h.b16 %v5845
        %v6022 = vunpack.c.l.b16 %v5846
        %v6023 = vunpack.c.h.b16 %v5846
        %v6024 = vunpack.c.l.b16 %v5847
        %v6025 = vunpack.c.h.b16 %v5847
        %v6026 = vunpack.c.l.b16 %v5848
        %v6027 = vunpack.c.h.b16 %v5848
        %v6028 = vunpack.c.l.b16 %v5849
        %v6029 = vunpack.c.h.b16 %v5849
        %v6030 = vunpack.c.l.b16 %v5850
        %v6031 = vunpack.c.h.b16 %v5850
        %v6032 = vunpack.c.l.b16 %v5851
        %v6033 = vunpack.c.h.b16 %v5851
        %v6034 = vunpack.c.l.b16 %v5852
        %v6035 = vunpack.c.h.b16 %v5852
        %v6036 = vunpack.c.l.b16 %v5853
        %v6037 = vunpack.c.h.b16 %v5853
        %v6038 = vunpack.c.l.b16 %v5854
        %v6039 = vunpack.c.h.b16 %v5854
        %v6040 = vunpack.c.l.b16 %v5855
        %v6041 = vunpack.c.h.b16 %v5855
        %v6042 = vunpack.c.l.b16 %v5856
        %v6043 = vunpack.c.h.b16 %v5856
        %v6044 = vunpack.c.l.b16 %v5857
        %v6045 = vunpack.c.h.b16 %v5857
        %v6046 = vunpack.c.l.b16 %v5858
        %v6047 = vunpack.c.h.b16 %v5858
        %v6048 = vunpack.c.l.b16 %v5859
        %v6049 = vunpack.c.h.b16 %v5859
        %v6050 = vunpack.c.l.b16 %v5860
        %v6051 = vunpack.c.h.b16 %v5860
        %v6052 = vunpack.c.l.b16 %v5861
        %v6053 = vunpack.c.h.b16 %v5861
        %v6054 = vunpack.c.l.b16 %v5862
        %v6055 = vunpack.c.h.b16 %v5862
        %v6056 = vunpack.c.l.b16 %v5863
        %v6057 = vunpack.c.h.b16 %v5863
        %v6058 = vunpack.c.l.b16 %v5864
        %v6059 = vunpack.c.h.b16 %v5864
        %v6060 = vunpack.c.l.b16 %v5865
        %v6061 = vunpack.c.h.b16 %v5865
        %v6062 = vunpack.c.l.b16 %v5866
        %v6063 = vunpack.c.h.b16 %v5866
        %v6064 = vunpack.c.l.b16 %v5867
        %v6065 = vunpack.c.h.b16 %v5867
        %v6066 = vunpack.c.l.b16 %v5868
        %v6067 = vunpack.c.h.b16 %v5868
        %v6068 = vunpack.c.l.b16 %v5869
        %v6069 = vunpack.c.h.b16 %v5869
        %v6070 = vunpack.c.l.b16 %v5870
        %v6071 = vunpack.c.h.b16 %v5870
        %v6072 = vunpack.c.l.b16 %v5871
        %v6073 = vunpack.c.h.b16 %v5871
        %v6074 = vunpack.c.l.b16 %v5872
        %v6075 = vunpack.c.h.b16 %v5872
        %v6076 = vunpack.c.l.b16 %v5873
        %v6077 = vunpack.c.h.b16 %v5873
        %v6078 = vunpack.c.l.b16 %v5874
        %v6079 = vunpack.c.h.b16 %v5874
        %v6080 = vunpack.c.l.b16 %v5875
        %v6081 = vunpack.c.h.b16 %v5875
        %v6082 = vunpack.c.l.b16 %v5876
        %v6083 = vunpack.c.h.b16 %v5876
        %v6084 = vunpack.c.l.b16 %v5877
        %v6085 = vunpack.c.h.b16 %v5877
        %v6086 = vunpack.c.l.b16 %v5878
        %v6087 = vunpack.c.h.b16 %v5878
        %v6088 = vunpack.c.l.b16 %v5879
        %v6089 = vunpack.c.h.b16 %v5879
        %v6090 = vunpack.c.l.b16 %v5880
        %v6091 = vunpack.c.h.b16 %v5880
        %v6092 = vunpack.c.l.b16 %v5881
        %v6093 = vunpack.c.h.b16 %v5881
        %v6094 = vunpack.c.l.b16 %v5882
        %v6095 = vunpack.c.h.b16 %v5882
        %v6096 = vunpack.c.l.b16 %v5883
        %v6097 = vunpack.c.h.b16 %v5883
        %v6098 = vunpack.c.l.b16 %v5884
        %v6099 = vunpack.c.h.b16 %v5884
        %v6100 = vunpack.c.l.b16 %v5885
        %v6101 = vunpack.c.h.b16 %v5885
        %v6102 = vunpack.c.l.b16 %v5886
        %v6103 = vunpack.c.h.b16 %v5886
        %v6104 = vunpack.c.l.b16 %v5887
        %v6105 = vunpack.c.h.b16 %v5887
        %v6106 = vunpack.c.l.b16 %v5888
        %v6107 = vunpack.c.h.b16 %v5888
        %v6108 = vunpack.c.l.b16 %v5889
        %v6109 = vunpack.c.h.b16 %v5889
        %v6110 = vunpack.c.l.b16 %v5890
        %v6111 = vunpack.c.h.b16 %v5890
        %v6112 = vunpack.c.l.b16 %v5891
        %v6113 = vunpack.c.h.b16 %v5891
        %v6114 = vunpack.c.l.b16 %v5892
        %v6115 = vunpack.c.h.b16 %v5892
        %v6116 = vunpack.c.l.b16 %v5893
        %v6117 = vunpack.c.h.b16 %v5893
        %v6118 = vunpack.c.l.b16 %v5894
        %v6119 = vunpack.c.h.b16 %v5894
        %v6120 = vunpack.c.l.b16 %v5895
        %v6121 = vunpack.c.h.b16 %v5895
        %v6122 = vunpack.c.l.b16 %v5896
        %v6123 = vunpack.c.h.b16 %v5896
        %v6124 = vunpack.c.l.b16 %v5897
        %v6125 = vunpack.c.h.b16 %v5897
        %v6126 = vunpack.c.l.b16 %v5898
        %v6127 = vunpack.c.h.b16 %v5898
        %v6128 = vunpack.c.l.b16 %v5899
        %v6129 = vunpack.c.h.b16 %v5899
        %v6130 = vunpack.c.l.b16 %v5900
        %v6131 = vunpack.c.h.b16 %v5900
        %v6132 = vunpack.c.l.b16 %v5901
        %v6133 = vunpack.c.h.b16 %v5901
        %v6134 = vunpack.c.l.b16 %v5902
        %v6135 = vunpack.c.h.b16 %v5902
        %v6136 = vunpack.c.l.b16 %v5903
        %v6137 = vunpack.c.h.b16 %v5903
        %v6138 = vunpack.c.l.b16 %v5904
        %v6139 = vunpack.c.h.b16 %v5904
        %v6140 = vunpack.c.l.b16 %v5905
        %v6141 = vunpack.c.h.b16 %v5905
        %v6142 = vunpack.c.l.b16 %v5906
        %v6143 = vunpack.c.h.b16 %v5906
        %v6144 = vunpack.c.l.b16 %v5907
        %v6145 = vunpack.c.h.b16 %v5907
        %v6146 = vunpack.c.l.b16 %v5908
        %v6147 = vunpack.c.h.b16 %v5908
        %v6148 = vunpack.c.l.b16 %v5909
        %v6149 = vunpack.c.h.b16 %v5909
        %v6150 = vpack.c.b16 %v5992, %v5990
        %v6151 = vpack.c.b16 %v5993, %v5991
        %v6152 = vpack.c.b16 %v5996, %v5994
        %v6153 = vpack.c.b16 %v5997, %v5995
        %v6154 = vpack.c.b16 %v6000, %v5998
        %v6155 = vpack.c.b16 %v6001, %v5999
        %v6156 = vpack.c.b16 %v6004, %v6002
        %v6157 = vpack.c.b16 %v6005, %v6003
        %v6158 = vpack.c.b16 %v6008, %v6006
        %v6159 = vpack.c.b16 %v6009, %v6007
        %v6160 = vpack.c.b16 %v6012, %v6010
        %v6161 = vpack.c.b16 %v6013, %v6011
        %v6162 = vpack.c.b16 %v6016, %v6014
        %v6163 = vpack.c.b16 %v6017, %v6015
        %v6164 = vpack.c.b16 %v6020, %v6018
        %v6165 = vpack.c.b16 %v6021, %v6019
        %v6166 = vpack.c.b16 %v6024, %v6022
        %v6167 = vpack.c.b16 %v6025, %v6023
        %v6168 = vpack.c.b16 %v6028, %v6026
        %v6169 = vpack.c.b16 %v6029, %v6027
        %v6170 = vpack.c.b16 %v6032, %v6030
        %v6171 = vpack.c.b16 %v6033, %v6031
        %v6172 = vpack.c.b16 %v6036, %v6034
        %v6173 = vpack.c.b16 %v6037, %v6035
        %v6174 = vpack.c.b16 %v6040, %v6038
        %v6175 = vpack.c.b16 %v6041, %v6039
        %v6176 = vpack.c.b16 %v6044, %v6042
        %v6177 = vpack.c.b16 %v6045, %v6043
        %v6178 = vpack.c.b16 %v6048, %v6046
        %v6179 = vpack.c.b16 %v6049, %v6047
        %v6180 = vpack.c.b16 %v6052, %v6050
        %v6181 = vpack.c.b16 %v6053, %v6051
        %v6182 = vpack.c.b16 %v6056, %v6054
        %v6183 = vpack.c.b16 %v6057, %v6055
        %v6184 = vpack.c.b16 %v6060, %v6058
        %v6185 = vpack.c.b16 %v6061, %v6059
        %v6186 = vpack.c.b16 %v6064, %v6062
        %v6187 = vpack.c.b16 %v6065, %v6063
        %v6188 = vpack.c.b16 %v6068, %v6066
        %v6189 = vpack.c.b16 %v6069, %v6067
        %v6190 = vpack.c.b16 %v6072, %v6070
        %v6191 = vpack.c.b16 %v6073, %v6071
        %v6192 = vpack.c.b16 %v6076, %v6074
        %v6193 = vpack.c.b16 %v6077, %v6075
        %v6194 = vpack.c.b16 %v6080, %v6078
        %v6195 = vpack.c.b16 %v6081, %v6079
        %v6196 = vpack.c.b16 %v6084, %v6082
        %v6197 = vpack.c.b16 %v6085, %v6083
        %v6198 = vpack.c.b16 %v6088, %v6086
        %v6199 = vpack.c.b16 %v6089, %v6087
        %v6200 = vpack.c.b16 %v6092, %v6090
        %v6201 = vpack.c.b16 %v6093, %v6091
        %v6202 = vpack.c.b16 %v6096, %v6094
        %v6203 = vpack.c.b16 %v6097, %v6095
        %v6204 = vpack.c.b16 %v6100, %v6098
        %v6205 = vpack.c.b16 %v6101, %v6099
        %v6206 = vpack.c.b16 %v6104, %v6102
        %v6207 = vpack.c.b16 %v6105, %v6103
        %v6208 = vpack.c.b16 %v6108, %v6106
        %v6209 = vpack.c.b16 %v6109, %v6107
        %v6210 = vpack.c.b16 %v6112, %v6110
        %v6211 = vpack.c.b16 %v6113, %v6111
        %v6212 = vpack.c.b16 %v6116, %v6114
        %v6213 = vpack.c.b16 %v6117, %v6115
        %v6214 = vpack.c.b16 %v6120, %v6118
        %v6215 = vpack.c.b16 %v6121, %v6119
        %v6216 = vpack.c.b16 %v6124, %v6122
        %v6217 = vpack.c.b16 %v6125, %v6123
        %v6218 = vpack.c.b16 %v6128, %v6126
        %v6219 = vpack.c.b16 %v6129, %v6127
        %v6220 = vpack.c.b16 %v6132, %v6130
        %v6221 = vpack.c.b16 %v6133, %v6131
        %v6222 = vpack.c.b16 %v6136, %v6134
        %v6223 = vpack.c.b16 %v6137, %v6135
        %v6224 = vpack.c.b16 %v6140, %v6138
        %v6225 = vpack.c.b16 %v6141, %v6139
        %v6226 = vpack.c.b16 %v6144, %v6142
        %v6227 = vpack.c.b16 %v6145, %v6143
        %v6228 = vpack.c.b16 %v6148, %v6146
        %v6229 = vpack.c.b16 %v6149, %v6147
        %6310 = vmatprep.subr.bf16.mxu0 %v6151
        %6311 = vmatpush1.bf16.msra.mxu0 %v6150
        %6312 = vmatprep.subr.bf16.mxu0 %v6153
        %6313 = vmatpush1.bf16.msra.mxu0 %v6152
        %6314 = vmatprep.subr.bf16.mxu0 %v6155
        %6315 = vmatpush1.bf16.msra.mxu0 %v6154
        %6316 = vmatprep.subr.bf16.mxu0 %v6157
        %6317 = vmatpush1.bf16.msra.mxu0 %v6156
        %6318 = vmatprep.subr.bf16.mxu0 %v6159
        %6319 = vmatpush1.bf16.msra.mxu0 %v6158
        %6320 = vmatprep.subr.bf16.mxu0 %v6161
        %6321 = vmatpush1.bf16.msra.mxu0 %v6160
        %6322 = vmatprep.subr.bf16.mxu0 %v6163
        %6323 = vmatpush1.bf16.msra.mxu0 %v6162
        %6324 = vmatprep.subr.bf16.mxu0 %v6165
        %6325 = vmatpush1.bf16.msra.mxu0 %v6164
        %6326 = vmatprep.subr.bf16.mxu0 %v6167
        %6327 = vmatpush1.bf16.msra.mxu0 %v6166
        %6328 = vmatprep.subr.bf16.mxu0 %v6169
        %6329 = vmatpush1.bf16.msra.mxu0 %v6168
        %6330 = vmatprep.subr.bf16.mxu0 %v6171
        %6331 = vmatpush1.bf16.msra.mxu0 %v6170
        %6332 = vmatprep.subr.bf16.mxu0 %v6173
        %6333 = vmatpush1.bf16.msra.mxu0 %v6172
        %6334 = vmatprep.subr.bf16.mxu0 %v6175
        %6335 = vmatpush1.bf16.msra.mxu0 %v6174
        %6336 = vmatprep.subr.bf16.mxu0 %v6177
        %6337 = vmatpush1.bf16.msra.mxu0 %v6176
        %6338 = vmatprep.subr.bf16.mxu0 %v6179
        %6339 = vmatpush1.bf16.msra.mxu0 %v6178
        %6340 = vmatprep.subr.bf16.mxu0 %v6181
        %6341 = vmatpush1.bf16.msra.mxu0 %v6180
        %6342 = vmatprep.mubr.bf16.mxu0 %v5751
        %6343 = vmatmul.mubr.bf16.gmra.mrb[0].mxu0 %v5750
        %v6344 = vpop.f32.mrb[0].mxu0
        %v6345 = vadd.f32 0.0, %v6344
        %v6346 = vpop.f32.mrb[0].mxu0
        %v6347 = vadd.f32 0.0, %v6346
        %v6348 = vpop.f32.mrb[0].mxu0
        %v6349 = vadd.f32 0.0, %v6348
        %v6350 = vpop.f32.mrb[0].mxu0
        %v6351 = vadd.f32 0.0, %v6350
        %6352 = vmatprep.mubr.bf16.mxu0 %v5756
        %6353 = vmatmul.mubr.bf16.gmra.mrb[0].mxu0 %v5755
        %v6354 = vpop.f32.mrb[0].mxu0
        %v6355 = vadd.f32 0.0, %v6354
        %v6356 = vpop.f32.mrb[0].mxu0
        %v6357 = vadd.f32 0.0, %v6356
        %v6358 = vpop.f32.mrb[0].mxu0
        %v6359 = vadd.f32 0.0, %v6358
        %v6360 = vpop.f32.mrb[0].mxu0
        %v6361 = vadd.f32 0.0, %v6360
        %6362 = vmatprep.mubr.bf16.mxu0 %v5761
        %6363 = vmatmul.mubr.bf16.gmra.mrb[0].mxu0 %v5760
        %v6364 = vpop.f32.mrb[0].mxu0
        %v6365 = vadd.f32 0.0, %v6364
        %v6366 = vpop.f32.mrb[0].mxu0
        %v6367 = vadd.f32 0.0, %v6366
        %v6368 = vpop.f32.mrb[0].mxu0
        %v6369 = vadd.f32 0.0, %v6368
        %v6370 = vpop.f32.mrb[0].mxu0
        %v6371 = vadd.f32 0.0, %v6370
        %6372 = vmatprep.mubr.bf16.mxu0 %v5766
        %6373 = vmatmul.mubr.bf16.gmra.mrb[0].mxu0 %v5765
        %v6374 = vpop.f32.mrb[0].mxu0
        %v6375 = vadd.f32 0.0, %v6374
        %v6376 = vpop.f32.mrb[0].mxu0
        %v6377 = vadd.f32 0.0, %v6376
        %v6378 = vpop.f32.mrb[0].mxu0
        %v6379 = vadd.f32 0.0, %v6378
        %v6380 = vpop.f32.mrb[0].mxu0
        %v6381 = vadd.f32 0.0, %v6380
        %6382 = vmatprep.mubr.bf16.mxu0 %v5771
        %6383 = vmatmul.mubr.bf16.gmra.mrb[0].mxu0 %v5770
        %v6384 = vpop.f32.mrb[0].mxu0
        %v6385 = vadd.f32 0.0, %v6384
        %v6386 = vpop.f32.mrb[0].mxu0
        %v6387 = vadd.f32 0.0, %v6386
        %v6388 = vpop.f32.mrb[0].mxu0
        %v6389 = vadd.f32 0.0, %v6388
        %v6390 = vpop.f32.mrb[0].mxu0
        %v6391 = vadd.f32 0.0, %v6390
        %6392 = vmatprep.mubr.bf16.mxu0 %v5776
        %6393 = vmatmul.mubr.bf16.gmra.mrb[0].mxu0 %v5775
        %v6394 = vpop.f32.mrb[0].mxu0
        %v6395 = vadd.f32 0.0, %v6394
        %v6396 = vpop.f32.mrb[0].mxu0
        %v6397 = vadd.f32 0.0, %v6396
        %v6398 = vpop.f32.mrb[0].mxu0
        %v6399 = vadd.f32 0.0, %v6398
        %v6400 = vpop.f32.mrb[0].mxu0
        %v6401 = vadd.f32 0.0, %v6400
        %6402 = vmatprep.mubr.bf16.mxu0 %v5781
        %6403 = vmatmul.mubr.bf16.gmra.mrb[0].mxu0 %v5780
        %v6404 = vpop.f32.mrb[0].mxu0
        %v6405 = vadd.f32 0.0, %v6404
        %v6406 = vpop.f32.mrb[0].mxu0
        %v6407 = vadd.f32 0.0, %v6406
        %v6408 = vpop.f32.mrb[0].mxu0
        %v6409 = vadd.f32 0.0, %v6408
        %v6410 = vpop.f32.mrb[0].mxu0
        %v6411 = vadd.f32 0.0, %v6410
        %6412 = vmatprep.mubr.bf16.mxu0 %v5786
        %6413 = vmatmul.mubr.bf16.gmra.mrb[0].mxu0 %v5785
        %v6414 = vpop.f32.mrb[0].mxu0
        %v6415 = vadd.f32 0.0, %v6414
        %v6416 = vpop.f32.mrb[0].mxu0
        %v6417 = vadd.f32 0.0, %v6416
        %v6418 = vpop.f32.mrb[0].mxu0
        %v6419 = vadd.f32 0.0, %v6418
        %v6420 = vpop.f32.mrb[0].mxu0
        %v6421 = vadd.f32 0.0, %v6420
        %6422 = vmatprep.mubr.bf16.mxu0 %v5791
        %6423 = vmatmul.mubr.bf16.gmra.mrb[0].mxu0 %v5790
        %v6424 = vpop.f32.mrb[0].mxu0
        %v6425 = vadd.f32 0.0, %v6424
        %v6426 = vpop.f32.mrb[0].mxu0
        %v6427 = vadd.f32 0.0, %v6426
        %v6428 = vpop.f32.mrb[0].mxu0
        %v6429 = vadd.f32 0.0, %v6428
        %v6430 = vpop.f32.mrb[0].mxu0
        %v6431 = vadd.f32 0.0, %v6430
        %6432 = vmatprep.mubr.bf16.mxu0 %v5796
        %6433 = vmatmul.mubr.bf16.gmra.mrb[0].mxu0 %v5795
        %v6434 = vpop.f32.mrb[0].mxu0
        %v6435 = vadd.f32 0.0, %v6434
        %v6436 = vpop.f32.mrb[0].mxu0
        %v6437 = vadd.f32 0.0, %v6436
        %v6438 = vpop.f32.mrb[0].mxu0
        %v6439 = vadd.f32 0.0, %v6438
        %v6440 = vpop.f32.mrb[0].mxu0
        %v6441 = vadd.f32 0.0, %v6440
        %6442 = vmatprep.mubr.bf16.mxu0 %v5801
        %6443 = vmatmul.mubr.bf16.gmra.mrb[0].mxu0 %v5800
        %v6444 = vpop.f32.mrb[0].mxu0
        %v6445 = vadd.f32 0.0, %v6444
        %v6446 = vpop.f32.mrb[0].mxu0
        %v6447 = vadd.f32 0.0, %v6446
        %v6448 = vpop.f32.mrb[0].mxu0
        %v6449 = vadd.f32 0.0, %v6448
        %v6450 = vpop.f32.mrb[0].mxu0
        %v6451 = vadd.f32 0.0, %v6450
        %6452 = vmatprep.mubr.bf16.mxu0 %v5806
        %6453 = vmatmul.mubr.bf16.gmra.mrb[0].mxu0 %v5805
        %v6454 = vpop.f32.mrb[0].mxu0
        %v6455 = vadd.f32 0.0, %v6454
        %v6456 = vpop.f32.mrb[0].mxu0
        %v6457 = vadd.f32 0.0, %v6456
        %v6458 = vpop.f32.mrb[0].mxu0
        %v6459 = vadd.f32 0.0, %v6458
        %v6460 = vpop.f32.mrb[0].mxu0
        %v6461 = vadd.f32 0.0, %v6460
        %6462 = vmatprep.mubr.bf16.mxu0 %v5811
        %6463 = vmatmul.mubr.bf16.gmra.mrb[0].mxu0 %v5810
        %v6464 = vpop.f32.mrb[0].mxu0
        %v6465 = vadd.f32 0.0, %v6464
        %v6466 = vpop.f32.mrb[0].mxu0
        %v6467 = vadd.f32 0.0, %v6466
        %v6468 = vpop.f32.mrb[0].mxu0
        %v6469 = vadd.f32 0.0, %v6468
        %v6470 = vpop.f32.mrb[0].mxu0
        %v6471 = vadd.f32 0.0, %v6470
        %6472 = vmatprep.mubr.bf16.mxu0 %v5816
        %6473 = vmatmul.mubr.bf16.gmra.mrb[0].mxu0 %v5815
        %v6474 = vpop.f32.mrb[0].mxu0
        %v6475 = vadd.f32 0.0, %v6474
        %v6476 = vpop.f32.mrb[0].mxu0
        %v6477 = vadd.f32 0.0, %v6476
        %v6478 = vpop.f32.mrb[0].mxu0
        %v6479 = vadd.f32 0.0, %v6478
        %v6480 = vpop.f32.mrb[0].mxu0
        %v6481 = vadd.f32 0.0, %v6480
        %6482 = vmatprep.mubr.bf16.mxu0 %v5821
        %6483 = vmatmul.mubr.bf16.gmra.mrb[0].mxu0 %v5820
        %v6484 = vpop.f32.mrb[0].mxu0
        %v6485 = vadd.f32 0.0, %v6484
        %v6486 = vpop.f32.mrb[0].mxu0
        %v6487 = vadd.f32 0.0, %v6486
        %v6488 = vpop.f32.mrb[0].mxu0
        %v6489 = vadd.f32 0.0, %v6488
        %v6490 = vpop.f32.mrb[0].mxu0
        %v6491 = vadd.f32 0.0, %v6490
        %6492 = vmatprep.mubr.bf16.mxu0 %v5826
        %6493 = vmatmul.mubr.bf16.gmra.mrb[0].mxu0 %v5825
        %v6494 = vpop.f32.mrb[0].mxu0
        %v6495 = vadd.f32 0.0, %v6494
        %v6496 = vpop.f32.mrb[0].mxu0
        %v6497 = vadd.f32 0.0, %v6496
        %v6498 = vpop.f32.mrb[0].mxu0
        %v6499 = vadd.f32 0.0, %v6498
        %v6500 = vpop.f32.mrb[0].mxu0
        %v6501 = vadd.f32 0.0, %v6500
        %6502 = vdwg.mxu0
        %6503 = vmatprep.subr.bf16.mxu0 %v6183
        %6504 = vmatpush1.bf16.msra.mxu0 %v6182
        %6505 = vmatprep.subr.bf16.mxu0 %v6185
        %6506 = vmatpush1.bf16.msra.mxu0 %v6184
        %6507 = vmatprep.subr.bf16.mxu0 %v6187
        %6508 = vmatpush1.bf16.msra.mxu0 %v6186
        %6509 = vmatprep.subr.bf16.mxu0 %v6189
        %6510 = vmatpush1.bf16.msra.mxu0 %v6188
        %6511 = vmatprep.subr.bf16.mxu0 %v6191
        %6512 = vmatpush1.bf16.msra.mxu0 %v6190
        %6513 = vmatprep.subr.bf16.mxu0 %v6193
        %6514 = vmatpush1.bf16.msra.mxu0 %v6192
        %6515 = vmatprep.subr.bf16.mxu0 %v6195
        %6516 = vmatpush1.bf16.msra.mxu0 %v6194
        %6517 = vmatprep.subr.bf16.mxu0 %v6197
        %6518 = vmatpush1.bf16.msra.mxu0 %v6196
        %6519 = vmatprep.subr.bf16.mxu0 %v6199
        %6520 = vmatpush1.bf16.msra.mxu0 %v6198
        %6521 = vmatprep.subr.bf16.mxu0 %v6201
        %6522 = vmatpush1.bf16.msra.mxu0 %v6200
        %6523 = vmatprep.subr.bf16.mxu0 %v6203
        %6524 = vmatpush1.bf16.msra.mxu0 %v6202
        %6525 = vmatprep.subr.bf16.mxu0 %v6205
        %6526 = vmatpush1.bf16.msra.mxu0 %v6204
        %6527 = vmatprep.subr.bf16.mxu0 %v6207
        %6528 = vmatpush1.bf16.msra.mxu0 %v6206
        %6529 = vmatprep.subr.bf16.mxu0 %v6209
        %6530 = vmatpush1.bf16.msra.mxu0 %v6208
        %6531 = vmatprep.subr.bf16.mxu0 %v6211
        %6532 = vmatpush1.bf16.msra.mxu0 %v6210
        %6533 = vmatprep.subr.bf16.mxu0 %v6213
        %6534 = vmatpush1.bf16.msra.mxu0 %v6212
        %6535 = vmatprep.mubr.bf16.mxu0 %v5753
        %6536 = vmatmul.mubr.bf16.gmra.mrb[0].mxu0 %v5752
        %v6537 = vpop.f32.mrb[0].mxu0
        %v6538 = vadd.f32 %v6345, %v6537
        %v6539 = vpop.f32.mrb[0].mxu0
        %v6540 = vadd.f32 %v6347, %v6539
        %v6541 = vpop.f32.mrb[0].mxu0
        %v6542 = vadd.f32 %v6349, %v6541
        %v6543 = vpop.f32.mrb[0].mxu0
        %v6544 = vadd.f32 %v6351, %v6543
        %6545 = vmatprep.mubr.bf16.mxu0 %v5758
        %6546 = vmatmul.mubr.bf16.gmra.mrb[0].mxu0 %v5757
        %v6547 = vpop.f32.mrb[0].mxu0
        %v6548 = vadd.f32 %v6355, %v6547
        %v6549 = vpop.f32.mrb[0].mxu0
        %v6550 = vadd.f32 %v6357, %v6549
        %v6551 = vpop.f32.mrb[0].mxu0
        %v6552 = vadd.f32 %v6359, %v6551
        %v6553 = vpop.f32.mrb[0].mxu0
        %v6554 = vadd.f32 %v6361, %v6553
        %6555 = vmatprep.mubr.bf16.mxu0 %v5763
        %6556 = vmatmul.mubr.bf16.gmra.mrb[0].mxu0 %v5762
        %v6557 = vpop.f32.mrb[0].mxu0
        %v6558 = vadd.f32 %v6365, %v6557
        %v6559 = vpop.f32.mrb[0].mxu0
        %v6560 = vadd.f32 %v6367, %v6559
        %v6561 = vpop.f32.mrb[0].mxu0
        %v6562 = vadd.f32 %v6369, %v6561
        %v6563 = vpop.f32.mrb[0].mxu0
        %v6564 = vadd.f32 %v6371, %v6563
        %6565 = vmatprep.mubr.bf16.mxu0 %v5768
        %6566 = vmatmul.mubr.bf16.gmra.mrb[0].mxu0 %v5767
        %v6567 = vpop.f32.mrb[0].mxu0
        %v6568 = vadd.f32 %v6375, %v6567
        %v6569 = vpop.f32.mrb[0].mxu0
        %v6570 = vadd.f32 %v6377, %v6569
        %v6571 = vpop.f32.mrb[0].mxu0
        %v6572 = vadd.f32 %v6379, %v6571
        %v6573 = vpop.f32.mrb[0].mxu0
        %v6574 = vadd.f32 %v6381, %v6573
        %6575 = vmatprep.mubr.bf16.mxu0 %v5773
        %6576 = vmatmul.mubr.bf16.gmra.mrb[0].mxu0 %v5772
        %v6577 = vpop.f32.mrb[0].mxu0
        %v6578 = vadd.f32 %v6385, %v6577
        %v6579 = vpop.f32.mrb[0].mxu0
        %v6580 = vadd.f32 %v6387, %v6579
        %v6581 = vpop.f32.mrb[0].mxu0
        %v6582 = vadd.f32 %v6389, %v6581
        %v6583 = vpop.f32.mrb[0].mxu0
        %v6584 = vadd.f32 %v6391, %v6583
        %6585 = vmatprep.mubr.bf16.mxu0 %v5778
        %6586 = vmatmul.mubr.bf16.gmra.mrb[0].mxu0 %v5777
        %v6587 = vpop.f32.mrb[0].mxu0
        %v6588 = vadd.f32 %v6395, %v6587
        %v6589 = vpop.f32.mrb[0].mxu0
        %v6590 = vadd.f32 %v6397, %v6589
        %v6591 = vpop.f32.mrb[0].mxu0
        %v6592 = vadd.f32 %v6399, %v6591
        %v6593 = vpop.f32.mrb[0].mxu0
        %v6594 = vadd.f32 %v6401, %v6593
        %6595 = vmatprep.mubr.bf16.mxu0 %v5783
        %6596 = vmatmul.mubr.bf16.gmra.mrb[0].mxu0 %v5782
        %v6597 = vpop.f32.mrb[0].mxu0
        %v6598 = vadd.f32 %v6405, %v6597
        %v6599 = vpop.f32.mrb[0].mxu0
        %v6600 = vadd.f32 %v6407, %v6599
        %v6601 = vpop.f32.mrb[0].mxu0
        %v6602 = vadd.f32 %v6409, %v6601
        %v6603 = vpop.f32.mrb[0].mxu0
        %v6604 = vadd.f32 %v6411, %v6603
        %6605 = vmatprep.mubr.bf16.mxu0 %v5788
        %6606 = vmatmul.mubr.bf16.gmra.mrb[0].mxu0 %v5787
        %v6607 = vpop.f32.mrb[0].mxu0
        %v6608 = vadd.f32 %v6415, %v6607
        %v6609 = vpop.f32.mrb[0].mxu0
        %v6610 = vadd.f32 %v6417, %v6609
        %v6611 = vpop.f32.mrb[0].mxu0
        %v6612 = vadd.f32 %v6419, %v6611
        %v6613 = vpop.f32.mrb[0].mxu0
        %v6614 = vadd.f32 %v6421, %v6613
        %6615 = vmatprep.mubr.bf16.mxu0 %v5793
        %6616 = vmatmul.mubr.bf16.gmra.mrb[0].mxu0 %v5792
        %v6617 = vpop.f32.mrb[0].mxu0
        %v6618 = vadd.f32 %v6425, %v6617
        %v6619 = vpop.f32.mrb[0].mxu0
        %v6620 = vadd.f32 %v6427, %v6619
        %v6621 = vpop.f32.mrb[0].mxu0
        %v6622 = vadd.f32 %v6429, %v6621
        %v6623 = vpop.f32.mrb[0].mxu0
        %v6624 = vadd.f32 %v6431, %v6623
        %6625 = vmatprep.mubr.bf16.mxu0 %v5798
        %6626 = vmatmul.mubr.bf16.gmra.mrb[0].mxu0 %v5797
        %v6627 = vpop.f32.mrb[0].mxu0
        %v6628 = vadd.f32 %v6435, %v6627
        %v6629 = vpop.f32.mrb[0].mxu0
        %v6630 = vadd.f32 %v6437, %v6629
        %v6631 = vpop.f32.mrb[0].mxu0
        %v6632 = vadd.f32 %v6439, %v6631
        %v6633 = vpop.f32.mrb[0].mxu0
        %v6634 = vadd.f32 %v6441, %v6633
        %6635 = vmatprep.mubr.bf16.mxu0 %v5803
        %6636 = vmatmul.mubr.bf16.gmra.mrb[0].mxu0 %v5802
        %v6637 = vpop.f32.mrb[0].mxu0
        %v6638 = vadd.f32 %v6445, %v6637
        %v6639 = vpop.f32.mrb[0].mxu0
        %v6640 = vadd.f32 %v6447, %v6639
        %v6641 = vpop.f32.mrb[0].mxu0
        %v6642 = vadd.f32 %v6449, %v6641
        %v6643 = vpop.f32.mrb[0].mxu0
        %v6644 = vadd.f32 %v6451, %v6643
        %6645 = vmatprep.mubr.bf16.mxu0 %v5808
        %6646 = vmatmul.mubr.bf16.gmra.mrb[0].mxu0 %v5807
        %v6647 = vpop.f32.mrb[0].mxu0
        %v6648 = vadd.f32 %v6455, %v6647
        %v6649 = vpop.f32.mrb[0].mxu0
        %v6650 = vadd.f32 %v6457, %v6649
        %v6651 = vpop.f32.mrb[0].mxu0
        %v6652 = vadd.f32 %v6459, %v6651
        %v6653 = vpop.f32.mrb[0].mxu0
        %v6654 = vadd.f32 %v6461, %v6653
        %6655 = vmatprep.mubr.bf16.mxu0 %v5813
        %6656 = vmatmul.mubr.bf16.gmra.mrb[0].mxu0 %v5812
        %v6657 = vpop.f32.mrb[0].mxu0
        %v6658 = vadd.f32 %v6465, %v6657
        %v6659 = vpop.f32.mrb[0].mxu0
        %v6660 = vadd.f32 %v6467, %v6659
        %v6661 = vpop.f32.mrb[0].mxu0
        %v6662 = vadd.f32 %v6469, %v6661
        %v6663 = vpop.f32.mrb[0].mxu0
        %v6664 = vadd.f32 %v6471, %v6663
        %6665 = vmatprep.mubr.bf16.mxu0 %v5818
        %6666 = vmatmul.mubr.bf16.gmra.mrb[0].mxu0 %v5817
        %v6667 = vpop.f32.mrb[0].mxu0
        %v6668 = vadd.f32 %v6475, %v6667
        %v6669 = vpop.f32.mrb[0].mxu0
        %v6670 = vadd.f32 %v6477, %v6669
        %v6671 = vpop.f32.mrb[0].mxu0
        %v6672 = vadd.f32 %v6479, %v6671
        %v6673 = vpop.f32.mrb[0].mxu0
        %v6674 = vadd.f32 %v6481, %v6673
        %6675 = vmatprep.mubr.bf16.mxu0 %v5823
        %6676 = vmatmul.mubr.bf16.gmra.mrb[0].mxu0 %v5822
        %v6677 = vpop.f32.mrb[0].mxu0
        %v6678 = vadd.f32 %v6485, %v6677
        %v6679 = vpop.f32.mrb[0].mxu0
        %v6680 = vadd.f32 %v6487, %v6679
        %v6681 = vpop.f32.mrb[0].mxu0
        %v6682 = vadd.f32 %v6489, %v6681
        %v6683 = vpop.f32.mrb[0].mxu0
        %v6684 = vadd.f32 %v6491, %v6683
        %6685 = vmatprep.mubr.bf16.mxu0 %v5828
        %6686 = vmatmul.mubr.bf16.gmra.mrb[0].mxu0 %v5827
        %v6687 = vpop.f32.mrb[0].mxu0
        %v6688 = vadd.f32 %v6495, %v6687
        %v6689 = vpop.f32.mrb[0].mxu0
        %v6690 = vadd.f32 %v6497, %v6689
        %v6691 = vpop.f32.mrb[0].mxu0
        %v6692 = vadd.f32 %v6499, %v6691
        %v6693 = vpop.f32.mrb[0].mxu0
        %v6694 = vadd.f32 %v6501, %v6693
        %6695 = vdwg.mxu0
        %6696 = vmatprep.subr.bf16.mxu0 %v6215
        %6697 = vmatpush1.bf16.msra.mxu0 %v6214
        %6698 = vmatprep.subr.bf16.mxu0 %v6217
        %6699 = vmatpush1.bf16.msra.mxu0 %v6216
        %6700 = vmatprep.subr.bf16.mxu0 %v6219
        %6701 = vmatpush1.bf16.msra.mxu0 %v6218
        %6702 = vmatprep.subr.bf16.mxu0 %v6221
        %6703 = vmatpush1.bf16.msra.mxu0 %v6220
        %6704 = vmatprep.subr.bf16.mxu0 %v6223
        %6705 = vmatpush1.bf16.msra.mxu0 %v6222
        %6706 = vmatprep.subr.bf16.mxu0 %v6225
        %6707 = vmatpush1.bf16.msra.mxu0 %v6224
        %6708 = vmatprep.subr.bf16.mxu0 %v6227
        %6709 = vmatpush1.bf16.msra.mxu0 %v6226
        %6710 = vmatprep.subr.bf16.mxu0 %v6229
        %6711 = vmatpush1.bf16.msra.mxu0 %v6228
        %6712 = vmatprep.subr.bf16.mxu0 0
        %6713 = vmatpush1.bf16.msra.mxu0 0
        %6714 = vmatprep.subr.bf16.mxu0 0
        %6715 = vmatpush1.bf16.msra.mxu0 0
        %6716 = vmatprep.subr.bf16.mxu0 0
        %6717 = vmatpush1.bf16.msra.mxu0 0
        %6718 = vmatprep.subr.bf16.mxu0 0
        %6719 = vmatpush1.bf16.msra.mxu0 0
        %6720 = vmatprep.subr.bf16.mxu0 0
        %6721 = vmatpush1.bf16.msra.mxu0 0
        %6722 = vmatprep.subr.bf16.mxu0 0
        %6723 = vmatpush1.bf16.msra.mxu0 0
        %6724 = vmatprep.subr.bf16.mxu0 0
        %6725 = vmatpush1.bf16.msra.mxu0 0
        %6726 = vmatprep.subr.bf16.mxu0 0
        %6727 = vmatpush1.bf16.msra.mxu0 0
        %6728 = vmatprep.mubr.bf16.mxu0 0
        %6729 = vmatmul.mubr.bf16.gmra.mrb[0].mxu0 %v5754
        %v6730 = vpop.f32.mrb[0].mxu0
        %v6731 = vadd.f32 %v6538, %v6730
        %v6732 = vpop.f32.mrb[0].mxu0
        %v6733 = vadd.f32 %v6540, %v6732
        %v6734 = vpop.f32.mrb[0].mxu0
        %v6735 = vadd.f32 %v6542, %v6734
        %v6736 = vpop.f32.mrb[0].mxu0
        %v6737 = vadd.f32 %v6544, %v6736
        %6738 = vmatprep.mubr.bf16.mxu0 0
        %6739 = vmatmul.mubr.bf16.gmra.mrb[0].mxu0 %v5759
        %v6740 = vpop.f32.mrb[0].mxu0
        %v6741 = vadd.f32 %v6548, %v6740
        %v6742 = vpop.f32.mrb[0].mxu0
        %v6743 = vadd.f32 %v6550, %v6742
        %v6744 = vpop.f32.mrb[0].mxu0
        %v6745 = vadd.f32 %v6552, %v6744
        %v6746 = vpop.f32.mrb[0].mxu0
        %v6747 = vadd.f32 %v6554, %v6746
        %6748 = vmatprep.mubr.bf16.mxu0 0
        %6749 = vmatmul.mubr.bf16.gmra.mrb[0].mxu0 %v5764
        %v6750 = vpop.f32.mrb[0].mxu0
        %v6751 = vadd.f32 %v6558, %v6750
        %v6752 = vpop.f32.mrb[0].mxu0
        %v6753 = vadd.f32 %v6560, %v6752
        %v6754 = vpop.f32.mrb[0].mxu0
        %v6755 = vadd.f32 %v6562, %v6754
        %v6756 = vpop.f32.mrb[0].mxu0
        %v6757 = vadd.f32 %v6564, %v6756
        %6758 = vmatprep.mubr.bf16.mxu0 0
        %6759 = vmatmul.mubr.bf16.gmra.mrb[0].mxu0 %v5769
        %v6760 = vpop.f32.mrb[0].mxu0
        %v6761 = vadd.f32 %v6568, %v6760
        %v6762 = vpop.f32.mrb[0].mxu0
        %v6763 = vadd.f32 %v6570, %v6762
        %v6764 = vpop.f32.mrb[0].mxu0
        %v6765 = vadd.f32 %v6572, %v6764
        %v6766 = vpop.f32.mrb[0].mxu0
        %v6767 = vadd.f32 %v6574, %v6766
        %6768 = vmatprep.mubr.bf16.mxu0 0
        %6769 = vmatmul.mubr.bf16.gmra.mrb[0].mxu0 %v5774
        %v6770 = vpop.f32.mrb[0].mxu0
        %v6771 = vadd.f32 %v6578, %v6770
        %v6772 = vpop.f32.mrb[0].mxu0
        %v6773 = vadd.f32 %v6580, %v6772
        %v6774 = vpop.f32.mrb[0].mxu0
        %v6775 = vadd.f32 %v6582, %v6774
        %v6776 = vpop.f32.mrb[0].mxu0
        %v6777 = vadd.f32 %v6584, %v6776
        %6778 = vmatprep.mubr.bf16.mxu0 0
        %6779 = vmatmul.mubr.bf16.gmra.mrb[0].mxu0 %v5779
        %v6780 = vpop.f32.mrb[0].mxu0
        %v6781 = vadd.f32 %v6588, %v6780
        %v6782 = vpop.f32.mrb[0].mxu0
        %v6783 = vadd.f32 %v6590, %v6782
        %v6784 = vpop.f32.mrb[0].mxu0
        %v6785 = vadd.f32 %v6592, %v6784
        %v6786 = vpop.f32.mrb[0].mxu0
        %v6787 = vadd.f32 %v6594, %v6786
        %6788 = vmatprep.mubr.bf16.mxu0 0
        %6789 = vmatmul.mubr.bf16.gmra.mrb[0].mxu0 %v5784
        %v6790 = vpop.f32.mrb[0].mxu0
        %v6791 = vadd.f32 %v6598, %v6790
        %v6792 = vpop.f32.mrb[0].mxu0
        %v6793 = vadd.f32 %v6600, %v6792
        %v6794 = vpop.f32.mrb[0].mxu0
        %v6795 = vadd.f32 %v6602, %v6794
        %v6796 = vpop.f32.mrb[0].mxu0
        %v6797 = vadd.f32 %v6604, %v6796
        %6798 = vmatprep.mubr.bf16.mxu0 0
        %6799 = vmatmul.mubr.bf16.gmra.mrb[0].mxu0 %v5789
        %v6800 = vpop.f32.mrb[0].mxu0
        %v6801 = vadd.f32 %v6608, %v6800
        %v6802 = vpop.f32.mrb[0].mxu0
        %v6803 = vadd.f32 %v6610, %v6802
        %v6804 = vpop.f32.mrb[0].mxu0
        %v6805 = vadd.f32 %v6612, %v6804
        %v6806 = vpop.f32.mrb[0].mxu0
        %v6807 = vadd.f32 %v6614, %v6806
        %6808 = vmatprep.mubr.bf16.mxu0 0
        %6809 = vmatmul.mubr.bf16.gmra.mrb[0].mxu0 %v5794
        %v6810 = vpop.f32.mrb[0].mxu0
        %v6811 = vadd.f32 %v6618, %v6810
        %v6812 = vpop.f32.mrb[0].mxu0
        %v6813 = vadd.f32 %v6620, %v6812
        %v6814 = vpop.f32.mrb[0].mxu0
        %v6815 = vadd.f32 %v6622, %v6814
        %v6816 = vpop.f32.mrb[0].mxu0
        %v6817 = vadd.f32 %v6624, %v6816
        %6818 = vmatprep.mubr.bf16.mxu0 0
        %6819 = vmatmul.mubr.bf16.gmra.mrb[0].mxu0 %v5799
        %v6820 = vpop.f32.mrb[0].mxu0
        %v6821 = vadd.f32 %v6628, %v6820
        %v6822 = vpop.f32.mrb[0].mxu0
        %v6823 = vadd.f32 %v6630, %v6822
        %v6824 = vpop.f32.mrb[0].mxu0
        %v6825 = vadd.f32 %v6632, %v6824
        %v6826 = vpop.f32.mrb[0].mxu0
        %v6827 = vadd.f32 %v6634, %v6826
        %6828 = vmatprep.mubr.bf16.mxu0 0
        %6829 = vmatmul.mubr.bf16.gmra.mrb[0].mxu0 %v5804
        %v6830 = vpop.f32.mrb[0].mxu0
        %v6831 = vadd.f32 %v6638, %v6830
        %v6832 = vpop.f32.mrb[0].mxu0
        %v6833 = vadd.f32 %v6640, %v6832
        %v6834 = vpop.f32.mrb[0].mxu0
        %v6835 = vadd.f32 %v6642, %v6834
        %v6836 = vpop.f32.mrb[0].mxu0
        %v6837 = vadd.f32 %v6644, %v6836
        %6838 = vmatprep.mubr.bf16.mxu0 0
        %6839 = vmatmul.mubr.bf16.gmra.mrb[0].mxu0 %v5809
        %v6840 = vpop.f32.mrb[0].mxu0
        %v6841 = vadd.f32 %v6648, %v6840
        %v6842 = vpop.f32.mrb[0].mxu0
        %v6843 = vadd.f32 %v6650, %v6842
        %v6844 = vpop.f32.mrb[0].mxu0
        %v6845 = vadd.f32 %v6652, %v6844
        %v6846 = vpop.f32.mrb[0].mxu0
        %v6847 = vadd.f32 %v6654, %v6846
        %6848 = vmatprep.mubr.bf16.mxu0 0
        %6849 = vmatmul.mubr.bf16.gmra.mrb[0].mxu0 %v5814
        %v6850 = vpop.f32.mrb[0].mxu0
        %v6851 = vadd.f32 %v6658, %v6850
        %v6852 = vpop.f32.mrb[0].mxu0
        %v6853 = vadd.f32 %v6660, %v6852
        %v6854 = vpop.f32.mrb[0].mxu0
        %v6855 = vadd.f32 %v6662, %v6854
        %v6856 = vpop.f32.mrb[0].mxu0
        %v6857 = vadd.f32 %v6664, %v6856
        %6858 = vmatprep.mubr.bf16.mxu0 0
        %6859 = vmatmul.mubr.bf16.gmra.mrb[0].mxu0 %v5819
        %v6860 = vpop.f32.mrb[0].mxu0
        %v6861 = vadd.f32 %v6668, %v6860
        %v6862 = vpop.f32.mrb[0].mxu0
        %v6863 = vadd.f32 %v6670, %v6862
        %v6864 = vpop.f32.mrb[0].mxu0
        %v6865 = vadd.f32 %v6672, %v6864
        %v6866 = vpop.f32.mrb[0].mxu0
        %v6867 = vadd.f32 %v6674, %v6866
        %6868 = vmatprep.mubr.bf16.mxu0 0
        %6869 = vmatmul.mubr.bf16.gmra.mrb[0].mxu0 %v5824
        %v6870 = vpop.f32.mrb[0].mxu0
        %v6871 = vadd.f32 %v6678, %v6870
        %v6872 = vpop.f32.mrb[0].mxu0
        %v6873 = vadd.f32 %v6680, %v6872
        %v6874 = vpop.f32.mrb[0].mxu0
        %v6875 = vadd.f32 %v6682, %v6874
        %v6876 = vpop.f32.mrb[0].mxu0
        %v6877 = vadd.f32 %v6684, %v6876
        %6878 = vmatprep.mubr.bf16.mxu0 0
        %6879 = vmatmul.mubr.bf16.gmra.mrb[0].mxu0 %v5829
        %v6880 = vpop.f32.mrb[0].mxu0
        %v6881 = vadd.f32 %v6688, %v6880
        %v6882 = vpop.f32.mrb[0].mxu0
        %v6883 = vadd.f32 %v6690, %v6882
        %v6884 = vpop.f32.mrb[0].mxu0
        %v6885 = vadd.f32 %v6692, %v6884
        %v6886 = vpop.f32.mrb[0].mxu0
        %v6887 = vadd.f32 %v6694, %v6886
        %6888 = vdwg.mxu0
        %v6889 = vadd.f32 %v5686, %v6731
        %v6890 = vadd.f32 %v5687, %v6735
        %v6891 = vadd.f32 %v5688, %v6741
        %v6892 = vadd.f32 %v5689, %v6745
        %v6893 = vadd.f32 %v5690, %v6751
        %v6894 = vadd.f32 %v5691, %v6755
        %v6895 = vadd.f32 %v5692, %v6761
        %v6896 = vadd.f32 %v5693, %v6765
        %v6897 = vadd.f32 %v5694, %v6771
        %v6898 = vadd.f32 %v5695, %v6775
        %v6899 = vadd.f32 %v5696, %v6781
        %v6900 = vadd.f32 %v5697, %v6785
        %v6901 = vadd.f32 %v5698, %v6791
        %v6902 = vadd.f32 %v5699, %v6795
        %v6903 = vadd.f32 %v5700, %v6801
        %v6904 = vadd.f32 %v5701, %v6805
        %v6905 = vadd.f32 %v5702, %v6811
        %v6906 = vadd.f32 %v5703, %v6815
        %v6907 = vadd.f32 %v5704, %v6821
        %v6908 = vadd.f32 %v5705, %v6825
        %v6909 = vadd.f32 %v5706, %v6831
        %v6910 = vadd.f32 %v5707, %v6835
        %v6911 = vadd.f32 %v5708, %v6841
        %v6912 = vadd.f32 %v5709, %v6845
        %v6913 = vadd.f32 %v5710, %v6851
        %v6914 = vadd.f32 %v5711, %v6855
        %v6915 = vadd.f32 %v5712, %v6861
        %v6916 = vadd.f32 %v5713, %v6865
        %v6917 = vadd.f32 %v5714, %v6871
        %v6918 = vadd.f32 %v5715, %v6875
        %v6919 = vadd.f32 %v5716, %v6881
        %v6920 = vadd.f32 %v5717, %v6885
        %v6921 = vadd.f32 %v5718, %v6733
        %v6922 = vadd.f32 %v5719, %v6737
        %v6923 = vadd.f32 %v5720, %v6743
        %v6924 = vadd.f32 %v5721, %v6747
        %v6925 = vadd.f32 %v5722, %v6753
        %v6926 = vadd.f32 %v5723, %v6757
        %v6927 = vadd.f32 %v5724, %v6763
        %v6928 = vadd.f32 %v5725, %v6767
        %v6929 = vadd.f32 %v5726, %v6773
        %v6930 = vadd.f32 %v5727, %v6777
        %v6931 = vadd.f32 %v5728, %v6783
        %v6932 = vadd.f32 %v5729, %v6787
        %v6933 = vadd.f32 %v5730, %v6793
        %v6934 = vadd.f32 %v5731, %v6797
        %v6935 = vadd.f32 %v5732, %v6803
        %v6936 = vadd.f32 %v5733, %v6807
        %v6937 = vadd.f32 %v5734, %v6813
        %v6938 = vadd.f32 %v5735, %v6817
        %v6939 = vadd.f32 %v5736, %v6823
        %v6940 = vadd.f32 %v5737, %v6827
        %v6941 = vadd.f32 %v5738, %v6833
        %v6942 = vadd.f32 %v5739, %v6837
        %v6943 = vadd.f32 %v5740, %v6843
        %v6944 = vadd.f32 %v5741, %v6847
        %v6945 = vadd.f32 %v5742, %v6853
        %v6946 = vadd.f32 %v5743, %v6857
        %v6947 = vadd.f32 %v5744, %v6863
        %v6948 = vadd.f32 %v5745, %v6867
        %v6949 = vadd.f32 %v5746, %v6873
        %v6950 = vadd.f32 %v5747, %v6877
        %v6951 = vadd.f32 %v5748, %v6883
        %v6952 = vadd.f32 %v5749, %v6887
        %v6953 = vld [vmem:[#allocation2 + $0xa0] sm:$0xff]
        %v6954 = vld [vmem:[#allocation2 + $0xa8] sm:$0xff]
        %v6955 = vld [vmem:[#allocation2 + $0xb0] sm:$0xff]
        %v6956 = vld [vmem:[#allocation2 + $0xb8] sm:$0xff]
        %v6957 = vld [vmem:[#allocation2 + $0xc0] sm:$0xff]
        %v6958 = vld [vmem:[#allocation2 + $0xc8] sm:$0xff]
        %v6959 = vld [vmem:[#allocation2 + $0xd0] sm:$0xff]
        %v6960 = vld [vmem:[#allocation2 + $0xd8] sm:$0xff]
        %v6961 = vld [vmem:[#allocation2 + $0xe0] sm:$0xff]
        %v6962 = vld [vmem:[#allocation2 + $0xe8] sm:$0xff]
        %v6963 = vld [vmem:[#allocation2 + $0xf0] sm:$0xff]
        %v6964 = vld [vmem:[#allocation2 + $0xf8] sm:$0xff]
        %v6965 = vld [vmem:[#allocation2 + $0x100] sm:$0xff]
        %v6966 = vld [vmem:[#allocation2 + $0x108] sm:$0xff]
        %v6967 = vld [vmem:[#allocation2 + $0x110] sm:$0xff]
        %v6968 = vld [vmem:[#allocation2 + $0x118] sm:$0xff]
        %v6969 = vld [vmem:[#allocation2 + $0x120] sm:$0xff]
        %v6970 = vld [vmem:[#allocation2 + $0x128] sm:$0xff]
        %v6971 = vld [vmem:[#allocation2 + $0x130] sm:$0xff]
        %v6972 = vld [vmem:[#allocation2 + $0x138] sm:$0xff]
        %v6973 = vld [vmem:[#allocation2 + $0x140] sm:$0xff]
        %v6974 = vld [vmem:[#allocation2 + $0x148] sm:$0xff]
        %v6975 = vld [vmem:[#allocation2 + $0x150] sm:$0xff]
        %v6976 = vld [vmem:[#allocation2 + $0x158] sm:$0xff]
        %v6977 = vld [vmem:[#allocation2 + $0x160] sm:$0xff]
        %v6978 = vld [vmem:[#allocation2 + $0x168] sm:$0xff]
        %v6979 = vld [vmem:[#allocation2 + $0x170] sm:$0xff]
        %v6980 = vld [vmem:[#allocation2 + $0x178] sm:$0xff]
        %v6981 = vld [vmem:[#allocation2 + $0x180] sm:$0xff]
        %v6982 = vld [vmem:[#allocation2 + $0x188] sm:$0xff]
        %v6983 = vld [vmem:[#allocation2 + $0x190] sm:$0xff]
        %v6984 = vld [vmem:[#allocation2 + $0x198] sm:$0xff]
        %v6985 = vld [vmem:[#allocation2 + $0x1a0] sm:$0xff]
        %v6986 = vld [vmem:[#allocation2 + $0x1a8] sm:$0xff]
        %v6987 = vld [vmem:[#allocation2 + $0x1b0] sm:$0xff]
        %v6988 = vld [vmem:[#allocation2 + $0x1b8] sm:$0xff]
        %v6989 = vld [vmem:[#allocation2 + $0x1c0] sm:$0xff]
        %v6990 = vld [vmem:[#allocation2 + $0x1c8] sm:$0xff]
        %v6991 = vld [vmem:[#allocation2 + $0x1d0] sm:$0xff]
        %v6992 = vld [vmem:[#allocation2 + $0x1d8] sm:$0xff]
        %v6993 = vld [vmem:[#allocation2 + $0x1e0] sm:$0xff]
        %v6994 = vld [vmem:[#allocation2 + $0x1e8] sm:$0xff]
        %v6995 = vld [vmem:[#allocation2 + $0x1f0] sm:$0xff]
        %v6996 = vld [vmem:[#allocation2 + $0x1f8] sm:$0xff]
        %v6997 = vld [vmem:[#allocation2 + $0x200] sm:$0xff]
        %v6998 = vld [vmem:[#allocation2 + $0x208] sm:$0xff]
        %v6999 = vld [vmem:[#allocation2 + $0x210] sm:$0xff]
        %v7000 = vld [vmem:[#allocation2 + $0x218] sm:$0xff]
        %v7001 = vld [vmem:[#allocation2 + $0x220] sm:$0xff]
        %v7002 = vld [vmem:[#allocation2 + $0x228] sm:$0xff]
        %v7003 = vld [vmem:[#allocation2 + $0x230] sm:$0xff]
        %v7004 = vld [vmem:[#allocation2 + $0x238] sm:$0xff]
        %v7005 = vld [vmem:[#allocation2 + $0x240] sm:$0xff]
        %v7006 = vld [vmem:[#allocation2 + $0x248] sm:$0xff]
        %v7007 = vld [vmem:[#allocation2 + $0x250] sm:$0xff]
        %v7008 = vld [vmem:[#allocation2 + $0x258] sm:$0xff]
        %v7009 = vld [vmem:[#allocation2 + $0x260] sm:$0xff]
        %v7010 = vld [vmem:[#allocation2 + $0x268] sm:$0xff]
        %v7011 = vld [vmem:[#allocation2 + $0x270] sm:$0xff]
        %v7012 = vld [vmem:[#allocation2 + $0x278] sm:$0xff]
        %v7013 = vld [vmem:[#allocation2 + $0x280] sm:$0xff]
        %v7014 = vld [vmem:[#allocation2 + $0x288] sm:$0xff]
        %v7015 = vld [vmem:[#allocation2 + $0x290] sm:$0xff]
        %v7016 = vld [vmem:[#allocation2 + $0x298] sm:$0xff]
        %v7017 = vld [vmem:[#allocation2 + $0x2a0] sm:$0xff]
        %v7018 = vld [vmem:[#allocation2 + $0x2a8] sm:$0xff]
        %v7019 = vld [vmem:[#allocation2 + $0x2b0] sm:$0xff]
        %v7020 = vld [vmem:[#allocation2 + $0x2b8] sm:$0xff]
        %v7021 = vld [vmem:[#allocation2 + $0x2c0] sm:$0xff]
        %v7022 = vld [vmem:[#allocation2 + $0x2c8] sm:$0xff]
        %v7023 = vld [vmem:[#allocation2 + $0x2d0] sm:$0xff]
        %v7024 = vld [vmem:[#allocation2 + $0x2d8] sm:$0xff]
        %v7025 = vld [vmem:[#allocation2 + $0x2e0] sm:$0xff]
        %v7026 = vld [vmem:[#allocation2 + $0x2e8] sm:$0xff]
        %v7027 = vld [vmem:[#allocation2 + $0x2f0] sm:$0xff]
        %v7028 = vld [vmem:[#allocation2 + $0x2f8] sm:$0xff]
        %v7029 = vld [vmem:[#allocation2 + $0x300] sm:$0xff]
        %v7030 = vld [vmem:[#allocation2 + $0x308] sm:$0xff]
        %v7031 = vld [vmem:[#allocation2 + $0x310] sm:$0xff]
        %v7032 = vld [vmem:[#allocation2 + $0x318] sm:$0xff]
        %v7033 = vld [vmem:[#allocation3 + $0x1c] sm:$0xf]
        %v7034 = vld [vmem:[#allocation3 + $0x3c] sm:$0xf]
        %v7035 = vld [vmem:[#allocation3 + $0x5c] sm:$0xf]
        %v7036 = vld [vmem:[#allocation3 + $0x7c] sm:$0xf]
        %v7037 = vld [vmem:[#allocation3 + $0x9c] sm:$0xf]
        %v7038 = vld [vmem:[#allocation3 + $0xbc] sm:$0xf]
        %v7039 = vld [vmem:[#allocation3 + $0xdc] sm:$0xf]
        %v7040 = vld [vmem:[#allocation3 + $0xfc] sm:$0xf]
        %v7041 = vld [vmem:[#allocation3 + $0x11c] sm:$0xf]
        %v7042 = vld [vmem:[#allocation3 + $0x13c] sm:$0xf]
        %v7043 = vld [vmem:[#allocation3 + $0x15c] sm:$0xf]
        %v7044 = vld [vmem:[#allocation3 + $0x17c] sm:$0xf]
        %v7045 = vld [vmem:[#allocation3 + $0x19c] sm:$0xf]
        %v7046 = vld [vmem:[#allocation3 + $0x1bc] sm:$0xf]
        %v7047 = vld [vmem:[#allocation3 + $0x1dc] sm:$0xf]
        %v7048 = vld [vmem:[#allocation3 + $0x1fc] sm:$0xf]
        %v7049 = vld [vmem:[#allocation3 + $0x21c] sm:$0xf]
        %v7050 = vld [vmem:[#allocation3 + $0x23c] sm:$0xf]
        %v7051 = vld [vmem:[#allocation3 + $0x25c] sm:$0xf]
        %v7052 = vld [vmem:[#allocation3 + $0x27c] sm:$0xf]
        %v7053 = vld [vmem:[#allocation3 + $0x29c] sm:$0xf]
        %v7054 = vld [vmem:[#allocation3 + $0x2bc] sm:$0xf]
        %v7055 = vld [vmem:[#allocation3 + $0x2dc] sm:$0xf]
        %v7056 = vld [vmem:[#allocation3 + $0x2fc] sm:$0xf]
        %v7057 = vld [vmem:[#allocation3 + $0x31c] sm:$0xf]
        %v7058 = vld [vmem:[#allocation3 + $0x33c] sm:$0xf]
        %v7059 = vld [vmem:[#allocation3 + $0x35c] sm:$0xf]
        %v7060 = vld [vmem:[#allocation3 + $0x37c] sm:$0xf]
        %v7061 = vld [vmem:[#allocation3 + $0x39c] sm:$0xf]
        %v7062 = vld [vmem:[#allocation3 + $0x3bc] sm:$0xf]
        %v7063 = vld [vmem:[#allocation3 + $0x3dc] sm:$0xf]
        %v7064 = vld [vmem:[#allocation3 + $0x3fc] sm:$0xf]
        %v7065 = vld [vmem:[#allocation3 + $0x41c] sm:$0xf]
        %v7066 = vld [vmem:[#allocation3 + $0x43c] sm:$0xf]
        %v7067 = vld [vmem:[#allocation3 + $0x45c] sm:$0xf]
        %v7068 = vld [vmem:[#allocation3 + $0x47c] sm:$0xf]
        %v7069 = vld [vmem:[#allocation3 + $0x49c] sm:$0xf]
        %v7070 = vld [vmem:[#allocation3 + $0x4bc] sm:$0xf]
        %v7071 = vld [vmem:[#allocation3 + $0x4dc] sm:$0xf]
        %v7072 = vld [vmem:[#allocation3 + $0x4fc] sm:$0xf]
        %v7073 = vld [vmem:[#allocation3 + $0x51c] sm:$0xf]
        %v7074 = vld [vmem:[#allocation3 + $0x53c] sm:$0xf]
        %v7075 = vld [vmem:[#allocation3 + $0x55c] sm:$0xf]
        %v7076 = vld [vmem:[#allocation3 + $0x57c] sm:$0xf]
        %v7077 = vld [vmem:[#allocation3 + $0x59c] sm:$0xf]
        %v7078 = vld [vmem:[#allocation3 + $0x5bc] sm:$0xf]
        %v7079 = vld [vmem:[#allocation3 + $0x5dc] sm:$0xf]
        %v7080 = vld [vmem:[#allocation3 + $0x5fc] sm:$0xf]
        %v7081 = vld [vmem:[#allocation3 + $0x61c] sm:$0xf]
        %v7082 = vld [vmem:[#allocation3 + $0x63c] sm:$0xf]
        %v7083 = vld [vmem:[#allocation3 + $0x65c] sm:$0xf]
        %v7084 = vld [vmem:[#allocation3 + $0x67c] sm:$0xf]
        %v7085 = vld [vmem:[#allocation3 + $0x69c] sm:$0xf]
        %v7086 = vld [vmem:[#allocation3 + $0x6bc] sm:$0xf]
        %v7087 = vld [vmem:[#allocation3 + $0x6dc] sm:$0xf]
        %v7088 = vld [vmem:[#allocation3 + $0x6fc] sm:$0xf]
        %v7089 = vld [vmem:[#allocation3 + $0x71c] sm:$0xf]
        %v7090 = vld [vmem:[#allocation3 + $0x73c] sm:$0xf]
        %v7091 = vld [vmem:[#allocation3 + $0x75c] sm:$0xf]
        %v7092 = vld [vmem:[#allocation3 + $0x77c] sm:$0xf]
        %v7093 = vld [vmem:[#allocation3 + $0x79c] sm:$0xf]
        %v7094 = vld [vmem:[#allocation3 + $0x7bc] sm:$0xf]
        %v7095 = vld [vmem:[#allocation3 + $0x7dc] sm:$0xf]
        %v7096 = vld [vmem:[#allocation3 + $0x7fc] sm:$0xf]
        %v7097 = vld [vmem:[#allocation3 + $0x81c] sm:$0xf]
        %v7098 = vld [vmem:[#allocation3 + $0x83c] sm:$0xf]
        %v7099 = vld [vmem:[#allocation3 + $0x85c] sm:$0xf]
        %v7100 = vld [vmem:[#allocation3 + $0x87c] sm:$0xf]
        %v7101 = vld [vmem:[#allocation3 + $0x89c] sm:$0xf]
        %v7102 = vld [vmem:[#allocation3 + $0x8bc] sm:$0xf]
        %v7103 = vld [vmem:[#allocation3 + $0x8dc] sm:$0xf]
        %v7104 = vld [vmem:[#allocation3 + $0x8fc] sm:$0xf]
        %v7105 = vld [vmem:[#allocation3 + $0x91c] sm:$0xf]
        %v7106 = vld [vmem:[#allocation3 + $0x93c] sm:$0xf]
        %v7107 = vld [vmem:[#allocation3 + $0x95c] sm:$0xf]
        %v7108 = vld [vmem:[#allocation3 + $0x97c] sm:$0xf]
        %v7109 = vld [vmem:[#allocation3 + $0x99c] sm:$0xf]
        %v7110 = vld [vmem:[#allocation3 + $0x9bc] sm:$0xf]
        %v7111 = vld [vmem:[#allocation3 + $0x9dc] sm:$0xf]
        %v7112 = vld [vmem:[#allocation3 + $0x9fc] sm:$0xf]
        %v7193 = vunpack.c.l.b16 %v7033
        %v7194 = vunpack.c.l.b16 %v7034
        %v7195 = vunpack.c.l.b16 %v7035
        %v7196 = vunpack.c.l.b16 %v7036
        %v7197 = vunpack.c.l.b16 %v7037
        %v7198 = vunpack.c.l.b16 %v7038
        %v7199 = vunpack.c.l.b16 %v7039
        %v7200 = vunpack.c.l.b16 %v7040
        %v7201 = vunpack.c.l.b16 %v7041
        %v7202 = vunpack.c.l.b16 %v7042
        %v7203 = vunpack.c.l.b16 %v7043
        %v7204 = vunpack.c.l.b16 %v7044
        %v7205 = vunpack.c.l.b16 %v7045
        %v7206 = vunpack.c.l.b16 %v7046
        %v7207 = vunpack.c.l.b16 %v7047
        %v7208 = vunpack.c.l.b16 %v7048
        %v7209 = vunpack.c.l.b16 %v7049
        %v7210 = vunpack.c.l.b16 %v7050
        %v7211 = vunpack.c.l.b16 %v7051
        %v7212 = vunpack.c.l.b16 %v7052
        %v7213 = vunpack.c.l.b16 %v7053
        %v7214 = vunpack.c.l.b16 %v7054
        %v7215 = vunpack.c.l.b16 %v7055
        %v7216 = vunpack.c.l.b16 %v7056
        %v7217 = vunpack.c.l.b16 %v7057
        %v7218 = vunpack.c.l.b16 %v7058
        %v7219 = vunpack.c.l.b16 %v7059
        %v7220 = vunpack.c.l.b16 %v7060
        %v7221 = vunpack.c.l.b16 %v7061
        %v7222 = vunpack.c.l.b16 %v7062
        %v7223 = vunpack.c.l.b16 %v7063
        %v7224 = vunpack.c.l.b16 %v7064
        %v7225 = vunpack.c.l.b16 %v7065
        %v7226 = vunpack.c.l.b16 %v7066
        %v7227 = vunpack.c.l.b16 %v7067
        %v7228 = vunpack.c.l.b16 %v7068
        %v7229 = vunpack.c.l.b16 %v7069
        %v7230 = vunpack.c.l.b16 %v7070
        %v7231 = vunpack.c.l.b16 %v7071
        %v7232 = vunpack.c.l.b16 %v7072
        %v7233 = vunpack.c.l.b16 %v7073
        %v7234 = vunpack.c.l.b16 %v7074
        %v7235 = vunpack.c.l.b16 %v7075
        %v7236 = vunpack.c.l.b16 %v7076
        %v7237 = vunpack.c.l.b16 %v7077
        %v7238 = vunpack.c.l.b16 %v7078
        %v7239 = vunpack.c.l.b16 %v7079
        %v7240 = vunpack.c.l.b16 %v7080
        %v7241 = vunpack.c.l.b16 %v7081
        %v7242 = vunpack.c.l.b16 %v7082
        %v7243 = vunpack.c.l.b16 %v7083
        %v7244 = vunpack.c.l.b16 %v7084
        %v7245 = vunpack.c.l.b16 %v7085
        %v7246 = vunpack.c.l.b16 %v7086
        %v7247 = vunpack.c.l.b16 %v7087
        %v7248 = vunpack.c.l.b16 %v7088
        %v7249 = vunpack.c.l.b16 %v7089
        %v7250 = vunpack.c.l.b16 %v7090
        %v7251 = vunpack.c.l.b16 %v7091
        %v7252 = vunpack.c.l.b16 %v7092
        %v7253 = vunpack.c.l.b16 %v7093
        %v7254 = vunpack.c.l.b16 %v7094
        %v7255 = vunpack.c.l.b16 %v7095
        %v7256 = vunpack.c.l.b16 %v7096
        %v7257 = vunpack.c.l.b16 %v7097
        %v7258 = vunpack.c.l.b16 %v7098
        %v7259 = vunpack.c.l.b16 %v7099
        %v7260 = vunpack.c.l.b16 %v7100
        %v7261 = vunpack.c.l.b16 %v7101
        %v7262 = vunpack.c.l.b16 %v7102
        %v7263 = vunpack.c.l.b16 %v7103
        %v7264 = vunpack.c.l.b16 %v7104
        %v7265 = vunpack.c.l.b16 %v7105
        %v7266 = vunpack.c.l.b16 %v7106
        %v7267 = vunpack.c.l.b16 %v7107
        %v7268 = vunpack.c.l.b16 %v7108
        %v7269 = vunpack.c.l.b16 %v7109
        %v7270 = vunpack.c.l.b16 %v7110
        %v7271 = vunpack.c.l.b16 %v7111
        %v7272 = vunpack.c.l.b16 %v7112
        %v7273 = vpack.c.b16 %v7194, %v7193
        %v7274 = vpack.c.b16 %v7196, %v7195
        %v7275 = vpack.c.b16 %v7198, %v7197
        %v7276 = vpack.c.b16 %v7200, %v7199
        %v7277 = vpack.c.b16 %v7202, %v7201
        %v7278 = vpack.c.b16 %v7204, %v7203
        %v7279 = vpack.c.b16 %v7206, %v7205
        %v7280 = vpack.c.b16 %v7208, %v7207
        %v7281 = vpack.c.b16 %v7210, %v7209
        %v7282 = vpack.c.b16 %v7212, %v7211
        %v7283 = vpack.c.b16 %v7214, %v7213
        %v7284 = vpack.c.b16 %v7216, %v7215
        %v7285 = vpack.c.b16 %v7218, %v7217
        %v7286 = vpack.c.b16 %v7220, %v7219
        %v7287 = vpack.c.b16 %v7222, %v7221
        %v7288 = vpack.c.b16 %v7224, %v7223
        %v7289 = vpack.c.b16 %v7226, %v7225
        %v7290 = vpack.c.b16 %v7228, %v7227
        %v7291 = vpack.c.b16 %v7230, %v7229
        %v7292 = vpack.c.b16 %v7232, %v7231
        %v7293 = vpack.c.b16 %v7234, %v7233
        %v7294 = vpack.c.b16 %v7236, %v7235
        %v7295 = vpack.c.b16 %v7238, %v7237
        %v7296 = vpack.c.b16 %v7240, %v7239
        %v7297 = vpack.c.b16 %v7242, %v7241
        %v7298 = vpack.c.b16 %v7244, %v7243
        %v7299 = vpack.c.b16 %v7246, %v7245
        %v7300 = vpack.c.b16 %v7248, %v7247
        %v7301 = vpack.c.b16 %v7250, %v7249
        %v7302 = vpack.c.b16 %v7252, %v7251
        %v7303 = vpack.c.b16 %v7254, %v7253
        %v7304 = vpack.c.b16 %v7256, %v7255
        %v7305 = vpack.c.b16 %v7258, %v7257
        %v7306 = vpack.c.b16 %v7260, %v7259
        %v7307 = vpack.c.b16 %v7262, %v7261
        %v7308 = vpack.c.b16 %v7264, %v7263
        %v7309 = vpack.c.b16 %v7266, %v7265
        %v7310 = vpack.c.b16 %v7268, %v7267
        %v7311 = vpack.c.b16 %v7270, %v7269
        %v7312 = vpack.c.b16 %v7272, %v7271
        %7353 = vmatprep.subr.bf16.mxu0 0
        %7354 = vmatpush1.bf16.msra.mxu0 %v7273
        %7355 = vmatprep.subr.bf16.mxu0 0
        %7356 = vmatpush1.bf16.msra.mxu0 %v7274
        %7357 = vmatprep.subr.bf16.mxu0 0
        %7358 = vmatpush1.bf16.msra.mxu0 %v7275
        %7359 = vmatprep.subr.bf16.mxu0 0
        %7360 = vmatpush1.bf16.msra.mxu0 %v7276
        %7361 = vmatprep.subr.bf16.mxu0 0
        %7362 = vmatpush1.bf16.msra.mxu0 %v7277
        %7363 = vmatprep.subr.bf16.mxu0 0
        %7364 = vmatpush1.bf16.msra.mxu0 %v7278
        %7365 = vmatprep.subr.bf16.mxu0 0
        %7366 = vmatpush1.bf16.msra.mxu0 %v7279
        %7367 = vmatprep.subr.bf16.mxu0 0
        %7368 = vmatpush1.bf16.msra.mxu0 %v7280
        %7369 = vmatprep.subr.bf16.mxu0 0
        %7370 = vmatpush1.bf16.msra.mxu0 %v7281
        %7371 = vmatprep.subr.bf16.mxu0 0
        %7372 = vmatpush1.bf16.msra.mxu0 %v7282
        %7373 = vmatprep.subr.bf16.mxu0 0
        %7374 = vmatpush1.bf16.msra.mxu0 %v7283
        %7375 = vmatprep.subr.bf16.mxu0 0
        %7376 = vmatpush1.bf16.msra.mxu0 %v7284
        %7377 = vmatprep.subr.bf16.mxu0 0
        %7378 = vmatpush1.bf16.msra.mxu0 %v7285
        %7379 = vmatprep.subr.bf16.mxu0 0
        %7380 = vmatpush1.bf16.msra.mxu0 %v7286
        %7381 = vmatprep.subr.bf16.mxu0 0
        %7382 = vmatpush1.bf16.msra.mxu0 %v7287
        %7383 = vmatprep.subr.bf16.mxu0 0
        %7384 = vmatpush1.bf16.msra.mxu0 %v7288
        %7385 = vmatprep.mubr.bf16.mxu0 %v6954
        %7386 = vmatmul.mubr.bf16.gmra.mrb[0].mxu0 %v6953
        %v7387 = vpop.f32.mrb[0].mxu0
        %v7388 = vadd.f32 0.0, %v7387
        %v7389 = vpop.f32.mrb[0].mxu0
        %v7390 = vpop.f32.mrb[0].mxu0
        %v7391 = vadd.f32 0.0, %v7390
        %v7392 = vpop.f32.mrb[0].mxu0
        %7393 = vmatprep.mubr.bf16.mxu0 %v6959
        %7394 = vmatmul.mubr.bf16.gmra.mrb[0].mxu0 %v6958
        %v7395 = vpop.f32.mrb[0].mxu0
        %v7396 = vadd.f32 0.0, %v7395
        %v7397 = vpop.f32.mrb[0].mxu0
        %v7398 = vpop.f32.mrb[0].mxu0
        %v7399 = vadd.f32 0.0, %v7398
        %v7400 = vpop.f32.mrb[0].mxu0
        %7401 = vmatprep.mubr.bf16.mxu0 %v6964
        %7402 = vmatmul.mubr.bf16.gmra.mrb[0].mxu0 %v6963
        %v7403 = vpop.f32.mrb[0].mxu0
        %v7404 = vadd.f32 0.0, %v7403
        %v7405 = vpop.f32.mrb[0].mxu0
        %v7406 = vpop.f32.mrb[0].mxu0
        %v7407 = vadd.f32 0.0, %v7406
        %v7408 = vpop.f32.mrb[0].mxu0
        %7409 = vmatprep.mubr.bf16.mxu0 %v6969
        %7410 = vmatmul.mubr.bf16.gmra.mrb[0].mxu0 %v6968
        %v7411 = vpop.f32.mrb[0].mxu0
        %v7412 = vadd.f32 0.0, %v7411
        %v7413 = vpop.f32.mrb[0].mxu0
        %v7414 = vpop.f32.mrb[0].mxu0
        %v7415 = vadd.f32 0.0, %v7414
        %v7416 = vpop.f32.mrb[0].mxu0
        %7417 = vmatprep.mubr.bf16.mxu0 %v6974
        %7418 = vmatmul.mubr.bf16.gmra.mrb[0].mxu0 %v6973
        %v7419 = vpop.f32.mrb[0].mxu0
        %v7420 = vadd.f32 0.0, %v7419
        %v7421 = vpop.f32.mrb[0].mxu0
        %v7422 = vpop.f32.mrb[0].mxu0
        %v7423 = vadd.f32 0.0, %v7422
        %v7424 = vpop.f32.mrb[0].mxu0
        %7425 = vmatprep.mubr.bf16.mxu0 %v6979
        %7426 = vmatmul.mubr.bf16.gmra.mrb[0].mxu0 %v6978
        %v7427 = vpop.f32.mrb[0].mxu0
        %v7428 = vadd.f32 0.0, %v7427
        %v7429 = vpop.f32.mrb[0].mxu0
        %v7430 = vpop.f32.mrb[0].mxu0
        %v7431 = vadd.f32 0.0, %v7430
        %v7432 = vpop.f32.mrb[0].mxu0
        %7433 = vmatprep.mubr.bf16.mxu0 %v6984
        %7434 = vmatmul.mubr.bf16.gmra.mrb[0].mxu0 %v6983
        %v7435 = vpop.f32.mrb[0].mxu0
        %v7436 = vadd.f32 0.0, %v7435
        %v7437 = vpop.f32.mrb[0].mxu0
        %v7438 = vpop.f32.mrb[0].mxu0
        %v7439 = vadd.f32 0.0, %v7438
        %v7440 = vpop.f32.mrb[0].mxu0
        %7441 = vmatprep.mubr.bf16.mxu0 %v6989
        %7442 = vmatmul.mubr.bf16.gmra.mrb[0].mxu0 %v6988
        %v7443 = vpop.f32.mrb[0].mxu0
        %v7444 = vadd.f32 0.0, %v7443
        %v7445 = vpop.f32.mrb[0].mxu0
        %v7446 = vpop.f32.mrb[0].mxu0
        %v7447 = vadd.f32 0.0, %v7446
        %v7448 = vpop.f32.mrb[0].mxu0
        %7449 = vmatprep.mubr.bf16.mxu0 %v6994
        %7450 = vmatmul.mubr.bf16.gmra.mrb[0].mxu0 %v6993
        %v7451 = vpop.f32.mrb[0].mxu0
        %v7452 = vadd.f32 0.0, %v7451
        %v7453 = vpop.f32.mrb[0].mxu0
        %v7454 = vpop.f32.mrb[0].mxu0
        %v7455 = vadd.f32 0.0, %v7454
        %v7456 = vpop.f32.mrb[0].mxu0
        %7457 = vmatprep.mubr.bf16.mxu0 %v6999
        %7458 = vmatmul.mubr.bf16.gmra.mrb[0].mxu0 %v6998
        %v7459 = vpop.f32.mrb[0].mxu0
        %v7460 = vadd.f32 0.0, %v7459
        %v7461 = vpop.f32.mrb[0].mxu0
        %v7462 = vpop.f32.mrb[0].mxu0
        %v7463 = vadd.f32 0.0, %v7462
        %v7464 = vpop.f32.mrb[0].mxu0
        %7465 = vmatprep.mubr.bf16.mxu0 %v7004
        %7466 = vmatmul.mubr.bf16.gmra.mrb[0].mxu0 %v7003
        %v7467 = vpop.f32.mrb[0].mxu0
        %v7468 = vadd.f32 0.0, %v7467
        %v7469 = vpop.f32.mrb[0].mxu0
        %v7470 = vpop.f32.mrb[0].mxu0
        %v7471 = vadd.f32 0.0, %v7470
        %v7472 = vpop.f32.mrb[0].mxu0
        %7473 = vmatprep.mubr.bf16.mxu0 %v7009
        %7474 = vmatmul.mubr.bf16.gmra.mrb[0].mxu0 %v7008
        %v7475 = vpop.f32.mrb[0].mxu0
        %v7476 = vadd.f32 0.0, %v7475
        %v7477 = vpop.f32.mrb[0].mxu0
        %v7478 = vpop.f32.mrb[0].mxu0
        %v7479 = vadd.f32 0.0, %v7478
        %v7480 = vpop.f32.mrb[0].mxu0
        %7481 = vmatprep.mubr.bf16.mxu0 %v7014
        %7482 = vmatmul.mubr.bf16.gmra.mrb[0].mxu0 %v7013
        %v7483 = vpop.f32.mrb[0].mxu0
        %v7484 = vadd.f32 0.0, %v7483
        %v7485 = vpop.f32.mrb[0].mxu0
        %v7486 = vpop.f32.mrb[0].mxu0
        %v7487 = vadd.f32 0.0, %v7486
        %v7488 = vpop.f32.mrb[0].mxu0
        %7489 = vmatprep.mubr.bf16.mxu0 %v7019
        %7490 = vmatmul.mubr.bf16.gmra.mrb[0].mxu0 %v7018
        %v7491 = vpop.f32.mrb[0].mxu0
        %v7492 = vadd.f32 0.0, %v7491
        %v7493 = vpop.f32.mrb[0].mxu0
        %v7494 = vpop.f32.mrb[0].mxu0
        %v7495 = vadd.f32 0.0, %v7494
        %v7496 = vpop.f32.mrb[0].mxu0
        %7497 = vmatprep.mubr.bf16.mxu0 %v7024
        %7498 = vmatmul.mubr.bf16.gmra.mrb[0].mxu0 %v7023
        %v7499 = vpop.f32.mrb[0].mxu0
        %v7500 = vadd.f32 0.0, %v7499
        %v7501 = vpop.f32.mrb[0].mxu0
        %v7502 = vpop.f32.mrb[0].mxu0
        %v7503 = vadd.f32 0.0, %v7502
        %v7504 = vpop.f32.mrb[0].mxu0
        %7505 = vmatprep.mubr.bf16.mxu0 %v7029
        %7506 = vmatmul.mubr.bf16.gmra.mrb[0].mxu0 %v7028
        %v7507 = vpop.f32.mrb[0].mxu0
        %v7508 = vadd.f32 0.0, %v7507
        %v7509 = vpop.f32.mrb[0].mxu0
        %v7510 = vpop.f32.mrb[0].mxu0
        %v7511 = vadd.f32 0.0, %v7510
        %v7512 = vpop.f32.mrb[0].mxu0
        %7513 = vdwg.mxu0
        %7514 = vmatprep.subr.bf16.mxu0 0
        %7515 = vmatpush1.bf16.msra.mxu0 %v7289
        %7516 = vmatprep.subr.bf16.mxu0 0
        %7517 = vmatpush1.bf16.msra.mxu0 %v7290
        %7518 = vmatprep.subr.bf16.mxu0 0
        %7519 = vmatpush1.bf16.msra.mxu0 %v7291
        %7520 = vmatprep.subr.bf16.mxu0 0
        %7521 = vmatpush1.bf16.msra.mxu0 %v7292
        %7522 = vmatprep.subr.bf16.mxu0 0
        %7523 = vmatpush1.bf16.msra.mxu0 %v7293
        %7524 = vmatprep.subr.bf16.mxu0 0
        %7525 = vmatpush1.bf16.msra.mxu0 %v7294
        %7526 = vmatprep.subr.bf16.mxu0 0
        %7527 = vmatpush1.bf16.msra.mxu0 %v7295
        %7528 = vmatprep.subr.bf16.mxu0 0
        %7529 = vmatpush1.bf16.msra.mxu0 %v7296
        %7530 = vmatprep.subr.bf16.mxu0 0
        %7531 = vmatpush1.bf16.msra.mxu0 %v7297
        %7532 = vmatprep.subr.bf16.mxu0 0
        %7533 = vmatpush1.bf16.msra.mxu0 %v7298
        %7534 = vmatprep.subr.bf16.mxu0 0
        %7535 = vmatpush1.bf16.msra.mxu0 %v7299
        %7536 = vmatprep.subr.bf16.mxu0 0
        %7537 = vmatpush1.bf16.msra.mxu0 %v7300
        %7538 = vmatprep.subr.bf16.mxu0 0
        %7539 = vmatpush1.bf16.msra.mxu0 %v7301
        %7540 = vmatprep.subr.bf16.mxu0 0
        %7541 = vmatpush1.bf16.msra.mxu0 %v7302
        %7542 = vmatprep.subr.bf16.mxu0 0
        %7543 = vmatpush1.bf16.msra.mxu0 %v7303
        %7544 = vmatprep.subr.bf16.mxu0 0
        %7545 = vmatpush1.bf16.msra.mxu0 %v7304
        %7546 = vmatprep.mubr.bf16.mxu0 %v6956
        %7547 = vmatmul.mubr.bf16.gmra.mrb[0].mxu0 %v6955
        %v7548 = vpop.f32.mrb[0].mxu0
        %v7549 = vadd.f32 %v7388, %v7548
        %v7550 = vpop.f32.mrb[0].mxu0
        %v7551 = vpop.f32.mrb[0].mxu0
        %v7552 = vadd.f32 %v7391, %v7551
        %v7553 = vpop.f32.mrb[0].mxu0
        %7554 = vmatprep.mubr.bf16.mxu0 %v6961
        %7555 = vmatmul.mubr.bf16.gmra.mrb[0].mxu0 %v6960
        %v7556 = vpop.f32.mrb[0].mxu0
        %v7557 = vadd.f32 %v7396, %v7556
        %v7558 = vpop.f32.mrb[0].mxu0
        %v7559 = vpop.f32.mrb[0].mxu0
        %v7560 = vadd.f32 %v7399, %v7559
        %v7561 = vpop.f32.mrb[0].mxu0
        %7562 = vmatprep.mubr.bf16.mxu0 %v6966
        %7563 = vmatmul.mubr.bf16.gmra.mrb[0].mxu0 %v6965
        %v7564 = vpop.f32.mrb[0].mxu0
        %v7565 = vadd.f32 %v7404, %v7564
        %v7566 = vpop.f32.mrb[0].mxu0
        %v7567 = vpop.f32.mrb[0].mxu0
        %v7568 = vadd.f32 %v7407, %v7567
        %v7569 = vpop.f32.mrb[0].mxu0
        %7570 = vmatprep.mubr.bf16.mxu0 %v6971
        %7571 = vmatmul.mubr.bf16.gmra.mrb[0].mxu0 %v6970
        %v7572 = vpop.f32.mrb[0].mxu0
        %v7573 = vadd.f32 %v7412, %v7572
        %v7574 = vpop.f32.mrb[0].mxu0
        %v7575 = vpop.f32.mrb[0].mxu0
        %v7576 = vadd.f32 %v7415, %v7575
        %v7577 = vpop.f32.mrb[0].mxu0
        %7578 = vmatprep.mubr.bf16.mxu0 %v6976
        %7579 = vmatmul.mubr.bf16.gmra.mrb[0].mxu0 %v6975
        %v7580 = vpop.f32.mrb[0].mxu0
        %v7581 = vadd.f32 %v7420, %v7580
        %v7582 = vpop.f32.mrb[0].mxu0
        %v7583 = vpop.f32.mrb[0].mxu0
        %v7584 = vadd.f32 %v7423, %v7583
        %v7585 = vpop.f32.mrb[0].mxu0
        %7586 = vmatprep.mubr.bf16.mxu0 %v6981
        %7587 = vmatmul.mubr.bf16.gmra.mrb[0].mxu0 %v6980
        %v7588 = vpop.f32.mrb[0].mxu0
        %v7589 = vadd.f32 %v7428, %v7588
        %v7590 = vpop.f32.mrb[0].mxu0
        %v7591 = vpop.f32.mrb[0].mxu0
        %v7592 = vadd.f32 %v7431, %v7591
        %v7593 = vpop.f32.mrb[0].mxu0
        %7594 = vmatprep.mubr.bf16.mxu0 %v6986
        %7595 = vmatmul.mubr.bf16.gmra.mrb[0].mxu0 %v6985
        %v7596 = vpop.f32.mrb[0].mxu0
        %v7597 = vadd.f32 %v7436, %v7596
        %v7598 = vpop.f32.mrb[0].mxu0
        %v7599 = vpop.f32.mrb[0].mxu0
        %v7600 = vadd.f32 %v7439, %v7599
        %v7601 = vpop.f32.mrb[0].mxu0
        %7602 = vmatprep.mubr.bf16.mxu0 %v6991
        %7603 = vmatmul.mubr.bf16.gmra.mrb[0].mxu0 %v6990
        %v7604 = vpop.f32.mrb[0].mxu0
        %v7605 = vadd.f32 %v7444, %v7604
        %v7606 = vpop.f32.mrb[0].mxu0
        %v7607 = vpop.f32.mrb[0].mxu0
        %v7608 = vadd.f32 %v7447, %v7607
        %v7609 = vpop.f32.mrb[0].mxu0
        %7610 = vmatprep.mubr.bf16.mxu0 %v6996
        %7611 = vmatmul.mubr.bf16.gmra.mrb[0].mxu0 %v6995
        %v7612 = vpop.f32.mrb[0].mxu0
        %v7613 = vadd.f32 %v7452, %v7612
        %v7614 = vpop.f32.mrb[0].mxu0
        %v7615 = vpop.f32.mrb[0].mxu0
        %v7616 = vadd.f32 %v7455, %v7615
        %v7617 = vpop.f32.mrb[0].mxu0
        %7618 = vmatprep.mubr.bf16.mxu0 %v7001
        %7619 = vmatmul.mubr.bf16.gmra.mrb[0].mxu0 %v7000
        %v7620 = vpop.f32.mrb[0].mxu0
        %v7621 = vadd.f32 %v7460, %v7620
        %v7622 = vpop.f32.mrb[0].mxu0
        %v7623 = vpop.f32.mrb[0].mxu0
        %v7624 = vadd.f32 %v7463, %v7623
        %v7625 = vpop.f32.mrb[0].mxu0
        %7626 = vmatprep.mubr.bf16.mxu0 %v7006
        %7627 = vmatmul.mubr.bf16.gmra.mrb[0].mxu0 %v7005
        %v7628 = vpop.f32.mrb[0].mxu0
        %v7629 = vadd.f32 %v7468, %v7628
        %v7630 = vpop.f32.mrb[0].mxu0
        %v7631 = vpop.f32.mrb[0].mxu0
        %v7632 = vadd.f32 %v7471, %v7631
        %v7633 = vpop.f32.mrb[0].mxu0
        %7634 = vmatprep.mubr.bf16.mxu0 %v7011
        %7635 = vmatmul.mubr.bf16.gmra.mrb[0].mxu0 %v7010
        %v7636 = vpop.f32.mrb[0].mxu0
        %v7637 = vadd.f32 %v7476, %v7636
        %v7638 = vpop.f32.mrb[0].mxu0
        %v7639 = vpop.f32.mrb[0].mxu0
        %v7640 = vadd.f32 %v7479, %v7639
        %v7641 = vpop.f32.mrb[0].mxu0
        %7642 = vmatprep.mubr.bf16.mxu0 %v7016
        %7643 = vmatmul.mubr.bf16.gmra.mrb[0].mxu0 %v7015
        %v7644 = vpop.f32.mrb[0].mxu0
        %v7645 = vadd.f32 %v7484, %v7644
        %v7646 = vpop.f32.mrb[0].mxu0
        %v7647 = vpop.f32.mrb[0].mxu0
        %v7648 = vadd.f32 %v7487, %v7647
        %v7649 = vpop.f32.mrb[0].mxu0
        %7650 = vmatprep.mubr.bf16.mxu0 %v7021
        %7651 = vmatmul.mubr.bf16.gmra.mrb[0].mxu0 %v7020
        %v7652 = vpop.f32.mrb[0].mxu0
        %v7653 = vadd.f32 %v7492, %v7652
        %v7654 = vpop.f32.mrb[0].mxu0
        %v7655 = vpop.f32.mrb[0].mxu0
        %v7656 = vadd.f32 %v7495, %v7655
        %v7657 = vpop.f32.mrb[0].mxu0
        %7658 = vmatprep.mubr.bf16.mxu0 %v7026
        %7659 = vmatmul.mubr.bf16.gmra.mrb[0].mxu0 %v7025
        %v7660 = vpop.f32.mrb[0].mxu0
        %v7661 = vadd.f32 %v7500, %v7660
        %v7662 = vpop.f32.mrb[0].mxu0
        %v7663 = vpop.f32.mrb[0].mxu0
        %v7664 = vadd.f32 %v7503, %v7663
        %v7665 = vpop.f32.mrb[0].mxu0
        %7666 = vmatprep.mubr.bf16.mxu0 %v7031
        %7667 = vmatmul.mubr.bf16.gmra.mrb[0].mxu0 %v7030
        %v7668 = vpop.f32.mrb[0].mxu0
        %v7669 = vadd.f32 %v7508, %v7668
        %v7670 = vpop.f32.mrb[0].mxu0
        %v7671 = vpop.f32.mrb[0].mxu0
        %v7672 = vadd.f32 %v7511, %v7671
        %v7673 = vpop.f32.mrb[0].mxu0
        %7674 = vdwg.mxu0
        %7675 = vmatprep.subr.bf16.mxu0 0
        %7676 = vmatpush1.bf16.msra.mxu0 %v7305
        %7677 = vmatprep.subr.bf16.mxu0 0
        %7678 = vmatpush1.bf16.msra.mxu0 %v7306
        %7679 = vmatprep.subr.bf16.mxu0 0
        %7680 = vmatpush1.bf16.msra.mxu0 %v7307
        %7681 = vmatprep.subr.bf16.mxu0 0
        %7682 = vmatpush1.bf16.msra.mxu0 %v7308
        %7683 = vmatprep.subr.bf16.mxu0 0
        %7684 = vmatpush1.bf16.msra.mxu0 %v7309
        %7685 = vmatprep.subr.bf16.mxu0 0
        %7686 = vmatpush1.bf16.msra.mxu0 %v7310
        %7687 = vmatprep.subr.bf16.mxu0 0
        %7688 = vmatpush1.bf16.msra.mxu0 %v7311
        %7689 = vmatprep.subr.bf16.mxu0 0
        %7690 = vmatpush1.bf16.msra.mxu0 %v7312
        %7691 = vmatprep.subr.bf16.mxu0 0
        %7692 = vmatpush1.bf16.msra.mxu0 0
        %7693 = vmatprep.subr.bf16.mxu0 0
        %7694 = vmatpush1.bf16.msra.mxu0 0
        %7695 = vmatprep.subr.bf16.mxu0 0
        %7696 = vmatpush1.bf16.msra.mxu0 0
        %7697 = vmatprep.subr.bf16.mxu0 0
        %7698 = vmatpush1.bf16.msra.mxu0 0
        %7699 = vmatprep.subr.bf16.mxu0 0
        %7700 = vmatpush1.bf16.msra.mxu0 0
        %7701 = vmatprep.subr.bf16.mxu0 0
        %7702 = vmatpush1.bf16.msra.mxu0 0
        %7703 = vmatprep.subr.bf16.mxu0 0
        %7704 = vmatpush1.bf16.msra.mxu0 0
        %7705 = vmatprep.subr.bf16.mxu0 0
        %7706 = vmatpush1.bf16.msra.mxu0 0
        %7707 = vmatprep.mubr.bf16.mxu0 0
        %7708 = vmatmul.mubr.bf16.gmra.mrb[0].mxu0 %v6957
        %v7709 = vpop.f32.mrb[0].mxu0
        %v7710 = vadd.f32 %v7549, %v7709
        %v7711 = vpop.f32.mrb[0].mxu0
        %v7712 = vpop.f32.mrb[0].mxu0
        %v7713 = vadd.f32 %v7552, %v7712
        %v7714 = vpop.f32.mrb[0].mxu0
        %7715 = vmatprep.mubr.bf16.mxu0 0
        %7716 = vmatmul.mubr.bf16.gmra.mrb[0].mxu0 %v6962
        %v7717 = vpop.f32.mrb[0].mxu0
        %v7718 = vadd.f32 %v7557, %v7717
        %v7719 = vpop.f32.mrb[0].mxu0
        %v7720 = vpop.f32.mrb[0].mxu0
        %v7721 = vadd.f32 %v7560, %v7720
        %v7722 = vpop.f32.mrb[0].mxu0
        %7723 = vmatprep.mubr.bf16.mxu0 0
        %7724 = vmatmul.mubr.bf16.gmra.mrb[0].mxu0 %v6967
        %v7725 = vpop.f32.mrb[0].mxu0
        %v7726 = vadd.f32 %v7565, %v7725
        %v7727 = vpop.f32.mrb[0].mxu0
        %v7728 = vpop.f32.mrb[0].mxu0
        %v7729 = vadd.f32 %v7568, %v7728
        %v7730 = vpop.f32.mrb[0].mxu0
        %7731 = vmatprep.mubr.bf16.mxu0 0
        %7732 = vmatmul.mubr.bf16.gmra.mrb[0].mxu0 %v6972
        %v7733 = vpop.f32.mrb[0].mxu0
        %v7734 = vadd.f32 %v7573, %v7733
        %v7735 = vpop.f32.mrb[0].mxu0
        %v7736 = vpop.f32.mrb[0].mxu0
        %v7737 = vadd.f32 %v7576, %v7736
        %v7738 = vpop.f32.mrb[0].mxu0
        %7739 = vmatprep.mubr.bf16.mxu0 0
        %7740 = vmatmul.mubr.bf16.gmra.mrb[0].mxu0 %v6977
        %v7741 = vpop.f32.mrb[0].mxu0
        %v7742 = vadd.f32 %v7581, %v7741
        %v7743 = vpop.f32.mrb[0].mxu0
        %v7744 = vpop.f32.mrb[0].mxu0
        %v7745 = vadd.f32 %v7584, %v7744
        %v7746 = vpop.f32.mrb[0].mxu0
        %7747 = vmatprep.mubr.bf16.mxu0 0
        %7748 = vmatmul.mubr.bf16.gmra.mrb[0].mxu0 %v6982
        %v7749 = vpop.f32.mrb[0].mxu0
        %v7750 = vadd.f32 %v7589, %v7749
        %v7751 = vpop.f32.mrb[0].mxu0
        %v7752 = vpop.f32.mrb[0].mxu0
        %v7753 = vadd.f32 %v7592, %v7752
        %v7754 = vpop.f32.mrb[0].mxu0
        %7755 = vmatprep.mubr.bf16.mxu0 0
        %7756 = vmatmul.mubr.bf16.gmra.mrb[0].mxu0 %v6987
        %v7757 = vpop.f32.mrb[0].mxu0
        %v7758 = vadd.f32 %v7597, %v7757
        %v7759 = vpop.f32.mrb[0].mxu0
        %v7760 = vpop.f32.mrb[0].mxu0
        %v7761 = vadd.f32 %v7600, %v7760
        %v7762 = vpop.f32.mrb[0].mxu0
        %7763 = vmatprep.mubr.bf16.mxu0 0
        %7764 = vmatmul.mubr.bf16.gmra.mrb[0].mxu0 %v6992
        %v7765 = vpop.f32.mrb[0].mxu0
        %v7766 = vadd.f32 %v7605, %v7765
        %v7767 = vpop.f32.mrb[0].mxu0
        %v7768 = vpop.f32.mrb[0].mxu0
        %v7769 = vadd.f32 %v7608, %v7768
        %v7770 = vpop.f32.mrb[0].mxu0
        %7771 = vmatprep.mubr.bf16.mxu0 0
        %7772 = vmatmul.mubr.bf16.gmra.mrb[0].mxu0 %v6997
        %v7773 = vpop.f32.mrb[0].mxu0
        %v7774 = vadd.f32 %v7613, %v7773
        %v7775 = vpop.f32.mrb[0].mxu0
        %v7776 = vpop.f32.mrb[0].mxu0
        %v7777 = vadd.f32 %v7616, %v7776
        %v7778 = vpop.f32.mrb[0].mxu0
        %7779 = vmatprep.mubr.bf16.mxu0 0
        %7780 = vmatmul.mubr.bf16.gmra.mrb[0].mxu0 %v7002
        %v7781 = vpop.f32.mrb[0].mxu0
        %v7782 = vadd.f32 %v7621, %v7781
        %v7783 = vpop.f32.mrb[0].mxu0
        %v7784 = vpop.f32.mrb[0].mxu0
        %v7785 = vadd.f32 %v7624, %v7784
        %v7786 = vpop.f32.mrb[0].mxu0
        %7787 = vmatprep.mubr.bf16.mxu0 0
        %7788 = vmatmul.mubr.bf16.gmra.mrb[0].mxu0 %v7007
        %v7789 = vpop.f32.mrb[0].mxu0
        %v7790 = vadd.f32 %v7629, %v7789
        %v7791 = vpop.f32.mrb[0].mxu0
        %v7792 = vpop.f32.mrb[0].mxu0
        %v7793 = vadd.f32 %v7632, %v7792
        %v7794 = vpop.f32.mrb[0].mxu0
        %7795 = vmatprep.mubr.bf16.mxu0 0
        %7796 = vmatmul.mubr.bf16.gmra.mrb[0].mxu0 %v7012
        %v7797 = vpop.f32.mrb[0].mxu0
        %v7798 = vadd.f32 %v7637, %v7797
        %v7799 = vpop.f32.mrb[0].mxu0
        %v7800 = vpop.f32.mrb[0].mxu0
        %v7801 = vadd.f32 %v7640, %v7800
        %v7802 = vpop.f32.mrb[0].mxu0
        %7803 = vmatprep.mubr.bf16.mxu0 0
        %7804 = vmatmul.mubr.bf16.gmra.mrb[0].mxu0 %v7017
        %v7805 = vpop.f32.mrb[0].mxu0
        %v7806 = vadd.f32 %v7645, %v7805
        %v7807 = vpop.f32.mrb[0].mxu0
        %v7808 = vpop.f32.mrb[0].mxu0
        %v7809 = vadd.f32 %v7648, %v7808
        %v7810 = vpop.f32.mrb[0].mxu0
        %7811 = vmatprep.mubr.bf16.mxu0 0
        %7812 = vmatmul.mubr.bf16.gmra.mrb[0].mxu0 %v7022
        %v7813 = vpop.f32.mrb[0].mxu0
        %v7814 = vadd.f32 %v7653, %v7813
        %v7815 = vpop.f32.mrb[0].mxu0
        %v7816 = vpop.f32.mrb[0].mxu0
        %v7817 = vadd.f32 %v7656, %v7816
        %v7818 = vpop.f32.mrb[0].mxu0
        %7819 = vmatprep.mubr.bf16.mxu0 0
        %7820 = vmatmul.mubr.bf16.gmra.mrb[0].mxu0 %v7027
        %v7821 = vpop.f32.mrb[0].mxu0
        %v7822 = vadd.f32 %v7661, %v7821
        %v7823 = vpop.f32.mrb[0].mxu0
        %v7824 = vpop.f32.mrb[0].mxu0
        %v7825 = vadd.f32 %v7664, %v7824
        %v7826 = vpop.f32.mrb[0].mxu0
        %7827 = vmatprep.mubr.bf16.mxu0 0
        %7828 = vmatmul.mubr.bf16.gmra.mrb[0].mxu0 %v7032
        %v7829 = vpop.f32.mrb[0].mxu0
        %v7830 = vadd.f32 %v7669, %v7829
        %v7831 = vpop.f32.mrb[0].mxu0
        %v7832 = vpop.f32.mrb[0].mxu0
        %v7833 = vadd.f32 %v7672, %v7832
        %v7834 = vpop.f32.mrb[0].mxu0
        %7835 = vdwg.mxu0
        %v7836 = vadd.f32 %v6921, %v7710
        %v7837 = vadd.f32 %v6922, %v7713
        %v7838 = vadd.f32 %v6923, %v7718
        %v7839 = vadd.f32 %v6924, %v7721
        %v7840 = vadd.f32 %v6925, %v7726
        %v7841 = vadd.f32 %v6926, %v7729
        %v7842 = vadd.f32 %v6927, %v7734
        %v7843 = vadd.f32 %v6928, %v7737
        %v7844 = vadd.f32 %v6929, %v7742
        %v7845 = vadd.f32 %v6930, %v7745
        %v7846 = vadd.f32 %v6931, %v7750
        %v7847 = vadd.f32 %v6932, %v7753
        %v7848 = vadd.f32 %v6933, %v7758
        %v7849 = vadd.f32 %v6934, %v7761
        %v7850 = vadd.f32 %v6935, %v7766
        %v7851 = vadd.f32 %v6936, %v7769
        %v7852 = vadd.f32 %v6937, %v7774
        %v7853 = vadd.f32 %v6938, %v7777
        %v7854 = vadd.f32 %v6939, %v7782
        %v7855 = vadd.f32 %v6940, %v7785
        %v7856 = vadd.f32 %v6941, %v7790
        %v7857 = vadd.f32 %v6942, %v7793
        %v7858 = vadd.f32 %v6943, %v7798
        %v7859 = vadd.f32 %v6944, %v7801
        %v7860 = vadd.f32 %v6945, %v7806
        %v7861 = vadd.f32 %v6946, %v7809
        %v7862 = vadd.f32 %v6947, %v7814
        %v7863 = vadd.f32 %v6948, %v7817
        %v7864 = vadd.f32 %v6949, %v7822
        %v7865 = vadd.f32 %v6950, %v7825
        %v7866 = vadd.f32 %v6951, %v7830
        %v7867 = vadd.f32 %v6952, %v7833
        %v7868 = vld [vmem:[#allocation6] sm:$0x1]
        %v7870 = vlaneseq
        %v7871 = vshrl.u32 %v7870, 7
        %v7872 = vsub.s32 0, %v7871
        %v7873 = vrot.slane %v7868, %v7872
        %v7875 = vmul.f32 %v6889, %v7873
        %v7876 = vmul.f32 %v6890, %v7873
        %v7877 = vmul.f32 %v6891, %v7873
        %v7878 = vmul.f32 %v6892, %v7873
        %v7879 = vmul.f32 %v6893, %v7873
        %v7880 = vmul.f32 %v6894, %v7873
        %v7881 = vmul.f32 %v6895, %v7873
        %v7882 = vmul.f32 %v6896, %v7873
        %v7883 = vmul.f32 %v6897, %v7873
        %v7884 = vmul.f32 %v6898, %v7873
        %v7885 = vmul.f32 %v6899, %v7873
        %v7886 = vmul.f32 %v6900, %v7873
        %v7887 = vmul.f32 %v6901, %v7873
        %v7888 = vmul.f32 %v6902, %v7873
        %v7889 = vmul.f32 %v6903, %v7873
        %v7890 = vmul.f32 %v6904, %v7873
        %v7891 = vmul.f32 %v6905, %v7873
        %v7892 = vmul.f32 %v6906, %v7873
        %v7893 = vmul.f32 %v6907, %v7873
        %v7894 = vmul.f32 %v6908, %v7873
        %v7895 = vmul.f32 %v6909, %v7873
        %v7896 = vmul.f32 %v6910, %v7873
        %v7897 = vmul.f32 %v6911, %v7873
        %v7898 = vmul.f32 %v6912, %v7873
        %v7899 = vmul.f32 %v6913, %v7873
        %v7900 = vmul.f32 %v6914, %v7873
        %v7901 = vmul.f32 %v6915, %v7873
        %v7902 = vmul.f32 %v6916, %v7873
        %v7903 = vmul.f32 %v6917, %v7873
        %v7904 = vmul.f32 %v6918, %v7873
        %v7905 = vmul.f32 %v6919, %v7873
        %v7906 = vmul.f32 %v6920, %v7873
        %v7907 = vld [vmem:[#allocation8] sm:$0x1]
        %v7909 = vlaneseq
        %v7910 = vshrl.u32 %v7909, 7
        %v7911 = vsub.s32 0, %v7910
        %v7912 = vrot.slane %v7907, %v7911
        %v7914 = vadd.f32 %v7875, %v7912
        %v7915 = vadd.f32 %v7876, %v7912
        %v7916 = vadd.f32 %v7877, %v7912
        %v7917 = vadd.f32 %v7878, %v7912
        %v7918 = vadd.f32 %v7879, %v7912
        %v7919 = vadd.f32 %v7880, %v7912
        %v7920 = vadd.f32 %v7881, %v7912
        %v7921 = vadd.f32 %v7882, %v7912
        %v7922 = vadd.f32 %v7883, %v7912
        %v7923 = vadd.f32 %v7884, %v7912
        %v7924 = vadd.f32 %v7885, %v7912
        %v7925 = vadd.f32 %v7886, %v7912
        %v7926 = vadd.f32 %v7887, %v7912
        %v7927 = vadd.f32 %v7888, %v7912
        %v7928 = vadd.f32 %v7889, %v7912
        %v7929 = vadd.f32 %v7890, %v7912
        %v7930 = vadd.f32 %v7891, %v7912
        %v7931 = vadd.f32 %v7892, %v7912
        %v7932 = vadd.f32 %v7893, %v7912
        %v7933 = vadd.f32 %v7894, %v7912
        %v7934 = vadd.f32 %v7895, %v7912
        %v7935 = vadd.f32 %v7896, %v7912
        %v7936 = vadd.f32 %v7897, %v7912
        %v7937 = vadd.f32 %v7898, %v7912
        %v7938 = vadd.f32 %v7899, %v7912
        %v7939 = vadd.f32 %v7900, %v7912
        %v7940 = vadd.f32 %v7901, %v7912
        %v7941 = vadd.f32 %v7902, %v7912
        %v7942 = vadd.f32 %v7903, %v7912
        %v7943 = vadd.f32 %v7904, %v7912
        %v7944 = vadd.f32 %v7905, %v7912
        %v7945 = vadd.f32 %v7906, %v7912
        %v7946 = vmax.f32 %v7914, 0.0
        %v7947 = vmax.f32 %v7915, 0.0
        %v7948 = vmax.f32 %v7916, 0.0
        %v7949 = vmax.f32 %v7917, 0.0
        %v7950 = vmax.f32 %v7918, 0.0
        %v7951 = vmax.f32 %v7919, 0.0
        %v7952 = vmax.f32 %v7920, 0.0
        %v7953 = vmax.f32 %v7921, 0.0
        %v7954 = vmax.f32 %v7922, 0.0
        %v7955 = vmax.f32 %v7923, 0.0
        %v7956 = vmax.f32 %v7924, 0.0
        %v7957 = vmax.f32 %v7925, 0.0
        %v7958 = vmax.f32 %v7926, 0.0
        %v7959 = vmax.f32 %v7927, 0.0
        %v7960 = vmax.f32 %v7928, 0.0
        %v7961 = vmax.f32 %v7929, 0.0
        %v7962 = vmax.f32 %v7930, 0.0
        %v7963 = vmax.f32 %v7931, 0.0
        %v7964 = vmax.f32 %v7932, 0.0
        %v7965 = vmax.f32 %v7933, 0.0
        %v7966 = vmax.f32 %v7934, 0.0
        %v7967 = vmax.f32 %v7935, 0.0
        %v7968 = vmax.f32 %v7936, 0.0
        %v7969 = vmax.f32 %v7937, 0.0
        %v7970 = vmax.f32 %v7938, 0.0
        %v7971 = vmax.f32 %v7939, 0.0
        %v7972 = vmax.f32 %v7940, 0.0
        %v7973 = vmax.f32 %v7941, 0.0
        %v7974 = vmax.f32 %v7942, 0.0
        %v7975 = vmax.f32 %v7943, 0.0
        %v7976 = vmax.f32 %v7944, 0.0
        %v7977 = vmax.f32 %v7945, 0.0
        %v7978 = vpack.c.bf16 %v7947, %v7946
        %v7979 = vpack.c.bf16 %v7949, %v7948
        %v7980 = vpack.c.bf16 %v7951, %v7950
        %v7981 = vpack.c.bf16 %v7953, %v7952
        %v7982 = vpack.c.bf16 %v7955, %v7954
        %v7983 = vpack.c.bf16 %v7957, %v7956
        %v7984 = vpack.c.bf16 %v7959, %v7958
        %v7985 = vpack.c.bf16 %v7961, %v7960
        %v7986 = vpack.c.bf16 %v7963, %v7962
        %v7987 = vpack.c.bf16 %v7965, %v7964
        %v7988 = vpack.c.bf16 %v7967, %v7966
        %v7989 = vpack.c.bf16 %v7969, %v7968
        %v7990 = vpack.c.bf16 %v7971, %v7970
        %v7991 = vpack.c.bf16 %v7973, %v7972
        %v7992 = vpack.c.bf16 %v7975, %v7974
        %v7993 = vpack.c.bf16 %v7977, %v7976
        %v8010 = vunpack.c.l.b16 %v7978
        %v8011 = vunpack.c.h.b16 %v7978
        %v8012 = vunpack.c.l.b16 %v7979
        %v8013 = vunpack.c.h.b16 %v7979
        %v8014 = vunpack.c.l.b16 %v7980
        %v8015 = vunpack.c.h.b16 %v7980
        %v8016 = vunpack.c.l.b16 %v7981
        %v8017 = vunpack.c.h.b16 %v7981
        %v8018 = vunpack.c.l.b16 %v7982
        %v8019 = vunpack.c.h.b16 %v7982
        %v8020 = vunpack.c.l.b16 %v7983
        %v8021 = vunpack.c.h.b16 %v7983
        %v8022 = vunpack.c.l.b16 %v7984
        %v8023 = vunpack.c.h.b16 %v7984
        %v8024 = vunpack.c.l.b16 %v7985
        %v8025 = vunpack.c.h.b16 %v7985
        %v8026 = vunpack.c.l.b16 %v7986
        %v8027 = vunpack.c.h.b16 %v7986
        %v8028 = vunpack.c.l.b16 %v7987
        %v8029 = vunpack.c.h.b16 %v7987
        %v8030 = vunpack.c.l.b16 %v7988
        %v8031 = vunpack.c.h.b16 %v7988
        %v8032 = vunpack.c.l.b16 %v7989
        %v8033 = vunpack.c.h.b16 %v7989
        %v8034 = vunpack.c.l.b16 %v7990
        %v8035 = vunpack.c.h.b16 %v7990
        %v8036 = vunpack.c.l.b16 %v7991
        %v8037 = vunpack.c.h.b16 %v7991
        %v8038 = vunpack.c.l.b16 %v7992
        %v8039 = vunpack.c.h.b16 %v7992
        %v8040 = vunpack.c.l.b16 %v7993
        %v8041 = vunpack.c.h.b16 %v7993
        %v8042 = vpack.c.b16 %v8010, %v8010
        %v8043 = vpack.c.b16 %v8011, %v8011
        %v8044 = vpack.c.b16 %v8012, %v8012
        %v8045 = vpack.c.b16 %v8013, %v8013
        %v8046 = vpack.c.b16 %v8014, %v8014
        %v8047 = vpack.c.b16 %v8015, %v8015
        %v8048 = vpack.c.b16 %v8016, %v8016
        %v8049 = vpack.c.b16 %v8017, %v8017
        %v8050 = vpack.c.b16 %v8018, %v8018
        %v8051 = vpack.c.b16 %v8019, %v8019
        %v8052 = vpack.c.b16 %v8020, %v8020
        %v8053 = vpack.c.b16 %v8021, %v8021
        %v8054 = vpack.c.b16 %v8022, %v8022
        %v8055 = vpack.c.b16 %v8023, %v8023
        %v8056 = vpack.c.b16 %v8024, %v8024
        %v8057 = vpack.c.b16 %v8025, %v8025
        %v8058 = vpack.c.b16 %v8026, %v8026
        %v8059 = vpack.c.b16 %v8027, %v8027
        %v8060 = vpack.c.b16 %v8028, %v8028
        %v8061 = vpack.c.b16 %v8029, %v8029
        %v8062 = vpack.c.b16 %v8030, %v8030
        %v8063 = vpack.c.b16 %v8031, %v8031
        %v8064 = vpack.c.b16 %v8032, %v8032
        %v8065 = vpack.c.b16 %v8033, %v8033
        %v8066 = vpack.c.b16 %v8034, %v8034
        %v8067 = vpack.c.b16 %v8035, %v8035
        %v8068 = vpack.c.b16 %v8036, %v8036
        %v8069 = vpack.c.b16 %v8037, %v8037
        %v8070 = vpack.c.b16 %v8038, %v8038
        %v8071 = vpack.c.b16 %v8039, %v8039
        %v8072 = vpack.c.b16 %v8040, %v8040
        %v8073 = vpack.c.b16 %v8041, %v8041
        %8106 = vst [vmem:[%s277] sm:$0xf] %v8042
        %8107 = vst [vmem:[%s277 + $0x8] sm:$0xf] %v8043
        %8108 = vst [vmem:[%s277 + $0x10] sm:$0xf] %v8044
        %8109 = vst [vmem:[%s277 + $0x18] sm:$0xf] %v8045
        %8110 = vst [vmem:[%s277 + $0x20] sm:$0xf] %v8046
        %8111 = vst [vmem:[%s277 + $0x28] sm:$0xf] %v8047
        %8112 = vst [vmem:[%s277 + $0x30] sm:$0xf] %v8048
        %8113 = vst [vmem:[%s277 + $0x38] sm:$0xf] %v8049
        %8114 = vst [vmem:[%s277 + $0x40] sm:$0xf] %v8050
        %8115 = vst [vmem:[%s277 + $0x48] sm:$0xf] %v8051
        %8116 = vst [vmem:[%s277 + $0x50] sm:$0xf] %v8052
        %8117 = vst [vmem:[%s277 + $0x58] sm:$0xf] %v8053
        %8118 = vst [vmem:[%s277 + $0x60] sm:$0xf] %v8054
        %8119 = vst [vmem:[%s277 + $0x68] sm:$0xf] %v8055
        %8120 = vst [vmem:[%s277 + $0x70] sm:$0xf] %v8056
        %8121 = vst [vmem:[%s277 + $0x78] sm:$0xf] %v8057
        %8122 = vst [vmem:[%s277 + $0x80] sm:$0xf] %v8058
        %8123 = vst [vmem:[%s277 + $0x88] sm:$0xf] %v8059
        %8124 = vst [vmem:[%s277 + $0x90] sm:$0xf] %v8060
        %8125 = vst [vmem:[%s277 + $0x98] sm:$0xf] %v8061
        %8126 = vst [vmem:[%s277 + $0xa0] sm:$0xf] %v8062
        %8127 = vst [vmem:[%s277 + $0xa8] sm:$0xf] %v8063
        %8128 = vst [vmem:[%s277 + $0xb0] sm:$0xf] %v8064
        %8129 = vst [vmem:[%s277 + $0xb8] sm:$0xf] %v8065
        %8130 = vst [vmem:[%s277 + $0xc0] sm:$0xf] %v8066
        %8131 = vst [vmem:[%s277 + $0xc8] sm:$0xf] %v8067
        %8132 = vst [vmem:[%s277 + $0xd0] sm:$0xf] %v8068
        %8133 = vst [vmem:[%s277 + $0xd8] sm:$0xf] %v8069
        %8134 = vst [vmem:[%s277 + $0xe0] sm:$0xf] %v8070
        %8135 = vst [vmem:[%s277 + $0xe8] sm:$0xf] %v8071
        %8136 = vst [vmem:[%s277 + $0xf0] sm:$0xf] %v8072
        %8137 = vst [vmem:[%s277 + $0xf8] sm:$0xf] %v8073
        %v8138 = vld [vmem:[#allocation6 + $0x1] sm:$0x1]
        %v8140 = vlaneseq
        %v8141 = vshrl.u32 %v8140, 7
        %v8142 = vsub.s32 0, %v8141
        %v8143 = vrot.slane %v8138, %v8142
        %v8145 = vmul.f32 %v7836, %v8143
        %v8146 = vmul.f32 %v7837, %v8143
        %v8147 = vmul.f32 %v7838, %v8143
        %v8148 = vmul.f32 %v7839, %v8143
        %v8149 = vmul.f32 %v7840, %v8143
        %v8150 = vmul.f32 %v7841, %v8143
        %v8151 = vmul.f32 %v7842, %v8143
        %v8152 = vmul.f32 %v7843, %v8143
        %v8153 = vmul.f32 %v7844, %v8143
        %v8154 = vmul.f32 %v7845, %v8143
        %v8155 = vmul.f32 %v7846, %v8143
        %v8156 = vmul.f32 %v7847, %v8143
        %v8157 = vmul.f32 %v7848, %v8143
        %v8158 = vmul.f32 %v7849, %v8143
        %v8159 = vmul.f32 %v7850, %v8143
        %v8160 = vmul.f32 %v7851, %v8143
        %v8161 = vmul.f32 %v7852, %v8143
        %v8162 = vmul.f32 %v7853, %v8143
        %v8163 = vmul.f32 %v7854, %v8143
        %v8164 = vmul.f32 %v7855, %v8143
        %v8165 = vmul.f32 %v7856, %v8143
        %v8166 = vmul.f32 %v7857, %v8143
        %v8167 = vmul.f32 %v7858, %v8143
        %v8168 = vmul.f32 %v7859, %v8143
        %v8169 = vmul.f32 %v7860, %v8143
        %v8170 = vmul.f32 %v7861, %v8143
        %v8171 = vmul.f32 %v7862, %v8143
        %v8172 = vmul.f32 %v7863, %v8143
        %v8173 = vmul.f32 %v7864, %v8143
        %v8174 = vmul.f32 %v7865, %v8143
        %v8175 = vmul.f32 %v7866, %v8143
        %v8176 = vmul.f32 %v7867, %v8143
        %v8177 = vld [vmem:[#allocation8 + $0x1] sm:$0x1]
        %v8179 = vlaneseq
        %v8180 = vshrl.u32 %v8179, 7
        %v8181 = vsub.s32 0, %v8180
        %v8182 = vrot.slane %v8177, %v8181
        %v8184 = vadd.f32 %v8145, %v8182
        %v8185 = vadd.f32 %v8146, %v8182
        %v8186 = vadd.f32 %v8147, %v8182
        %v8187 = vadd.f32 %v8148, %v8182
        %v8188 = vadd.f32 %v8149, %v8182
        %v8189 = vadd.f32 %v8150, %v8182
        %v8190 = vadd.f32 %v8151, %v8182
        %v8191 = vadd.f32 %v8152, %v8182
        %v8192 = vadd.f32 %v8153, %v8182
        %v8193 = vadd.f32 %v8154, %v8182
        %v8194 = vadd.f32 %v8155, %v8182
        %v8195 = vadd.f32 %v8156, %v8182
        %v8196 = vadd.f32 %v8157, %v8182
        %v8197 = vadd.f32 %v8158, %v8182
        %v8198 = vadd.f32 %v8159, %v8182
        %v8199 = vadd.f32 %v8160, %v8182
        %v8200 = vadd.f32 %v8161, %v8182
        %v8201 = vadd.f32 %v8162, %v8182
        %v8202 = vadd.f32 %v8163, %v8182
        %v8203 = vadd.f32 %v8164, %v8182
        %v8204 = vadd.f32 %v8165, %v8182
        %v8205 = vadd.f32 %v8166, %v8182
        %v8206 = vadd.f32 %v8167, %v8182
        %v8207 = vadd.f32 %v8168, %v8182
        %v8208 = vadd.f32 %v8169, %v8182
        %v8209 = vadd.f32 %v8170, %v8182
        %v8210 = vadd.f32 %v8171, %v8182
        %v8211 = vadd.f32 %v8172, %v8182
        %v8212 = vadd.f32 %v8173, %v8182
        %v8213 = vadd.f32 %v8174, %v8182
        %v8214 = vadd.f32 %v8175, %v8182
        %v8215 = vadd.f32 %v8176, %v8182
        %v8216 = vmax.f32 %v8184, 0.0
        %v8217 = vmax.f32 %v8185, 0.0
        %v8218 = vmax.f32 %v8186, 0.0
        %v8219 = vmax.f32 %v8187, 0.0
        %v8220 = vmax.f32 %v8188, 0.0
        %v8221 = vmax.f32 %v8189, 0.0
        %v8222 = vmax.f32 %v8190, 0.0
        %v8223 = vmax.f32 %v8191, 0.0
        %v8224 = vmax.f32 %v8192, 0.0
        %v8225 = vmax.f32 %v8193, 0.0
        %v8226 = vmax.f32 %v8194, 0.0
        %v8227 = vmax.f32 %v8195, 0.0
        %v8228 = vmax.f32 %v8196, 0.0
        %v8229 = vmax.f32 %v8197, 0.0
        %v8230 = vmax.f32 %v8198, 0.0
        %v8231 = vmax.f32 %v8199, 0.0
        %v8232 = vmax.f32 %v8200, 0.0
        %v8233 = vmax.f32 %v8201, 0.0
        %v8234 = vmax.f32 %v8202, 0.0
        %v8235 = vmax.f32 %v8203, 0.0
        %v8236 = vmax.f32 %v8204, 0.0
        %v8237 = vmax.f32 %v8205, 0.0
        %v8238 = vmax.f32 %v8206, 0.0
        %v8239 = vmax.f32 %v8207, 0.0
        %v8240 = vmax.f32 %v8208, 0.0
        %v8241 = vmax.f32 %v8209, 0.0
        %v8242 = vmax.f32 %v8210, 0.0
        %v8243 = vmax.f32 %v8211, 0.0
        %v8244 = vmax.f32 %v8212, 0.0
        %v8245 = vmax.f32 %v8213, 0.0
        %v8246 = vmax.f32 %v8214, 0.0
        %v8247 = vmax.f32 %v8215, 0.0
        %v8248 = vadd.f32 %v7946, %v8216
        %v8249 = vadd.f32 %v7947, %v8217
        %v8250 = vadd.f32 %v7948, %v8218
        %v8251 = vadd.f32 %v7949, %v8219
        %v8252 = vadd.f32 %v7950, %v8220
        %v8253 = vadd.f32 %v7951, %v8221
        %v8254 = vadd.f32 %v7952, %v8222
        %v8255 = vadd.f32 %v7953, %v8223
        %v8256 = vadd.f32 %v7954, %v8224
        %v8257 = vadd.f32 %v7955, %v8225
        %v8258 = vadd.f32 %v7956, %v8226
        %v8259 = vadd.f32 %v7957, %v8227
        %v8260 = vadd.f32 %v7958, %v8228
        %v8261 = vadd.f32 %v7959, %v8229
        %v8262 = vadd.f32 %v7960, %v8230
        %v8263 = vadd.f32 %v7961, %v8231
        %v8264 = vadd.f32 %v7962, %v8232
        %v8265 = vadd.f32 %v7963, %v8233
        %v8266 = vadd.f32 %v7964, %v8234
        %v8267 = vadd.f32 %v7965, %v8235
        %v8268 = vadd.f32 %v7966, %v8236
        %v8269 = vadd.f32 %v7967, %v8237
        %v8270 = vadd.f32 %v7968, %v8238
        %v8271 = vadd.f32 %v7969, %v8239
        %v8272 = vadd.f32 %v7970, %v8240
        %v8273 = vadd.f32 %v7971, %v8241
        %v8274 = vadd.f32 %v7972, %v8242
        %v8275 = vadd.f32 %v7973, %v8243
        %v8276 = vadd.f32 %v7974, %v8244
        %v8277 = vadd.f32 %v7975, %v8245
        %v8278 = vadd.f32 %v7976, %v8246
        %v8279 = vadd.f32 %v7977, %v8247
        %v8280 = vpack.c.bf16 %v8217, %v8216
        %v8281 = vpack.c.bf16 %v8219, %v8218
        %v8282 = vpack.c.bf16 %v8221, %v8220
        %v8283 = vpack.c.bf16 %v8223, %v8222
        %v8284 = vpack.c.bf16 %v8225, %v8224
        %v8285 = vpack.c.bf16 %v8227, %v8226
        %v8286 = vpack.c.bf16 %v8229, %v8228
        %v8287 = vpack.c.bf16 %v8231, %v8230
        %v8288 = vpack.c.bf16 %v8233, %v8232
        %v8289 = vpack.c.bf16 %v8235, %v8234
        %v8290 = vpack.c.bf16 %v8237, %v8236
        %v8291 = vpack.c.bf16 %v8239, %v8238
        %v8292 = vpack.c.bf16 %v8241, %v8240
        %v8293 = vpack.c.bf16 %v8243, %v8242
        %v8294 = vpack.c.bf16 %v8245, %v8244
        %v8295 = vpack.c.bf16 %v8247, %v8246
        %v8312 = vunpack.c.l.b16 %v8280
        %v8313 = vunpack.c.h.b16 %v8280
        %v8314 = vunpack.c.l.b16 %v8281
        %v8315 = vunpack.c.h.b16 %v8281
        %v8316 = vunpack.c.l.b16 %v8282
        %v8317 = vunpack.c.h.b16 %v8282
        %v8318 = vunpack.c.l.b16 %v8283
        %v8319 = vunpack.c.h.b16 %v8283
        %v8320 = vunpack.c.l.b16 %v8284
        %v8321 = vunpack.c.h.b16 %v8284
        %v8322 = vunpack.c.l.b16 %v8285
        %v8323 = vunpack.c.h.b16 %v8285
        %v8324 = vunpack.c.l.b16 %v8286
        %v8325 = vunpack.c.h.b16 %v8286
        %v8326 = vunpack.c.l.b16 %v8287
        %v8327 = vunpack.c.h.b16 %v8287
        %v8328 = vunpack.c.l.b16 %v8288
        %v8329 = vunpack.c.h.b16 %v8288
        %v8330 = vunpack.c.l.b16 %v8289
        %v8331 = vunpack.c.h.b16 %v8289
        %v8332 = vunpack.c.l.b16 %v8290
        %v8333 = vunpack.c.h.b16 %v8290
        %v8334 = vunpack.c.l.b16 %v8291
        %v8335 = vunpack.c.h.b16 %v8291
        %v8336 = vunpack.c.l.b16 %v8292
        %v8337 = vunpack.c.h.b16 %v8292
        %v8338 = vunpack.c.l.b16 %v8293
        %v8339 = vunpack.c.h.b16 %v8293
        %v8340 = vunpack.c.l.b16 %v8294
        %v8341 = vunpack.c.h.b16 %v8294
        %v8342 = vunpack.c.l.b16 %v8295
        %v8343 = vunpack.c.h.b16 %v8295
        %v8344 = vpack.c.b16 %v8312, %v8312
        %v8345 = vpack.c.b16 %v8313, %v8313
        %v8346 = vpack.c.b16 %v8314, %v8314
        %v8347 = vpack.c.b16 %v8315, %v8315
        %v8348 = vpack.c.b16 %v8316, %v8316
        %v8349 = vpack.c.b16 %v8317, %v8317
        %v8350 = vpack.c.b16 %v8318, %v8318
        %v8351 = vpack.c.b16 %v8319, %v8319
        %v8352 = vpack.c.b16 %v8320, %v8320
        %v8353 = vpack.c.b16 %v8321, %v8321
        %v8354 = vpack.c.b16 %v8322, %v8322
        %v8355 = vpack.c.b16 %v8323, %v8323
        %v8356 = vpack.c.b16 %v8324, %v8324
        %v8357 = vpack.c.b16 %v8325, %v8325
        %v8358 = vpack.c.b16 %v8326, %v8326
        %v8359 = vpack.c.b16 %v8327, %v8327
        %v8360 = vpack.c.b16 %v8328, %v8328
        %v8361 = vpack.c.b16 %v8329, %v8329
        %v8362 = vpack.c.b16 %v8330, %v8330
        %v8363 = vpack.c.b16 %v8331, %v8331
        %v8364 = vpack.c.b16 %v8332, %v8332
        %v8365 = vpack.c.b16 %v8333, %v8333
        %v8366 = vpack.c.b16 %v8334, %v8334
        %v8367 = vpack.c.b16 %v8335, %v8335
        %v8368 = vpack.c.b16 %v8336, %v8336
        %v8369 = vpack.c.b16 %v8337, %v8337
        %v8370 = vpack.c.b16 %v8338, %v8338
        %v8371 = vpack.c.b16 %v8339, %v8339
        %v8372 = vpack.c.b16 %v8340, %v8340
        %v8373 = vpack.c.b16 %v8341, %v8341
        %v8374 = vpack.c.b16 %v8342, %v8342
        %v8375 = vpack.c.b16 %v8343, %v8343
        %8408 = vst [vmem:[%s277 + $0x4] sm:$0xf] %v8344
        %8409 = vst [vmem:[%s277 + $0xc] sm:$0xf] %v8345
        %8410 = vst [vmem:[%s277 + $0x14] sm:$0xf] %v8346
        %8411 = vst [vmem:[%s277 + $0x1c] sm:$0xf] %v8347
        %8412 = vst [vmem:[%s277 + $0x24] sm:$0xf] %v8348
        %8413 = vst [vmem:[%s277 + $0x2c] sm:$0xf] %v8349
        %8414 = vst [vmem:[%s277 + $0x34] sm:$0xf] %v8350
        %8415 = vst [vmem:[%s277 + $0x3c] sm:$0xf] %v8351
        %8416 = vst [vmem:[%s277 + $0x44] sm:$0xf] %v8352
        %8417 = vst [vmem:[%s277 + $0x4c] sm:$0xf] %v8353
        %8418 = vst [vmem:[%s277 + $0x54] sm:$0xf] %v8354
        %8419 = vst [vmem:[%s277 + $0x5c] sm:$0xf] %v8355
        %8420 = vst [vmem:[%s277 + $0x64] sm:$0xf] %v8356
        %8421 = vst [vmem:[%s277 + $0x6c] sm:$0xf] %v8357
        %8422 = vst [vmem:[%s277 + $0x74] sm:$0xf] %v8358
        %8423 = vst [vmem:[%s277 + $0x7c] sm:$0xf] %v8359
        %8424 = vst [vmem:[%s277 + $0x84] sm:$0xf] %v8360
        %8425 = vst [vmem:[%s277 + $0x8c] sm:$0xf] %v8361
        %8426 = vst [vmem:[%s277 + $0x94] sm:$0xf] %v8362
        %8427 = vst [vmem:[%s277 + $0x9c] sm:$0xf] %v8363
        %8428 = vst [vmem:[%s277 + $0xa4] sm:$0xf] %v8364
        %8429 = vst [vmem:[%s277 + $0xac] sm:$0xf] %v8365
        %8430 = vst [vmem:[%s277 + $0xb4] sm:$0xf] %v8366
        %8431 = vst [vmem:[%s277 + $0xbc] sm:$0xf] %v8367
        %8432 = vst [vmem:[%s277 + $0xc4] sm:$0xf] %v8368
        %8433 = vst [vmem:[%s277 + $0xcc] sm:$0xf] %v8369
        %8434 = vst [vmem:[%s277 + $0xd4] sm:$0xf] %v8370
        %8435 = vst [vmem:[%s277 + $0xdc] sm:$0xf] %v8371
        %8436 = vst [vmem:[%s277 + $0xe4] sm:$0xf] %v8372
        %8437 = vst [vmem:[%s277 + $0xec] sm:$0xf] %v8373
        %8438 = vst [vmem:[%s277 + $0xf4] sm:$0xf] %v8374
        %8439 = vst [vmem:[%s277 + $0xfc] sm:$0xf] %v8375
        %v8440 = vadd.f32 %v8248, %v8249
        %v8441 = vadd.f32 %v8440, %v8250
        %v8442 = vadd.f32 %v8441, %v8251
        %v8443 = vrot.slane %v8442, 4
        %v8444 = vadd.f32 %v8442, %v8443
        %v8445 = vrot.slane %v8444, 2
        %v8446 = vadd.f32 %v8444, %v8445
        %v8447 = vrot.slane %v8446, 1
        %v8448 = vadd.f32 %v8446, %v8447
        %v8449 = vadd.f32 %v8252, %v8253
        %v8450 = vadd.f32 %v8449, %v8254
        %v8451 = vadd.f32 %v8450, %v8255
        %v8452 = vrot.slane %v8451, 4
        %v8453 = vadd.f32 %v8451, %v8452
        %v8454 = vrot.slane %v8453, 2
        %v8455 = vadd.f32 %v8453, %v8454
        %v8456 = vrot.slane %v8455, 1
        %v8457 = vadd.f32 %v8455, %v8456
        %v8458 = vadd.f32 %v8256, %v8257
        %v8459 = vadd.f32 %v8458, %v8258
        %v8460 = vadd.f32 %v8459, %v8259
        %v8461 = vrot.slane %v8460, 4
        %v8462 = vadd.f32 %v8460, %v8461
        %v8463 = vrot.slane %v8462, 2
        %v8464 = vadd.f32 %v8462, %v8463
        %v8465 = vrot.slane %v8464, 1
        %v8466 = vadd.f32 %v8464, %v8465
        %v8467 = vadd.f32 %v8260, %v8261
        %v8468 = vadd.f32 %v8467, %v8262
        %v8469 = vadd.f32 %v8468, %v8263
        %v8470 = vrot.slane %v8469, 4
        %v8471 = vadd.f32 %v8469, %v8470
        %v8472 = vrot.slane %v8471, 2
        %v8473 = vadd.f32 %v8471, %v8472
        %v8474 = vrot.slane %v8473, 1
        %v8475 = vadd.f32 %v8473, %v8474
        %v8476 = vadd.f32 %v8264, %v8265
        %v8477 = vadd.f32 %v8476, %v8266
        %v8478 = vadd.f32 %v8477, %v8267
        %v8479 = vrot.slane %v8478, 4
        %v8480 = vadd.f32 %v8478, %v8479
        %v8481 = vrot.slane %v8480, 2
        %v8482 = vadd.f32 %v8480, %v8481
        %v8483 = vrot.slane %v8482, 1
        %v8484 = vadd.f32 %v8482, %v8483
        %v8485 = vadd.f32 %v8268, %v8269
        %v8486 = vadd.f32 %v8485, %v8270
        %v8487 = vadd.f32 %v8486, %v8271
        %v8488 = vrot.slane %v8487, 4
        %v8489 = vadd.f32 %v8487, %v8488
        %v8490 = vrot.slane %v8489, 2
        %v8491 = vadd.f32 %v8489, %v8490
        %v8492 = vrot.slane %v8491, 1
        %v8493 = vadd.f32 %v8491, %v8492
        %v8494 = vadd.f32 %v8272, %v8273
        %v8495 = vadd.f32 %v8494, %v8274
        %v8496 = vadd.f32 %v8495, %v8275
        %v8497 = vrot.slane %v8496, 4
        %v8498 = vadd.f32 %v8496, %v8497
        %v8499 = vrot.slane %v8498, 2
        %v8500 = vadd.f32 %v8498, %v8499
        %v8501 = vrot.slane %v8500, 1
        %v8502 = vadd.f32 %v8500, %v8501
        %v8503 = vadd.f32 %v8276, %v8277
        %v8504 = vadd.f32 %v8503, %v8278
        %v8505 = vadd.f32 %v8504, %v8279
        %v8506 = vrot.slane %v8505, 4
        %v8507 = vadd.f32 %v8505, %v8506
        %v8508 = vrot.slane %v8507, 2
        %v8509 = vadd.f32 %v8507, %v8508
        %v8510 = vrot.slane %v8509, 1
        %v8511 = vadd.f32 %v8509, %v8510
        %vm8520 = vcmask 1041409
        %v8521 = vsel %vm8520, %v8457, %v8448
        %vm8522 = vcmask 1042434
        %v8523 = vsel %vm8522, %v8466, %v8521
        %vm8524 = vcmask 1043459
        %v8525 = vsel %vm8524, %v8475, %v8523
        %vm8526 = vcmask 1044484
        %v8527 = vsel %vm8526, %v8484, %v8525
        %vm8528 = vcmask 1045509
        %v8529 = vsel %vm8528, %v8493, %v8527
        %vm8530 = vcmask 1046534
        %v8531 = vsel %vm8530, %v8502, %v8529
        %vm8532 = vcmask 1047559
        %v8533 = vsel %vm8532, %v8511, %v8531
        %8535 = vst [vmem:[%s284] sm:$0xff] %v8533
        %s8536 = sand.u32 %s136, 1
        %s8537 = scalar_lea.sflag [#allocation5], %s8536
        %s8538 = sand.u32 %s136, 1
        %s8539 = smul.addr %s8538, 256
        %s8540 = scalar_lea.vmem [#allocation9], %s8539
        %s8541 = sand.u32 %s164, 1
        %s8542 = scalar_lea.sflag [#allocation11], %s8541
        %s8543 = sand.u32 %s164, 1
        %s8544 = smul.addr %s8543, 8
        %s8545 = scalar_lea.vmem [#allocation10], %s8544
        // Predicated region
        $region49: #{tpu_custom_call.1} parent=35 // pred_check
          %p8546 = pneg %p146
        $region50: #{tpu_custom_call.1} parent=35 // pred_check_branch
          %8548 = sbr.rel (%p8546) target = $region52
        $region51: #{tpu_custom_call.1} parent=35 // pred_region
          %s8549 = smul.u32 16, %s30
          %s8551 = ssub.s32 4096, 4096
          %8552 = vsyncadd %s8537, %s8551
          %s8553 = smul.addr %s8549, 4
          %s8554 = smul.addr %s29, 64
          %s8555 = sadd.s32 %s8553, %s8554
          %s8556 = smul.addr %s8555, 64
          %s8557 = scalar_lea.hbm %s4, %s8556
          %s8558 = sshll.u32 %s8540, 4
          %s8559 = int_to_ptr.vmem [resolvable:$true] %s8558
          %8564 = dma.vmem_to_hbm [thread:$0]  %s8559, 4096, %s8557, %s8537, 128, 128, 8
        $region52: #{tpu_custom_call.1} parent=35 // pred_fallthru
          _
        // Predicated region
        $region53: #{tpu_custom_call.1} parent=35 // pred_check
          %p8565 = pneg %p174
        $region54: #{tpu_custom_call.1} parent=35 // pred_check_branch
          %8567 = sbr.rel (%p8565) target = $region56
        $region55: #{tpu_custom_call.1} parent=35 // pred_region
          %s8569 = ssub.s32 128, 128
          %8570 = vsyncadd %s8542, %s8569
          %s8571 = sadd.s32 %s30, %s29
          %s8572 = smul.addr %s8571, 128
          %s8573 = scalar_lea.hbm %s5, %s8572
          %s8575 = sshll.u32 %s8545, 4
          %s8576 = int_to_ptr.vmem [resolvable:$true] %s8575
          %8578 = dma.vmem_to_hbm [thread:$0]  %s8576, 128, %s8573, %s8542
        $region56: #{tpu_custom_call.1} parent=35 // pred_fallthru
          _
      $region36: #{tpu_custom_call.1} parent=5 // pred_fallthru
        _
      %p8579 = scmp.le.s32.totalorder 2, %s20
      // Predicated region
      $region57: #{tpu_custom_call.1} parent=5 // pred_check
        %p8580 = pneg %p8579
      $region58: #{tpu_custom_call.1} parent=5 // pred_check_branch
        %8582 = sbr.rel (%p8580) target = $region60
      $region59: #{tpu_custom_call.1} parent=5 // pred_region
        %s8583 = ssub.s32 %s20, 2
        // Predicated region
        $region61: #{tpu_custom_call.1} parent=59 // pred_check
          %p8584 = pneg %p152
        $region62: #{tpu_custom_call.1} parent=59 // pred_check_branch
          %8586 = sbr.rel (%p8584) target = $region64
        $region63: #{tpu_custom_call.1} parent=59 // pred_region
          %s8587 = sand.u32 %s137, 1
          %s8588 = scalar_lea.sflag [#allocation5], %s8587
          %s8589 = sand.u32 %s137, 1
          %s8590 = smul.addr %s8589, 256
          %s8591 = scalar_lea.vmem [#allocation9], %s8590
          %8592 = dma.done %s8588, 4096
        $region64: #{tpu_custom_call.1} parent=59 // pred_fallthru
          _
        // Predicated region
        $region65: #{tpu_custom_call.1} parent=59 // pred_check
          %p8593 = pneg %p180
        $region66: #{tpu_custom_call.1} parent=59 // pred_check_branch
          %8595 = sbr.rel (%p8593) target = $region68
        $region67: #{tpu_custom_call.1} parent=59 // pred_region
          %s8596 = sand.u32 %s165, 1
          %s8597 = scalar_lea.sflag [#allocation11], %s8596
          %s8598 = sand.u32 %s165, 1
          %s8599 = smul.addr %s8598, 8
          %s8600 = scalar_lea.vmem [#allocation10], %s8599
          %8601 = dma.done %s8597, 128
        $region68: #{tpu_custom_call.1} parent=59 // pred_fallthru
          _
      $region60: #{tpu_custom_call.1} parent=5 // pred_fallthru
        _
    $region6: #{tpu_custom_call.1} parent=1 // loop_footer
      %s24 = sadd.s32 1, %s20
    $region7: #{tpu_custom_call.1} parent=1 // loop_footer_branch
      %19 = sbr.rel target = $region3
    $region8: #{tpu_custom_call.1} parent=1 // loop_exit
      _
    %8602 = vsyncpa [#allocation4], 1
    %s8603 = scalar_lea.sflag [#allocation4], 1
    %8604 = vsyncpa %s8603, 1
    %8605 = vsyncpa [#allocation7], 1
    %8606 = vsyncpa [#allocation5], 1
    %s8607 = scalar_lea.sflag [#allocation5], 1
    %8608 = vsyncpa %s8607, 1
    %8609 = vsyncpa [#allocation11], 1
    %s8610 = scalar_lea.sflag [#allocation11], 1
    %8611 = vsyncpa %s8610, 1

</llo_original>
